<compile_context>
chip_gen: v7x
topology: tpu7x:2x2x1
jax: 0.10.0
libtpu: 0.0.40
codegen_flags: <defaults>
</compile_context>

<pallas_src>
import math
import numpy as np
import jax
import jax.numpy as jnp
from jax.experimental import pallas as pl
from jax.experimental.pallas import tpu as pltpu

# ---- small synthetic config consistent with the module ----
B = 2
H = W = 8
C = 32                       # dim
NUM_HEADS = 4
HD = C // NUM_HEADS
WS = 4                       # window_size
SHIFT = 2                    # shift_size (SW-MSA)
MLP_RATIO = 4
HIDDEN = C * MLP_RATIO
N = WS * WS                  # tokens per window
NW = (H // WS) * (W // WS)   # windows per batch element
T = NW * N                   # tokens per batch element (== H*W here)
BT = B * T                   # total tokens (all batch elements stacked)
SCALE = HD ** -0.5
EPS = 1e-5                   # nn.LayerNorm default
NEG_INF = -1e9               # cross-window suppression (exp underflows to exactly 0)

# Precomputed bias/permutation assume no window padding; guard the config.
assert H % WS == 0 and W % WS == 0


# ------------------------- fused Pallas kernel -------------------------

def _swin_block_kernel(x_ref, pm_ref, pmi_ref, bias_ref, g1_ref, b1_ref,
                       wq_ref, bq_ref, wk_ref, bk_ref, wvp_ref, bvp_ref, bproj_ref,
                       g2_ref, b2_ref, w1_ref, b1m_ref, w2_ref, b2m_ref, o_ref):
    """Whole SwinTransformerBlock for all B*T tokens in one step (everything in VMEM)."""
    x_all = x_ref[...]                                       # (BT, C) original token order
    pm = pm_ref[...]                                         # (BT, BT) 0/1 permutation

    # cyclic shift + window_partition == row permutation -> one tiny (exact) MXU matmul
    x_win = jnp.dot(pm, x_all, preferred_element_type=jnp.float32)      # (BT, C)

    # LayerNorm 1 (per-token; commutes with the permutation)
    mu = jnp.mean(x_win, axis=-1, keepdims=True)
    var = jnp.mean((x_win - mu) ** 2, axis=-1, keepdims=True)
    xn = (x_win - mu) * jax.lax.rsqrt(var + EPS) * g1_ref[...] + b1_ref[...]

    # W-MSA over all B*nW windows at once: block-diagonal (BT, BT) attention.
    # bias_ref[h] already contains rel-pos bias + SW-MSA mask on the diagonal
    # window blocks and -1e9 everywhere else (cross-window & cross-batch).
    attn_acc = jnp.zeros((BT, C), jnp.float32)
    for h in range(NUM_HEADS):                                # static 4-iter loop
        q = jnp.dot(xn, wq_ref[h], preferred_element_type=jnp.float32) + bq_ref[h]   # scale folded in
        k = jnp.dot(xn, wk_ref[h], preferred_element_type=jnp.float32) + bk_ref[h]   # (BT, HD)
        vp = jnp.dot(xn, wvp_ref[h], preferred_element_type=jnp.float32) + bvp_ref[h]  # (BT, C), proj folded in
        s = jnp.einsum('nd,md->nm', q, k,
                       preferred_element_type=jnp.float32) + bias_ref[h]              # (BT, BT)
        m = jnp.max(s, axis=-1, keepdims=True)
        e = jnp.exp(s - m)
        p = e / jnp.sum(e, axis=-1, keepdims=True)
        attn_acc = attn_acc + jnp.dot(p, vp, preferred_element_type=jnp.float32)

    # residual 1 (still in window order; shortcut == x_win)
    y = x_win + (attn_acc + bproj_ref[...])

    # LayerNorm 2 + MLP + residual 2
    mu2 = jnp.mean(y, axis=-1, keepdims=True)
    var2 = jnp.mean((y - mu2) ** 2, axis=-1, keepdims=True)
    yn = (y - mu2) * jax.lax.rsqrt(var2 + EPS) * g2_ref[...] + b2_ref[...]
    hid = jnp.dot(yn, w1_ref[...], preferred_element_type=jnp.float32) + b1m_ref[...]
    # exact (erf-based) GELU, matching torch.nn.GELU default
    hid = 0.5 * hid * (1.0 + jax.lax.erf(hid * (1.0 / math.sqrt(2.0))))
    z = y + jnp.dot(hid, w2_ref[...], preferred_element_type=jnp.float32) + b2m_ref[...]

    # window_reverse + reverse cyclic shift == inverse permutation (exact matmul)
    o_ref[...] = jnp.dot(pmi_ref[...], z, preferred_element_type=jnp.float32)


# ------------------------- pallas_call wrapper -------------------------

def swin_block_forward(x, p):
    """Full SwinTransformerBlock.forward (eval mode: dropout/drop_path are identity)."""
    Bx, L, Cx = x.shape
    assert Bx == B and L == H * W and Cx == C
    x_flat = x.reshape(Bx * L, Cx)

    def fullspec(shape):
        nd = len(shape)
        return pl.BlockSpec(shape, lambda i, _nd=nd: (0,) * _nd)

    out = pl.pallas_call(
        _swin_block_kernel,
        out_shape=jax.ShapeDtypeStruct((BT, C), jnp.float32),
        grid=(1,),                                    # single step: launch/latency bound size
        in_specs=[
            fullspec((BT, C)),                        # x (original token order, batch-stacked)
            fullspec((BT, BT)),                       # permutation matrix P
            fullspec((BT, BT)),                       # inverse permutation P^T
            fullspec((NUM_HEADS, BT, BT)),            # folded attention bias (resident)
            fullspec((1, C)), fullspec((1, C)),       # LN1 gamma / beta
            fullspec((NUM_HEADS, C, HD)),             # wq (scale folded)
            fullspec((NUM_HEADS, 1, HD)),             # bq (scale folded)
            fullspec((NUM_HEADS, C, HD)),             # wk
            fullspec((NUM_HEADS, 1, HD)),             # bk
            fullspec((NUM_HEADS, C, C)),              # wvp = Wv_h @ Wproj_h
            fullspec((NUM_HEADS, 1, C)),              # bvp = bv_h @ Wproj_h
            fullspec((1, C)),                         # bproj
            fullspec((1, C)), fullspec((1, C)),       # LN2 gamma / beta
            fullspec((C, HIDDEN)), fullspec((1, HIDDEN)),   # fc1
            fullspec((HIDDEN, C)), fullspec((1, C)),        # fc2
        ],
        out_specs=fullspec((BT, C)),
        compiler_params=pltpu.CompilerParams(dimension_semantics=("arbitrary",)),
    )(x_flat, p['pm'], p['pm_inv'], p['attn_bias_full'], p['g1'], p['b1'],
      p['wq'], p['bq'], p['wk'], p['bk'], p['wvp'], p['bvp'], p['bproj'],
      p['g2'], p['b2'], p['w1'], p['b1m'], p['w2'], p['b2m'])
    return out.reshape(Bx, L, Cx)


# ------------------------- glue for the pure-JAX reference -------------------------

def window_partition_jax(x, ws):
    Bx, Hx, Wx, Cx = x.shape
    x = x.reshape(Bx, Hx // ws, ws, Wx // ws, ws, Cx)
    return x.transpose(0, 1, 3, 2, 4, 5).reshape(-1, ws, ws, Cx)


def window_reverse_jax(wins, ws, Hx, Wx):
    Bx = wins.shape[0] // (Hx * Wx // ws // ws)
    x = wins.reshape(Bx, Hx // ws, Wx // ws, ws, ws, -1)
    return x.transpose(0, 1, 3, 2, 4, 5).reshape(Bx, Hx, Wx, -1)


def create_attn_mask_np(Hp, Wp, ws, shift):
    """Static SW-MSA mask: (nW, N, N) with 0 / -100 entries (pure numpy, build-time)."""
    img_mask = np.zeros((1, Hp, Wp, 1), dtype=np.float32)
    h_slices = (slice(0, -ws), slice(-ws, -shift), slice(-shift, None))
    w_slices = (slice(0, -ws), slice(-ws, -shift), slice(-shift, None))
    cnt = 0
    for hs in h_slices:
        for wsl in w_slices:
            img_mask[:, hs, wsl, :] = cnt
            cnt += 1
    mw = (img_mask.reshape(1, Hp // ws, ws, Wp // ws, ws, 1)
                  .transpose(0, 1, 3, 2, 4, 5).reshape(-1, ws * ws))
    attn_mask = mw[:, None, :] - mw[:, :, None]
    return np.where(attn_mask != 0, -100.0, 0.0).astype(np.float32)


# ------------------------- pure-JAX reference (for validation) -------------------------

def reference_forward(x, p):
    def ln(z, g, b):
        mu = jnp.mean(z, -1, keepdims=True)
        var = jnp.mean((z - mu) ** 2, -1, keepdims=True)
        return (z - mu) / jnp.sqrt(var + EPS) * g + b

    shortcut = x
    xn = ln(x, p['g1'][0], p['b1'][0]).reshape(B, H, W, C)
    if SHIFT > 0:
        shifted = jnp.roll(xn, shift=(-SHIFT, -SHIFT), axis=(1, 2))
        mask = p['attn_mask']
    else:
        shifted = xn
        mask = None
    xw = window_partition_jax(shifted, WS).reshape(-1, N, C)
    qkv = xw @ p['wqkv'] + p['bqkv'][0]
    qkv = qkv.reshape(-1, N, 3, NUM_HEADS, HD).transpose(2, 0, 3, 1, 4)
    q, k, v = qkv[0], qkv[1], qkv[2]
    attn = (q * SCALE) @ jnp.swapaxes(k, -2, -1)
    attn = attn + p['rel_bias'][None]
    if mask is not None:
        nW = mask.shape[0]
        attn = attn.reshape(B, nW, NUM_HEADS, N, N) + mask[None, :, None]
        attn = attn.reshape(-1, NUM_HEADS, N, N)
    attn = jax.nn.softmax(attn, axis=-1)
    out = (attn @ v).transpose(0, 2, 1, 3).reshape(-1, N, C)
    out = out @ p['wproj'] + p['bproj'][0]
    sh = window_reverse_jax(out.reshape(-1, WS, WS, C), WS, H, W)
    if SHIFT > 0:
        sh = jnp.roll(sh, shift=(SHIFT, SHIFT), axis=(1, 2))
    y = shortcut + sh.reshape(B, H * W, C)
    yn = ln(y, p['g2'][0], p['b2'][0])
    hid = yn @ p['w1'] + p['b1m'][0]
    hid = 0.5 * hid * (1.0 + jax.lax.erf(hid / math.sqrt(2.0)))
    return y + hid @ p['w2'] + p['b2m'][0]


# ------------------------- params (all heavy precompute at setup) -------------------------

def make_params(key):
    ks = jax.random.split(key, 8)
    table = 0.02 * jax.random.normal(ks[0], ((2 * WS - 1) * (2 * WS - 1), NUM_HEADS), jnp.float32)

    # relative_position_index (static, numpy) — same construction as the PyTorch module
    coords = np.stack(np.meshgrid(np.arange(WS), np.arange(WS), indexing='ij'))
    coords_flat = coords.reshape(2, -1)
    rel = (coords_flat[:, :, None] - coords_flat[:, None, :]).transpose(1, 2, 0).astype(np.int64)
    rel[:, :, 0] += WS - 1
    rel[:, :, 1] += WS - 1
    rel[:, :, 0] *= 2 * WS - 1
    rel_index = rel.sum(-1)                                        # (N, N)
    rel_bias = table[jnp.asarray(rel_index.reshape(-1))].reshape(N, N, NUM_HEADS)
    rel_bias = jnp.transpose(rel_bias, (2, 0, 1))                  # (NH, N, N)

    # SW-MSA mask (static for this (H, W, WS, SHIFT); no window padding in this config)
    if SHIFT > 0:
        attn_mask = jnp.asarray(create_attn_mask_np(H, W, WS, SHIFT))   # (nW, N, N)
    else:
        attn_mask = jnp.zeros((NW, N, N), jnp.float32)

    # Fold rel-pos bias + SW mask into one block-diagonal (NH, BT, BT) additive bias;
    # off-window (and cross-batch) entries get -1e9 so their softmax weight is exactly 0.
    block_np = np.asarray(rel_bias)[:, None, :, :] + np.asarray(attn_mask)[None, :, :, :]  # (NH, NW, N, N)
    big = np.full((NUM_HEADS, B * NW, N, B * NW, N), NEG_INF, np.float32)
    for bw in range(B * NW):
        big[:, bw, :, bw, :] = block_np[:, bw % NW]
    attn_bias_full = jnp.asarray(big.reshape(NUM_HEADS, BT, BT))

    # Token permutation: cyclic (-SHIFT) roll + window_partition, per batch element,
    # expressed as a block-diagonal 0/1 matrix (applied in-kernel via an exact matmul).
    nWW = W // WS
    perm = np.empty(T, np.int64)
    for wh in range(H // WS):
        for ww in range(nWW):
            for r in range(WS):
                for c in range(WS):
                    t = (wh * nWW + ww) * N + r * WS + c
                    si = (wh * WS + r + SHIFT) % H
                    sj = (ww * WS + c + SHIFT) % W
                    perm[t] = si * W + sj
    pm_np = np.zeros((BT, BT), np.float32)
    for b in range(B):
        pm_np[b * T + np.arange(T), b * T + perm] = 1.0

    # packed weights (used by the reference, and source for the per-head stacks)
    wqkv = 0.02 * jax.random.normal(ks[1], (C, 3 * C), jnp.float32)
    bqkv = 0.02 * jax.random.normal(ks[2], (1, 3 * C), jnp.float32)
    wproj = 0.02 * jax.random.normal(ks[3], (C, C), jnp.float32)
    bproj = 0.02 * jax.random.normal(ks[4], (1, C), jnp.float32)

    # per-head leading-axis weight stacks (no in-kernel lane slicing);
    # softmax scale folded into q, output projection folded into v.
    wq = jnp.transpose(wqkv[:, 0 * C:1 * C].reshape(C, NUM_HEADS, HD), (1, 0, 2)) * SCALE
    wk = jnp.transpose(wqkv[:, 1 * C:2 * C].reshape(C, NUM_HEADS, HD), (1, 0, 2))
    wv = jnp.transpose(wqkv[:, 2 * C:3 * C].reshape(C, NUM_HEADS, HD), (1, 0, 2))
    bq = bqkv[0, 0 * C:1 * C].reshape(NUM_HEADS, 1, HD) * SCALE
    bk = bqkv[0, 1 * C:2 * C].reshape(NUM_HEADS, 1, HD)
    bv = bqkv[0, 2 * C:3 * C].reshape(NUM_HEADS, 1, HD)
    wproj_h = wproj.reshape(NUM_HEADS, HD, C)                      # rows grouped by head
    wvp = jnp.einsum('hcd,hdk->hck', wv, wproj_h)                  # (NH, C, C)
    bvp = jnp.einsum('hxd,hdk->hxk', bv, wproj_h)                  # (NH, 1, C)

    return {
        # kernel operands
        'pm': jnp.asarray(pm_np), 'pm_inv': jnp.asarray(pm_np.T),
        'attn_bias_full': attn_bias_full,
        'g1': jnp.ones((1, C), jnp.float32), 'b1': jnp.zeros((1, C), jnp.float32),
        'wq': wq, 'bq': bq, 'wk': wk, 'bk': bk, 'wvp': wvp, 'bvp': bvp, 'bproj': bproj,
        'g2': jnp.ones((1, C), jnp.float32), 'b2': jnp.zeros((1, C), jnp.float32),
        'w1': 0.02 * jax.random.normal(ks[5], (C, HIDDEN), jnp.float32),
        'b1m': jnp.zeros((1, HIDDEN), jnp.float32),
        'w2': 0.02 * jax.random.normal(ks[6], (HIDDEN, C), jnp.float32),
        'b2m': jnp.zeros((1, C), jnp.float32),
        # reference-only operands
        'wqkv': wqkv, 'bqkv': bqkv, 'wproj': wproj,
        'rel_bias': rel_bias, 'attn_mask': attn_mask,
    }


if __name__ == "__main__":
    key = jax.random.PRNGKey(0)
    kx, kp = jax.random.split(key)
    x = jax.random.normal(kx, (B, H * W, C), jnp.float32)
    params = make_params(kp)

    fwd = jax.jit(swin_block_forward)
    out = jax.block_until_ready(fwd(x, params))

    ref = jax.block_until_ready(reference_forward(x, params))
    assert out.shape == (B, H * W, C)
    np.testing.assert_allclose(np.asarray(out), np.asarray(ref), atol=1e-4, rtol=1e-4)

    print("KERNEL_OK")
</pallas_src>

<mosaic_0001>
module attributes {stable_mosaic.version = 11 : i64} {
  func.func @_swin_block_kernel(%arg0: i32, %arg1: memref<128x32xf32, #tpu.memory_space<vmem>>, %arg2: memref<128x128xf32, #tpu.memory_space<vmem>>, %arg3: memref<128x128xf32, #tpu.memory_space<vmem>>, %arg4: memref<4x128x128xf32, #tpu.memory_space<vmem>>, %arg5: memref<1x32xf32, #tpu.memory_space<vmem>>, %arg6: memref<1x32xf32, #tpu.memory_space<vmem>>, %arg7: memref<4x32x8xf32, #tpu.memory_space<vmem>>, %arg8: memref<4x1x8xf32, #tpu.memory_space<vmem>>, %arg9: memref<4x32x8xf32, #tpu.memory_space<vmem>>, %arg10: memref<4x1x8xf32, #tpu.memory_space<vmem>>, %arg11: memref<4x32x32xf32, #tpu.memory_space<vmem>>, %arg12: memref<4x1x32xf32, #tpu.memory_space<vmem>>, %arg13: memref<1x32xf32, #tpu.memory_space<vmem>>, %arg14: memref<1x32xf32, #tpu.memory_space<vmem>>, %arg15: memref<1x32xf32, #tpu.memory_space<vmem>>, %arg16: memref<32x128xf32, #tpu.memory_space<vmem>>, %arg17: memref<1x128xf32, #tpu.memory_space<vmem>>, %arg18: memref<128x32xf32, #tpu.memory_space<vmem>>, %arg19: memref<1x32xf32, #tpu.memory_space<vmem>>, %arg20: memref<128x32xf32, #tpu.memory_space<vmem>>) attributes {dimension_semantics = [#tpu.dimension_semantics<arbitrary>], iteration_bounds = array<i64: 1>, scalar_prefetch = 0 : i64, scratch_operands = 0 : i64, tpu.core_type = #tpu.core_type<tc>, window_params = [{pipeline_mode = #tpu.pipeline_mode<synchronous>, transform_indices = @transform_0, window_bounds = array<i64: 128, 32>}, {pipeline_mode = #tpu.pipeline_mode<synchronous>, transform_indices = @transform_1, window_bounds = array<i64: 128, 128>}, {pipeline_mode = #tpu.pipeline_mode<synchronous>, transform_indices = @transform_2, window_bounds = array<i64: 128, 128>}, {pipeline_mode = #tpu.pipeline_mode<synchronous>, transform_indices = @transform_3, window_bounds = array<i64: 4, 128, 128>}, {pipeline_mode = #tpu.pipeline_mode<synchronous>, transform_indices = @transform_4, window_bounds = array<i64: 1, 32>}, {pipeline_mode = #tpu.pipeline_mode<synchronous>, transform_indices = @transform_5, window_bounds = array<i64: 1, 32>}, {pipeline_mode = #tpu.pipeline_mode<synchronous>, transform_indices = @transform_6, window_bounds = array<i64: 4, 32, 8>}, {pipeline_mode = #tpu.pipeline_mode<synchronous>, transform_indices = @transform_7, window_bounds = array<i64: 4, 1, 8>}, {pipeline_mode = #tpu.pipeline_mode<synchronous>, transform_indices = @transform_8, window_bounds = array<i64: 4, 32, 8>}, {pipeline_mode = #tpu.pipeline_mode<synchronous>, transform_indices = @transform_9, window_bounds = array<i64: 4, 1, 8>}, {pipeline_mode = #tpu.pipeline_mode<synchronous>, transform_indices = @transform_10, window_bounds = array<i64: 4, 32, 32>}, {pipeline_mode = #tpu.pipeline_mode<synchronous>, transform_indices = @transform_11, window_bounds = array<i64: 4, 1, 32>}, {pipeline_mode = #tpu.pipeline_mode<synchronous>, transform_indices = @transform_12, window_bounds = array<i64: 1, 32>}, {pipeline_mode = #tpu.pipeline_mode<synchronous>, transform_indices = @transform_13, window_bounds = array<i64: 1, 32>}, {pipeline_mode = #tpu.pipeline_mode<synchronous>, transform_indices = @transform_14, window_bounds = array<i64: 1, 32>}, {pipeline_mode = #tpu.pipeline_mode<synchronous>, transform_indices = @transform_15, window_bounds = array<i64: 32, 128>}, {pipeline_mode = #tpu.pipeline_mode<synchronous>, transform_indices = @transform_16, window_bounds = array<i64: 1, 128>}, {pipeline_mode = #tpu.pipeline_mode<synchronous>, transform_indices = @transform_17, window_bounds = array<i64: 128, 32>}, {pipeline_mode = #tpu.pipeline_mode<synchronous>, transform_indices = @transform_18, window_bounds = array<i64: 1, 32>}, {pipeline_mode = #tpu.pipeline_mode<synchronous>, transform_indices = @transform_19, window_bounds = array<i64: 128, 32>}]} {
    %c0 = arith.constant 0 : index
    %c0_0 = arith.constant 0 : index
    %0 = vector.load %arg1[%c0, %c0_0] : memref<128x32xf32, #tpu.memory_space<vmem>>, vector<128x32xf32>
    %c0_1 = arith.constant 0 : index
    %c0_2 = arith.constant 0 : index
    %1 = vector.load %arg2[%c0_1, %c0_2] : memref<128x128xf32, #tpu.memory_space<vmem>>, vector<128x128xf32>
    %cst = arith.constant dense<0.000000e+00> : vector<128x32xf32>
    %2 = tpu.matmul %1, %0, %cst {dimension_numbers = #tpu.dot_dimension_numbers<[1], [0], [0], [1], [0, 0, 1, 1], [], []>} : vector<128x128xf32>, vector<128x32xf32>, vector<128x32xf32> -> vector<128x32xf32>
    %cst_3 = arith.constant dense<0.000000e+00> : vector<128xf32>
    %3 = vector.multi_reduction <add>, %2, %cst_3 [1] : vector<128x32xf32> to vector<128xf32>
    %4 = vector.shape_cast %3 : vector<128xf32> to vector<128x1xf32>
    %cst_4 = arith.constant 3.200000e+01 : f32
    %5 = vector.broadcast %cst_4 : f32 to vector<128x1xf32>
    %6 = arith.divf %4, %5 : vector<128x1xf32>
    %7 = vector.broadcast %6 : vector<128x1xf32> to vector<128x32xf32>
    %8 = arith.subf %2, %7 : vector<128x32xf32>
    %9 = arith.mulf %8, %8 : vector<128x32xf32>
    %cst_5 = arith.constant dense<0.000000e+00> : vector<128xf32>
    %10 = vector.multi_reduction <add>, %9, %cst_5 [1] : vector<128x32xf32> to vector<128xf32>
    %11 = vector.shape_cast %10 : vector<128xf32> to vector<128x1xf32>
    %cst_6 = arith.constant 3.200000e+01 : f32
    %12 = vector.broadcast %cst_6 : f32 to vector<128x1xf32>
    %13 = arith.divf %11, %12 : vector<128x1xf32>
    %14 = vector.broadcast %6 : vector<128x1xf32> to vector<128x32xf32>
    %15 = arith.subf %2, %14 : vector<128x32xf32>
    %cst_7 = arith.constant 9.99999974E-6 : f32
    %16 = vector.broadcast %cst_7 : f32 to vector<128x1xf32>
    %17 = arith.addf %13, %16 : vector<128x1xf32>
    %18 = math.rsqrt %17 : vector<128x1xf32>
    %19 = vector.broadcast %18 : vector<128x1xf32> to vector<128x32xf32>
    %20 = arith.mulf %15, %19 : vector<128x32xf32>
    %c0_8 = arith.constant 0 : index
    %c0_9 = arith.constant 0 : index
    %21 = vector.load %arg5[%c0_8, %c0_9] : memref<1x32xf32, #tpu.memory_space<vmem>>, vector<1x32xf32>
    %22 = vector.broadcast %21 : vector<1x32xf32> to vector<128x32xf32>
    %23 = arith.mulf %20, %22 : vector<128x32xf32>
    %c0_10 = arith.constant 0 : index
    %c0_11 = arith.constant 0 : index
    %24 = vector.load %arg6[%c0_10, %c0_11] : memref<1x32xf32, #tpu.memory_space<vmem>>, vector<1x32xf32>
    %25 = vector.broadcast %24 : vector<1x32xf32> to vector<128x32xf32>
    %26 = arith.addf %23, %25 : vector<128x32xf32>
    %cst_12 = arith.constant 0.000000e+00 : f32
    %27 = vector.broadcast %cst_12 : f32 to vector<128x32xf32>
    %c0_13 = arith.constant 0 : index
    %c0_14 = arith.constant 0 : index
    %c0_15 = arith.constant 0 : index
    %28 = vector.load %arg7[%c0_13, %c0_14, %c0_15] : memref<4x32x8xf32, #tpu.memory_space<vmem>>, vector<1x32x8xf32>
    %29 = vector.shape_cast %28 : vector<1x32x8xf32> to vector<32x8xf32>
    %cst_16 = arith.constant dense<0.000000e+00> : vector<128x8xf32>
    %30 = tpu.matmul %26, %29, %cst_16 {dimension_numbers = #tpu.dot_dimension_numbers<[1], [0], [0], [1], [0, 0, 1, 1], [], []>} : vector<128x32xf32>, vector<32x8xf32>, vector<128x8xf32> -> vector<128x8xf32>
    %c0_17 = arith.constant 0 : index
    %c0_18 = arith.constant 0 : index
    %c0_19 = arith.constant 0 : index
    %31 = vector.load %arg8[%c0_17, %c0_18, %c0_19] : memref<4x1x8xf32, #tpu.memory_space<vmem>>, vector<1x1x8xf32>
    %32 = vector.shape_cast %31 : vector<1x1x8xf32> to vector<1x8xf32>
    %33 = vector.broadcast %32 : vector<1x8xf32> to vector<128x8xf32>
    %34 = arith.addf %30, %33 : vector<128x8xf32>
    %c0_20 = arith.constant 0 : index
    %c0_21 = arith.constant 0 : index
    %c0_22 = arith.constant 0 : index
    %35 = vector.load %arg9[%c0_20, %c0_21, %c0_22] : memref<4x32x8xf32, #tpu.memory_space<vmem>>, vector<1x32x8xf32>
    %36 = vector.shape_cast %35 : vector<1x32x8xf32> to vector<32x8xf32>
    %cst_23 = arith.constant dense<0.000000e+00> : vector<128x8xf32>
    %37 = tpu.matmul %26, %36, %cst_23 {dimension_numbers = #tpu.dot_dimension_numbers<[1], [0], [0], [1], [0, 0, 1, 1], [], []>} : vector<128x32xf32>, vector<32x8xf32>, vector<128x8xf32> -> vector<128x8xf32>
    %c0_24 = arith.constant 0 : index
    %c0_25 = arith.constant 0 : index
    %c0_26 = arith.constant 0 : index
    %38 = vector.load %arg10[%c0_24, %c0_25, %c0_26] : memref<4x1x8xf32, #tpu.memory_space<vmem>>, vector<1x1x8xf32>
    %39 = vector.shape_cast %38 : vector<1x1x8xf32> to vector<1x8xf32>
    %40 = vector.broadcast %39 : vector<1x8xf32> to vector<128x8xf32>
    %41 = arith.addf %37, %40 : vector<128x8xf32>
    %c0_27 = arith.constant 0 : index
    %c0_28 = arith.constant 0 : index
    %c0_29 = arith.constant 0 : index
    %42 = vector.load %arg11[%c0_27, %c0_28, %c0_29] : memref<4x32x32xf32, #tpu.memory_space<vmem>>, vector<1x32x32xf32>
    %43 = vector.shape_cast %42 : vector<1x32x32xf32> to vector<32x32xf32>
    %cst_30 = arith.constant dense<0.000000e+00> : vector<128x32xf32>
    %44 = tpu.matmul %26, %43, %cst_30 {dimension_numbers = #tpu.dot_dimension_numbers<[1], [0], [0], [1], [0, 0, 1, 1], [], []>} : vector<128x32xf32>, vector<32x32xf32>, vector<128x32xf32> -> vector<128x32xf32>
    %c0_31 = arith.constant 0 : index
    %c0_32 = arith.constant 0 : index
    %c0_33 = arith.constant 0 : index
    %45 = vector.load %arg12[%c0_31, %c0_32, %c0_33] : memref<4x1x32xf32, #tpu.memory_space<vmem>>, vector<1x1x32xf32>
    %46 = vector.shape_cast %45 : vector<1x1x32xf32> to vector<1x32xf32>
    %47 = vector.broadcast %46 : vector<1x32xf32> to vector<128x32xf32>
    %48 = arith.addf %44, %47 : vector<128x32xf32>
    "tpu.trace_start"() <{level = 10 : i32, message = "nd,md->nm"}> : () -> ()
    %cst_34 = arith.constant dense<0.000000e+00> : vector<128x128xf32>
    %49 = tpu.matmul %34, %41, %cst_34 {dimension_numbers = #tpu.dot_dimension_numbers<[1], [1], [0], [0], [0, 0, 1, 0], [], []>} : vector<128x8xf32>, vector<128x8xf32>, vector<128x128xf32> -> vector<128x128xf32>
    "tpu.trace_stop"() : () -> ()
    %c0_35 = arith.constant 0 : index
    %c0_36 = arith.constant 0 : index
    %c0_37 = arith.constant 0 : index
    %50 = vector.load %arg4[%c0_35, %c0_36, %c0_37] : memref<4x128x128xf32, #tpu.memory_space<vmem>>, vector<1x128x128xf32>
    %51 = vector.shape_cast %50 : vector<1x128x128xf32> to vector<128x128xf32>
    %52 = arith.addf %49, %51 : vector<128x128xf32>
    %cst_38 = arith.constant dense<0xFF800000> : vector<128xf32>
    %53 = vector.multi_reduction <maximumf>, %52, %cst_38 [1] : vector<128x128xf32> to vector<128xf32>
    %54 = vector.shape_cast %53 : vector<128xf32> to vector<128x1xf32>
    %55 = vector.broadcast %54 : vector<128x1xf32> to vector<128x128xf32>
    %56 = arith.subf %52, %55 : vector<128x128xf32>
    %57 = math.exp %56 : vector<128x128xf32>
    %cst_39 = arith.constant dense<0.000000e+00> : vector<128xf32>
    %58 = vector.multi_reduction <add>, %57, %cst_39 [1] : vector<128x128xf32> to vector<128xf32>
    %59 = vector.shape_cast %58 : vector<128xf32> to vector<128x1xf32>
    %60 = vector.broadcast %59 : vector<128x1xf32> to vector<128x128xf32>
    %61 = arith.divf %57, %60 : vector<128x128xf32>
    %cst_40 = arith.constant dense<0.000000e+00> : vector<128x32xf32>
    %62 = tpu.matmul %61, %48, %cst_40 {dimension_numbers = #tpu.dot_dimension_numbers<[1], [0], [0], [1], [0, 0, 1, 1], [], []>} : vector<128x128xf32>, vector<128x32xf32>, vector<128x32xf32> -> vector<128x32xf32>
    %63 = arith.addf %27, %62 : vector<128x32xf32>
    %c1 = arith.constant 1 : index
    %c0_41 = arith.constant 0 : index
    %c0_42 = arith.constant 0 : index
    %64 = vector.load %arg7[%c1, %c0_41, %c0_42] : memref<4x32x8xf32, #tpu.memory_space<vmem>>, vector<1x32x8xf32>
    %65 = vector.shape_cast %64 : vector<1x32x8xf32> to vector<32x8xf32>
    %cst_43 = arith.constant dense<0.000000e+00> : vector<128x8xf32>
    %66 = tpu.matmul %26, %65, %cst_43 {dimension_numbers = #tpu.dot_dimension_numbers<[1], [0], [0], [1], [0, 0, 1, 1], [], []>} : vector<128x32xf32>, vector<32x8xf32>, vector<128x8xf32> -> vector<128x8xf32>
    %c1_44 = arith.constant 1 : index
    %c0_45 = arith.constant 0 : index
    %c0_46 = arith.constant 0 : index
    %67 = vector.load %arg8[%c1_44, %c0_45, %c0_46] : memref<4x1x8xf32, #tpu.memory_space<vmem>>, vector<1x1x8xf32>
    %68 = vector.shape_cast %67 : vector<1x1x8xf32> to vector<1x8xf32>
    %69 = vector.broadcast %68 : vector<1x8xf32> to vector<128x8xf32>
    %70 = arith.addf %66, %69 : vector<128x8xf32>
    %c1_47 = arith.constant 1 : index
    %c0_48 = arith.constant 0 : index
    %c0_49 = arith.constant 0 : index
    %71 = vector.load %arg9[%c1_47, %c0_48, %c0_49] : memref<4x32x8xf32, #tpu.memory_space<vmem>>, vector<1x32x8xf32>
    %72 = vector.shape_cast %71 : vector<1x32x8xf32> to vector<32x8xf32>
    %cst_50 = arith.constant dense<0.000000e+00> : vector<128x8xf32>
    %73 = tpu.matmul %26, %72, %cst_50 {dimension_numbers = #tpu.dot_dimension_numbers<[1], [0], [0], [1], [0, 0, 1, 1], [], []>} : vector<128x32xf32>, vector<32x8xf32>, vector<128x8xf32> -> vector<128x8xf32>
    %c1_51 = arith.constant 1 : index
    %c0_52 = arith.constant 0 : index
    %c0_53 = arith.constant 0 : index
    %74 = vector.load %arg10[%c1_51, %c0_52, %c0_53] : memref<4x1x8xf32, #tpu.memory_space<vmem>>, vector<1x1x8xf32>
    %75 = vector.shape_cast %74 : vector<1x1x8xf32> to vector<1x8xf32>
    %76 = vector.broadcast %75 : vector<1x8xf32> to vector<128x8xf32>
    %77 = arith.addf %73, %76 : vector<128x8xf32>
    %c1_54 = arith.constant 1 : index
    %c0_55 = arith.constant 0 : index
    %c0_56 = arith.constant 0 : index
    %78 = vector.load %arg11[%c1_54, %c0_55, %c0_56] : memref<4x32x32xf32, #tpu.memory_space<vmem>>, vector<1x32x32xf32>
    %79 = vector.shape_cast %78 : vector<1x32x32xf32> to vector<32x32xf32>
    %cst_57 = arith.constant dense<0.000000e+00> : vector<128x32xf32>
    %80 = tpu.matmul %26, %79, %cst_57 {dimension_numbers = #tpu.dot_dimension_numbers<[1], [0], [0], [1], [0, 0, 1, 1], [], []>} : vector<128x32xf32>, vector<32x32xf32>, vector<128x32xf32> -> vector<128x32xf32>
    %c1_58 = arith.constant 1 : index
    %c0_59 = arith.constant 0 : index
    %c0_60 = arith.constant 0 : index
    %81 = vector.load %arg12[%c1_58, %c0_59, %c0_60] : memref<4x1x32xf32, #tpu.memory_space<vmem>>, vector<1x1x32xf32>
    %82 = vector.shape_cast %81 : vector<1x1x32xf32> to vector<1x32xf32>
    %83 = vector.broadcast %82 : vector<1x32xf32> to vector<128x32xf32>
    %84 = arith.addf %80, %83 : vector<128x32xf32>
    "tpu.trace_start"() <{level = 10 : i32, message = "nd,md->nm"}> : () -> ()
    %cst_61 = arith.constant dense<0.000000e+00> : vector<128x128xf32>
    %85 = tpu.matmul %70, %77, %cst_61 {dimension_numbers = #tpu.dot_dimension_numbers<[1], [1], [0], [0], [0, 0, 1, 0], [], []>} : vector<128x8xf32>, vector<128x8xf32>, vector<128x128xf32> -> vector<128x128xf32>
    "tpu.trace_stop"() : () -> ()
    %c1_62 = arith.constant 1 : index
    %c0_63 = arith.constant 0 : index
    %c0_64 = arith.constant 0 : index
    %86 = vector.load %arg4[%c1_62, %c0_63, %c0_64] : memref<4x128x128xf32, #tpu.memory_space<vmem>>, vector<1x128x128xf32>
    %87 = vector.shape_cast %86 : vector<1x128x128xf32> to vector<128x128xf32>
    %88 = arith.addf %85, %87 : vector<128x128xf32>
    %cst_65 = arith.constant dense<0xFF800000> : vector<128xf32>
    %89 = vector.multi_reduction <maximumf>, %88, %cst_65 [1] : vector<128x128xf32> to vector<128xf32>
    %90 = vector.shape_cast %89 : vector<128xf32> to vector<128x1xf32>
    %91 = vector.broadcast %90 : vector<128x1xf32> to vector<128x128xf32>
    %92 = arith.subf %88, %91 : vector<128x128xf32>
    %93 = math.exp %92 : vector<128x128xf32>
    %cst_66 = arith.constant dense<0.000000e+00> : vector<128xf32>
    %94 = vector.multi_reduction <add>, %93, %cst_66 [1] : vector<128x128xf32> to vector<128xf32>
    %95 = vector.shape_cast %94 : vector<128xf32> to vector<128x1xf32>
    %96 = vector.broadcast %95 : vector<128x1xf32> to vector<128x128xf32>
    %97 = arith.divf %93, %96 : vector<128x128xf32>
    %cst_67 = arith.constant dense<0.000000e+00> : vector<128x32xf32>
    %98 = tpu.matmul %97, %84, %cst_67 {dimension_numbers = #tpu.dot_dimension_numbers<[1], [0], [0], [1], [0, 0, 1, 1], [], []>} : vector<128x128xf32>, vector<128x32xf32>, vector<128x32xf32> -> vector<128x32xf32>
    %99 = arith.addf %63, %98 : vector<128x32xf32>
    %c2 = arith.constant 2 : index
    %c0_68 = arith.constant 0 : index
    %c0_69 = arith.constant 0 : index
    %100 = vector.load %arg7[%c2, %c0_68, %c0_69] : memref<4x32x8xf32, #tpu.memory_space<vmem>>, vector<1x32x8xf32>
    %101 = vector.shape_cast %100 : vector<1x32x8xf32> to vector<32x8xf32>
    %cst_70 = arith.constant dense<0.000000e+00> : vector<128x8xf32>
    %102 = tpu.matmul %26, %101, %cst_70 {dimension_numbers = #tpu.dot_dimension_numbers<[1], [0], [0], [1], [0, 0, 1, 1], [], []>} : vector<128x32xf32>, vector<32x8xf32>, vector<128x8xf32> -> vector<128x8xf32>
    %c2_71 = arith.constant 2 : index
    %c0_72 = arith.constant 0 : index
    %c0_73 = arith.constant 0 : index
    %103 = vector.load %arg8[%c2_71, %c0_72, %c0_73] : memref<4x1x8xf32, #tpu.memory_space<vmem>>, vector<1x1x8xf32>
    %104 = vector.shape_cast %103 : vector<1x1x8xf32> to vector<1x8xf32>
    %105 = vector.broadcast %104 : vector<1x8xf32> to vector<128x8xf32>
    %106 = arith.addf %102, %105 : vector<128x8xf32>
    %c2_74 = arith.constant 2 : index
    %c0_75 = arith.constant 0 : index
    %c0_76 = arith.constant 0 : index
    %107 = vector.load %arg9[%c2_74, %c0_75, %c0_76] : memref<4x32x8xf32, #tpu.memory_space<vmem>>, vector<1x32x8xf32>
    %108 = vector.shape_cast %107 : vector<1x32x8xf32> to vector<32x8xf32>
    %cst_77 = arith.constant dense<0.000000e+00> : vector<128x8xf32>
    %109 = tpu.matmul %26, %108, %cst_77 {dimension_numbers = #tpu.dot_dimension_numbers<[1], [0], [0], [1], [0, 0, 1, 1], [], []>} : vector<128x32xf32>, vector<32x8xf32>, vector<128x8xf32> -> vector<128x8xf32>
    %c2_78 = arith.constant 2 : index
    %c0_79 = arith.constant 0 : index
    %c0_80 = arith.constant 0 : index
    %110 = vector.load %arg10[%c2_78, %c0_79, %c0_80] : memref<4x1x8xf32, #tpu.memory_space<vmem>>, vector<1x1x8xf32>
    %111 = vector.shape_cast %110 : vector<1x1x8xf32> to vector<1x8xf32>
    %112 = vector.broadcast %111 : vector<1x8xf32> to vector<128x8xf32>
    %113 = arith.addf %109, %112 : vector<128x8xf32>
    %c2_81 = arith.constant 2 : index
    %c0_82 = arith.constant 0 : index
    %c0_83 = arith.constant 0 : index
    %114 = vector.load %arg11[%c2_81, %c0_82, %c0_83] : memref<4x32x32xf32, #tpu.memory_space<vmem>>, vector<1x32x32xf32>
    %115 = vector.shape_cast %114 : vector<1x32x32xf32> to vector<32x32xf32>
    %cst_84 = arith.constant dense<0.000000e+00> : vector<128x32xf32>
    %116 = tpu.matmul %26, %115, %cst_84 {dimension_numbers = #tpu.dot_dimension_numbers<[1], [0], [0], [1], [0, 0, 1, 1], [], []>} : vector<128x32xf32>, vector<32x32xf32>, vector<128x32xf32> -> vector<128x32xf32>
    %c2_85 = arith.constant 2 : index
    %c0_86 = arith.constant 0 : index
    %c0_87 = arith.constant 0 : index
    %117 = vector.load %arg12[%c2_85, %c0_86, %c0_87] : memref<4x1x32xf32, #tpu.memory_space<vmem>>, vector<1x1x32xf32>
    %118 = vector.shape_cast %117 : vector<1x1x32xf32> to vector<1x32xf32>
    %119 = vector.broadcast %118 : vector<1x32xf32> to vector<128x32xf32>
    %120 = arith.addf %116, %119 : vector<128x32xf32>
    "tpu.trace_start"() <{level = 10 : i32, message = "nd,md->nm"}> : () -> ()
    %cst_88 = arith.constant dense<0.000000e+00> : vector<128x128xf32>
    %121 = tpu.matmul %106, %113, %cst_88 {dimension_numbers = #tpu.dot_dimension_numbers<[1], [1], [0], [0], [0, 0, 1, 0], [], []>} : vector<128x8xf32>, vector<128x8xf32>, vector<128x128xf32> -> vector<128x128xf32>
    "tpu.trace_stop"() : () -> ()
    %c2_89 = arith.constant 2 : index
    %c0_90 = arith.constant 0 : index
    %c0_91 = arith.constant 0 : index
    %122 = vector.load %arg4[%c2_89, %c0_90, %c0_91] : memref<4x128x128xf32, #tpu.memory_space<vmem>>, vector<1x128x128xf32>
    %123 = vector.shape_cast %122 : vector<1x128x128xf32> to vector<128x128xf32>
    %124 = arith.addf %121, %123 : vector<128x128xf32>
    %cst_92 = arith.constant dense<0xFF800000> : vector<128xf32>
    %125 = vector.multi_reduction <maximumf>, %124, %cst_92 [1] : vector<128x128xf32> to vector<128xf32>
    %126 = vector.shape_cast %125 : vector<128xf32> to vector<128x1xf32>
    %127 = vector.broadcast %126 : vector<128x1xf32> to vector<128x128xf32>
    %128 = arith.subf %124, %127 : vector<128x128xf32>
    %129 = math.exp %128 : vector<128x128xf32>
    %cst_93 = arith.constant dense<0.000000e+00> : vector<128xf32>
    %130 = vector.multi_reduction <add>, %129, %cst_93 [1] : vector<128x128xf32> to vector<128xf32>
    %131 = vector.shape_cast %130 : vector<128xf32> to vector<128x1xf32>
    %132 = vector.broadcast %131 : vector<128x1xf32> to vector<128x128xf32>
    %133 = arith.divf %129, %132 : vector<128x128xf32>
    %cst_94 = arith.constant dense<0.000000e+00> : vector<128x32xf32>
    %134 = tpu.matmul %133, %120, %cst_94 {dimension_numbers = #tpu.dot_dimension_numbers<[1], [0], [0], [1], [0, 0, 1, 1], [], []>} : vector<128x128xf32>, vector<128x32xf32>, vector<128x32xf32> -> vector<128x32xf32>
    %135 = arith.addf %99, %134 : vector<128x32xf32>
    %c3 = arith.constant 3 : index
    %c0_95 = arith.constant 0 : index
    %c0_96 = arith.constant 0 : index
    %136 = vector.load %arg7[%c3, %c0_95, %c0_96] : memref<4x32x8xf32, #tpu.memory_space<vmem>>, vector<1x32x8xf32>
    %137 = vector.shape_cast %136 : vector<1x32x8xf32> to vector<32x8xf32>
    %cst_97 = arith.constant dense<0.000000e+00> : vector<128x8xf32>
    %138 = tpu.matmul %26, %137, %cst_97 {dimension_numbers = #tpu.dot_dimension_numbers<[1], [0], [0], [1], [0, 0, 1, 1], [], []>} : vector<128x32xf32>, vector<32x8xf32>, vector<128x8xf32> -> vector<128x8xf32>
    %c3_98 = arith.constant 3 : index
    %c0_99 = arith.constant 0 : index
    %c0_100 = arith.constant 0 : index
    %139 = vector.load %arg8[%c3_98, %c0_99, %c0_100] : memref<4x1x8xf32, #tpu.memory_space<vmem>>, vector<1x1x8xf32>
    %140 = vector.shape_cast %139 : vector<1x1x8xf32> to vector<1x8xf32>
    %141 = vector.broadcast %140 : vector<1x8xf32> to vector<128x8xf32>
    %142 = arith.addf %138, %141 : vector<128x8xf32>
    %c3_101 = arith.constant 3 : index
    %c0_102 = arith.constant 0 : index
    %c0_103 = arith.constant 0 : index
    %143 = vector.load %arg9[%c3_101, %c0_102, %c0_103] : memref<4x32x8xf32, #tpu.memory_space<vmem>>, vector<1x32x8xf32>
    %144 = vector.shape_cast %143 : vector<1x32x8xf32> to vector<32x8xf32>
    %cst_104 = arith.constant dense<0.000000e+00> : vector<128x8xf32>
    %145 = tpu.matmul %26, %144, %cst_104 {dimension_numbers = #tpu.dot_dimension_numbers<[1], [0], [0], [1], [0, 0, 1, 1], [], []>} : vector<128x32xf32>, vector<32x8xf32>, vector<128x8xf32> -> vector<128x8xf32>
    %c3_105 = arith.constant 3 : index
    %c0_106 = arith.constant 0 : index
    %c0_107 = arith.constant 0 : index
    %146 = vector.load %arg10[%c3_105, %c0_106, %c0_107] : memref<4x1x8xf32, #tpu.memory_space<vmem>>, vector<1x1x8xf32>
    %147 = vector.shape_cast %146 : vector<1x1x8xf32> to vector<1x8xf32>
    %148 = vector.broadcast %147 : vector<1x8xf32> to vector<128x8xf32>
    %149 = arith.addf %145, %148 : vector<128x8xf32>
    %c3_108 = arith.constant 3 : index
    %c0_109 = arith.constant 0 : index
    %c0_110 = arith.constant 0 : index
    %150 = vector.load %arg11[%c3_108, %c0_109, %c0_110] : memref<4x32x32xf32, #tpu.memory_space<vmem>>, vector<1x32x32xf32>
    %151 = vector.shape_cast %150 : vector<1x32x32xf32> to vector<32x32xf32>
    %cst_111 = arith.constant dense<0.000000e+00> : vector<128x32xf32>
    %152 = tpu.matmul %26, %151, %cst_111 {dimension_numbers = #tpu.dot_dimension_numbers<[1], [0], [0], [1], [0, 0, 1, 1], [], []>} : vector<128x32xf32>, vector<32x32xf32>, vector<128x32xf32> -> vector<128x32xf32>
    %c3_112 = arith.constant 3 : index
    %c0_113 = arith.constant 0 : index
    %c0_114 = arith.constant 0 : index
    %153 = vector.load %arg12[%c3_112, %c0_113, %c0_114] : memref<4x1x32xf32, #tpu.memory_space<vmem>>, vector<1x1x32xf32>
    %154 = vector.shape_cast %153 : vector<1x1x32xf32> to vector<1x32xf32>
    %155 = vector.broadcast %154 : vector<1x32xf32> to vector<128x32xf32>
    %156 = arith.addf %152, %155 : vector<128x32xf32>
    "tpu.trace_start"() <{level = 10 : i32, message = "nd,md->nm"}> : () -> ()
    %cst_115 = arith.constant dense<0.000000e+00> : vector<128x128xf32>
    %157 = tpu.matmul %142, %149, %cst_115 {dimension_numbers = #tpu.dot_dimension_numbers<[1], [1], [0], [0], [0, 0, 1, 0], [], []>} : vector<128x8xf32>, vector<128x8xf32>, vector<128x128xf32> -> vector<128x128xf32>
    "tpu.trace_stop"() : () -> ()
    %c3_116 = arith.constant 3 : index
    %c0_117 = arith.constant 0 : index
    %c0_118 = arith.constant 0 : index
    %158 = vector.load %arg4[%c3_116, %c0_117, %c0_118] : memref<4x128x128xf32, #tpu.memory_space<vmem>>, vector<1x128x128xf32>
    %159 = vector.shape_cast %158 : vector<1x128x128xf32> to vector<128x128xf32>
    %160 = arith.addf %157, %159 : vector<128x128xf32>
    %cst_119 = arith.constant dense<0xFF800000> : vector<128xf32>
    %161 = vector.multi_reduction <maximumf>, %160, %cst_119 [1] : vector<128x128xf32> to vector<128xf32>
    %162 = vector.shape_cast %161 : vector<128xf32> to vector<128x1xf32>
    %163 = vector.broadcast %162 : vector<128x1xf32> to vector<128x128xf32>
    %164 = arith.subf %160, %163 : vector<128x128xf32>
    %165 = math.exp %164 : vector<128x128xf32>
    %cst_120 = arith.constant dense<0.000000e+00> : vector<128xf32>
    %166 = vector.multi_reduction <add>, %165, %cst_120 [1] : vector<128x128xf32> to vector<128xf32>
    %167 = vector.shape_cast %166 : vector<128xf32> to vector<128x1xf32>
    %168 = vector.broadcast %167 : vector<128x1xf32> to vector<128x128xf32>
    %169 = arith.divf %165, %168 : vector<128x128xf32>
    %cst_121 = arith.constant dense<0.000000e+00> : vector<128x32xf32>
    %170 = tpu.matmul %169, %156, %cst_121 {dimension_numbers = #tpu.dot_dimension_numbers<[1], [0], [0], [1], [0, 0, 1, 1], [], []>} : vector<128x128xf32>, vector<128x32xf32>, vector<128x32xf32> -> vector<128x32xf32>
    %171 = arith.addf %135, %170 : vector<128x32xf32>
    %c0_122 = arith.constant 0 : index
    %c0_123 = arith.constant 0 : index
    %172 = vector.load %arg13[%c0_122, %c0_123] : memref<1x32xf32, #tpu.memory_space<vmem>>, vector<1x32xf32>
    %173 = vector.broadcast %172 : vector<1x32xf32> to vector<128x32xf32>
    %174 = arith.addf %171, %173 : vector<128x32xf32>
    %175 = arith.addf %2, %174 : vector<128x32xf32>
    %cst_124 = arith.constant dense<0.000000e+00> : vector<128xf32>
    %176 = vector.multi_reduction <add>, %175, %cst_124 [1] : vector<128x32xf32> to vector<128xf32>
    %177 = vector.shape_cast %176 : vector<128xf32> to vector<128x1xf32>
    %cst_125 = arith.constant 3.200000e+01 : f32
    %178 = vector.broadcast %cst_125 : f32 to vector<128x1xf32>
    %179 = arith.divf %177, %178 : vector<128x1xf32>
    %180 = vector.broadcast %179 : vector<128x1xf32> to vector<128x32xf32>
    %181 = arith.subf %175, %180 : vector<128x32xf32>
    %182 = arith.mulf %181, %181 : vector<128x32xf32>
    %cst_126 = arith.constant dense<0.000000e+00> : vector<128xf32>
    %183 = vector.multi_reduction <add>, %182, %cst_126 [1] : vector<128x32xf32> to vector<128xf32>
    %184 = vector.shape_cast %183 : vector<128xf32> to vector<128x1xf32>
    %cst_127 = arith.constant 3.200000e+01 : f32
    %185 = vector.broadcast %cst_127 : f32 to vector<128x1xf32>
    %186 = arith.divf %184, %185 : vector<128x1xf32>
    %187 = vector.broadcast %179 : vector<128x1xf32> to vector<128x32xf32>
    %188 = arith.subf %175, %187 : vector<128x32xf32>
    %cst_128 = arith.constant 9.99999974E-6 : f32
    %189 = vector.broadcast %cst_128 : f32 to vector<128x1xf32>
    %190 = arith.addf %186, %189 : vector<128x1xf32>
    %191 = math.rsqrt %190 : vector<128x1xf32>
    %192 = vector.broadcast %191 : vector<128x1xf32> to vector<128x32xf32>
    %193 = arith.mulf %188, %192 : vector<128x32xf32>
    %c0_129 = arith.constant 0 : index
    %c0_130 = arith.constant 0 : index
    %194 = vector.load %arg14[%c0_129, %c0_130] : memref<1x32xf32, #tpu.memory_space<vmem>>, vector<1x32xf32>
    %195 = vector.broadcast %194 : vector<1x32xf32> to vector<128x32xf32>
    %196 = arith.mulf %193, %195 : vector<128x32xf32>
    %c0_131 = arith.constant 0 : index
    %c0_132 = arith.constant 0 : index
    %197 = vector.load %arg15[%c0_131, %c0_132] : memref<1x32xf32, #tpu.memory_space<vmem>>, vector<1x32xf32>
    %198 = vector.broadcast %197 : vector<1x32xf32> to vector<128x32xf32>
    %199 = arith.addf %196, %198 : vector<128x32xf32>
    %c0_133 = arith.constant 0 : index
    %c0_134 = arith.constant 0 : index
    %200 = vector.load %arg16[%c0_133, %c0_134] : memref<32x128xf32, #tpu.memory_space<vmem>>, vector<32x128xf32>
    %cst_135 = arith.constant dense<0.000000e+00> : vector<128x128xf32>
    %201 = tpu.matmul %199, %200, %cst_135 {dimension_numbers = #tpu.dot_dimension_numbers<[1], [0], [0], [1], [0, 0, 1, 1], [], []>} : vector<128x32xf32>, vector<32x128xf32>, vector<128x128xf32> -> vector<128x128xf32>
    %c0_136 = arith.constant 0 : index
    %c0_137 = arith.constant 0 : index
    %202 = vector.load %arg17[%c0_136, %c0_137] : memref<1x128xf32, #tpu.memory_space<vmem>>, vector<1x128xf32>
    %203 = vector.broadcast %202 : vector<1x128xf32> to vector<128x128xf32>
    %204 = arith.addf %201, %203 : vector<128x128xf32>
    %cst_138 = arith.constant 5.000000e-01 : f32
    %205 = vector.broadcast %cst_138 : f32 to vector<128x128xf32>
    %206 = arith.mulf %205, %204 : vector<128x128xf32>
    %cst_139 = arith.constant 0.707106769 : f32
    %207 = vector.broadcast %cst_139 : f32 to vector<128x128xf32>
    %208 = arith.mulf %204, %207 : vector<128x128xf32>
    %209 = math.erf %208 : vector<128x128xf32>
    %cst_140 = arith.constant 1.000000e+00 : f32
    %210 = vector.broadcast %cst_140 : f32 to vector<128x128xf32>
    %211 = arith.addf %210, %209 : vector<128x128xf32>
    %212 = arith.mulf %206, %211 : vector<128x128xf32>
    %c0_141 = arith.constant 0 : index
    %c0_142 = arith.constant 0 : index
    %213 = vector.load %arg18[%c0_141, %c0_142] : memref<128x32xf32, #tpu.memory_space<vmem>>, vector<128x32xf32>
    %cst_143 = arith.constant dense<0.000000e+00> : vector<128x32xf32>
    %214 = tpu.matmul %212, %213, %cst_143 {dimension_numbers = #tpu.dot_dimension_numbers<[1], [0], [0], [1], [0, 0, 1, 1], [], []>} : vector<128x128xf32>, vector<128x32xf32>, vector<128x32xf32> -> vector<128x32xf32>
    %215 = arith.addf %175, %214 : vector<128x32xf32>
    %c0_144 = arith.constant 0 : index
    %c0_145 = arith.constant 0 : index
    %216 = vector.load %arg19[%c0_144, %c0_145] : memref<1x32xf32, #tpu.memory_space<vmem>>, vector<1x32xf32>
    %217 = vector.broadcast %216 : vector<1x32xf32> to vector<128x32xf32>
    %218 = arith.addf %215, %217 : vector<128x32xf32>
    %c0_146 = arith.constant 0 : index
    %c0_147 = arith.constant 0 : index
    %219 = vector.load %arg3[%c0_146, %c0_147] : memref<128x128xf32, #tpu.memory_space<vmem>>, vector<128x128xf32>
    %cst_148 = arith.constant dense<0.000000e+00> : vector<128x32xf32>
    %220 = tpu.matmul %219, %218, %cst_148 {dimension_numbers = #tpu.dot_dimension_numbers<[1], [0], [0], [1], [0, 0, 1, 1], [], []>} : vector<128x128xf32>, vector<128x32xf32>, vector<128x32xf32> -> vector<128x32xf32>
    %c0_149 = arith.constant 0 : index
    %c0_150 = arith.constant 0 : index
    %221 = vector.load %arg20[%c0_149, %c0_150] : memref<128x32xf32, #tpu.memory_space<vmem>>, vector<128x32xf32>
    tpu.vector_store %arg20[%c0_149, %c0_150], %220 {strides = array<i32>} : memref<128x32xf32, #tpu.memory_space<vmem>>, vector<128x32xf32>,
    return
  }
  func.func @transform_0(%arg0: i32) -> (i32, i32) {
    %c0_i32 = arith.constant 0 : i32
    %c0_i32_0 = arith.constant 0 : i32
    %c0_i32_1 = arith.constant 0 : i32
    return %c0_i32, %c0_i32_0 : i32, i32
  }
  func.func @transform_1(%arg0: i32) -> (i32, i32) {
    %c0_i32 = arith.constant 0 : i32
    %c0_i32_0 = arith.constant 0 : i32
    %c0_i32_1 = arith.constant 0 : i32
    return %c0_i32, %c0_i32_0 : i32, i32
  }
  func.func @transform_2(%arg0: i32) -> (i32, i32) {
    %c0_i32 = arith.constant 0 : i32
    %c0_i32_0 = arith.constant 0 : i32
    %c0_i32_1 = arith.constant 0 : i32
    return %c0_i32, %c0_i32_0 : i32, i32
  }
  func.func @transform_3(%arg0: i32) -> (i32, i32, i32) {
    %c0_i32 = arith.constant 0 : i32
    %c0_i32_0 = arith.constant 0 : i32
    %c0_i32_1 = arith.constant 0 : i32
    %c0_i32_2 = arith.constant 0 : i32
    return %c0_i32, %c0_i32_0, %c0_i32_1 : i32, i32, i32
  }
  func.func @transform_4(%arg0: i32) -> (i32, i32) {
    %c0_i32 = arith.constant 0 : i32
    %c0_i32_0 = arith.constant 0 : i32
    %c0_i32_1 = arith.constant 0 : i32
    return %c0_i32, %c0_i32_0 : i32, i32
  }
  func.func @transform_5(%arg0: i32) -> (i32, i32) {
    %c0_i32 = arith.constant 0 : i32
    %c0_i32_0 = arith.constant 0 : i32
    %c0_i32_1 = arith.constant 0 : i32
    return %c0_i32, %c0_i32_0 : i32, i32
  }
  func.func @transform_6(%arg0: i32) -> (i32, i32, i32) {
    %c0_i32 = arith.constant 0 : i32
    %c0_i32_0 = arith.constant 0 : i32
    %c0_i32_1 = arith.constant 0 : i32
    %c0_i32_2 = arith.constant 0 : i32
    return %c0_i32, %c0_i32_0, %c0_i32_1 : i32, i32, i32
  }
  func.func @transform_7(%arg0: i32) -> (i32, i32, i32) {
    %c0_i32 = arith.constant 0 : i32
    %c0_i32_0 = arith.constant 0 : i32
    %c0_i32_1 = arith.constant 0 : i32
    %c0_i32_2 = arith.constant 0 : i32
    return %c0_i32, %c0_i32_0, %c0_i32_1 : i32, i32, i32
  }
  func.func @transform_8(%arg0: i32) -> (i32, i32, i32) {
    %c0_i32 = arith.constant 0 : i32
    %c0_i32_0 = arith.constant 0 : i32
    %c0_i32_1 = arith.constant 0 : i32
    %c0_i32_2 = arith.constant 0 : i32
    return %c0_i32, %c0_i32_0, %c0_i32_1 : i32, i32, i32
  }
  func.func @transform_9(%arg0: i32) -> (i32, i32, i32) {
    %c0_i32 = arith.constant 0 : i32
    %c0_i32_0 = arith.constant 0 : i32
    %c0_i32_1 = arith.constant 0 : i32
    %c0_i32_2 = arith.constant 0 : i32
    return %c0_i32, %c0_i32_0, %c0_i32_1 : i32, i32, i32
  }
  func.func @transform_10(%arg0: i32) -> (i32, i32, i32) {
    %c0_i32 = arith.constant 0 : i32
    %c0_i32_0 = arith.constant 0 : i32
    %c0_i32_1 = arith.constant 0 : i32
    %c0_i32_2 = arith.constant 0 : i32
    return %c0_i32, %c0_i32_0, %c0_i32_1 : i32, i32, i32
  }
  func.func @transform_11(%arg0: i32) -> (i32, i32, i32) {
    %c0_i32 = arith.constant 0 : i32
    %c0_i32_0 = arith.constant 0 : i32
    %c0_i32_1 = arith.constant 0 : i32
    %c0_i32_2 = arith.constant 0 : i32
    return %c0_i32, %c0_i32_0, %c0_i32_1 : i32, i32, i32
  }
  func.func @transform_12(%arg0: i32) -> (i32, i32) {
    %c0_i32 = arith.constant 0 : i32
    %c0_i32_0 = arith.constant 0 : i32
    %c0_i32_1 = arith.constant 0 : i32
    return %c0_i32, %c0_i32_0 : i32, i32
  }
  func.func @transform_13(%arg0: i32) -> (i32, i32) {
    %c0_i32 = arith.constant 0 : i32
    %c0_i32_0 = arith.constant 0 : i32
    %c0_i32_1 = arith.constant 0 : i32
    return %c0_i32, %c0_i32_0 : i32, i32
  }
  func.func @transform_14(%arg0: i32) -> (i32, i32) {
    %c0_i32 = arith.constant 0 : i32
    %c0_i32_0 = arith.constant 0 : i32
    %c0_i32_1 = arith.constant 0 : i32
    return %c0_i32, %c0_i32_0 : i32, i32
  }
  func.func @transform_15(%arg0: i32) -> (i32, i32) {
    %c0_i32 = arith.constant 0 : i32
    %c0_i32_0 = arith.constant 0 : i32
    %c0_i32_1 = arith.constant 0 : i32
    return %c0_i32, %c0_i32_0 : i32, i32
  }
  func.func @transform_16(%arg0: i32) -> (i32, i32) {
    %c0_i32 = arith.constant 0 : i32
    %c0_i32_0 = arith.constant 0 : i32
    %c0_i32_1 = arith.constant 0 : i32
    return %c0_i32, %c0_i32_0 : i32, i32
  }
  func.func @transform_17(%arg0: i32) -> (i32, i32) {
    %c0_i32 = arith.constant 0 : i32
    %c0_i32_0 = arith.constant 0 : i32
    %c0_i32_1 = arith.constant 0 : i32
    return %c0_i32, %c0_i32_0 : i32, i32
  }
  func.func @transform_18(%arg0: i32) -> (i32, i32) {
    %c0_i32 = arith.constant 0 : i32
    %c0_i32_0 = arith.constant 0 : i32
    %c0_i32_1 = arith.constant 0 : i32
    return %c0_i32, %c0_i32_0 : i32, i32
  }
  func.func @transform_19(%arg0: i32) -> (i32, i32) {
    %c0_i32 = arith.constant 0 : i32
    %c0_i32_0 = arith.constant 0 : i32
    %c0_i32_1 = arith.constant 0 : i32
    return %c0_i32, %c0_i32_0 : i32, i32
  }
}

</mosaic_0001>

<llo_original>
// kernel: swin_block_forward.1
$region0: #{swin_block_forward.1}
  #allocation0 [shape = 'u32[]', space=smem, size = 0x4, offset = 0x4, fixed_abs, tag = 'smem constant byte address 0x4 - core index']
  #allocation1 [shape = 'u32[144,128]{1,0:T(1,128)}', space=vmem, size = 0x12000, scoped, tag = 'internal scratch']
  %s0 = inlined_call_operand.vmem [shape: f32[128,32], index: 0, kind: input, shape index: {}]
  %s1 = inlined_call_operand.vmem [shape: f32[128,128], index: 1, kind: input, shape index: {}]
  %s2 = inlined_call_operand.hbm [shape: f32[128,128], index: 2, kind: input, shape index: {}]
  %s3 = inlined_call_operand.vmem [shape: f32[4,128,128], index: 3, kind: input, shape index: {}]
  %s4 = inlined_call_operand.hbm [shape: f32[1,32], index: 4, kind: input, shape index: {}]
  %s5 = inlined_call_operand.hbm [shape: f32[1,32], index: 5, kind: input, shape index: {}]
  %s6 = inlined_call_operand.vmem [shape: f32[4,32,8], index: 6, kind: input, shape index: {}]
  %s7 = inlined_call_operand.hbm [shape: f32[4,1,8], index: 7, kind: input, shape index: {}]
  %s8 = inlined_call_operand.vmem [shape: f32[4,32,8], index: 8, kind: input, shape index: {}]
  %s9 = inlined_call_operand.hbm [shape: f32[4,1,8], index: 9, kind: input, shape index: {}]
  %s10 = inlined_call_operand.hbm [shape: f32[4,32,32], index: 10, kind: input, shape index: {}]
  %s11 = inlined_call_operand.hbm [shape: f32[4,1,32], index: 11, kind: input, shape index: {}]
  %s12 = inlined_call_operand.hbm [shape: f32[1,32], index: 12, kind: input, shape index: {}]
  %s13 = inlined_call_operand.hbm [shape: f32[1,32], index: 13, kind: input, shape index: {}]
  %s14 = inlined_call_operand.hbm [shape: f32[1,32], index: 14, kind: input, shape index: {}]
  %s15 = inlined_call_operand.hbm [shape: f32[32,128], index: 15, kind: input, shape index: {}]
  %s16 = inlined_call_operand.hbm [shape: f32[1,128], index: 16, kind: input, shape index: {}]
  %s17 = inlined_call_operand.vmem [shape: f32[128,32], index: 17, kind: input, shape index: {}]
  %s18 = inlined_call_operand.hbm [shape: f32[1,32], index: 18, kind: input, shape index: {}]
  %s19 = inlined_call_operand.vmem [shape: f32[128,32], index: 19, kind: output, shape index: {}]
  %s20 = sld [smem:[#allocation0]]
  $region138: #{swin_block_forward.1} parent=0
    _
  %s22 = ssub.s32 1, %s20
  %s23 = scalar_select 0, %s22, %s20
  $region1: #{swin_block_forward.1} parent=0
    #allocation2 [shape = 'u8[65536]{0}', space=vmem, size = 0x10000, scoped, tag = 'input window, operand 2, single buffered']
    #allocation3 [shape = 's32[1]{0}', space=sflag, size = 0x4, scoped, tag = 'scoped memory for swin_block_forward.1']
    #allocation4 [shape = 'u8[512]{0}', space=vmem, size = 0x400, scoped, tag = 'input window, operand 4, single buffered']
    #allocation5 [shape = 's32[1]{0}', space=sflag, size = 0x4, scoped, tag = 'scoped memory for swin_block_forward.1']
    #allocation6 [shape = 'u8[512]{0}', space=vmem, size = 0x400, scoped, tag = 'input window, operand 5, single buffered']
    #allocation7 [shape = 'u8[2048]{0}', space=vmem, size = 0x800, scoped, tag = 'input window, operand 7, single buffered']
    #allocation8 [shape = 's32[1]{0}', space=sflag, size = 0x4, scoped, tag = 'scoped memory for swin_block_forward.1']
    #allocation9 [shape = 'u8[2048]{0}', space=vmem, size = 0x800, scoped, tag = 'input window, operand 9, single buffered']
    #allocation10 [shape = 'u8[65536]{0}', space=vmem, size = 0x10000, scoped, tag = 'input window, operand 10, single buffered']
    #allocation11 [shape = 's32[1]{0}', space=sflag, size = 0x4, scoped, tag = 'scoped memory for swin_block_forward.1']
    #allocation12 [shape = 'u8[2048]{0}', space=vmem, size = 0x800, scoped, tag = 'input window, operand 11, single buffered']
    #allocation13 [shape = 'u8[512]{0}', space=vmem, size = 0x400, scoped, tag = 'input window, operand 12, single buffered']
    #allocation14 [shape = 's32[1]{0}', space=sflag, size = 0x4, scoped, tag = 'scoped memory for swin_block_forward.1']
    #allocation15 [shape = 'u8[512]{0}', space=vmem, size = 0x400, scoped, tag = 'input window, operand 13, single buffered']
    #allocation16 [shape = 'u8[512]{0}', space=vmem, size = 0x400, scoped, tag = 'input window, operand 14, single buffered']
    #allocation17 [shape = 's32[1]{0}', space=sflag, size = 0x4, scoped, tag = 'scoped memory for swin_block_forward.1']
    #allocation18 [shape = 'u8[16384]{0}', space=vmem, size = 0x4000, scoped, tag = 'input window, operand 15, single buffered']
    #allocation19 [shape = 'u8[512]{0}', space=vmem, size = 0x400, scoped, tag = 'input window, operand 16, single buffered']
    #allocation20 [shape = 's32[1]{0}', space=sflag, size = 0x4, scoped, tag = 'scoped memory for swin_block_forward.1']
    #allocation21 [shape = 'u8[512]{0}', space=vmem, size = 0x400, scoped, tag = 'input window, operand 18, single buffered']
    %24 = vsyncpa [#allocation3], 0
    %25 = vsyncpa [#allocation5], 0
    %26 = vsyncpa [#allocation8], 0
    %27 = vsyncpa [#allocation11], 0
    %28 = vsyncpa [#allocation14], 0
    %29 = vsyncpa [#allocation17], 0
    %30 = vsyncpa [#allocation20], 0
    // Predicated region
    $region2: #{swin_block_forward.1} parent=1 // pred_check
      _
    $region3: #{swin_block_forward.1} parent=1 // pred_check_branch
      %32 = sbr.rel (0) target = $region5
    $region4: #{swin_block_forward.1} parent=1 // pred_region
      _
    $region5: #{swin_block_forward.1} parent=1 // pred_fallthru
      _
    // Predicated region
    $region6: #{swin_block_forward.1} parent=1 // pred_check
      _
    $region7: #{swin_block_forward.1} parent=1 // pred_check_branch
      %34 = sbr.rel (0) target = $region9
    $region8: #{swin_block_forward.1} parent=1 // pred_region
      _
    $region9: #{swin_block_forward.1} parent=1 // pred_fallthru
      _
    // Predicated region
    $region10: #{swin_block_forward.1} parent=1 // pred_check
      _
    $region11: #{swin_block_forward.1} parent=1 // pred_check_branch
      %36 = sbr.rel (0) target = $region13
    $region12: #{swin_block_forward.1} parent=1 // pred_region
      %s38 = ssub.s32 2048, 2048
      %39 = vsyncadd [#allocation3], %s38
      %s40 = sshll.u32 [#allocation2], 4
      %s41 = int_to_ptr.vmem [resolvable:$true] %s40
      %46 = dma.hbm_to_vmem [thread:$0]  %s2, 2048, %s41, [#allocation3], 128, 128, 8
    $region13: #{swin_block_forward.1} parent=1 // pred_fallthru
      _
    // Predicated region
    $region14: #{swin_block_forward.1} parent=1 // pred_check
      _
    $region15: #{swin_block_forward.1} parent=1 // pred_check_branch
      %48 = sbr.rel (0) target = $region17
    $region16: #{swin_block_forward.1} parent=1 // pred_region
      _
    $region17: #{swin_block_forward.1} parent=1 // pred_fallthru
      _
    // Predicated region
    $region18: #{swin_block_forward.1} parent=1 // pred_check
      _
    $region19: #{swin_block_forward.1} parent=1 // pred_check_branch
      %50 = sbr.rel (0) target = $region21
    $region20: #{swin_block_forward.1} parent=1 // pred_region
      %s52 = ssub.s32 16, 16
      %53 = vsyncadd [#allocation5], %s52
      %s55 = sshll.u32 [#allocation4], 4
      %s56 = int_to_ptr.vmem [resolvable:$true] %s55
      %58 = dma.hbm_to_vmem [thread:$0]  %s4, 16, %s56, [#allocation5]
    $region21: #{swin_block_forward.1} parent=1 // pred_fallthru
      _
    // Predicated region
    $region22: #{swin_block_forward.1} parent=1 // pred_check
      _
    $region23: #{swin_block_forward.1} parent=1 // pred_check_branch
      %60 = sbr.rel (0) target = $region25
    $region24: #{swin_block_forward.1} parent=1 // pred_region
      %s62 = ssub.s32 16, 16
      %63 = vsyncadd [#allocation5], %s62
      %s65 = sshll.u32 [#allocation6], 4
      %s66 = int_to_ptr.vmem [resolvable:$true] %s65
      %68 = dma.hbm_to_vmem [thread:$0]  %s5, 16, %s66, [#allocation5]
    $region25: #{swin_block_forward.1} parent=1 // pred_fallthru
      _
    // Predicated region
    $region26: #{swin_block_forward.1} parent=1 // pred_check
      _
    $region27: #{swin_block_forward.1} parent=1 // pred_check_branch
      %70 = sbr.rel (0) target = $region29
    $region28: #{swin_block_forward.1} parent=1 // pred_region
      _
    $region29: #{swin_block_forward.1} parent=1 // pred_fallthru
      _
    // Predicated region
    $region30: #{swin_block_forward.1} parent=1 // pred_check
      _
    $region31: #{swin_block_forward.1} parent=1 // pred_check_branch
      %72 = sbr.rel (0) target = $region33
    $region32: #{swin_block_forward.1} parent=1 // pred_region
      %s74 = ssub.s32 64, 64
      %75 = vsyncadd [#allocation8], %s74
      %s76 = sshll.u32 [#allocation7], 4
      %s77 = int_to_ptr.vmem [resolvable:$true] %s76
      %82 = dma.hbm_to_vmem [thread:$0]  %s7, 64, %s77, [#allocation8], 16, 16, 1
    $region33: #{swin_block_forward.1} parent=1 // pred_fallthru
      _
    // Predicated region
    $region34: #{swin_block_forward.1} parent=1 // pred_check
      _
    $region35: #{swin_block_forward.1} parent=1 // pred_check_branch
      %84 = sbr.rel (0) target = $region37
    $region36: #{swin_block_forward.1} parent=1 // pred_region
      _
    $region37: #{swin_block_forward.1} parent=1 // pred_fallthru
      _
    // Predicated region
    $region38: #{swin_block_forward.1} parent=1 // pred_check
      _
    $region39: #{swin_block_forward.1} parent=1 // pred_check_branch
      %86 = sbr.rel (0) target = $region41
    $region40: #{swin_block_forward.1} parent=1 // pred_region
      %s88 = ssub.s32 64, 64
      %89 = vsyncadd [#allocation8], %s88
      %s90 = sshll.u32 [#allocation9], 4
      %s91 = int_to_ptr.vmem [resolvable:$true] %s90
      %96 = dma.hbm_to_vmem [thread:$0]  %s9, 64, %s91, [#allocation8], 16, 16, 1
    $region41: #{swin_block_forward.1} parent=1 // pred_fallthru
      _
    // Predicated region
    $region42: #{swin_block_forward.1} parent=1 // pred_check
      _
    $region43: #{swin_block_forward.1} parent=1 // pred_check_branch
      %98 = sbr.rel (0) target = $region45
    $region44: #{swin_block_forward.1} parent=1 // pred_region
      %s100 = ssub.s32 2048, 2048
      %101 = vsyncadd [#allocation11], %s100
      %s102 = sshll.u32 [#allocation10], 4
      %s103 = int_to_ptr.vmem [resolvable:$true] %s102
      %108 = dma.hbm_to_vmem [thread:$0]  %s10, 2048, %s103, [#allocation11], 128, 128, 8
    $region45: #{swin_block_forward.1} parent=1 // pred_fallthru
      _
    // Predicated region
    $region46: #{swin_block_forward.1} parent=1 // pred_check
      _
    $region47: #{swin_block_forward.1} parent=1 // pred_check_branch
      %110 = sbr.rel (0) target = $region49
    $region48: #{swin_block_forward.1} parent=1 // pred_region
      %s112 = ssub.s32 64, 64
      %113 = vsyncadd [#allocation11], %s112
      %s114 = sshll.u32 [#allocation12], 4
      %s115 = int_to_ptr.vmem [resolvable:$true] %s114
      %120 = dma.hbm_to_vmem [thread:$0]  %s11, 64, %s115, [#allocation11], 16, 16, 1
    $region49: #{swin_block_forward.1} parent=1 // pred_fallthru
      _
    // Predicated region
    $region50: #{swin_block_forward.1} parent=1 // pred_check
      _
    $region51: #{swin_block_forward.1} parent=1 // pred_check_branch
      %122 = sbr.rel (0) target = $region53
    $region52: #{swin_block_forward.1} parent=1 // pred_region
      %s124 = ssub.s32 16, 16
      %125 = vsyncadd [#allocation14], %s124
      %s127 = sshll.u32 [#allocation13], 4
      %s128 = int_to_ptr.vmem [resolvable:$true] %s127
      %130 = dma.hbm_to_vmem [thread:$0]  %s12, 16, %s128, [#allocation14]
    $region53: #{swin_block_forward.1} parent=1 // pred_fallthru
      _
    // Predicated region
    $region54: #{swin_block_forward.1} parent=1 // pred_check
      _
    $region55: #{swin_block_forward.1} parent=1 // pred_check_branch
      %132 = sbr.rel (0) target = $region57
    $region56: #{swin_block_forward.1} parent=1 // pred_region
      %s134 = ssub.s32 16, 16
      %135 = vsyncadd [#allocation14], %s134
      %s137 = sshll.u32 [#allocation15], 4
      %s138 = int_to_ptr.vmem [resolvable:$true] %s137
      %140 = dma.hbm_to_vmem [thread:$0]  %s13, 16, %s138, [#allocation14]
    $region57: #{swin_block_forward.1} parent=1 // pred_fallthru
      _
    // Predicated region
    $region58: #{swin_block_forward.1} parent=1 // pred_check
      _
    $region59: #{swin_block_forward.1} parent=1 // pred_check_branch
      %142 = sbr.rel (0) target = $region61
    $region60: #{swin_block_forward.1} parent=1 // pred_region
      %s144 = ssub.s32 16, 16
      %145 = vsyncadd [#allocation17], %s144
      %s147 = sshll.u32 [#allocation16], 4
      %s148 = int_to_ptr.vmem [resolvable:$true] %s147
      %150 = dma.hbm_to_vmem [thread:$0]  %s14, 16, %s148, [#allocation17]
    $region61: #{swin_block_forward.1} parent=1 // pred_fallthru
      _
    // Predicated region
    $region62: #{swin_block_forward.1} parent=1 // pred_check
      _
    $region63: #{swin_block_forward.1} parent=1 // pred_check_branch
      %152 = sbr.rel (0) target = $region65
    $region64: #{swin_block_forward.1} parent=1 // pred_region
      %s154 = ssub.s32 512, 512
      %155 = vsyncadd [#allocation17], %s154
      %s156 = sshll.u32 [#allocation18], 4
      %s157 = int_to_ptr.vmem [resolvable:$true] %s156
      %162 = dma.hbm_to_vmem [thread:$0]  %s15, 512, %s157, [#allocation17], 128, 128, 8
    $region65: #{swin_block_forward.1} parent=1 // pred_fallthru
      _
    // Predicated region
    $region66: #{swin_block_forward.1} parent=1 // pred_check
      _
    $region67: #{swin_block_forward.1} parent=1 // pred_check_branch
      %164 = sbr.rel (0) target = $region69
    $region68: #{swin_block_forward.1} parent=1 // pred_region
      %s166 = ssub.s32 16, 16
      %167 = vsyncadd [#allocation20], %s166
      %s169 = sshll.u32 [#allocation19], 4
      %s170 = int_to_ptr.vmem [resolvable:$true] %s169
      %172 = dma.hbm_to_vmem [thread:$0]  %s16, 16, %s170, [#allocation20]
    $region69: #{swin_block_forward.1} parent=1 // pred_fallthru
      _
    // Predicated region
    $region70: #{swin_block_forward.1} parent=1 // pred_check
      _
    $region71: #{swin_block_forward.1} parent=1 // pred_check_branch
      %174 = sbr.rel (0) target = $region73
    $region72: #{swin_block_forward.1} parent=1 // pred_region
      _
    $region73: #{swin_block_forward.1} parent=1 // pred_fallthru
      _
    // Predicated region
    $region74: #{swin_block_forward.1} parent=1 // pred_check
      _
    $region75: #{swin_block_forward.1} parent=1 // pred_check_branch
      %176 = sbr.rel (0) target = $region77
    $region76: #{swin_block_forward.1} parent=1 // pred_region
      %s178 = ssub.s32 16, 16
      %179 = vsyncadd [#allocation20], %s178
      %s181 = sshll.u32 [#allocation21], 4
      %s182 = int_to_ptr.vmem [resolvable:$true] %s181
      %184 = dma.hbm_to_vmem [thread:$0]  %s18, 16, %s182, [#allocation20]
    $region77: #{swin_block_forward.1} parent=1 // pred_fallthru
      _
    // Predicated region
    $region78: #{swin_block_forward.1} parent=1 // pred_check
      _
    $region79: #{swin_block_forward.1} parent=1 // pred_check_branch
      %186 = sbr.rel (0) target = $region81
    $region80: #{swin_block_forward.1} parent=1 // pred_region
      %187 = dma.done [#allocation3], 2048
    $region81: #{swin_block_forward.1} parent=1 // pred_fallthru
      _
    // Predicated region
    $region82: #{swin_block_forward.1} parent=1 // pred_check
      _
    $region83: #{swin_block_forward.1} parent=1 // pred_check_branch
      %189 = sbr.rel (0) target = $region85
    $region84: #{swin_block_forward.1} parent=1 // pred_region
      %190 = dma.done [#allocation5], 16
    $region85: #{swin_block_forward.1} parent=1 // pred_fallthru
      _
    // Predicated region
    $region86: #{swin_block_forward.1} parent=1 // pred_check
      _
    $region87: #{swin_block_forward.1} parent=1 // pred_check_branch
      %192 = sbr.rel (0) target = $region89
    $region88: #{swin_block_forward.1} parent=1 // pred_region
      %193 = dma.done [#allocation5], 16
    $region89: #{swin_block_forward.1} parent=1 // pred_fallthru
      _
    // Predicated region
    $region90: #{swin_block_forward.1} parent=1 // pred_check
      _
    $region91: #{swin_block_forward.1} parent=1 // pred_check_branch
      %195 = sbr.rel (0) target = $region93
    $region92: #{swin_block_forward.1} parent=1 // pred_region
      %196 = dma.done [#allocation8], 64
    $region93: #{swin_block_forward.1} parent=1 // pred_fallthru
      _
    // Predicated region
    $region94: #{swin_block_forward.1} parent=1 // pred_check
      _
    $region95: #{swin_block_forward.1} parent=1 // pred_check_branch
      %198 = sbr.rel (0) target = $region97
    $region96: #{swin_block_forward.1} parent=1 // pred_region
      %199 = dma.done [#allocation8], 64
    $region97: #{swin_block_forward.1} parent=1 // pred_fallthru
      _
    // Predicated region
    $region98: #{swin_block_forward.1} parent=1 // pred_check
      _
    $region99: #{swin_block_forward.1} parent=1 // pred_check_branch
      %201 = sbr.rel (0) target = $region101
    $region100: #{swin_block_forward.1} parent=1 // pred_region
      %202 = dma.done [#allocation11], 2048
    $region101: #{swin_block_forward.1} parent=1 // pred_fallthru
      _
    // Predicated region
    $region102: #{swin_block_forward.1} parent=1 // pred_check
      _
    $region103: #{swin_block_forward.1} parent=1 // pred_check_branch
      %204 = sbr.rel (0) target = $region105
    $region104: #{swin_block_forward.1} parent=1 // pred_region
      %205 = dma.done [#allocation11], 64
    $region105: #{swin_block_forward.1} parent=1 // pred_fallthru
      _
    // Predicated region
    $region106: #{swin_block_forward.1} parent=1 // pred_check
      _
    $region107: #{swin_block_forward.1} parent=1 // pred_check_branch
      %207 = sbr.rel (0) target = $region109
    $region108: #{swin_block_forward.1} parent=1 // pred_region
      %208 = dma.done [#allocation14], 16
    $region109: #{swin_block_forward.1} parent=1 // pred_fallthru
      _
    // Predicated region
    $region110: #{swin_block_forward.1} parent=1 // pred_check
      _
    $region111: #{swin_block_forward.1} parent=1 // pred_check_branch
      %210 = sbr.rel (0) target = $region113
    $region112: #{swin_block_forward.1} parent=1 // pred_region
      %211 = dma.done [#allocation14], 16
    $region113: #{swin_block_forward.1} parent=1 // pred_fallthru
      _
    // Predicated region
    $region114: #{swin_block_forward.1} parent=1 // pred_check
      _
    $region115: #{swin_block_forward.1} parent=1 // pred_check_branch
      %213 = sbr.rel (0) target = $region117
    $region116: #{swin_block_forward.1} parent=1 // pred_region
      %214 = dma.done [#allocation17], 16
    $region117: #{swin_block_forward.1} parent=1 // pred_fallthru
      _
    // Predicated region
    $region118: #{swin_block_forward.1} parent=1 // pred_check
      _
    $region119: #{swin_block_forward.1} parent=1 // pred_check_branch
      %216 = sbr.rel (0) target = $region121
    $region120: #{swin_block_forward.1} parent=1 // pred_region
      %217 = dma.done [#allocation17], 512
    $region121: #{swin_block_forward.1} parent=1 // pred_fallthru
      _
    // Predicated region
    $region122: #{swin_block_forward.1} parent=1 // pred_check
      _
    $region123: #{swin_block_forward.1} parent=1 // pred_check_branch
      %219 = sbr.rel (0) target = $region125
    $region124: #{swin_block_forward.1} parent=1 // pred_region
      %220 = dma.done [#allocation20], 16
    $region125: #{swin_block_forward.1} parent=1 // pred_fallthru
      _
    // Predicated region
    $region126: #{swin_block_forward.1} parent=1 // pred_check
      _
    $region127: #{swin_block_forward.1} parent=1 // pred_check_branch
      %222 = sbr.rel (0) target = $region129
    $region128: #{swin_block_forward.1} parent=1 // pred_region
      %223 = dma.done [#allocation20], 16
    $region129: #{swin_block_forward.1} parent=1 // pred_fallthru
      _
    %v224 = vld [vmem:[%s0] sm:$0xff]
    %v225 = vld [vmem:[%s0 + $0x8] sm:$0xff]
    %v226 = vld [vmem:[%s0 + $0x10] sm:$0xff]
    %v227 = vld [vmem:[%s0 + $0x18] sm:$0xff]
    %v228 = vld [vmem:[%s0 + $0x20] sm:$0xff]
    %v229 = vld [vmem:[%s0 + $0x28] sm:$0xff]
    %v230 = vld [vmem:[%s0 + $0x30] sm:$0xff]
    %v231 = vld [vmem:[%s0 + $0x38] sm:$0xff]
    %v232 = vld [vmem:[%s0 + $0x40] sm:$0xff]
    %v233 = vld [vmem:[%s0 + $0x48] sm:$0xff]
    %v234 = vld [vmem:[%s0 + $0x50] sm:$0xff]
    %v235 = vld [vmem:[%s0 + $0x58] sm:$0xff]
    %v236 = vld [vmem:[%s0 + $0x60] sm:$0xff]
    %v237 = vld [vmem:[%s0 + $0x68] sm:$0xff]
    %v238 = vld [vmem:[%s0 + $0x70] sm:$0xff]
    %v239 = vld [vmem:[%s0 + $0x78] sm:$0xff]
    %v240 = vld [vmem:[%s1] sm:$0xff]
    %v241 = vld [vmem:[%s1 + $0x8] sm:$0xff]
    %v242 = vld [vmem:[%s1 + $0x10] sm:$0xff]
    %v243 = vld [vmem:[%s1 + $0x18] sm:$0xff]
    %v244 = vld [vmem:[%s1 + $0x20] sm:$0xff]
    %v245 = vld [vmem:[%s1 + $0x28] sm:$0xff]
    %v246 = vld [vmem:[%s1 + $0x30] sm:$0xff]
    %v247 = vld [vmem:[%s1 + $0x38] sm:$0xff]
    %v248 = vld [vmem:[%s1 + $0x40] sm:$0xff]
    %v249 = vld [vmem:[%s1 + $0x48] sm:$0xff]
    %v250 = vld [vmem:[%s1 + $0x50] sm:$0xff]
    %v251 = vld [vmem:[%s1 + $0x58] sm:$0xff]
    %v252 = vld [vmem:[%s1 + $0x60] sm:$0xff]
    %v253 = vld [vmem:[%s1 + $0x68] sm:$0xff]
    %v254 = vld [vmem:[%s1 + $0x70] sm:$0xff]
    %v255 = vld [vmem:[%s1 + $0x78] sm:$0xff]
    %256 = vmatprep.subr.mxu0 0.0
    %257 = vmatpush1.msra.mxu0 %v224
    %258 = vmatprep.subr.mxu0 0.0
    %259 = vmatpush1.msra.mxu0 %v225
    %260 = vmatprep.subr.mxu0 0.0
    %261 = vmatpush1.msra.mxu0 %v226
    %262 = vmatprep.subr.mxu0 0.0
    %263 = vmatpush1.msra.mxu0 %v227
    %264 = vmatprep.subr.mxu0 0.0
    %265 = vmatpush1.msra.mxu0 %v228
    %266 = vmatprep.subr.mxu0 0.0
    %267 = vmatpush1.msra.mxu0 %v229
    %268 = vmatprep.subr.mxu0 0.0
    %269 = vmatpush1.msra.mxu0 %v230
    %270 = vmatprep.subr.mxu0 0.0
    %271 = vmatpush1.msra.mxu0 %v231
    %272 = vmatprep.subr.mxu0 0.0
    %273 = vmatpush1.msra.mxu0 %v232
    %274 = vmatprep.subr.mxu0 0.0
    %275 = vmatpush1.msra.mxu0 %v233
    %276 = vmatprep.subr.mxu0 0.0
    %277 = vmatpush1.msra.mxu0 %v234
    %278 = vmatprep.subr.mxu0 0.0
    %279 = vmatpush1.msra.mxu0 %v235
    %280 = vmatprep.subr.mxu0 0.0
    %281 = vmatpush1.msra.mxu0 %v236
    %282 = vmatprep.subr.mxu0 0.0
    %283 = vmatpush1.msra.mxu0 %v237
    %284 = vmatprep.subr.mxu0 0.0
    %285 = vmatpush1.msra.mxu0 %v238
    %286 = vmatprep.subr.mxu0 0.0
    %287 = vmatpush1.msra.mxu0 %v239
    %288 = vmatprep.subr.mxu0 0.0
    %289 = vmatpush1.msra.mxu0 0.0
    %290 = vmatprep.subr.mxu0 0.0
    %291 = vmatpush1.msra.mxu0 0.0
    %292 = vmatprep.subr.mxu0 0.0
    %293 = vmatpush1.msra.mxu0 0.0
    %294 = vmatprep.subr.mxu0 0.0
    %295 = vmatpush1.msra.mxu0 0.0
    %296 = vmatprep.subr.mxu0 0.0
    %297 = vmatpush1.msra.mxu0 0.0
    %298 = vmatprep.subr.mxu0 0.0
    %299 = vmatpush1.msra.mxu0 0.0
    %300 = vmatprep.subr.mxu0 0.0
    %301 = vmatpush1.msra.mxu0 0.0
    %302 = vmatprep.subr.mxu0 0.0
    %303 = vmatpush1.msra.mxu0 0.0
    %304 = vmatprep.subr.mxu0 0.0
    %305 = vmatpush1.msra.mxu0 0.0
    %306 = vmatprep.subr.mxu0 0.0
    %307 = vmatpush1.msra.mxu0 0.0
    %308 = vmatprep.subr.mxu0 0.0
    %309 = vmatpush1.msra.mxu0 0.0
    %310 = vmatprep.subr.mxu0 0.0
    %311 = vmatpush1.msra.mxu0 0.0
    %312 = vmatprep.subr.mxu0 0.0
    %313 = vmatpush1.msra.mxu0 0.0
    %314 = vmatprep.subr.mxu0 0.0
    %315 = vmatpush1.msra.mxu0 0.0
    %316 = vmatprep.subr.mxu0 0.0
    %317 = vmatpush1.msra.mxu0 0.0
    %318 = vmatprep.subr.mxu0 0.0
    %319 = vmatpush1.msra.mxu0 0.0
    %320 = vmatprep.mubr.f32.mxu0 0.0
    %321 = vmatmul.mubr.f32.gmra.mrb[0].mxu0 %v240
    %v322 = vpop.f32.mrb[0].mxu0
    %v323 = vadd.f32 0.0, %v322
    %v324 = vpop.f32.mrb[0].mxu0
    %325 = vmatprep.mubr.f32.mxu0 0.0
    %326 = vmatmul.mubr.f32.gmra.mrb[0].mxu0 %v241
    %v327 = vpop.f32.mrb[0].mxu0
    %v328 = vadd.f32 0.0, %v327
    %v329 = vpop.f32.mrb[0].mxu0
    %330 = vmatprep.mubr.f32.mxu0 0.0
    %331 = vmatmul.mubr.f32.gmra.mrb[0].mxu0 %v242
    %v332 = vpop.f32.mrb[0].mxu0
    %v333 = vadd.f32 0.0, %v332
    %v334 = vpop.f32.mrb[0].mxu0
    %335 = vmatprep.mubr.f32.mxu0 0.0
    %336 = vmatmul.mubr.f32.gmra.mrb[0].mxu0 %v243
    %v337 = vpop.f32.mrb[0].mxu0
    %v338 = vadd.f32 0.0, %v337
    %v339 = vpop.f32.mrb[0].mxu0
    %340 = vmatprep.mubr.f32.mxu0 0.0
    %341 = vmatmul.mubr.f32.gmra.mrb[0].mxu0 %v244
    %v342 = vpop.f32.mrb[0].mxu0
    %v343 = vadd.f32 0.0, %v342
    %v344 = vpop.f32.mrb[0].mxu0
    %345 = vmatprep.mubr.f32.mxu0 0.0
    %346 = vmatmul.mubr.f32.gmra.mrb[0].mxu0 %v245
    %v347 = vpop.f32.mrb[0].mxu0
    %v348 = vadd.f32 0.0, %v347
    %v349 = vpop.f32.mrb[0].mxu0
    %350 = vmatprep.mubr.f32.mxu0 0.0
    %351 = vmatmul.mubr.f32.gmra.mrb[0].mxu0 %v246
    %v352 = vpop.f32.mrb[0].mxu0
    %v353 = vadd.f32 0.0, %v352
    %v354 = vpop.f32.mrb[0].mxu0
    %355 = vmatprep.mubr.f32.mxu0 0.0
    %356 = vmatmul.mubr.f32.gmra.mrb[0].mxu0 %v247
    %v357 = vpop.f32.mrb[0].mxu0
    %v358 = vadd.f32 0.0, %v357
    %v359 = vpop.f32.mrb[0].mxu0
    %360 = vmatprep.mubr.f32.mxu0 0.0
    %361 = vmatmul.mubr.f32.gmra.mrb[0].mxu0 %v248
    %v362 = vpop.f32.mrb[0].mxu0
    %v363 = vadd.f32 0.0, %v362
    %v364 = vpop.f32.mrb[0].mxu0
    %365 = vmatprep.mubr.f32.mxu0 0.0
    %366 = vmatmul.mubr.f32.gmra.mrb[0].mxu0 %v249
    %v367 = vpop.f32.mrb[0].mxu0
    %v368 = vadd.f32 0.0, %v367
    %v369 = vpop.f32.mrb[0].mxu0
    %370 = vmatprep.mubr.f32.mxu0 0.0
    %371 = vmatmul.mubr.f32.gmra.mrb[0].mxu0 %v250
    %v372 = vpop.f32.mrb[0].mxu0
    %v373 = vadd.f32 0.0, %v372
    %v374 = vpop.f32.mrb[0].mxu0
    %375 = vmatprep.mubr.f32.mxu0 0.0
    %376 = vmatmul.mubr.f32.gmra.mrb[0].mxu0 %v251
    %v377 = vpop.f32.mrb[0].mxu0
    %v378 = vadd.f32 0.0, %v377
    %v379 = vpop.f32.mrb[0].mxu0
    %380 = vmatprep.mubr.f32.mxu0 0.0
    %381 = vmatmul.mubr.f32.gmra.mrb[0].mxu0 %v252
    %v382 = vpop.f32.mrb[0].mxu0
    %v383 = vadd.f32 0.0, %v382
    %v384 = vpop.f32.mrb[0].mxu0
    %385 = vmatprep.mubr.f32.mxu0 0.0
    %386 = vmatmul.mubr.f32.gmra.mrb[0].mxu0 %v253
    %v387 = vpop.f32.mrb[0].mxu0
    %v388 = vadd.f32 0.0, %v387
    %v389 = vpop.f32.mrb[0].mxu0
    %390 = vmatprep.mubr.f32.mxu0 0.0
    %391 = vmatmul.mubr.f32.gmra.mrb[0].mxu0 %v254
    %v392 = vpop.f32.mrb[0].mxu0
    %v393 = vadd.f32 0.0, %v392
    %v394 = vpop.f32.mrb[0].mxu0
    %395 = vmatprep.mubr.f32.mxu0 0.0
    %396 = vmatmul.mubr.f32.gmra.mrb[0].mxu0 %v255
    %v397 = vpop.f32.mrb[0].mxu0
    %v398 = vadd.f32 0.0, %v397
    %v399 = vpop.f32.mrb[0].mxu0
    %400 = vdwg.mxu0
    %vm401 = vcmask 261120
    %v402 = vsel %vm401, %v323, 0.0
    %403 = vadd.xlane.f32.xlu0 %v402
    %v404 = vpop.xlane.xlu0 %403
    %v405 = vsel %vm401, %v328, 0.0
    %406 = vadd.xlane.f32.xlu0 %v405
    %v407 = vpop.xlane.xlu0 %406
    %v408 = vsel %vm401, %v333, 0.0
    %409 = vadd.xlane.f32.xlu0 %v408
    %v410 = vpop.xlane.xlu0 %409
    %v411 = vsel %vm401, %v338, 0.0
    %412 = vadd.xlane.f32.xlu0 %v411
    %v413 = vpop.xlane.xlu0 %412
    %v414 = vsel %vm401, %v343, 0.0
    %415 = vadd.xlane.f32.xlu0 %v414
    %v416 = vpop.xlane.xlu0 %415
    %v417 = vsel %vm401, %v348, 0.0
    %418 = vadd.xlane.f32.xlu0 %v417
    %v419 = vpop.xlane.xlu0 %418
    %v420 = vsel %vm401, %v353, 0.0
    %421 = vadd.xlane.f32.xlu0 %v420
    %v422 = vpop.xlane.xlu0 %421
    %v423 = vsel %vm401, %v358, 0.0
    %424 = vadd.xlane.f32.xlu0 %v423
    %v425 = vpop.xlane.xlu0 %424
    %v426 = vsel %vm401, %v363, 0.0
    %427 = vadd.xlane.f32.xlu0 %v426
    %v428 = vpop.xlane.xlu0 %427
    %v429 = vsel %vm401, %v368, 0.0
    %430 = vadd.xlane.f32.xlu0 %v429
    %v431 = vpop.xlane.xlu0 %430
    %v432 = vsel %vm401, %v373, 0.0
    %433 = vadd.xlane.f32.xlu0 %v432
    %v434 = vpop.xlane.xlu0 %433
    %v435 = vsel %vm401, %v378, 0.0
    %436 = vadd.xlane.f32.xlu0 %v435
    %v437 = vpop.xlane.xlu0 %436
    %v438 = vsel %vm401, %v383, 0.0
    %439 = vadd.xlane.f32.xlu0 %v438
    %v440 = vpop.xlane.xlu0 %439
    %v441 = vsel %vm401, %v388, 0.0
    %442 = vadd.xlane.f32.xlu0 %v441
    %v443 = vpop.xlane.xlu0 %442
    %v444 = vsel %vm401, %v393, 0.0
    %445 = vadd.xlane.f32.xlu0 %v444
    %v446 = vpop.xlane.xlu0 %445
    %v447 = vsel %vm401, %v398, 0.0
    %448 = vadd.xlane.f32.xlu0 %v447
    %v449 = vpop.xlane.xlu0 %448
    %v450 = vrcp.pop 32.0
    %v451 = vmul.f32 %v404, %v450
    %v452 = vmul.f32 %v407, %v450
    %v453 = vmul.f32 %v410, %v450
    %v454 = vmul.f32 %v413, %v450
    %v455 = vmul.f32 %v416, %v450
    %v456 = vmul.f32 %v419, %v450
    %v457 = vmul.f32 %v422, %v450
    %v458 = vmul.f32 %v425, %v450
    %v459 = vmul.f32 %v428, %v450
    %v460 = vmul.f32 %v431, %v450
    %v461 = vmul.f32 %v434, %v450
    %v462 = vmul.f32 %v437, %v450
    %v463 = vmul.f32 %v440, %v450
    %v464 = vmul.f32 %v443, %v450
    %v465 = vmul.f32 %v446, %v450
    %v466 = vmul.f32 %v449, %v450
    %v467 = vsub.f32 %v323, %v451
    %v468 = vsub.f32 %v328, %v452
    %v469 = vsub.f32 %v333, %v453
    %v470 = vsub.f32 %v338, %v454
    %v471 = vsub.f32 %v343, %v455
    %v472 = vsub.f32 %v348, %v456
    %v473 = vsub.f32 %v353, %v457
    %v474 = vsub.f32 %v358, %v458
    %v475 = vsub.f32 %v363, %v459
    %v476 = vsub.f32 %v368, %v460
    %v477 = vsub.f32 %v373, %v461
    %v478 = vsub.f32 %v378, %v462
    %v479 = vsub.f32 %v383, %v463
    %v480 = vsub.f32 %v388, %v464
    %v481 = vsub.f32 %v393, %v465
    %v482 = vsub.f32 %v398, %v466
    %v483 = vmul.f32 %v467, %v467
    %v484 = vmul.f32 %v468, %v468
    %v485 = vmul.f32 %v469, %v469
    %v486 = vmul.f32 %v470, %v470
    %v487 = vmul.f32 %v471, %v471
    %v488 = vmul.f32 %v472, %v472
    %v489 = vmul.f32 %v473, %v473
    %v490 = vmul.f32 %v474, %v474
    %v491 = vmul.f32 %v475, %v475
    %v492 = vmul.f32 %v476, %v476
    %v493 = vmul.f32 %v477, %v477
    %v494 = vmul.f32 %v478, %v478
    %v495 = vmul.f32 %v479, %v479
    %v496 = vmul.f32 %v480, %v480
    %v497 = vmul.f32 %v481, %v481
    %v498 = vmul.f32 %v482, %v482
    %v499 = vsel %vm401, %v483, 0.0
    %500 = vadd.xlane.f32.xlu0 %v499
    %v501 = vpop.xlane.xlu0 %500
    %v502 = vsel %vm401, %v484, 0.0
    %503 = vadd.xlane.f32.xlu0 %v502
    %v504 = vpop.xlane.xlu0 %503
    %v505 = vsel %vm401, %v485, 0.0
    %506 = vadd.xlane.f32.xlu0 %v505
    %v507 = vpop.xlane.xlu0 %506
    %v508 = vsel %vm401, %v486, 0.0
    %509 = vadd.xlane.f32.xlu0 %v508
    %v510 = vpop.xlane.xlu0 %509
    %v511 = vsel %vm401, %v487, 0.0
    %512 = vadd.xlane.f32.xlu0 %v511
    %v513 = vpop.xlane.xlu0 %512
    %v514 = vsel %vm401, %v488, 0.0
    %515 = vadd.xlane.f32.xlu0 %v514
    %v516 = vpop.xlane.xlu0 %515
    %v517 = vsel %vm401, %v489, 0.0
    %518 = vadd.xlane.f32.xlu0 %v517
    %v519 = vpop.xlane.xlu0 %518
    %v520 = vsel %vm401, %v490, 0.0
    %521 = vadd.xlane.f32.xlu0 %v520
    %v522 = vpop.xlane.xlu0 %521
    %v523 = vsel %vm401, %v491, 0.0
    %524 = vadd.xlane.f32.xlu0 %v523
    %v525 = vpop.xlane.xlu0 %524
    %v526 = vsel %vm401, %v492, 0.0
    %527 = vadd.xlane.f32.xlu0 %v526
    %v528 = vpop.xlane.xlu0 %527
    %v529 = vsel %vm401, %v493, 0.0
    %530 = vadd.xlane.f32.xlu0 %v529
    %v531 = vpop.xlane.xlu0 %530
    %v532 = vsel %vm401, %v494, 0.0
    %533 = vadd.xlane.f32.xlu0 %v532
    %v534 = vpop.xlane.xlu0 %533
    %v535 = vsel %vm401, %v495, 0.0
    %536 = vadd.xlane.f32.xlu0 %v535
    %v537 = vpop.xlane.xlu0 %536
    %v538 = vsel %vm401, %v496, 0.0
    %539 = vadd.xlane.f32.xlu0 %v538
    %v540 = vpop.xlane.xlu0 %539
    %v541 = vsel %vm401, %v497, 0.0
    %542 = vadd.xlane.f32.xlu0 %v541
    %v543 = vpop.xlane.xlu0 %542
    %v544 = vsel %vm401, %v498, 0.0
    %545 = vadd.xlane.f32.xlu0 %v544
    %v546 = vpop.xlane.xlu0 %545
    %v547 = vmul.f32 %v501, %v450
    %v548 = vmul.f32 %v504, %v450
    %v549 = vmul.f32 %v507, %v450
    %v550 = vmul.f32 %v510, %v450
    %v551 = vmul.f32 %v513, %v450
    %v552 = vmul.f32 %v516, %v450
    %v553 = vmul.f32 %v519, %v450
    %v554 = vmul.f32 %v522, %v450
    %v555 = vmul.f32 %v525, %v450
    %v556 = vmul.f32 %v528, %v450
    %v557 = vmul.f32 %v531, %v450
    %v558 = vmul.f32 %v534, %v450
    %v559 = vmul.f32 %v537, %v450
    %v560 = vmul.f32 %v540, %v450
    %v561 = vmul.f32 %v543, %v450
    %v562 = vmul.f32 %v546, %v450
    %v563 = vadd.f32 %v547, 1e-05
    %v564 = vadd.f32 %v548, 1e-05
    %v565 = vadd.f32 %v549, 1e-05
    %v566 = vadd.f32 %v550, 1e-05
    %v567 = vadd.f32 %v551, 1e-05
    %v568 = vadd.f32 %v552, 1e-05
    %v569 = vadd.f32 %v553, 1e-05
    %v570 = vadd.f32 %v554, 1e-05
    %v571 = vadd.f32 %v555, 1e-05
    %v572 = vadd.f32 %v556, 1e-05
    %v573 = vadd.f32 %v557, 1e-05
    %v574 = vadd.f32 %v558, 1e-05
    %v575 = vadd.f32 %v559, 1e-05
    %v576 = vadd.f32 %v560, 1e-05
    %v577 = vadd.f32 %v561, 1e-05
    %v578 = vadd.f32 %v562, 1e-05
    %v579 = vrsqrt.pop %v563
    %v580 = vrsqrt.pop %v564
    %v581 = vrsqrt.pop %v565
    %v582 = vrsqrt.pop %v566
    %v583 = vrsqrt.pop %v567
    %v584 = vrsqrt.pop %v568
    %v585 = vrsqrt.pop %v569
    %v586 = vrsqrt.pop %v570
    %v587 = vrsqrt.pop %v571
    %v588 = vrsqrt.pop %v572
    %v589 = vrsqrt.pop %v573
    %v590 = vrsqrt.pop %v574
    %v591 = vrsqrt.pop %v575
    %v592 = vrsqrt.pop %v576
    %v593 = vrsqrt.pop %v577
    %v594 = vrsqrt.pop %v578
    %v595 = vmul.f32 %v467, %v579
    %v596 = vmul.f32 %v468, %v580
    %v597 = vmul.f32 %v469, %v581
    %v598 = vmul.f32 %v470, %v582
    %v599 = vmul.f32 %v471, %v583
    %v600 = vmul.f32 %v472, %v584
    %v601 = vmul.f32 %v473, %v585
    %v602 = vmul.f32 %v474, %v586
    %v603 = vmul.f32 %v475, %v587
    %v604 = vmul.f32 %v476, %v588
    %v605 = vmul.f32 %v477, %v589
    %v606 = vmul.f32 %v478, %v590
    %v607 = vmul.f32 %v479, %v591
    %v608 = vmul.f32 %v480, %v592
    %v609 = vmul.f32 %v481, %v593
    %v610 = vmul.f32 %v482, %v594
    %v611 = vld [vmem:[#allocation4] sm:$0x1]
    %v613 = vlaneseq
    %v614 = vshrl.u32 %v613, 7
    %v615 = vsub.s32 0, %v614
    %v616 = vrot.slane %v611, %v615
    %v618 = vmul.f32 %v595, %v616
    %v619 = vmul.f32 %v596, %v616
    %v620 = vmul.f32 %v597, %v616
    %v621 = vmul.f32 %v598, %v616
    %v622 = vmul.f32 %v599, %v616
    %v623 = vmul.f32 %v600, %v616
    %v624 = vmul.f32 %v601, %v616
    %v625 = vmul.f32 %v602, %v616
    %v626 = vmul.f32 %v603, %v616
    %v627 = vmul.f32 %v604, %v616
    %v628 = vmul.f32 %v605, %v616
    %v629 = vmul.f32 %v606, %v616
    %v630 = vmul.f32 %v607, %v616
    %v631 = vmul.f32 %v608, %v616
    %v632 = vmul.f32 %v609, %v616
    %v633 = vmul.f32 %v610, %v616
    %v634 = vld [vmem:[#allocation6] sm:$0x1]
    %v636 = vlaneseq
    %v637 = vshrl.u32 %v636, 7
    %v638 = vsub.s32 0, %v637
    %v639 = vrot.slane %v634, %v638
    %v641 = vadd.f32 %v618, %v639
    %v642 = vadd.f32 %v619, %v639
    %v643 = vadd.f32 %v620, %v639
    %v644 = vadd.f32 %v621, %v639
    %v645 = vadd.f32 %v622, %v639
    %v646 = vadd.f32 %v623, %v639
    %v647 = vadd.f32 %v624, %v639
    %v648 = vadd.f32 %v625, %v639
    %v649 = vadd.f32 %v626, %v639
    %v650 = vadd.f32 %v627, %v639
    %v651 = vadd.f32 %v628, %v639
    %v652 = vadd.f32 %v629, %v639
    %v653 = vadd.f32 %v630, %v639
    %v654 = vadd.f32 %v631, %v639
    %v655 = vadd.f32 %v632, %v639
    %v656 = vadd.f32 %v633, %v639
    %v657 = vld [vmem:[%s6] sm:$0xff]
    %v658 = vld [vmem:[%s6 + $0x8] sm:$0xff]
    %v659 = vld [vmem:[%s6 + $0x10] sm:$0xff]
    %v660 = vld [vmem:[%s6 + $0x18] sm:$0xff]
    %v661 = vld [vmem:[#allocation7] sm:$0x1]
    %v663 = vlaneseq
    %v664 = vshrl.u32 %v663, 7
    %v665 = vsub.s32 0, %v664
    %v666 = vrot.slane %v661, %v665
    %v669 = vsel %vm401, %v641, 0
    %v672 = vsel %vm401, %v642, 0
    %v675 = vsel %vm401, %v643, 0
    %v678 = vsel %vm401, %v644, 0
    %v681 = vsel %vm401, %v645, 0
    %v684 = vsel %vm401, %v646, 0
    %v687 = vsel %vm401, %v647, 0
    %v690 = vsel %vm401, %v648, 0
    %v693 = vsel %vm401, %v649, 0
    %v696 = vsel %vm401, %v650, 0
    %v699 = vsel %vm401, %v651, 0
    %v702 = vsel %vm401, %v652, 0
    %v705 = vsel %vm401, %v653, 0
    %v708 = vsel %vm401, %v654, 0
    %v711 = vsel %vm401, %v655, 0
    %v714 = vsel %vm401, %v656, 0
    %716 = vmatprep.subr.mxu0 0.0
    %717 = vmatpush1.msra.mxu0 %v657
    %718 = vmatprep.subr.mxu0 0.0
    %719 = vmatpush1.msra.mxu0 %v658
    %720 = vmatprep.subr.mxu0 0.0
    %721 = vmatpush1.msra.mxu0 %v659
    %722 = vmatprep.subr.mxu0 0.0
    %723 = vmatpush1.msra.mxu0 %v660
    %724 = vmatprep.subr.mxu0 0.0
    %725 = vmatpush1.msra.mxu0 0.0
    %726 = vmatprep.subr.mxu0 0.0
    %727 = vmatpush1.msra.mxu0 0.0
    %728 = vmatprep.subr.mxu0 0.0
    %729 = vmatpush1.msra.mxu0 0.0
    %730 = vmatprep.subr.mxu0 0.0
    %731 = vmatpush1.msra.mxu0 0.0
    %732 = vmatprep.subr.mxu0 0.0
    %733 = vmatpush1.msra.mxu0 0.0
    %734 = vmatprep.subr.mxu0 0.0
    %735 = vmatpush1.msra.mxu0 0.0
    %736 = vmatprep.subr.mxu0 0.0
    %737 = vmatpush1.msra.mxu0 0.0
    %738 = vmatprep.subr.mxu0 0.0
    %739 = vmatpush1.msra.mxu0 0.0
    %740 = vmatprep.subr.mxu0 0.0
    %741 = vmatpush1.msra.mxu0 0.0
    %742 = vmatprep.subr.mxu0 0.0
    %743 = vmatpush1.msra.mxu0 0.0
    %744 = vmatprep.subr.mxu0 0.0
    %745 = vmatpush1.msra.mxu0 0.0
    %746 = vmatprep.subr.mxu0 0.0
    %747 = vmatpush1.msra.mxu0 0.0
    %748 = vmatprep.subr.mxu0 0.0
    %749 = vmatpush1.msra.mxu0 0.0
    %750 = vmatprep.subr.mxu0 0.0
    %751 = vmatpush1.msra.mxu0 0.0
    %752 = vmatprep.subr.mxu0 0.0
    %753 = vmatpush1.msra.mxu0 0.0
    %754 = vmatprep.subr.mxu0 0.0
    %755 = vmatpush1.msra.mxu0 0.0
    %756 = vmatprep.subr.mxu0 0.0
    %757 = vmatpush1.msra.mxu0 0.0
    %758 = vmatprep.subr.mxu0 0.0
    %759 = vmatpush1.msra.mxu0 0.0
    %760 = vmatprep.subr.mxu0 0.0
    %761 = vmatpush1.msra.mxu0 0.0
    %762 = vmatprep.subr.mxu0 0.0
    %763 = vmatpush1.msra.mxu0 0.0
    %764 = vmatprep.subr.mxu0 0.0
    %765 = vmatpush1.msra.mxu0 0.0
    %766 = vmatprep.subr.mxu0 0.0
    %767 = vmatpush1.msra.mxu0 0.0
    %768 = vmatprep.subr.mxu0 0.0
    %769 = vmatpush1.msra.mxu0 0.0
    %770 = vmatprep.subr.mxu0 0.0
    %771 = vmatpush1.msra.mxu0 0.0
    %772 = vmatprep.subr.mxu0 0.0
    %773 = vmatpush1.msra.mxu0 0.0
    %774 = vmatprep.subr.mxu0 0.0
    %775 = vmatpush1.msra.mxu0 0.0
    %776 = vmatprep.subr.mxu0 0.0
    %777 = vmatpush1.msra.mxu0 0.0
    %778 = vmatprep.subr.mxu0 0.0
    %779 = vmatpush1.msra.mxu0 0.0
    %780 = vmatprep.mubr.f32.mxu0 0.0
    %781 = vmatmul.mubr.f32.gmra.mrb[0].mxu0 %v669
    %v782 = vpop.f32.mrb[0].mxu0
    %v783 = vadd.f32 %v666, %v782
    %v784 = vpop.f32.mrb[0].mxu0
    %785 = vmatprep.mubr.f32.mxu0 0.0
    %786 = vmatmul.mubr.f32.gmra.mrb[0].mxu0 %v672
    %v787 = vpop.f32.mrb[0].mxu0
    %v788 = vadd.f32 %v666, %v787
    %v789 = vpop.f32.mrb[0].mxu0
    %790 = vmatprep.mubr.f32.mxu0 0.0
    %791 = vmatmul.mubr.f32.gmra.mrb[0].mxu0 %v675
    %v792 = vpop.f32.mrb[0].mxu0
    %v793 = vadd.f32 %v666, %v792
    %v794 = vpop.f32.mrb[0].mxu0
    %795 = vmatprep.mubr.f32.mxu0 0.0
    %796 = vmatmul.mubr.f32.gmra.mrb[0].mxu0 %v678
    %v797 = vpop.f32.mrb[0].mxu0
    %v798 = vadd.f32 %v666, %v797
    %v799 = vpop.f32.mrb[0].mxu0
    %800 = vmatprep.mubr.f32.mxu0 0.0
    %801 = vmatmul.mubr.f32.gmra.mrb[0].mxu0 %v681
    %v802 = vpop.f32.mrb[0].mxu0
    %v803 = vadd.f32 %v666, %v802
    %v804 = vpop.f32.mrb[0].mxu0
    %805 = vmatprep.mubr.f32.mxu0 0.0
    %806 = vmatmul.mubr.f32.gmra.mrb[0].mxu0 %v684
    %v807 = vpop.f32.mrb[0].mxu0
    %v808 = vadd.f32 %v666, %v807
    %v809 = vpop.f32.mrb[0].mxu0
    %810 = vmatprep.mubr.f32.mxu0 0.0
    %811 = vmatmul.mubr.f32.gmra.mrb[0].mxu0 %v687
    %v812 = vpop.f32.mrb[0].mxu0
    %v813 = vadd.f32 %v666, %v812
    %v814 = vpop.f32.mrb[0].mxu0
    %815 = vmatprep.mubr.f32.mxu0 0.0
    %816 = vmatmul.mubr.f32.gmra.mrb[0].mxu0 %v690
    %v817 = vpop.f32.mrb[0].mxu0
    %v818 = vadd.f32 %v666, %v817
    %v819 = vpop.f32.mrb[0].mxu0
    %820 = vmatprep.mubr.f32.mxu0 0.0
    %821 = vmatmul.mubr.f32.gmra.mrb[0].mxu0 %v693
    %v822 = vpop.f32.mrb[0].mxu0
    %v823 = vadd.f32 %v666, %v822
    %v824 = vpop.f32.mrb[0].mxu0
    %825 = vmatprep.mubr.f32.mxu0 0.0
    %826 = vmatmul.mubr.f32.gmra.mrb[0].mxu0 %v696
    %v827 = vpop.f32.mrb[0].mxu0
    %v828 = vadd.f32 %v666, %v827
    %v829 = vpop.f32.mrb[0].mxu0
    %830 = vmatprep.mubr.f32.mxu0 0.0
    %831 = vmatmul.mubr.f32.gmra.mrb[0].mxu0 %v699
    %v832 = vpop.f32.mrb[0].mxu0
    %v833 = vadd.f32 %v666, %v832
    %v834 = vpop.f32.mrb[0].mxu0
    %835 = vmatprep.mubr.f32.mxu0 0.0
    %836 = vmatmul.mubr.f32.gmra.mrb[0].mxu0 %v702
    %v837 = vpop.f32.mrb[0].mxu0
    %v838 = vadd.f32 %v666, %v837
    %v839 = vpop.f32.mrb[0].mxu0
    %840 = vmatprep.mubr.f32.mxu0 0.0
    %841 = vmatmul.mubr.f32.gmra.mrb[0].mxu0 %v705
    %v842 = vpop.f32.mrb[0].mxu0
    %v843 = vadd.f32 %v666, %v842
    %v844 = vpop.f32.mrb[0].mxu0
    %845 = vmatprep.mubr.f32.mxu0 0.0
    %846 = vmatmul.mubr.f32.gmra.mrb[0].mxu0 %v708
    %v847 = vpop.f32.mrb[0].mxu0
    %v848 = vadd.f32 %v666, %v847
    %v849 = vpop.f32.mrb[0].mxu0
    %850 = vmatprep.mubr.f32.mxu0 0.0
    %851 = vmatmul.mubr.f32.gmra.mrb[0].mxu0 %v711
    %v852 = vpop.f32.mrb[0].mxu0
    %v853 = vadd.f32 %v666, %v852
    %v854 = vpop.f32.mrb[0].mxu0
    %855 = vmatprep.mubr.f32.mxu0 0.0
    %856 = vmatmul.mubr.f32.gmra.mrb[0].mxu0 %v714
    %v857 = vpop.f32.mrb[0].mxu0
    %v858 = vadd.f32 %v666, %v857
    %v859 = vpop.f32.mrb[0].mxu0
    %860 = vdwg.mxu0
    %v861 = vld [vmem:[%s8] sm:$0xff]
    %v862 = vld [vmem:[%s8 + $0x8] sm:$0xff]
    %v863 = vld [vmem:[%s8 + $0x10] sm:$0xff]
    %v864 = vld [vmem:[%s8 + $0x18] sm:$0xff]
    %v865 = vld [vmem:[#allocation9] sm:$0x1]
    %v867 = vlaneseq
    %v868 = vshrl.u32 %v867, 7
    %v869 = vsub.s32 0, %v868
    %v870 = vrot.slane %v865, %v869
    %872 = vmatprep.subr.mxu0 0.0
    %873 = vmatpush1.msra.mxu0 %v861
    %874 = vmatprep.subr.mxu0 0.0
    %875 = vmatpush1.msra.mxu0 %v862
    %876 = vmatprep.subr.mxu0 0.0
    %877 = vmatpush1.msra.mxu0 %v863
    %878 = vmatprep.subr.mxu0 0.0
    %879 = vmatpush1.msra.mxu0 %v864
    %880 = vmatprep.subr.mxu0 0.0
    %881 = vmatpush1.msra.mxu0 0.0
    %882 = vmatprep.subr.mxu0 0.0
    %883 = vmatpush1.msra.mxu0 0.0
    %884 = vmatprep.subr.mxu0 0.0
    %885 = vmatpush1.msra.mxu0 0.0
    %886 = vmatprep.subr.mxu0 0.0
    %887 = vmatpush1.msra.mxu0 0.0
    %888 = vmatprep.subr.mxu0 0.0
    %889 = vmatpush1.msra.mxu0 0.0
    %890 = vmatprep.subr.mxu0 0.0
    %891 = vmatpush1.msra.mxu0 0.0
    %892 = vmatprep.subr.mxu0 0.0
    %893 = vmatpush1.msra.mxu0 0.0
    %894 = vmatprep.subr.mxu0 0.0
    %895 = vmatpush1.msra.mxu0 0.0
    %896 = vmatprep.subr.mxu0 0.0
    %897 = vmatpush1.msra.mxu0 0.0
    %898 = vmatprep.subr.mxu0 0.0
    %899 = vmatpush1.msra.mxu0 0.0
    %900 = vmatprep.subr.mxu0 0.0
    %901 = vmatpush1.msra.mxu0 0.0
    %902 = vmatprep.subr.mxu0 0.0
    %903 = vmatpush1.msra.mxu0 0.0
    %904 = vmatprep.subr.mxu0 0.0
    %905 = vmatpush1.msra.mxu0 0.0
    %906 = vmatprep.subr.mxu0 0.0
    %907 = vmatpush1.msra.mxu0 0.0
    %908 = vmatprep.subr.mxu0 0.0
    %909 = vmatpush1.msra.mxu0 0.0
    %910 = vmatprep.subr.mxu0 0.0
    %911 = vmatpush1.msra.mxu0 0.0
    %912 = vmatprep.subr.mxu0 0.0
    %913 = vmatpush1.msra.mxu0 0.0
    %914 = vmatprep.subr.mxu0 0.0
    %915 = vmatpush1.msra.mxu0 0.0
    %916 = vmatprep.subr.mxu0 0.0
    %917 = vmatpush1.msra.mxu0 0.0
    %918 = vmatprep.subr.mxu0 0.0
    %919 = vmatpush1.msra.mxu0 0.0
    %920 = vmatprep.subr.mxu0 0.0
    %921 = vmatpush1.msra.mxu0 0.0
    %922 = vmatprep.subr.mxu0 0.0
    %923 = vmatpush1.msra.mxu0 0.0
    %924 = vmatprep.subr.mxu0 0.0
    %925 = vmatpush1.msra.mxu0 0.0
    %926 = vmatprep.subr.mxu0 0.0
    %927 = vmatpush1.msra.mxu0 0.0
    %928 = vmatprep.subr.mxu0 0.0
    %929 = vmatpush1.msra.mxu0 0.0
    %930 = vmatprep.subr.mxu0 0.0
    %931 = vmatpush1.msra.mxu0 0.0
    %932 = vmatprep.subr.mxu0 0.0
    %933 = vmatpush1.msra.mxu0 0.0
    %934 = vmatprep.subr.mxu0 0.0
    %935 = vmatpush1.msra.mxu0 0.0
    %936 = vmatprep.mubr.f32.mxu0 0.0
    %937 = vmatmul.mubr.f32.gmra.mrb[0].mxu0 %v669
    %v938 = vpop.f32.mrb[0].mxu0
    %v939 = vadd.f32 %v870, %v938
    %v940 = vpop.f32.mrb[0].mxu0
    %941 = vmatprep.mubr.f32.mxu0 0.0
    %942 = vmatmul.mubr.f32.gmra.mrb[0].mxu0 %v672
    %v943 = vpop.f32.mrb[0].mxu0
    %v944 = vadd.f32 %v870, %v943
    %v945 = vpop.f32.mrb[0].mxu0
    %946 = vmatprep.mubr.f32.mxu0 0.0
    %947 = vmatmul.mubr.f32.gmra.mrb[0].mxu0 %v675
    %v948 = vpop.f32.mrb[0].mxu0
    %v949 = vadd.f32 %v870, %v948
    %v950 = vpop.f32.mrb[0].mxu0
    %951 = vmatprep.mubr.f32.mxu0 0.0
    %952 = vmatmul.mubr.f32.gmra.mrb[0].mxu0 %v678
    %v953 = vpop.f32.mrb[0].mxu0
    %v954 = vadd.f32 %v870, %v953
    %v955 = vpop.f32.mrb[0].mxu0
    %956 = vmatprep.mubr.f32.mxu0 0.0
    %957 = vmatmul.mubr.f32.gmra.mrb[0].mxu0 %v681
    %v958 = vpop.f32.mrb[0].mxu0
    %v959 = vadd.f32 %v870, %v958
    %v960 = vpop.f32.mrb[0].mxu0
    %961 = vmatprep.mubr.f32.mxu0 0.0
    %962 = vmatmul.mubr.f32.gmra.mrb[0].mxu0 %v684
    %v963 = vpop.f32.mrb[0].mxu0
    %v964 = vadd.f32 %v870, %v963
    %v965 = vpop.f32.mrb[0].mxu0
    %966 = vmatprep.mubr.f32.mxu0 0.0
    %967 = vmatmul.mubr.f32.gmra.mrb[0].mxu0 %v687
    %v968 = vpop.f32.mrb[0].mxu0
    %v969 = vadd.f32 %v870, %v968
    %v970 = vpop.f32.mrb[0].mxu0
    %971 = vmatprep.mubr.f32.mxu0 0.0
    %972 = vmatmul.mubr.f32.gmra.mrb[0].mxu0 %v690
    %v973 = vpop.f32.mrb[0].mxu0
    %v974 = vadd.f32 %v870, %v973
    %v975 = vpop.f32.mrb[0].mxu0
    %976 = vmatprep.mubr.f32.mxu0 0.0
    %977 = vmatmul.mubr.f32.gmra.mrb[0].mxu0 %v693
    %v978 = vpop.f32.mrb[0].mxu0
    %v979 = vadd.f32 %v870, %v978
    %v980 = vpop.f32.mrb[0].mxu0
    %981 = vmatprep.mubr.f32.mxu0 0.0
    %982 = vmatmul.mubr.f32.gmra.mrb[0].mxu0 %v696
    %v983 = vpop.f32.mrb[0].mxu0
    %v984 = vadd.f32 %v870, %v983
    %v985 = vpop.f32.mrb[0].mxu0
    %986 = vmatprep.mubr.f32.mxu0 0.0
    %987 = vmatmul.mubr.f32.gmra.mrb[0].mxu0 %v699
    %v988 = vpop.f32.mrb[0].mxu0
    %v989 = vadd.f32 %v870, %v988
    %v990 = vpop.f32.mrb[0].mxu0
    %991 = vmatprep.mubr.f32.mxu0 0.0
    %992 = vmatmul.mubr.f32.gmra.mrb[0].mxu0 %v702
    %v993 = vpop.f32.mrb[0].mxu0
    %v994 = vadd.f32 %v870, %v993
    %v995 = vpop.f32.mrb[0].mxu0
    %996 = vmatprep.mubr.f32.mxu0 0.0
    %997 = vmatmul.mubr.f32.gmra.mrb[0].mxu0 %v705
    %v998 = vpop.f32.mrb[0].mxu0
    %v999 = vadd.f32 %v870, %v998
    %v1000 = vpop.f32.mrb[0].mxu0
    %1001 = vmatprep.mubr.f32.mxu0 0.0
    %1002 = vmatmul.mubr.f32.gmra.mrb[0].mxu0 %v708
    %v1003 = vpop.f32.mrb[0].mxu0
    %v1004 = vadd.f32 %v870, %v1003
    %v1005 = vpop.f32.mrb[0].mxu0
    %1006 = vmatprep.mubr.f32.mxu0 0.0
    %1007 = vmatmul.mubr.f32.gmra.mrb[0].mxu0 %v711
    %v1008 = vpop.f32.mrb[0].mxu0
    %v1009 = vadd.f32 %v870, %v1008
    %v1010 = vpop.f32.mrb[0].mxu0
    %1011 = vmatprep.mubr.f32.mxu0 0.0
    %1012 = vmatmul.mubr.f32.gmra.mrb[0].mxu0 %v714
    %v1013 = vpop.f32.mrb[0].mxu0
    %v1014 = vadd.f32 %v870, %v1013
    %v1015 = vpop.f32.mrb[0].mxu0
    %1016 = vdwg.mxu0
    %v1017 = vld [vmem:[#allocation10] sm:$0xff]
    %v1018 = vld [vmem:[#allocation10 + $0x8] sm:$0xff]
    %v1019 = vld [vmem:[#allocation10 + $0x10] sm:$0xff]
    %v1020 = vld [vmem:[#allocation10 + $0x18] sm:$0xff]
    %v1021 = vld [vmem:[#allocation12] sm:$0x1]
    %v1023 = vlaneseq
    %v1024 = vshrl.u32 %v1023, 7
    %v1025 = vsub.s32 0, %v1024
    %v1026 = vrot.slane %v1021, %v1025
    %1028 = vmatprep.subr.mxu0 0.0
    %1029 = vmatpush1.msra.mxu0 %v1017
    %1030 = vmatprep.subr.mxu0 0.0
    %1031 = vmatpush1.msra.mxu0 %v1018
    %1032 = vmatprep.subr.mxu0 0.0
    %1033 = vmatpush1.msra.mxu0 %v1019
    %1034 = vmatprep.subr.mxu0 0.0
    %1035 = vmatpush1.msra.mxu0 %v1020
    %1036 = vmatprep.subr.mxu0 0.0
    %1037 = vmatpush1.msra.mxu0 0.0
    %1038 = vmatprep.subr.mxu0 0.0
    %1039 = vmatpush1.msra.mxu0 0.0
    %1040 = vmatprep.subr.mxu0 0.0
    %1041 = vmatpush1.msra.mxu0 0.0
    %1042 = vmatprep.subr.mxu0 0.0
    %1043 = vmatpush1.msra.mxu0 0.0
    %1044 = vmatprep.subr.mxu0 0.0
    %1045 = vmatpush1.msra.mxu0 0.0
    %1046 = vmatprep.subr.mxu0 0.0
    %1047 = vmatpush1.msra.mxu0 0.0
    %1048 = vmatprep.subr.mxu0 0.0
    %1049 = vmatpush1.msra.mxu0 0.0
    %1050 = vmatprep.subr.mxu0 0.0
    %1051 = vmatpush1.msra.mxu0 0.0
    %1052 = vmatprep.subr.mxu0 0.0
    %1053 = vmatpush1.msra.mxu0 0.0
    %1054 = vmatprep.subr.mxu0 0.0
    %1055 = vmatpush1.msra.mxu0 0.0
    %1056 = vmatprep.subr.mxu0 0.0
    %1057 = vmatpush1.msra.mxu0 0.0
    %1058 = vmatprep.subr.mxu0 0.0
    %1059 = vmatpush1.msra.mxu0 0.0
    %1060 = vmatprep.subr.mxu0 0.0
    %1061 = vmatpush1.msra.mxu0 0.0
    %1062 = vmatprep.subr.mxu0 0.0
    %1063 = vmatpush1.msra.mxu0 0.0
    %1064 = vmatprep.subr.mxu0 0.0
    %1065 = vmatpush1.msra.mxu0 0.0
    %1066 = vmatprep.subr.mxu0 0.0
    %1067 = vmatpush1.msra.mxu0 0.0
    %1068 = vmatprep.subr.mxu0 0.0
    %1069 = vmatpush1.msra.mxu0 0.0
    %1070 = vmatprep.subr.mxu0 0.0
    %1071 = vmatpush1.msra.mxu0 0.0
    %1072 = vmatprep.subr.mxu0 0.0
    %1073 = vmatpush1.msra.mxu0 0.0
    %1074 = vmatprep.subr.mxu0 0.0
    %1075 = vmatpush1.msra.mxu0 0.0
    %1076 = vmatprep.subr.mxu0 0.0
    %1077 = vmatpush1.msra.mxu0 0.0
    %1078 = vmatprep.subr.mxu0 0.0
    %1079 = vmatpush1.msra.mxu0 0.0
    %1080 = vmatprep.subr.mxu0 0.0
    %1081 = vmatpush1.msra.mxu0 0.0
    %1082 = vmatprep.subr.mxu0 0.0
    %1083 = vmatpush1.msra.mxu0 0.0
    %1084 = vmatprep.subr.mxu0 0.0
    %1085 = vmatpush1.msra.mxu0 0.0
    %1086 = vmatprep.subr.mxu0 0.0
    %1087 = vmatpush1.msra.mxu0 0.0
    %1088 = vmatprep.subr.mxu0 0.0
    %1089 = vmatpush1.msra.mxu0 0.0
    %1090 = vmatprep.subr.mxu0 0.0
    %1091 = vmatpush1.msra.mxu0 0.0
    %1092 = vmatprep.mubr.f32.mxu0 0.0
    %1093 = vmatmul.mubr.f32.gmra.mrb[0].mxu0 %v669
    %v1094 = vpop.f32.mrb[0].mxu0
    %v1095 = vadd.f32 %v1026, %v1094
    %v1096 = vpop.f32.mrb[0].mxu0
    %1097 = vmatprep.mubr.f32.mxu0 0.0
    %1098 = vmatmul.mubr.f32.gmra.mrb[0].mxu0 %v672
    %v1099 = vpop.f32.mrb[0].mxu0
    %v1100 = vadd.f32 %v1026, %v1099
    %v1101 = vpop.f32.mrb[0].mxu0
    %1102 = vmatprep.mubr.f32.mxu0 0.0
    %1103 = vmatmul.mubr.f32.gmra.mrb[0].mxu0 %v675
    %v1104 = vpop.f32.mrb[0].mxu0
    %v1105 = vadd.f32 %v1026, %v1104
    %v1106 = vpop.f32.mrb[0].mxu0
    %1107 = vmatprep.mubr.f32.mxu0 0.0
    %1108 = vmatmul.mubr.f32.gmra.mrb[0].mxu0 %v678
    %v1109 = vpop.f32.mrb[0].mxu0
    %v1110 = vadd.f32 %v1026, %v1109
    %v1111 = vpop.f32.mrb[0].mxu0
    %1112 = vmatprep.mubr.f32.mxu0 0.0
    %1113 = vmatmul.mubr.f32.gmra.mrb[0].mxu0 %v681
    %v1114 = vpop.f32.mrb[0].mxu0
    %v1115 = vadd.f32 %v1026, %v1114
    %v1116 = vpop.f32.mrb[0].mxu0
    %1117 = vmatprep.mubr.f32.mxu0 0.0
    %1118 = vmatmul.mubr.f32.gmra.mrb[0].mxu0 %v684
    %v1119 = vpop.f32.mrb[0].mxu0
    %v1120 = vadd.f32 %v1026, %v1119
    %v1121 = vpop.f32.mrb[0].mxu0
    %1122 = vmatprep.mubr.f32.mxu0 0.0
    %1123 = vmatmul.mubr.f32.gmra.mrb[0].mxu0 %v687
    %v1124 = vpop.f32.mrb[0].mxu0
    %v1125 = vadd.f32 %v1026, %v1124
    %v1126 = vpop.f32.mrb[0].mxu0
    %1127 = vmatprep.mubr.f32.mxu0 0.0
    %1128 = vmatmul.mubr.f32.gmra.mrb[0].mxu0 %v690
    %v1129 = vpop.f32.mrb[0].mxu0
    %v1130 = vadd.f32 %v1026, %v1129
    %v1131 = vpop.f32.mrb[0].mxu0
    %1132 = vmatprep.mubr.f32.mxu0 0.0
    %1133 = vmatmul.mubr.f32.gmra.mrb[0].mxu0 %v693
    %v1134 = vpop.f32.mrb[0].mxu0
    %v1135 = vadd.f32 %v1026, %v1134
    %v1136 = vpop.f32.mrb[0].mxu0
    %1137 = vmatprep.mubr.f32.mxu0 0.0
    %1138 = vmatmul.mubr.f32.gmra.mrb[0].mxu0 %v696
    %v1139 = vpop.f32.mrb[0].mxu0
    %v1140 = vadd.f32 %v1026, %v1139
    %v1141 = vpop.f32.mrb[0].mxu0
    %1142 = vmatprep.mubr.f32.mxu0 0.0
    %1143 = vmatmul.mubr.f32.gmra.mrb[0].mxu0 %v699
    %v1144 = vpop.f32.mrb[0].mxu0
    %v1145 = vadd.f32 %v1026, %v1144
    %v1146 = vpop.f32.mrb[0].mxu0
    %1147 = vmatprep.mubr.f32.mxu0 0.0
    %1148 = vmatmul.mubr.f32.gmra.mrb[0].mxu0 %v702
    %v1149 = vpop.f32.mrb[0].mxu0
    %v1150 = vadd.f32 %v1026, %v1149
    %v1151 = vpop.f32.mrb[0].mxu0
    %1152 = vmatprep.mubr.f32.mxu0 0.0
    %1153 = vmatmul.mubr.f32.gmra.mrb[0].mxu0 %v705
    %v1154 = vpop.f32.mrb[0].mxu0
    %v1155 = vadd.f32 %v1026, %v1154
    %v1156 = vpop.f32.mrb[0].mxu0
    %1157 = vmatprep.mubr.f32.mxu0 0.0
    %1158 = vmatmul.mubr.f32.gmra.mrb[0].mxu0 %v708
    %v1159 = vpop.f32.mrb[0].mxu0
    %v1160 = vadd.f32 %v1026, %v1159
    %v1161 = vpop.f32.mrb[0].mxu0
    %1162 = vmatprep.mubr.f32.mxu0 0.0
    %1163 = vmatmul.mubr.f32.gmra.mrb[0].mxu0 %v711
    %v1164 = vpop.f32.mrb[0].mxu0
    %v1165 = vadd.f32 %v1026, %v1164
    %v1166 = vpop.f32.mrb[0].mxu0
    %1167 = vmatprep.mubr.f32.mxu0 0.0
    %1168 = vmatmul.mubr.f32.gmra.mrb[0].mxu0 %v714
    %v1169 = vpop.f32.mrb[0].mxu0
    %v1170 = vadd.f32 %v1026, %v1169
    %v1171 = vpop.f32.mrb[0].mxu0
    %1172 = vdwg.mxu0
    %v1173 = vld [vmem:[%s3] sm:$0xff]
    %v1174 = vld [vmem:[%s3 + $0x8] sm:$0xff]
    %v1175 = vld [vmem:[%s3 + $0x10] sm:$0xff]
    %v1176 = vld [vmem:[%s3 + $0x18] sm:$0xff]
    %v1177 = vld [vmem:[%s3 + $0x20] sm:$0xff]
    %v1178 = vld [vmem:[%s3 + $0x28] sm:$0xff]
    %v1179 = vld [vmem:[%s3 + $0x30] sm:$0xff]
    %v1180 = vld [vmem:[%s3 + $0x38] sm:$0xff]
    %v1181 = vld [vmem:[%s3 + $0x40] sm:$0xff]
    %v1182 = vld [vmem:[%s3 + $0x48] sm:$0xff]
    %v1183 = vld [vmem:[%s3 + $0x50] sm:$0xff]
    %v1184 = vld [vmem:[%s3 + $0x58] sm:$0xff]
    %v1185 = vld [vmem:[%s3 + $0x60] sm:$0xff]
    %v1186 = vld [vmem:[%s3 + $0x68] sm:$0xff]
    %v1187 = vld [vmem:[%s3 + $0x70] sm:$0xff]
    %v1188 = vld [vmem:[%s3 + $0x78] sm:$0xff]
    %vm1189 = vcmask 64512
    %v1191 = vsel %vm1189, %v783, 0
    %v1194 = vsel %vm1189, %v788, 0
    %v1197 = vsel %vm1189, %v793, 0
    %v1200 = vsel %vm1189, %v798, 0
    %v1203 = vsel %vm1189, %v803, 0
    %v1206 = vsel %vm1189, %v808, 0
    %v1209 = vsel %vm1189, %v813, 0
    %v1212 = vsel %vm1189, %v818, 0
    %v1215 = vsel %vm1189, %v823, 0
    %v1218 = vsel %vm1189, %v828, 0
    %v1221 = vsel %vm1189, %v833, 0
    %v1224 = vsel %vm1189, %v838, 0
    %v1227 = vsel %vm1189, %v843, 0
    %v1230 = vsel %vm1189, %v848, 0
    %v1233 = vsel %vm1189, %v853, 0
    %v1236 = vsel %vm1189, %v858, 0
    %v1239 = vsel %vm1189, %v939, 0
    %v1242 = vsel %vm1189, %v944, 0
    %v1245 = vsel %vm1189, %v949, 0
    %v1248 = vsel %vm1189, %v954, 0
    %v1251 = vsel %vm1189, %v959, 0
    %v1254 = vsel %vm1189, %v964, 0
    %v1257 = vsel %vm1189, %v969, 0
    %v1260 = vsel %vm1189, %v974, 0
    %v1263 = vsel %vm1189, %v979, 0
    %v1266 = vsel %vm1189, %v984, 0
    %v1269 = vsel %vm1189, %v989, 0
    %v1272 = vsel %vm1189, %v994, 0
    %v1275 = vsel %vm1189, %v999, 0
    %v1278 = vsel %vm1189, %v1004, 0
    %v1281 = vsel %vm1189, %v1009, 0
    %v1284 = vsel %vm1189, %v1014, 0
    %1286 = vmatprep.subr.mxu0 0.0
    %1287 = vmatpush1.xpose.msra.mxu0 %v1239
    %1288 = vmatprep.subr.mxu0 0.0
    %1289 = vmatpush1.xpose.msra.mxu0 %v1242
    %1290 = vmatprep.subr.mxu0 0.0
    %1291 = vmatpush1.xpose.msra.mxu0 %v1245
    %1292 = vmatprep.subr.mxu0 0.0
    %1293 = vmatpush1.xpose.msra.mxu0 %v1248
    %1294 = vmatprep.subr.mxu0 0.0
    %1295 = vmatpush1.xpose.msra.mxu0 %v1251
    %1296 = vmatprep.subr.mxu0 0.0
    %1297 = vmatpush1.xpose.msra.mxu0 %v1254
    %1298 = vmatprep.subr.mxu0 0.0
    %1299 = vmatpush1.xpose.msra.mxu0 %v1257
    %1300 = vmatprep.subr.mxu0 0.0
    %1301 = vmatpush1.xpose.msra.mxu0 %v1260
    %1302 = vmatprep.subr.mxu0 0.0
    %1303 = vmatpush1.xpose.msra.mxu0 %v1263
    %1304 = vmatprep.subr.mxu0 0.0
    %1305 = vmatpush1.xpose.msra.mxu0 %v1266
    %1306 = vmatprep.subr.mxu0 0.0
    %1307 = vmatpush1.xpose.msra.mxu0 %v1269
    %1308 = vmatprep.subr.mxu0 0.0
    %1309 = vmatpush1.xpose.msra.mxu0 %v1272
    %1310 = vmatprep.subr.mxu0 0.0
    %1311 = vmatpush1.xpose.msra.mxu0 %v1275
    %1312 = vmatprep.subr.mxu0 0.0
    %1313 = vmatpush1.xpose.msra.mxu0 %v1278
    %1314 = vmatprep.subr.mxu0 0.0
    %1315 = vmatpush1.xpose.msra.mxu0 %v1281
    %1316 = vmatprep.subr.mxu0 0.0
    %1317 = vmatpush1.xpose.msra.mxu0 %v1284
    %1318 = vmatprep.subr.mxu0 0.0
    %1319 = vmatpush1.xpose.msra.mxu0 0.0
    %1320 = vmatprep.subr.mxu0 0.0
    %1321 = vmatpush1.xpose.msra.mxu0 0.0
    %1322 = vmatprep.subr.mxu0 0.0
    %1323 = vmatpush1.xpose.msra.mxu0 0.0
    %1324 = vmatprep.subr.mxu0 0.0
    %1325 = vmatpush1.xpose.msra.mxu0 0.0
    %1326 = vmatprep.subr.mxu0 0.0
    %1327 = vmatpush1.xpose.msra.mxu0 0.0
    %1328 = vmatprep.subr.mxu0 0.0
    %1329 = vmatpush1.xpose.msra.mxu0 0.0
    %1330 = vmatprep.subr.mxu0 0.0
    %1331 = vmatpush1.xpose.msra.mxu0 0.0
    %1332 = vmatprep.subr.mxu0 0.0
    %1333 = vmatpush1.xpose.msra.mxu0 0.0
    %1334 = vmatprep.subr.mxu0 0.0
    %1335 = vmatpush1.xpose.msra.mxu0 0.0
    %1336 = vmatprep.subr.mxu0 0.0
    %1337 = vmatpush1.xpose.msra.mxu0 0.0
    %1338 = vmatprep.subr.mxu0 0.0
    %1339 = vmatpush1.xpose.msra.mxu0 0.0
    %1340 = vmatprep.subr.mxu0 0.0
    %1341 = vmatpush1.xpose.msra.mxu0 0.0
    %1342 = vmatprep.subr.mxu0 0.0
    %1343 = vmatpush1.xpose.msra.mxu0 0.0
    %1344 = vmatprep.subr.mxu0 0.0
    %1345 = vmatpush1.xpose.msra.mxu0 0.0
    %1346 = vmatprep.subr.mxu0 0.0
    %1347 = vmatpush1.xpose.msra.mxu0 0.0
    %1348 = vmatprep.subr.mxu0 0.0
    %1349 = vmatpush1.xpose.msra.mxu0 0.0
    %1350 = vmatprep.mubr.f32.mxu0 0.0
    %1351 = vmatmul.mubr.f32.gmra.mrb[0].mxu0 %v1191
    %v1352 = vpop.f32.mrb[0].mxu0
    %v1353 = vadd.f32 %v1173, %v1352
    %v1354 = vpop.f32.mrb[0].mxu0
    %1355 = vmatprep.mubr.f32.mxu0 0.0
    %1356 = vmatmul.mubr.f32.gmra.mrb[0].mxu0 %v1194
    %v1357 = vpop.f32.mrb[0].mxu0
    %v1358 = vadd.f32 %v1174, %v1357
    %v1359 = vpop.f32.mrb[0].mxu0
    %1360 = vmatprep.mubr.f32.mxu0 0.0
    %1361 = vmatmul.mubr.f32.gmra.mrb[0].mxu0 %v1197
    %v1362 = vpop.f32.mrb[0].mxu0
    %v1363 = vadd.f32 %v1175, %v1362
    %v1364 = vpop.f32.mrb[0].mxu0
    %1365 = vmatprep.mubr.f32.mxu0 0.0
    %1366 = vmatmul.mubr.f32.gmra.mrb[0].mxu0 %v1200
    %v1367 = vpop.f32.mrb[0].mxu0
    %v1368 = vadd.f32 %v1176, %v1367
    %v1369 = vpop.f32.mrb[0].mxu0
    %1370 = vmatprep.mubr.f32.mxu0 0.0
    %1371 = vmatmul.mubr.f32.gmra.mrb[0].mxu0 %v1203
    %v1372 = vpop.f32.mrb[0].mxu0
    %v1373 = vadd.f32 %v1177, %v1372
    %v1374 = vpop.f32.mrb[0].mxu0
    %1375 = vmatprep.mubr.f32.mxu0 0.0
    %1376 = vmatmul.mubr.f32.gmra.mrb[0].mxu0 %v1206
    %v1377 = vpop.f32.mrb[0].mxu0
    %v1378 = vadd.f32 %v1178, %v1377
    %v1379 = vpop.f32.mrb[0].mxu0
    %1380 = vmatprep.mubr.f32.mxu0 0.0
    %1381 = vmatmul.mubr.f32.gmra.mrb[0].mxu0 %v1209
    %v1382 = vpop.f32.mrb[0].mxu0
    %v1383 = vadd.f32 %v1179, %v1382
    %v1384 = vpop.f32.mrb[0].mxu0
    %1385 = vmatprep.mubr.f32.mxu0 0.0
    %1386 = vmatmul.mubr.f32.gmra.mrb[0].mxu0 %v1212
    %v1387 = vpop.f32.mrb[0].mxu0
    %v1388 = vadd.f32 %v1180, %v1387
    %v1389 = vpop.f32.mrb[0].mxu0
    %1390 = vmatprep.mubr.f32.mxu0 0.0
    %1391 = vmatmul.mubr.f32.gmra.mrb[0].mxu0 %v1215
    %v1392 = vpop.f32.mrb[0].mxu0
    %v1393 = vadd.f32 %v1181, %v1392
    %v1394 = vpop.f32.mrb[0].mxu0
    %1395 = vmatprep.mubr.f32.mxu0 0.0
    %1396 = vmatmul.mubr.f32.gmra.mrb[0].mxu0 %v1218
    %v1397 = vpop.f32.mrb[0].mxu0
    %v1398 = vadd.f32 %v1182, %v1397
    %v1399 = vpop.f32.mrb[0].mxu0
    %1400 = vmatprep.mubr.f32.mxu0 0.0
    %1401 = vmatmul.mubr.f32.gmra.mrb[0].mxu0 %v1221
    %v1402 = vpop.f32.mrb[0].mxu0
    %v1403 = vadd.f32 %v1183, %v1402
    %v1404 = vpop.f32.mrb[0].mxu0
    %1405 = vmatprep.mubr.f32.mxu0 0.0
    %1406 = vmatmul.mubr.f32.gmra.mrb[0].mxu0 %v1224
    %v1407 = vpop.f32.mrb[0].mxu0
    %v1408 = vadd.f32 %v1184, %v1407
    %v1409 = vpop.f32.mrb[0].mxu0
    %1410 = vmatprep.mubr.f32.mxu0 0.0
    %1411 = vmatmul.mubr.f32.gmra.mrb[0].mxu0 %v1227
    %v1412 = vpop.f32.mrb[0].mxu0
    %v1413 = vadd.f32 %v1185, %v1412
    %v1414 = vpop.f32.mrb[0].mxu0
    %1415 = vmatprep.mubr.f32.mxu0 0.0
    %1416 = vmatmul.mubr.f32.gmra.mrb[0].mxu0 %v1230
    %v1417 = vpop.f32.mrb[0].mxu0
    %v1418 = vadd.f32 %v1186, %v1417
    %v1419 = vpop.f32.mrb[0].mxu0
    %1420 = vmatprep.mubr.f32.mxu0 0.0
    %1421 = vmatmul.mubr.f32.gmra.mrb[0].mxu0 %v1233
    %v1422 = vpop.f32.mrb[0].mxu0
    %v1423 = vadd.f32 %v1187, %v1422
    %v1424 = vpop.f32.mrb[0].mxu0
    %1425 = vmatprep.mubr.f32.mxu0 0.0
    %1426 = vmatmul.mubr.f32.gmra.mrb[0].mxu0 %v1236
    %v1427 = vpop.f32.mrb[0].mxu0
    %v1428 = vadd.f32 %v1188, %v1427
    %v1429 = vpop.f32.mrb[0].mxu0
    %1430 = vdwg.mxu0
    %1431 = vmax.xlane.f32.xlu0 %v1353
    %v1432 = vpop.xlane.xlu0 %1431
    %1433 = vmax.xlane.f32.xlu0 %v1358
    %v1434 = vpop.xlane.xlu0 %1433
    %1435 = vmax.xlane.f32.xlu0 %v1363
    %v1436 = vpop.xlane.xlu0 %1435
    %1437 = vmax.xlane.f32.xlu0 %v1368
    %v1438 = vpop.xlane.xlu0 %1437
    %1439 = vmax.xlane.f32.xlu0 %v1373
    %v1440 = vpop.xlane.xlu0 %1439
    %1441 = vmax.xlane.f32.xlu0 %v1378
    %v1442 = vpop.xlane.xlu0 %1441
    %1443 = vmax.xlane.f32.xlu0 %v1383
    %v1444 = vpop.xlane.xlu0 %1443
    %1445 = vmax.xlane.f32.xlu0 %v1388
    %v1446 = vpop.xlane.xlu0 %1445
    %1447 = vmax.xlane.f32.xlu0 %v1393
    %v1448 = vpop.xlane.xlu0 %1447
    %1449 = vmax.xlane.f32.xlu0 %v1398
    %v1450 = vpop.xlane.xlu0 %1449
    %1451 = vmax.xlane.f32.xlu0 %v1403
    %v1452 = vpop.xlane.xlu0 %1451
    %1453 = vmax.xlane.f32.xlu0 %v1408
    %v1454 = vpop.xlane.xlu0 %1453
    %1455 = vmax.xlane.f32.xlu0 %v1413
    %v1456 = vpop.xlane.xlu0 %1455
    %1457 = vmax.xlane.f32.xlu0 %v1418
    %v1458 = vpop.xlane.xlu0 %1457
    %1459 = vmax.xlane.f32.xlu0 %v1423
    %v1460 = vpop.xlane.xlu0 %1459
    %1461 = vmax.xlane.f32.xlu0 %v1428
    %v1462 = vpop.xlane.xlu0 %1461
    %v1463 = vsub.f32 %v1353, %v1432
    %v1464 = vsub.f32 %v1358, %v1434
    %v1465 = vsub.f32 %v1363, %v1436
    %v1466 = vsub.f32 %v1368, %v1438
    %v1467 = vsub.f32 %v1373, %v1440
    %v1468 = vsub.f32 %v1378, %v1442
    %v1469 = vsub.f32 %v1383, %v1444
    %v1470 = vsub.f32 %v1388, %v1446
    %v1471 = vsub.f32 %v1393, %v1448
    %v1472 = vsub.f32 %v1398, %v1450
    %v1473 = vsub.f32 %v1403, %v1452
    %v1474 = vsub.f32 %v1408, %v1454
    %v1475 = vsub.f32 %v1413, %v1456
    %v1476 = vsub.f32 %v1418, %v1458
    %v1477 = vsub.f32 %v1423, %v1460
    %v1478 = vsub.f32 %v1428, %v1462
    %v1479 = vmul.f32 %v1463, 1.442695
    %v1480 = vpow.pop %v1479
    %v1481 = vmul.f32 %v1464, 1.442695
    %v1482 = vpow.pop %v1481
    %v1483 = vmul.f32 %v1465, 1.442695
    %v1484 = vpow.pop %v1483
    %v1485 = vmul.f32 %v1466, 1.442695
    %v1486 = vpow.pop %v1485
    %v1487 = vmul.f32 %v1467, 1.442695
    %v1488 = vpow.pop %v1487
    %v1489 = vmul.f32 %v1468, 1.442695
    %v1490 = vpow.pop %v1489
    %v1491 = vmul.f32 %v1469, 1.442695
    %v1492 = vpow.pop %v1491
    %v1493 = vmul.f32 %v1470, 1.442695
    %v1494 = vpow.pop %v1493
    %v1495 = vmul.f32 %v1471, 1.442695
    %v1496 = vpow.pop %v1495
    %v1497 = vmul.f32 %v1472, 1.442695
    %v1498 = vpow.pop %v1497
    %v1499 = vmul.f32 %v1473, 1.442695
    %v1500 = vpow.pop %v1499
    %v1501 = vmul.f32 %v1474, 1.442695
    %v1502 = vpow.pop %v1501
    %v1503 = vmul.f32 %v1475, 1.442695
    %v1504 = vpow.pop %v1503
    %v1505 = vmul.f32 %v1476, 1.442695
    %v1506 = vpow.pop %v1505
    %v1507 = vmul.f32 %v1477, 1.442695
    %v1508 = vpow.pop %v1507
    %v1509 = vmul.f32 %v1478, 1.442695
    %v1510 = vpow.pop %v1509
    %1511 = vadd.xlane.f32.xlu0 %v1480
    %v1512 = vpop.xlane.xlu0 %1511
    %1513 = vadd.xlane.f32.xlu0 %v1482
    %v1514 = vpop.xlane.xlu0 %1513
    %1515 = vadd.xlane.f32.xlu0 %v1484
    %v1516 = vpop.xlane.xlu0 %1515
    %1517 = vadd.xlane.f32.xlu0 %v1486
    %v1518 = vpop.xlane.xlu0 %1517
    %1519 = vadd.xlane.f32.xlu0 %v1488
    %v1520 = vpop.xlane.xlu0 %1519
    %1521 = vadd.xlane.f32.xlu0 %v1490
    %v1522 = vpop.xlane.xlu0 %1521
    %1523 = vadd.xlane.f32.xlu0 %v1492
    %v1524 = vpop.xlane.xlu0 %1523
    %1525 = vadd.xlane.f32.xlu0 %v1494
    %v1526 = vpop.xlane.xlu0 %1525
    %1527 = vadd.xlane.f32.xlu0 %v1496
    %v1528 = vpop.xlane.xlu0 %1527
    %1529 = vadd.xlane.f32.xlu0 %v1498
    %v1530 = vpop.xlane.xlu0 %1529
    %1531 = vadd.xlane.f32.xlu0 %v1500
    %v1532 = vpop.xlane.xlu0 %1531
    %1533 = vadd.xlane.f32.xlu0 %v1502
    %v1534 = vpop.xlane.xlu0 %1533
    %1535 = vadd.xlane.f32.xlu0 %v1504
    %v1536 = vpop.xlane.xlu0 %1535
    %1537 = vadd.xlane.f32.xlu0 %v1506
    %v1538 = vpop.xlane.xlu0 %1537
    %1539 = vadd.xlane.f32.xlu0 %v1508
    %v1540 = vpop.xlane.xlu0 %1539
    %1541 = vadd.xlane.f32.xlu0 %v1510
    %v1542 = vpop.xlane.xlu0 %1541
    %v1543 = vrcp.pop %v1512
    %v1544 = vmul.f32 %v1480, %v1543
    %v1545 = vrcp.pop %v1514
    %v1546 = vmul.f32 %v1482, %v1545
    %v1547 = vrcp.pop %v1516
    %v1548 = vmul.f32 %v1484, %v1547
    %v1549 = vrcp.pop %v1518
    %v1550 = vmul.f32 %v1486, %v1549
    %v1551 = vrcp.pop %v1520
    %v1552 = vmul.f32 %v1488, %v1551
    %v1553 = vrcp.pop %v1522
    %v1554 = vmul.f32 %v1490, %v1553
    %v1555 = vrcp.pop %v1524
    %v1556 = vmul.f32 %v1492, %v1555
    %v1557 = vrcp.pop %v1526
    %v1558 = vmul.f32 %v1494, %v1557
    %v1559 = vrcp.pop %v1528
    %v1560 = vmul.f32 %v1496, %v1559
    %v1561 = vrcp.pop %v1530
    %v1562 = vmul.f32 %v1498, %v1561
    %v1563 = vrcp.pop %v1532
    %v1564 = vmul.f32 %v1500, %v1563
    %v1565 = vrcp.pop %v1534
    %v1566 = vmul.f32 %v1502, %v1565
    %v1567 = vrcp.pop %v1536
    %v1568 = vmul.f32 %v1504, %v1567
    %v1569 = vrcp.pop %v1538
    %v1570 = vmul.f32 %v1506, %v1569
    %v1571 = vrcp.pop %v1540
    %v1572 = vmul.f32 %v1508, %v1571
    %v1573 = vrcp.pop %v1542
    %v1574 = vmul.f32 %v1510, %v1573
    %s1575 = scalar_lea.vmem %s6, 32
    %v1576 = vld [vmem:[%s1575] sm:$0xff]
    %v1577 = vld [vmem:[%s1575 + $0x8] sm:$0xff]
    %v1578 = vld [vmem:[%s1575 + $0x10] sm:$0xff]
    %v1579 = vld [vmem:[%s1575 + $0x18] sm:$0xff]
    %s1580 = scalar_lea.vmem [#allocation7], 1
    %v1581 = vld [vmem:[%s1580] sm:$0x1]
    %v1583 = vlaneseq
    %v1584 = vshrl.u32 %v1583, 7
    %v1585 = vsub.s32 0, %v1584
    %v1586 = vrot.slane %v1581, %v1585
    %1588 = vmatprep.subr.mxu0 0.0
    %1589 = vmatpush1.msra.mxu0 %v1576
    %1590 = vmatprep.subr.mxu0 0.0
    %1591 = vmatpush1.msra.mxu0 %v1577
    %1592 = vmatprep.subr.mxu0 0.0
    %1593 = vmatpush1.msra.mxu0 %v1578
    %1594 = vmatprep.subr.mxu0 0.0
    %1595 = vmatpush1.msra.mxu0 %v1579
    %1596 = vmatprep.subr.mxu0 0.0
    %1597 = vmatpush1.msra.mxu0 0.0
    %1598 = vmatprep.subr.mxu0 0.0
    %1599 = vmatpush1.msra.mxu0 0.0
    %1600 = vmatprep.subr.mxu0 0.0
    %1601 = vmatpush1.msra.mxu0 0.0
    %1602 = vmatprep.subr.mxu0 0.0
    %1603 = vmatpush1.msra.mxu0 0.0
    %1604 = vmatprep.subr.mxu0 0.0
    %1605 = vmatpush1.msra.mxu0 0.0
    %1606 = vmatprep.subr.mxu0 0.0
    %1607 = vmatpush1.msra.mxu0 0.0
    %1608 = vmatprep.subr.mxu0 0.0
    %1609 = vmatpush1.msra.mxu0 0.0
    %1610 = vmatprep.subr.mxu0 0.0
    %1611 = vmatpush1.msra.mxu0 0.0
    %1612 = vmatprep.subr.mxu0 0.0
    %1613 = vmatpush1.msra.mxu0 0.0
    %1614 = vmatprep.subr.mxu0 0.0
    %1615 = vmatpush1.msra.mxu0 0.0
    %1616 = vmatprep.subr.mxu0 0.0
    %1617 = vmatpush1.msra.mxu0 0.0
    %1618 = vmatprep.subr.mxu0 0.0
    %1619 = vmatpush1.msra.mxu0 0.0
    %1620 = vmatprep.subr.mxu0 0.0
    %1621 = vmatpush1.msra.mxu0 0.0
    %1622 = vmatprep.subr.mxu0 0.0
    %1623 = vmatpush1.msra.mxu0 0.0
    %1624 = vmatprep.subr.mxu0 0.0
    %1625 = vmatpush1.msra.mxu0 0.0
    %1626 = vmatprep.subr.mxu0 0.0
    %1627 = vmatpush1.msra.mxu0 0.0
    %1628 = vmatprep.subr.mxu0 0.0
    %1629 = vmatpush1.msra.mxu0 0.0
    %1630 = vmatprep.subr.mxu0 0.0
    %1631 = vmatpush1.msra.mxu0 0.0
    %1632 = vmatprep.subr.mxu0 0.0
    %1633 = vmatpush1.msra.mxu0 0.0
    %1634 = vmatprep.subr.mxu0 0.0
    %1635 = vmatpush1.msra.mxu0 0.0
    %1636 = vmatprep.subr.mxu0 0.0
    %1637 = vmatpush1.msra.mxu0 0.0
    %1638 = vmatprep.subr.mxu0 0.0
    %1639 = vmatpush1.msra.mxu0 0.0
    %1640 = vmatprep.subr.mxu0 0.0
    %1641 = vmatpush1.msra.mxu0 0.0
    %1642 = vmatprep.subr.mxu0 0.0
    %1643 = vmatpush1.msra.mxu0 0.0
    %1644 = vmatprep.subr.mxu0 0.0
    %1645 = vmatpush1.msra.mxu0 0.0
    %1646 = vmatprep.subr.mxu0 0.0
    %1647 = vmatpush1.msra.mxu0 0.0
    %1648 = vmatprep.subr.mxu0 0.0
    %1649 = vmatpush1.msra.mxu0 0.0
    %1650 = vmatprep.subr.mxu0 0.0
    %1651 = vmatpush1.msra.mxu0 0.0
    %1652 = vmatprep.mubr.f32.mxu0 0.0
    %1653 = vmatmul.mubr.f32.gmra.mrb[0].mxu0 %v669
    %v1654 = vpop.f32.mrb[0].mxu0
    %v1655 = vadd.f32 %v1586, %v1654
    %v1656 = vpop.f32.mrb[0].mxu0
    %1657 = vmatprep.mubr.f32.mxu0 0.0
    %1658 = vmatmul.mubr.f32.gmra.mrb[0].mxu0 %v672
    %v1659 = vpop.f32.mrb[0].mxu0
    %v1660 = vadd.f32 %v1586, %v1659
    %v1661 = vpop.f32.mrb[0].mxu0
    %1662 = vmatprep.mubr.f32.mxu0 0.0
    %1663 = vmatmul.mubr.f32.gmra.mrb[0].mxu0 %v675
    %v1664 = vpop.f32.mrb[0].mxu0
    %v1665 = vadd.f32 %v1586, %v1664
    %v1666 = vpop.f32.mrb[0].mxu0
    %1667 = vmatprep.mubr.f32.mxu0 0.0
    %1668 = vmatmul.mubr.f32.gmra.mrb[0].mxu0 %v678
    %v1669 = vpop.f32.mrb[0].mxu0
    %v1670 = vadd.f32 %v1586, %v1669
    %v1671 = vpop.f32.mrb[0].mxu0
    %1672 = vmatprep.mubr.f32.mxu0 0.0
    %1673 = vmatmul.mubr.f32.gmra.mrb[0].mxu0 %v681
    %v1674 = vpop.f32.mrb[0].mxu0
    %v1675 = vadd.f32 %v1586, %v1674
    %v1676 = vpop.f32.mrb[0].mxu0
    %1677 = vmatprep.mubr.f32.mxu0 0.0
    %1678 = vmatmul.mubr.f32.gmra.mrb[0].mxu0 %v684
    %v1679 = vpop.f32.mrb[0].mxu0
    %v1680 = vadd.f32 %v1586, %v1679
    %v1681 = vpop.f32.mrb[0].mxu0
    %1682 = vmatprep.mubr.f32.mxu0 0.0
    %1683 = vmatmul.mubr.f32.gmra.mrb[0].mxu0 %v687
    %v1684 = vpop.f32.mrb[0].mxu0
    %v1685 = vadd.f32 %v1586, %v1684
    %v1686 = vpop.f32.mrb[0].mxu0
    %1687 = vmatprep.mubr.f32.mxu0 0.0
    %1688 = vmatmul.mubr.f32.gmra.mrb[0].mxu0 %v690
    %v1689 = vpop.f32.mrb[0].mxu0
    %v1690 = vadd.f32 %v1586, %v1689
    %v1691 = vpop.f32.mrb[0].mxu0
    %1692 = vmatprep.mubr.f32.mxu0 0.0
    %1693 = vmatmul.mubr.f32.gmra.mrb[0].mxu0 %v693
    %v1694 = vpop.f32.mrb[0].mxu0
    %v1695 = vadd.f32 %v1586, %v1694
    %v1696 = vpop.f32.mrb[0].mxu0
    %1697 = vmatprep.mubr.f32.mxu0 0.0
    %1698 = vmatmul.mubr.f32.gmra.mrb[0].mxu0 %v696
    %v1699 = vpop.f32.mrb[0].mxu0
    %v1700 = vadd.f32 %v1586, %v1699
    %v1701 = vpop.f32.mrb[0].mxu0
    %1702 = vmatprep.mubr.f32.mxu0 0.0
    %1703 = vmatmul.mubr.f32.gmra.mrb[0].mxu0 %v699
    %v1704 = vpop.f32.mrb[0].mxu0
    %v1705 = vadd.f32 %v1586, %v1704
    %v1706 = vpop.f32.mrb[0].mxu0
    %1707 = vmatprep.mubr.f32.mxu0 0.0
    %1708 = vmatmul.mubr.f32.gmra.mrb[0].mxu0 %v702
    %v1709 = vpop.f32.mrb[0].mxu0
    %v1710 = vadd.f32 %v1586, %v1709
    %v1711 = vpop.f32.mrb[0].mxu0
    %1712 = vmatprep.mubr.f32.mxu0 0.0
    %1713 = vmatmul.mubr.f32.gmra.mrb[0].mxu0 %v705
    %v1714 = vpop.f32.mrb[0].mxu0
    %v1715 = vadd.f32 %v1586, %v1714
    %v1716 = vpop.f32.mrb[0].mxu0
    %1717 = vmatprep.mubr.f32.mxu0 0.0
    %1718 = vmatmul.mubr.f32.gmra.mrb[0].mxu0 %v708
    %v1719 = vpop.f32.mrb[0].mxu0
    %v1720 = vadd.f32 %v1586, %v1719
    %v1721 = vpop.f32.mrb[0].mxu0
    %1722 = vmatprep.mubr.f32.mxu0 0.0
    %1723 = vmatmul.mubr.f32.gmra.mrb[0].mxu0 %v711
    %v1724 = vpop.f32.mrb[0].mxu0
    %v1725 = vadd.f32 %v1586, %v1724
    %v1726 = vpop.f32.mrb[0].mxu0
    %1727 = vmatprep.mubr.f32.mxu0 0.0
    %1728 = vmatmul.mubr.f32.gmra.mrb[0].mxu0 %v714
    %v1729 = vpop.f32.mrb[0].mxu0
    %v1730 = vadd.f32 %v1586, %v1729
    %v1731 = vpop.f32.mrb[0].mxu0
    %1732 = vdwg.mxu0
    %s1733 = scalar_lea.vmem %s8, 32
    %v1734 = vld [vmem:[%s1733] sm:$0xff]
    %v1735 = vld [vmem:[%s1733 + $0x8] sm:$0xff]
    %v1736 = vld [vmem:[%s1733 + $0x10] sm:$0xff]
    %v1737 = vld [vmem:[%s1733 + $0x18] sm:$0xff]
    %s1738 = scalar_lea.vmem [#allocation9], 1
    %v1739 = vld [vmem:[%s1738] sm:$0x1]
    %v1741 = vlaneseq
    %v1742 = vshrl.u32 %v1741, 7
    %v1743 = vsub.s32 0, %v1742
    %v1744 = vrot.slane %v1739, %v1743
    %1746 = vmatprep.subr.mxu0 0.0
    %1747 = vmatpush1.msra.mxu0 %v1734
    %1748 = vmatprep.subr.mxu0 0.0
    %1749 = vmatpush1.msra.mxu0 %v1735
    %1750 = vmatprep.subr.mxu0 0.0
    %1751 = vmatpush1.msra.mxu0 %v1736
    %1752 = vmatprep.subr.mxu0 0.0
    %1753 = vmatpush1.msra.mxu0 %v1737
    %1754 = vmatprep.subr.mxu0 0.0
    %1755 = vmatpush1.msra.mxu0 0.0
    %1756 = vmatprep.subr.mxu0 0.0
    %1757 = vmatpush1.msra.mxu0 0.0
    %1758 = vmatprep.subr.mxu0 0.0
    %1759 = vmatpush1.msra.mxu0 0.0
    %1760 = vmatprep.subr.mxu0 0.0
    %1761 = vmatpush1.msra.mxu0 0.0
    %1762 = vmatprep.subr.mxu0 0.0
    %1763 = vmatpush1.msra.mxu0 0.0
    %1764 = vmatprep.subr.mxu0 0.0
    %1765 = vmatpush1.msra.mxu0 0.0
    %1766 = vmatprep.subr.mxu0 0.0
    %1767 = vmatpush1.msra.mxu0 0.0
    %1768 = vmatprep.subr.mxu0 0.0
    %1769 = vmatpush1.msra.mxu0 0.0
    %1770 = vmatprep.subr.mxu0 0.0
    %1771 = vmatpush1.msra.mxu0 0.0
    %1772 = vmatprep.subr.mxu0 0.0
    %1773 = vmatpush1.msra.mxu0 0.0
    %1774 = vmatprep.subr.mxu0 0.0
    %1775 = vmatpush1.msra.mxu0 0.0
    %1776 = vmatprep.subr.mxu0 0.0
    %1777 = vmatpush1.msra.mxu0 0.0
    %1778 = vmatprep.subr.mxu0 0.0
    %1779 = vmatpush1.msra.mxu0 0.0
    %1780 = vmatprep.subr.mxu0 0.0
    %1781 = vmatpush1.msra.mxu0 0.0
    %1782 = vmatprep.subr.mxu0 0.0
    %1783 = vmatpush1.msra.mxu0 0.0
    %1784 = vmatprep.subr.mxu0 0.0
    %1785 = vmatpush1.msra.mxu0 0.0
    %1786 = vmatprep.subr.mxu0 0.0
    %1787 = vmatpush1.msra.mxu0 0.0
    %1788 = vmatprep.subr.mxu0 0.0
    %1789 = vmatpush1.msra.mxu0 0.0
    %1790 = vmatprep.subr.mxu0 0.0
    %1791 = vmatpush1.msra.mxu0 0.0
    %1792 = vmatprep.subr.mxu0 0.0
    %1793 = vmatpush1.msra.mxu0 0.0
    %1794 = vmatprep.subr.mxu0 0.0
    %1795 = vmatpush1.msra.mxu0 0.0
    %1796 = vmatprep.subr.mxu0 0.0
    %1797 = vmatpush1.msra.mxu0 0.0
    %1798 = vmatprep.subr.mxu0 0.0
    %1799 = vmatpush1.msra.mxu0 0.0
    %1800 = vmatprep.subr.mxu0 0.0
    %1801 = vmatpush1.msra.mxu0 0.0
    %1802 = vmatprep.subr.mxu0 0.0
    %1803 = vmatpush1.msra.mxu0 0.0
    %1804 = vmatprep.subr.mxu0 0.0
    %1805 = vmatpush1.msra.mxu0 0.0
    %1806 = vmatprep.subr.mxu0 0.0
    %1807 = vmatpush1.msra.mxu0 0.0
    %1808 = vmatprep.subr.mxu0 0.0
    %1809 = vmatpush1.msra.mxu0 0.0
    %1810 = vmatprep.mubr.f32.mxu0 0.0
    %1811 = vmatmul.mubr.f32.gmra.mrb[0].mxu0 %v669
    %v1812 = vpop.f32.mrb[0].mxu0
    %v1813 = vadd.f32 %v1744, %v1812
    %v1814 = vpop.f32.mrb[0].mxu0
    %1815 = vmatprep.mubr.f32.mxu0 0.0
    %1816 = vmatmul.mubr.f32.gmra.mrb[0].mxu0 %v672
    %v1817 = vpop.f32.mrb[0].mxu0
    %v1818 = vadd.f32 %v1744, %v1817
    %v1819 = vpop.f32.mrb[0].mxu0
    %1820 = vmatprep.mubr.f32.mxu0 0.0
    %1821 = vmatmul.mubr.f32.gmra.mrb[0].mxu0 %v675
    %v1822 = vpop.f32.mrb[0].mxu0
    %v1823 = vadd.f32 %v1744, %v1822
    %v1824 = vpop.f32.mrb[0].mxu0
    %1825 = vmatprep.mubr.f32.mxu0 0.0
    %1826 = vmatmul.mubr.f32.gmra.mrb[0].mxu0 %v678
    %v1827 = vpop.f32.mrb[0].mxu0
    %v1828 = vadd.f32 %v1744, %v1827
    %v1829 = vpop.f32.mrb[0].mxu0
    %1830 = vmatprep.mubr.f32.mxu0 0.0
    %1831 = vmatmul.mubr.f32.gmra.mrb[0].mxu0 %v681
    %v1832 = vpop.f32.mrb[0].mxu0
    %v1833 = vadd.f32 %v1744, %v1832
    %v1834 = vpop.f32.mrb[0].mxu0
    %1835 = vmatprep.mubr.f32.mxu0 0.0
    %1836 = vmatmul.mubr.f32.gmra.mrb[0].mxu0 %v684
    %v1837 = vpop.f32.mrb[0].mxu0
    %v1838 = vadd.f32 %v1744, %v1837
    %v1839 = vpop.f32.mrb[0].mxu0
    %1840 = vmatprep.mubr.f32.mxu0 0.0
    %1841 = vmatmul.mubr.f32.gmra.mrb[0].mxu0 %v687
    %v1842 = vpop.f32.mrb[0].mxu0
    %v1843 = vadd.f32 %v1744, %v1842
    %v1844 = vpop.f32.mrb[0].mxu0
    %1845 = vmatprep.mubr.f32.mxu0 0.0
    %1846 = vmatmul.mubr.f32.gmra.mrb[0].mxu0 %v690
    %v1847 = vpop.f32.mrb[0].mxu0
    %v1848 = vadd.f32 %v1744, %v1847
    %v1849 = vpop.f32.mrb[0].mxu0
    %1850 = vmatprep.mubr.f32.mxu0 0.0
    %1851 = vmatmul.mubr.f32.gmra.mrb[0].mxu0 %v693
    %v1852 = vpop.f32.mrb[0].mxu0
    %v1853 = vadd.f32 %v1744, %v1852
    %v1854 = vpop.f32.mrb[0].mxu0
    %1855 = vmatprep.mubr.f32.mxu0 0.0
    %1856 = vmatmul.mubr.f32.gmra.mrb[0].mxu0 %v696
    %v1857 = vpop.f32.mrb[0].mxu0
    %v1858 = vadd.f32 %v1744, %v1857
    %v1859 = vpop.f32.mrb[0].mxu0
    %1860 = vmatprep.mubr.f32.mxu0 0.0
    %1861 = vmatmul.mubr.f32.gmra.mrb[0].mxu0 %v699
    %v1862 = vpop.f32.mrb[0].mxu0
    %v1863 = vadd.f32 %v1744, %v1862
    %v1864 = vpop.f32.mrb[0].mxu0
    %1865 = vmatprep.mubr.f32.mxu0 0.0
    %1866 = vmatmul.mubr.f32.gmra.mrb[0].mxu0 %v702
    %v1867 = vpop.f32.mrb[0].mxu0
    %v1868 = vadd.f32 %v1744, %v1867
    %v1869 = vpop.f32.mrb[0].mxu0
    %1870 = vmatprep.mubr.f32.mxu0 0.0
    %1871 = vmatmul.mubr.f32.gmra.mrb[0].mxu0 %v705
    %v1872 = vpop.f32.mrb[0].mxu0
    %v1873 = vadd.f32 %v1744, %v1872
    %v1874 = vpop.f32.mrb[0].mxu0
    %1875 = vmatprep.mubr.f32.mxu0 0.0
    %1876 = vmatmul.mubr.f32.gmra.mrb[0].mxu0 %v708
    %v1877 = vpop.f32.mrb[0].mxu0
    %v1878 = vadd.f32 %v1744, %v1877
    %v1879 = vpop.f32.mrb[0].mxu0
    %1880 = vmatprep.mubr.f32.mxu0 0.0
    %1881 = vmatmul.mubr.f32.gmra.mrb[0].mxu0 %v711
    %v1882 = vpop.f32.mrb[0].mxu0
    %v1883 = vadd.f32 %v1744, %v1882
    %v1884 = vpop.f32.mrb[0].mxu0
    %1885 = vmatprep.mubr.f32.mxu0 0.0
    %1886 = vmatmul.mubr.f32.gmra.mrb[0].mxu0 %v714
    %v1887 = vpop.f32.mrb[0].mxu0
    %v1888 = vadd.f32 %v1744, %v1887
    %v1889 = vpop.f32.mrb[0].mxu0
    %1890 = vdwg.mxu0
    %s1891 = scalar_lea.vmem [#allocation10], 32
    %v1892 = vld [vmem:[%s1891] sm:$0xff]
    %v1893 = vld [vmem:[%s1891 + $0x8] sm:$0xff]
    %v1894 = vld [vmem:[%s1891 + $0x10] sm:$0xff]
    %v1895 = vld [vmem:[%s1891 + $0x18] sm:$0xff]
    %s1896 = scalar_lea.vmem [#allocation12], 1
    %v1897 = vld [vmem:[%s1896] sm:$0x1]
    %v1899 = vlaneseq
    %v1900 = vshrl.u32 %v1899, 7
    %v1901 = vsub.s32 0, %v1900
    %v1902 = vrot.slane %v1897, %v1901
    %1904 = vmatprep.subr.mxu0 0.0
    %1905 = vmatpush1.msra.mxu0 %v1892
    %1906 = vmatprep.subr.mxu0 0.0
    %1907 = vmatpush1.msra.mxu0 %v1893
    %1908 = vmatprep.subr.mxu0 0.0
    %1909 = vmatpush1.msra.mxu0 %v1894
    %1910 = vmatprep.subr.mxu0 0.0
    %1911 = vmatpush1.msra.mxu0 %v1895
    %1912 = vmatprep.subr.mxu0 0.0
    %1913 = vmatpush1.msra.mxu0 0.0
    %1914 = vmatprep.subr.mxu0 0.0
    %1915 = vmatpush1.msra.mxu0 0.0
    %1916 = vmatprep.subr.mxu0 0.0
    %1917 = vmatpush1.msra.mxu0 0.0
    %1918 = vmatprep.subr.mxu0 0.0
    %1919 = vmatpush1.msra.mxu0 0.0
    %1920 = vmatprep.subr.mxu0 0.0
    %1921 = vmatpush1.msra.mxu0 0.0
    %1922 = vmatprep.subr.mxu0 0.0
    %1923 = vmatpush1.msra.mxu0 0.0
    %1924 = vmatprep.subr.mxu0 0.0
    %1925 = vmatpush1.msra.mxu0 0.0
    %1926 = vmatprep.subr.mxu0 0.0
    %1927 = vmatpush1.msra.mxu0 0.0
    %1928 = vmatprep.subr.mxu0 0.0
    %1929 = vmatpush1.msra.mxu0 0.0
    %1930 = vmatprep.subr.mxu0 0.0
    %1931 = vmatpush1.msra.mxu0 0.0
    %1932 = vmatprep.subr.mxu0 0.0
    %1933 = vmatpush1.msra.mxu0 0.0
    %1934 = vmatprep.subr.mxu0 0.0
    %1935 = vmatpush1.msra.mxu0 0.0
    %1936 = vmatprep.subr.mxu0 0.0
    %1937 = vmatpush1.msra.mxu0 0.0
    %1938 = vmatprep.subr.mxu0 0.0
    %1939 = vmatpush1.msra.mxu0 0.0
    %1940 = vmatprep.subr.mxu0 0.0
    %1941 = vmatpush1.msra.mxu0 0.0
    %1942 = vmatprep.subr.mxu0 0.0
    %1943 = vmatpush1.msra.mxu0 0.0
    %1944 = vmatprep.subr.mxu0 0.0
    %1945 = vmatpush1.msra.mxu0 0.0
    %1946 = vmatprep.subr.mxu0 0.0
    %1947 = vmatpush1.msra.mxu0 0.0
    %1948 = vmatprep.subr.mxu0 0.0
    %1949 = vmatpush1.msra.mxu0 0.0
    %1950 = vmatprep.subr.mxu0 0.0
    %1951 = vmatpush1.msra.mxu0 0.0
    %1952 = vmatprep.subr.mxu0 0.0
    %1953 = vmatpush1.msra.mxu0 0.0
    %1954 = vmatprep.subr.mxu0 0.0
    %1955 = vmatpush1.msra.mxu0 0.0
    %1956 = vmatprep.subr.mxu0 0.0
    %1957 = vmatpush1.msra.mxu0 0.0
    %1958 = vmatprep.subr.mxu0 0.0
    %1959 = vmatpush1.msra.mxu0 0.0
    %1960 = vmatprep.subr.mxu0 0.0
    %1961 = vmatpush1.msra.mxu0 0.0
    %1962 = vmatprep.subr.mxu0 0.0
    %1963 = vmatpush1.msra.mxu0 0.0
    %1964 = vmatprep.subr.mxu0 0.0
    %1965 = vmatpush1.msra.mxu0 0.0
    %1966 = vmatprep.subr.mxu0 0.0
    %1967 = vmatpush1.msra.mxu0 0.0
    %1968 = vmatprep.mubr.f32.mxu0 0.0
    %1969 = vmatmul.mubr.f32.gmra.mrb[0].mxu0 %v669
    %v1970 = vpop.f32.mrb[0].mxu0
    %v1971 = vadd.f32 %v1902, %v1970
    %v1972 = vpop.f32.mrb[0].mxu0
    %1973 = vmatprep.mubr.f32.mxu0 0.0
    %1974 = vmatmul.mubr.f32.gmra.mrb[0].mxu0 %v672
    %v1975 = vpop.f32.mrb[0].mxu0
    %v1976 = vadd.f32 %v1902, %v1975
    %v1977 = vpop.f32.mrb[0].mxu0
    %1978 = vmatprep.mubr.f32.mxu0 0.0
    %1979 = vmatmul.mubr.f32.gmra.mrb[0].mxu0 %v675
    %v1980 = vpop.f32.mrb[0].mxu0
    %v1981 = vadd.f32 %v1902, %v1980
    %v1982 = vpop.f32.mrb[0].mxu0
    %1983 = vmatprep.mubr.f32.mxu0 0.0
    %1984 = vmatmul.mubr.f32.gmra.mrb[0].mxu0 %v678
    %v1985 = vpop.f32.mrb[0].mxu0
    %v1986 = vadd.f32 %v1902, %v1985
    %v1987 = vpop.f32.mrb[0].mxu0
    %1988 = vmatprep.mubr.f32.mxu0 0.0
    %1989 = vmatmul.mubr.f32.gmra.mrb[0].mxu0 %v681
    %v1990 = vpop.f32.mrb[0].mxu0
    %v1991 = vadd.f32 %v1902, %v1990
    %v1992 = vpop.f32.mrb[0].mxu0
    %1993 = vmatprep.mubr.f32.mxu0 0.0
    %1994 = vmatmul.mubr.f32.gmra.mrb[0].mxu0 %v684
    %v1995 = vpop.f32.mrb[0].mxu0
    %v1996 = vadd.f32 %v1902, %v1995
    %v1997 = vpop.f32.mrb[0].mxu0
    %1998 = vmatprep.mubr.f32.mxu0 0.0
    %1999 = vmatmul.mubr.f32.gmra.mrb[0].mxu0 %v687
    %v2000 = vpop.f32.mrb[0].mxu0
    %v2001 = vadd.f32 %v1902, %v2000
    %v2002 = vpop.f32.mrb[0].mxu0
    %2003 = vmatprep.mubr.f32.mxu0 0.0
    %2004 = vmatmul.mubr.f32.gmra.mrb[0].mxu0 %v690
    %v2005 = vpop.f32.mrb[0].mxu0
    %v2006 = vadd.f32 %v1902, %v2005
    %v2007 = vpop.f32.mrb[0].mxu0
    %2008 = vmatprep.mubr.f32.mxu0 0.0
    %2009 = vmatmul.mubr.f32.gmra.mrb[0].mxu0 %v693
    %v2010 = vpop.f32.mrb[0].mxu0
    %v2011 = vadd.f32 %v1902, %v2010
    %v2012 = vpop.f32.mrb[0].mxu0
    %2013 = vmatprep.mubr.f32.mxu0 0.0
    %2014 = vmatmul.mubr.f32.gmra.mrb[0].mxu0 %v696
    %v2015 = vpop.f32.mrb[0].mxu0
    %v2016 = vadd.f32 %v1902, %v2015
    %v2017 = vpop.f32.mrb[0].mxu0
    %2018 = vmatprep.mubr.f32.mxu0 0.0
    %2019 = vmatmul.mubr.f32.gmra.mrb[0].mxu0 %v699
    %v2020 = vpop.f32.mrb[0].mxu0
    %v2021 = vadd.f32 %v1902, %v2020
    %v2022 = vpop.f32.mrb[0].mxu0
    %2023 = vmatprep.mubr.f32.mxu0 0.0
    %2024 = vmatmul.mubr.f32.gmra.mrb[0].mxu0 %v702
    %v2025 = vpop.f32.mrb[0].mxu0
    %v2026 = vadd.f32 %v1902, %v2025
    %v2027 = vpop.f32.mrb[0].mxu0
    %2028 = vmatprep.mubr.f32.mxu0 0.0
    %2029 = vmatmul.mubr.f32.gmra.mrb[0].mxu0 %v705
    %v2030 = vpop.f32.mrb[0].mxu0
    %v2031 = vadd.f32 %v1902, %v2030
    %v2032 = vpop.f32.mrb[0].mxu0
    %2033 = vmatprep.mubr.f32.mxu0 0.0
    %2034 = vmatmul.mubr.f32.gmra.mrb[0].mxu0 %v708
    %v2035 = vpop.f32.mrb[0].mxu0
    %v2036 = vadd.f32 %v1902, %v2035
    %v2037 = vpop.f32.mrb[0].mxu0
    %2038 = vmatprep.mubr.f32.mxu0 0.0
    %2039 = vmatmul.mubr.f32.gmra.mrb[0].mxu0 %v711
    %v2040 = vpop.f32.mrb[0].mxu0
    %v2041 = vadd.f32 %v1902, %v2040
    %v2042 = vpop.f32.mrb[0].mxu0
    %2043 = vmatprep.mubr.f32.mxu0 0.0
    %2044 = vmatmul.mubr.f32.gmra.mrb[0].mxu0 %v714
    %v2045 = vpop.f32.mrb[0].mxu0
    %v2046 = vadd.f32 %v1902, %v2045
    %v2047 = vpop.f32.mrb[0].mxu0
    %2048 = vdwg.mxu0
    %s2049 = scalar_lea.vmem %s3, 128
    %v2050 = vld [vmem:[%s2049] sm:$0xff]
    %v2051 = vld [vmem:[%s2049 + $0x8] sm:$0xff]
    %v2052 = vld [vmem:[%s2049 + $0x10] sm:$0xff]
    %v2053 = vld [vmem:[%s2049 + $0x18] sm:$0xff]
    %v2054 = vld [vmem:[%s2049 + $0x20] sm:$0xff]
    %v2055 = vld [vmem:[%s2049 + $0x28] sm:$0xff]
    %v2056 = vld [vmem:[%s2049 + $0x30] sm:$0xff]
    %v2057 = vld [vmem:[%s2049 + $0x38] sm:$0xff]
    %v2058 = vld [vmem:[%s2049 + $0x40] sm:$0xff]
    %v2059 = vld [vmem:[%s2049 + $0x48] sm:$0xff]
    %v2060 = vld [vmem:[%s2049 + $0x50] sm:$0xff]
    %v2061 = vld [vmem:[%s2049 + $0x58] sm:$0xff]
    %v2062 = vld [vmem:[%s2049 + $0x60] sm:$0xff]
    %v2063 = vld [vmem:[%s2049 + $0x68] sm:$0xff]
    %v2064 = vld [vmem:[%s2049 + $0x70] sm:$0xff]
    %v2065 = vld [vmem:[%s2049 + $0x78] sm:$0xff]
    %v2067 = vsel %vm1189, %v1655, 0
    %v2070 = vsel %vm1189, %v1660, 0
    %v2073 = vsel %vm1189, %v1665, 0
    %v2076 = vsel %vm1189, %v1670, 0
    %v2079 = vsel %vm1189, %v1675, 0
    %v2082 = vsel %vm1189, %v1680, 0
    %v2085 = vsel %vm1189, %v1685, 0
    %v2088 = vsel %vm1189, %v1690, 0
    %v2091 = vsel %vm1189, %v1695, 0
    %v2094 = vsel %vm1189, %v1700, 0
    %v2097 = vsel %vm1189, %v1705, 0
    %v2100 = vsel %vm1189, %v1710, 0
    %v2103 = vsel %vm1189, %v1715, 0
    %v2106 = vsel %vm1189, %v1720, 0
    %v2109 = vsel %vm1189, %v1725, 0
    %v2112 = vsel %vm1189, %v1730, 0
    %v2115 = vsel %vm1189, %v1813, 0
    %v2118 = vsel %vm1189, %v1818, 0
    %v2121 = vsel %vm1189, %v1823, 0
    %v2124 = vsel %vm1189, %v1828, 0
    %v2127 = vsel %vm1189, %v1833, 0
    %v2130 = vsel %vm1189, %v1838, 0
    %v2133 = vsel %vm1189, %v1843, 0
    %v2136 = vsel %vm1189, %v1848, 0
    %v2139 = vsel %vm1189, %v1853, 0
    %v2142 = vsel %vm1189, %v1858, 0
    %v2145 = vsel %vm1189, %v1863, 0
    %v2148 = vsel %vm1189, %v1868, 0
    %v2151 = vsel %vm1189, %v1873, 0
    %v2154 = vsel %vm1189, %v1878, 0
    %v2157 = vsel %vm1189, %v1883, 0
    %v2160 = vsel %vm1189, %v1888, 0
    %2162 = vmatprep.subr.mxu0 0.0
    %2163 = vmatpush1.xpose.msra.mxu0 %v2115
    %2164 = vmatprep.subr.mxu0 0.0
    %2165 = vmatpush1.xpose.msra.mxu0 %v2118
    %2166 = vmatprep.subr.mxu0 0.0
    %2167 = vmatpush1.xpose.msra.mxu0 %v2121
    %2168 = vmatprep.subr.mxu0 0.0
    %2169 = vmatpush1.xpose.msra.mxu0 %v2124
    %2170 = vmatprep.subr.mxu0 0.0
    %2171 = vmatpush1.xpose.msra.mxu0 %v2127
    %2172 = vmatprep.subr.mxu0 0.0
    %2173 = vmatpush1.xpose.msra.mxu0 %v2130
    %2174 = vmatprep.subr.mxu0 0.0
    %2175 = vmatpush1.xpose.msra.mxu0 %v2133
    %2176 = vmatprep.subr.mxu0 0.0
    %2177 = vmatpush1.xpose.msra.mxu0 %v2136
    %2178 = vmatprep.subr.mxu0 0.0
    %2179 = vmatpush1.xpose.msra.mxu0 %v2139
    %2180 = vmatprep.subr.mxu0 0.0
    %2181 = vmatpush1.xpose.msra.mxu0 %v2142
    %2182 = vmatprep.subr.mxu0 0.0
    %2183 = vmatpush1.xpose.msra.mxu0 %v2145
    %2184 = vmatprep.subr.mxu0 0.0
    %2185 = vmatpush1.xpose.msra.mxu0 %v2148
    %2186 = vmatprep.subr.mxu0 0.0
    %2187 = vmatpush1.xpose.msra.mxu0 %v2151
    %2188 = vmatprep.subr.mxu0 0.0
    %2189 = vmatpush1.xpose.msra.mxu0 %v2154
    %2190 = vmatprep.subr.mxu0 0.0
    %2191 = vmatpush1.xpose.msra.mxu0 %v2157
    %2192 = vmatprep.subr.mxu0 0.0
    %2193 = vmatpush1.xpose.msra.mxu0 %v2160
    %2194 = vmatprep.subr.mxu0 0.0
    %2195 = vmatpush1.xpose.msra.mxu0 0.0
    %2196 = vmatprep.subr.mxu0 0.0
    %2197 = vmatpush1.xpose.msra.mxu0 0.0
    %2198 = vmatprep.subr.mxu0 0.0
    %2199 = vmatpush1.xpose.msra.mxu0 0.0
    %2200 = vmatprep.subr.mxu0 0.0
    %2201 = vmatpush1.xpose.msra.mxu0 0.0
    %2202 = vmatprep.subr.mxu0 0.0
    %2203 = vmatpush1.xpose.msra.mxu0 0.0
    %2204 = vmatprep.subr.mxu0 0.0
    %2205 = vmatpush1.xpose.msra.mxu0 0.0
    %2206 = vmatprep.subr.mxu0 0.0
    %2207 = vmatpush1.xpose.msra.mxu0 0.0
    %2208 = vmatprep.subr.mxu0 0.0
    %2209 = vmatpush1.xpose.msra.mxu0 0.0
    %2210 = vmatprep.subr.mxu0 0.0
    %2211 = vmatpush1.xpose.msra.mxu0 0.0
    %2212 = vmatprep.subr.mxu0 0.0
    %2213 = vmatpush1.xpose.msra.mxu0 0.0
    %2214 = vmatprep.subr.mxu0 0.0
    %2215 = vmatpush1.xpose.msra.mxu0 0.0
    %2216 = vmatprep.subr.mxu0 0.0
    %2217 = vmatpush1.xpose.msra.mxu0 0.0
    %2218 = vmatprep.subr.mxu0 0.0
    %2219 = vmatpush1.xpose.msra.mxu0 0.0
    %2220 = vmatprep.subr.mxu0 0.0
    %2221 = vmatpush1.xpose.msra.mxu0 0.0
    %2222 = vmatprep.subr.mxu0 0.0
    %2223 = vmatpush1.xpose.msra.mxu0 0.0
    %2224 = vmatprep.subr.mxu0 0.0
    %2225 = vmatpush1.xpose.msra.mxu0 0.0
    %2226 = vmatprep.mubr.f32.mxu0 0.0
    %2227 = vmatmul.mubr.f32.gmra.mrb[0].mxu0 %v2067
    %v2228 = vpop.f32.mrb[0].mxu0
    %v2229 = vadd.f32 %v2050, %v2228
    %v2230 = vpop.f32.mrb[0].mxu0
    %2231 = vmatprep.mubr.f32.mxu0 0.0
    %2232 = vmatmul.mubr.f32.gmra.mrb[0].mxu0 %v2070
    %v2233 = vpop.f32.mrb[0].mxu0
    %v2234 = vadd.f32 %v2051, %v2233
    %v2235 = vpop.f32.mrb[0].mxu0
    %2236 = vmatprep.mubr.f32.mxu0 0.0
    %2237 = vmatmul.mubr.f32.gmra.mrb[0].mxu0 %v2073
    %v2238 = vpop.f32.mrb[0].mxu0
    %v2239 = vadd.f32 %v2052, %v2238
    %v2240 = vpop.f32.mrb[0].mxu0
    %2241 = vmatprep.mubr.f32.mxu0 0.0
    %2242 = vmatmul.mubr.f32.gmra.mrb[0].mxu0 %v2076
    %v2243 = vpop.f32.mrb[0].mxu0
    %v2244 = vadd.f32 %v2053, %v2243
    %v2245 = vpop.f32.mrb[0].mxu0
    %2246 = vmatprep.mubr.f32.mxu0 0.0
    %2247 = vmatmul.mubr.f32.gmra.mrb[0].mxu0 %v2079
    %v2248 = vpop.f32.mrb[0].mxu0
    %v2249 = vadd.f32 %v2054, %v2248
    %v2250 = vpop.f32.mrb[0].mxu0
    %2251 = vmatprep.mubr.f32.mxu0 0.0
    %2252 = vmatmul.mubr.f32.gmra.mrb[0].mxu0 %v2082
    %v2253 = vpop.f32.mrb[0].mxu0
    %v2254 = vadd.f32 %v2055, %v2253
    %v2255 = vpop.f32.mrb[0].mxu0
    %2256 = vmatprep.mubr.f32.mxu0 0.0
    %2257 = vmatmul.mubr.f32.gmra.mrb[0].mxu0 %v2085
    %v2258 = vpop.f32.mrb[0].mxu0
    %v2259 = vadd.f32 %v2056, %v2258
    %v2260 = vpop.f32.mrb[0].mxu0
    %2261 = vmatprep.mubr.f32.mxu0 0.0
    %2262 = vmatmul.mubr.f32.gmra.mrb[0].mxu0 %v2088
    %v2263 = vpop.f32.mrb[0].mxu0
    %v2264 = vadd.f32 %v2057, %v2263
    %v2265 = vpop.f32.mrb[0].mxu0
    %2266 = vmatprep.mubr.f32.mxu0 0.0
    %2267 = vmatmul.mubr.f32.gmra.mrb[0].mxu0 %v2091
    %v2268 = vpop.f32.mrb[0].mxu0
    %v2269 = vadd.f32 %v2058, %v2268
    %v2270 = vpop.f32.mrb[0].mxu0
    %2271 = vmatprep.mubr.f32.mxu0 0.0
    %2272 = vmatmul.mubr.f32.gmra.mrb[0].mxu0 %v2094
    %v2273 = vpop.f32.mrb[0].mxu0
    %v2274 = vadd.f32 %v2059, %v2273
    %v2275 = vpop.f32.mrb[0].mxu0
    %2276 = vmatprep.mubr.f32.mxu0 0.0
    %2277 = vmatmul.mubr.f32.gmra.mrb[0].mxu0 %v2097
    %v2278 = vpop.f32.mrb[0].mxu0
    %v2279 = vadd.f32 %v2060, %v2278
    %v2280 = vpop.f32.mrb[0].mxu0
    %2281 = vmatprep.mubr.f32.mxu0 0.0
    %2282 = vmatmul.mubr.f32.gmra.mrb[0].mxu0 %v2100
    %v2283 = vpop.f32.mrb[0].mxu0
    %v2284 = vadd.f32 %v2061, %v2283
    %v2285 = vpop.f32.mrb[0].mxu0
    %2286 = vmatprep.mubr.f32.mxu0 0.0
    %2287 = vmatmul.mubr.f32.gmra.mrb[0].mxu0 %v2103
    %v2288 = vpop.f32.mrb[0].mxu0
    %v2289 = vadd.f32 %v2062, %v2288
    %v2290 = vpop.f32.mrb[0].mxu0
    %2291 = vmatprep.mubr.f32.mxu0 0.0
    %2292 = vmatmul.mubr.f32.gmra.mrb[0].mxu0 %v2106
    %v2293 = vpop.f32.mrb[0].mxu0
    %v2294 = vadd.f32 %v2063, %v2293
    %v2295 = vpop.f32.mrb[0].mxu0
    %2296 = vmatprep.mubr.f32.mxu0 0.0
    %2297 = vmatmul.mubr.f32.gmra.mrb[0].mxu0 %v2109
    %v2298 = vpop.f32.mrb[0].mxu0
    %v2299 = vadd.f32 %v2064, %v2298
    %v2300 = vpop.f32.mrb[0].mxu0
    %2301 = vmatprep.mubr.f32.mxu0 0.0
    %2302 = vmatmul.mubr.f32.gmra.mrb[0].mxu0 %v2112
    %v2303 = vpop.f32.mrb[0].mxu0
    %v2304 = vadd.f32 %v2065, %v2303
    %v2305 = vpop.f32.mrb[0].mxu0
    %2306 = vdwg.mxu0
    %2307 = vmax.xlane.f32.xlu0 %v2229
    %v2308 = vpop.xlane.xlu0 %2307
    %2309 = vmax.xlane.f32.xlu0 %v2234
    %v2310 = vpop.xlane.xlu0 %2309
    %2311 = vmax.xlane.f32.xlu0 %v2239
    %v2312 = vpop.xlane.xlu0 %2311
    %2313 = vmax.xlane.f32.xlu0 %v2244
    %v2314 = vpop.xlane.xlu0 %2313
    %2315 = vmax.xlane.f32.xlu0 %v2249
    %v2316 = vpop.xlane.xlu0 %2315
    %2317 = vmax.xlane.f32.xlu0 %v2254
    %v2318 = vpop.xlane.xlu0 %2317
    %2319 = vmax.xlane.f32.xlu0 %v2259
    %v2320 = vpop.xlane.xlu0 %2319
    %2321 = vmax.xlane.f32.xlu0 %v2264
    %v2322 = vpop.xlane.xlu0 %2321
    %2323 = vmax.xlane.f32.xlu0 %v2269
    %v2324 = vpop.xlane.xlu0 %2323
    %2325 = vmax.xlane.f32.xlu0 %v2274
    %v2326 = vpop.xlane.xlu0 %2325
    %2327 = vmax.xlane.f32.xlu0 %v2279
    %v2328 = vpop.xlane.xlu0 %2327
    %2329 = vmax.xlane.f32.xlu0 %v2284
    %v2330 = vpop.xlane.xlu0 %2329
    %2331 = vmax.xlane.f32.xlu0 %v2289
    %v2332 = vpop.xlane.xlu0 %2331
    %2333 = vmax.xlane.f32.xlu0 %v2294
    %v2334 = vpop.xlane.xlu0 %2333
    %2335 = vmax.xlane.f32.xlu0 %v2299
    %v2336 = vpop.xlane.xlu0 %2335
    %2337 = vmax.xlane.f32.xlu0 %v2304
    %v2338 = vpop.xlane.xlu0 %2337
    %v2339 = vsub.f32 %v2229, %v2308
    %v2340 = vsub.f32 %v2234, %v2310
    %v2341 = vsub.f32 %v2239, %v2312
    %v2342 = vsub.f32 %v2244, %v2314
    %v2343 = vsub.f32 %v2249, %v2316
    %v2344 = vsub.f32 %v2254, %v2318
    %v2345 = vsub.f32 %v2259, %v2320
    %v2346 = vsub.f32 %v2264, %v2322
    %v2347 = vsub.f32 %v2269, %v2324
    %v2348 = vsub.f32 %v2274, %v2326
    %v2349 = vsub.f32 %v2279, %v2328
    %v2350 = vsub.f32 %v2284, %v2330
    %v2351 = vsub.f32 %v2289, %v2332
    %v2352 = vsub.f32 %v2294, %v2334
    %v2353 = vsub.f32 %v2299, %v2336
    %v2354 = vsub.f32 %v2304, %v2338
    %v2355 = vmul.f32 %v2339, 1.442695
    %v2356 = vpow.pop %v2355
    %v2357 = vmul.f32 %v2340, 1.442695
    %v2358 = vpow.pop %v2357
    %v2359 = vmul.f32 %v2341, 1.442695
    %v2360 = vpow.pop %v2359
    %v2361 = vmul.f32 %v2342, 1.442695
    %v2362 = vpow.pop %v2361
    %v2363 = vmul.f32 %v2343, 1.442695
    %v2364 = vpow.pop %v2363
    %v2365 = vmul.f32 %v2344, 1.442695
    %v2366 = vpow.pop %v2365
    %v2367 = vmul.f32 %v2345, 1.442695
    %v2368 = vpow.pop %v2367
    %v2369 = vmul.f32 %v2346, 1.442695
    %v2370 = vpow.pop %v2369
    %v2371 = vmul.f32 %v2347, 1.442695
    %v2372 = vpow.pop %v2371
    %v2373 = vmul.f32 %v2348, 1.442695
    %v2374 = vpow.pop %v2373
    %v2375 = vmul.f32 %v2349, 1.442695
    %v2376 = vpow.pop %v2375
    %v2377 = vmul.f32 %v2350, 1.442695
    %v2378 = vpow.pop %v2377
    %v2379 = vmul.f32 %v2351, 1.442695
    %v2380 = vpow.pop %v2379
    %v2381 = vmul.f32 %v2352, 1.442695
    %v2382 = vpow.pop %v2381
    %v2383 = vmul.f32 %v2353, 1.442695
    %v2384 = vpow.pop %v2383
    %v2385 = vmul.f32 %v2354, 1.442695
    %v2386 = vpow.pop %v2385
    %2387 = vadd.xlane.f32.xlu0 %v2356
    %v2388 = vpop.xlane.xlu0 %2387
    %2389 = vadd.xlane.f32.xlu0 %v2358
    %v2390 = vpop.xlane.xlu0 %2389
    %2391 = vadd.xlane.f32.xlu0 %v2360
    %v2392 = vpop.xlane.xlu0 %2391
    %2393 = vadd.xlane.f32.xlu0 %v2362
    %v2394 = vpop.xlane.xlu0 %2393
    %2395 = vadd.xlane.f32.xlu0 %v2364
    %v2396 = vpop.xlane.xlu0 %2395
    %2397 = vadd.xlane.f32.xlu0 %v2366
    %v2398 = vpop.xlane.xlu0 %2397
    %2399 = vadd.xlane.f32.xlu0 %v2368
    %v2400 = vpop.xlane.xlu0 %2399
    %2401 = vadd.xlane.f32.xlu0 %v2370
    %v2402 = vpop.xlane.xlu0 %2401
    %2403 = vadd.xlane.f32.xlu0 %v2372
    %v2404 = vpop.xlane.xlu0 %2403
    %2405 = vadd.xlane.f32.xlu0 %v2374
    %v2406 = vpop.xlane.xlu0 %2405
    %2407 = vadd.xlane.f32.xlu0 %v2376
    %v2408 = vpop.xlane.xlu0 %2407
    %2409 = vadd.xlane.f32.xlu0 %v2378
    %v2410 = vpop.xlane.xlu0 %2409
    %2411 = vadd.xlane.f32.xlu0 %v2380
    %v2412 = vpop.xlane.xlu0 %2411
    %2413 = vadd.xlane.f32.xlu0 %v2382
    %v2414 = vpop.xlane.xlu0 %2413
    %2415 = vadd.xlane.f32.xlu0 %v2384
    %v2416 = vpop.xlane.xlu0 %2415
    %2417 = vadd.xlane.f32.xlu0 %v2386
    %v2418 = vpop.xlane.xlu0 %2417
    %v2419 = vrcp.pop %v2388
    %v2420 = vmul.f32 %v2356, %v2419
    %v2421 = vrcp.pop %v2390
    %v2422 = vmul.f32 %v2358, %v2421
    %v2423 = vrcp.pop %v2392
    %v2424 = vmul.f32 %v2360, %v2423
    %v2425 = vrcp.pop %v2394
    %v2426 = vmul.f32 %v2362, %v2425
    %v2427 = vrcp.pop %v2396
    %v2428 = vmul.f32 %v2364, %v2427
    %v2429 = vrcp.pop %v2398
    %v2430 = vmul.f32 %v2366, %v2429
    %v2431 = vrcp.pop %v2400
    %v2432 = vmul.f32 %v2368, %v2431
    %v2433 = vrcp.pop %v2402
    %v2434 = vmul.f32 %v2370, %v2433
    %v2435 = vrcp.pop %v2404
    %v2436 = vmul.f32 %v2372, %v2435
    %v2437 = vrcp.pop %v2406
    %v2438 = vmul.f32 %v2374, %v2437
    %v2439 = vrcp.pop %v2408
    %v2440 = vmul.f32 %v2376, %v2439
    %v2441 = vrcp.pop %v2410
    %v2442 = vmul.f32 %v2378, %v2441
    %v2443 = vrcp.pop %v2412
    %v2444 = vmul.f32 %v2380, %v2443
    %v2445 = vrcp.pop %v2414
    %v2446 = vmul.f32 %v2382, %v2445
    %v2447 = vrcp.pop %v2416
    %v2448 = vmul.f32 %v2384, %v2447
    %v2449 = vrcp.pop %v2418
    %v2450 = vmul.f32 %v2386, %v2449
    %2451 = vmatprep.subr.mxu0 0.0
    %2452 = vmatpush1.msra.mxu0 %v1971
    %2453 = vmatprep.subr.mxu0 0.0
    %2454 = vmatpush1.msra.mxu0 %v1976
    %2455 = vmatprep.subr.mxu0 0.0
    %2456 = vmatpush1.msra.mxu0 %v1981
    %2457 = vmatprep.subr.mxu0 0.0
    %2458 = vmatpush1.msra.mxu0 %v1986
    %2459 = vmatprep.subr.mxu0 0.0
    %2460 = vmatpush1.msra.mxu0 %v1991
    %2461 = vmatprep.subr.mxu0 0.0
    %2462 = vmatpush1.msra.mxu0 %v1996
    %2463 = vmatprep.subr.mxu0 0.0
    %2464 = vmatpush1.msra.mxu0 %v2001
    %2465 = vmatprep.subr.mxu0 0.0
    %2466 = vmatpush1.msra.mxu0 %v2006
    %2467 = vmatprep.subr.mxu0 0.0
    %2468 = vmatpush1.msra.mxu0 %v2011
    %2469 = vmatprep.subr.mxu0 0.0
    %2470 = vmatpush1.msra.mxu0 %v2016
    %2471 = vmatprep.subr.mxu0 0.0
    %2472 = vmatpush1.msra.mxu0 %v2021
    %2473 = vmatprep.subr.mxu0 0.0
    %2474 = vmatpush1.msra.mxu0 %v2026
    %2475 = vmatprep.subr.mxu0 0.0
    %2476 = vmatpush1.msra.mxu0 %v2031
    %2477 = vmatprep.subr.mxu0 0.0
    %2478 = vmatpush1.msra.mxu0 %v2036
    %2479 = vmatprep.subr.mxu0 0.0
    %2480 = vmatpush1.msra.mxu0 %v2041
    %2481 = vmatprep.subr.mxu0 0.0
    %2482 = vmatpush1.msra.mxu0 %v2046
    %2483 = vmatprep.subr.mxu0 0.0
    %2484 = vmatpush1.msra.mxu0 0.0
    %2485 = vmatprep.subr.mxu0 0.0
    %2486 = vmatpush1.msra.mxu0 0.0
    %2487 = vmatprep.subr.mxu0 0.0
    %2488 = vmatpush1.msra.mxu0 0.0
    %2489 = vmatprep.subr.mxu0 0.0
    %2490 = vmatpush1.msra.mxu0 0.0
    %2491 = vmatprep.subr.mxu0 0.0
    %2492 = vmatpush1.msra.mxu0 0.0
    %2493 = vmatprep.subr.mxu0 0.0
    %2494 = vmatpush1.msra.mxu0 0.0
    %2495 = vmatprep.subr.mxu0 0.0
    %2496 = vmatpush1.msra.mxu0 0.0
    %2497 = vmatprep.subr.mxu0 0.0
    %2498 = vmatpush1.msra.mxu0 0.0
    %2499 = vmatprep.subr.mxu0 0.0
    %2500 = vmatpush1.msra.mxu0 0.0
    %2501 = vmatprep.subr.mxu0 0.0
    %2502 = vmatpush1.msra.mxu0 0.0
    %2503 = vmatprep.subr.mxu0 0.0
    %2504 = vmatpush1.msra.mxu0 0.0
    %2505 = vmatprep.subr.mxu0 0.0
    %2506 = vmatpush1.msra.mxu0 0.0
    %2507 = vmatprep.subr.mxu0 0.0
    %2508 = vmatpush1.msra.mxu0 0.0
    %2509 = vmatprep.subr.mxu0 0.0
    %2510 = vmatpush1.msra.mxu0 0.0
    %2511 = vmatprep.subr.mxu0 0.0
    %2512 = vmatpush1.msra.mxu0 0.0
    %2513 = vmatprep.subr.mxu0 0.0
    %2514 = vmatpush1.msra.mxu0 0.0
    %2515 = vmatprep.mubr.f32.mxu0 0.0
    %2516 = vmatmul.mubr.f32.gmra.mrb[0].mxu0 %v2420
    %v2517 = vpop.f32.mrb[0].mxu0
    %v2518 = vadd.f32 0.0, %v2517
    %v2519 = vpop.f32.mrb[0].mxu0
    %2520 = vmatprep.mubr.f32.mxu0 0.0
    %2521 = vmatmul.mubr.f32.gmra.mrb[0].mxu0 %v2422
    %v2522 = vpop.f32.mrb[0].mxu0
    %v2523 = vadd.f32 0.0, %v2522
    %v2524 = vpop.f32.mrb[0].mxu0
    %2525 = vmatprep.mubr.f32.mxu0 0.0
    %2526 = vmatmul.mubr.f32.gmra.mrb[0].mxu0 %v2424
    %v2527 = vpop.f32.mrb[0].mxu0
    %v2528 = vadd.f32 0.0, %v2527
    %v2529 = vpop.f32.mrb[0].mxu0
    %2530 = vmatprep.mubr.f32.mxu0 0.0
    %2531 = vmatmul.mubr.f32.gmra.mrb[0].mxu0 %v2426
    %v2532 = vpop.f32.mrb[0].mxu0
    %v2533 = vadd.f32 0.0, %v2532
    %v2534 = vpop.f32.mrb[0].mxu0
    %2535 = vmatprep.mubr.f32.mxu0 0.0
    %2536 = vmatmul.mubr.f32.gmra.mrb[0].mxu0 %v2428
    %v2537 = vpop.f32.mrb[0].mxu0
    %v2538 = vadd.f32 0.0, %v2537
    %v2539 = vpop.f32.mrb[0].mxu0
    %2540 = vmatprep.mubr.f32.mxu0 0.0
    %2541 = vmatmul.mubr.f32.gmra.mrb[0].mxu0 %v2430
    %v2542 = vpop.f32.mrb[0].mxu0
    %v2543 = vadd.f32 0.0, %v2542
    %v2544 = vpop.f32.mrb[0].mxu0
    %2545 = vmatprep.mubr.f32.mxu0 0.0
    %2546 = vmatmul.mubr.f32.gmra.mrb[0].mxu0 %v2432
    %v2547 = vpop.f32.mrb[0].mxu0
    %v2548 = vadd.f32 0.0, %v2547
    %v2549 = vpop.f32.mrb[0].mxu0
    %2550 = vmatprep.mubr.f32.mxu0 0.0
    %2551 = vmatmul.mubr.f32.gmra.mrb[0].mxu0 %v2434
    %v2552 = vpop.f32.mrb[0].mxu0
    %v2553 = vadd.f32 0.0, %v2552
    %v2554 = vpop.f32.mrb[0].mxu0
    %2555 = vmatprep.mubr.f32.mxu0 0.0
    %2556 = vmatmul.mubr.f32.gmra.mrb[0].mxu0 %v2436
    %v2557 = vpop.f32.mrb[0].mxu0
    %v2558 = vadd.f32 0.0, %v2557
    %v2559 = vpop.f32.mrb[0].mxu0
    %2560 = vmatprep.mubr.f32.mxu0 0.0
    %2561 = vmatmul.mubr.f32.gmra.mrb[0].mxu0 %v2438
    %v2562 = vpop.f32.mrb[0].mxu0
    %v2563 = vadd.f32 0.0, %v2562
    %v2564 = vpop.f32.mrb[0].mxu0
    %2565 = vmatprep.mubr.f32.mxu0 0.0
    %2566 = vmatmul.mubr.f32.gmra.mrb[0].mxu0 %v2440
    %v2567 = vpop.f32.mrb[0].mxu0
    %v2568 = vadd.f32 0.0, %v2567
    %v2569 = vpop.f32.mrb[0].mxu0
    %2570 = vmatprep.mubr.f32.mxu0 0.0
    %2571 = vmatmul.mubr.f32.gmra.mrb[0].mxu0 %v2442
    %v2572 = vpop.f32.mrb[0].mxu0
    %v2573 = vadd.f32 0.0, %v2572
    %v2574 = vpop.f32.mrb[0].mxu0
    %2575 = vmatprep.mubr.f32.mxu0 0.0
    %2576 = vmatmul.mubr.f32.gmra.mrb[0].mxu0 %v2444
    %v2577 = vpop.f32.mrb[0].mxu0
    %v2578 = vadd.f32 0.0, %v2577
    %v2579 = vpop.f32.mrb[0].mxu0
    %2580 = vmatprep.mubr.f32.mxu0 0.0
    %2581 = vmatmul.mubr.f32.gmra.mrb[0].mxu0 %v2446
    %v2582 = vpop.f32.mrb[0].mxu0
    %v2583 = vadd.f32 0.0, %v2582
    %v2584 = vpop.f32.mrb[0].mxu0
    %2585 = vmatprep.mubr.f32.mxu0 0.0
    %2586 = vmatmul.mubr.f32.gmra.mrb[0].mxu0 %v2448
    %v2587 = vpop.f32.mrb[0].mxu0
    %v2588 = vadd.f32 0.0, %v2587
    %v2589 = vpop.f32.mrb[0].mxu0
    %2590 = vmatprep.mubr.f32.mxu0 0.0
    %2591 = vmatmul.mubr.f32.gmra.mrb[0].mxu0 %v2450
    %v2592 = vpop.f32.mrb[0].mxu0
    %v2593 = vadd.f32 0.0, %v2592
    %v2594 = vpop.f32.mrb[0].mxu0
    %2595 = vdwg.mxu0
    %2596 = vmatprep.subr.mxu0 0.0
    %2597 = vmatpush1.msra.mxu0 %v1095
    %2598 = vmatprep.subr.mxu0 0.0
    %2599 = vmatpush1.msra.mxu0 %v1100
    %2600 = vmatprep.subr.mxu0 0.0
    %2601 = vmatpush1.msra.mxu0 %v1105
    %2602 = vmatprep.subr.mxu0 0.0
    %2603 = vmatpush1.msra.mxu0 %v1110
    %2604 = vmatprep.subr.mxu0 0.0
    %2605 = vmatpush1.msra.mxu0 %v1115
    %2606 = vmatprep.subr.mxu0 0.0
    %2607 = vmatpush1.msra.mxu0 %v1120
    %2608 = vmatprep.subr.mxu0 0.0
    %2609 = vmatpush1.msra.mxu0 %v1125
    %2610 = vmatprep.subr.mxu0 0.0
    %2611 = vmatpush1.msra.mxu0 %v1130
    %2612 = vmatprep.subr.mxu0 0.0
    %2613 = vmatpush1.msra.mxu0 %v1135
    %2614 = vmatprep.subr.mxu0 0.0
    %2615 = vmatpush1.msra.mxu0 %v1140
    %2616 = vmatprep.subr.mxu0 0.0
    %2617 = vmatpush1.msra.mxu0 %v1145
    %2618 = vmatprep.subr.mxu0 0.0
    %2619 = vmatpush1.msra.mxu0 %v1150
    %2620 = vmatprep.subr.mxu0 0.0
    %2621 = vmatpush1.msra.mxu0 %v1155
    %2622 = vmatprep.subr.mxu0 0.0
    %2623 = vmatpush1.msra.mxu0 %v1160
    %2624 = vmatprep.subr.mxu0 0.0
    %2625 = vmatpush1.msra.mxu0 %v1165
    %2626 = vmatprep.subr.mxu0 0.0
    %2627 = vmatpush1.msra.mxu0 %v1170
    %2628 = vmatprep.subr.mxu0 0.0
    %2629 = vmatpush1.msra.mxu0 0.0
    %2630 = vmatprep.subr.mxu0 0.0
    %2631 = vmatpush1.msra.mxu0 0.0
    %2632 = vmatprep.subr.mxu0 0.0
    %2633 = vmatpush1.msra.mxu0 0.0
    %2634 = vmatprep.subr.mxu0 0.0
    %2635 = vmatpush1.msra.mxu0 0.0
    %2636 = vmatprep.subr.mxu0 0.0
    %2637 = vmatpush1.msra.mxu0 0.0
    %2638 = vmatprep.subr.mxu0 0.0
    %2639 = vmatpush1.msra.mxu0 0.0
    %2640 = vmatprep.subr.mxu0 0.0
    %2641 = vmatpush1.msra.mxu0 0.0
    %2642 = vmatprep.subr.mxu0 0.0
    %2643 = vmatpush1.msra.mxu0 0.0
    %2644 = vmatprep.subr.mxu0 0.0
    %2645 = vmatpush1.msra.mxu0 0.0
    %2646 = vmatprep.subr.mxu0 0.0
    %2647 = vmatpush1.msra.mxu0 0.0
    %2648 = vmatprep.subr.mxu0 0.0
    %2649 = vmatpush1.msra.mxu0 0.0
    %2650 = vmatprep.subr.mxu0 0.0
    %2651 = vmatpush1.msra.mxu0 0.0
    %2652 = vmatprep.subr.mxu0 0.0
    %2653 = vmatpush1.msra.mxu0 0.0
    %2654 = vmatprep.subr.mxu0 0.0
    %2655 = vmatpush1.msra.mxu0 0.0
    %2656 = vmatprep.subr.mxu0 0.0
    %2657 = vmatpush1.msra.mxu0 0.0
    %2658 = vmatprep.subr.mxu0 0.0
    %2659 = vmatpush1.msra.mxu0 0.0
    %2660 = vmatprep.mubr.f32.mxu0 0.0
    %2661 = vmatmul.mubr.f32.gmra.mrb[0].mxu0 %v1544
    %v2662 = vpop.f32.mrb[0].mxu0
    %v2663 = vadd.f32 %v2518, %v2662
    %v2664 = vpop.f32.mrb[0].mxu0
    %2665 = vmatprep.mubr.f32.mxu0 0.0
    %2666 = vmatmul.mubr.f32.gmra.mrb[0].mxu0 %v1546
    %v2667 = vpop.f32.mrb[0].mxu0
    %v2668 = vadd.f32 %v2523, %v2667
    %v2669 = vpop.f32.mrb[0].mxu0
    %2670 = vmatprep.mubr.f32.mxu0 0.0
    %2671 = vmatmul.mubr.f32.gmra.mrb[0].mxu0 %v1548
    %v2672 = vpop.f32.mrb[0].mxu0
    %v2673 = vadd.f32 %v2528, %v2672
    %v2674 = vpop.f32.mrb[0].mxu0
    %2675 = vmatprep.mubr.f32.mxu0 0.0
    %2676 = vmatmul.mubr.f32.gmra.mrb[0].mxu0 %v1550
    %v2677 = vpop.f32.mrb[0].mxu0
    %v2678 = vadd.f32 %v2533, %v2677
    %v2679 = vpop.f32.mrb[0].mxu0
    %2680 = vmatprep.mubr.f32.mxu0 0.0
    %2681 = vmatmul.mubr.f32.gmra.mrb[0].mxu0 %v1552
    %v2682 = vpop.f32.mrb[0].mxu0
    %v2683 = vadd.f32 %v2538, %v2682
    %v2684 = vpop.f32.mrb[0].mxu0
    %2685 = vmatprep.mubr.f32.mxu0 0.0
    %2686 = vmatmul.mubr.f32.gmra.mrb[0].mxu0 %v1554
    %v2687 = vpop.f32.mrb[0].mxu0
    %v2688 = vadd.f32 %v2543, %v2687
    %v2689 = vpop.f32.mrb[0].mxu0
    %2690 = vmatprep.mubr.f32.mxu0 0.0
    %2691 = vmatmul.mubr.f32.gmra.mrb[0].mxu0 %v1556
    %v2692 = vpop.f32.mrb[0].mxu0
    %v2693 = vadd.f32 %v2548, %v2692
    %v2694 = vpop.f32.mrb[0].mxu0
    %2695 = vmatprep.mubr.f32.mxu0 0.0
    %2696 = vmatmul.mubr.f32.gmra.mrb[0].mxu0 %v1558
    %v2697 = vpop.f32.mrb[0].mxu0
    %v2698 = vadd.f32 %v2553, %v2697
    %v2699 = vpop.f32.mrb[0].mxu0
    %2700 = vmatprep.mubr.f32.mxu0 0.0
    %2701 = vmatmul.mubr.f32.gmra.mrb[0].mxu0 %v1560
    %v2702 = vpop.f32.mrb[0].mxu0
    %v2703 = vadd.f32 %v2558, %v2702
    %v2704 = vpop.f32.mrb[0].mxu0
    %2705 = vmatprep.mubr.f32.mxu0 0.0
    %2706 = vmatmul.mubr.f32.gmra.mrb[0].mxu0 %v1562
    %v2707 = vpop.f32.mrb[0].mxu0
    %v2708 = vadd.f32 %v2563, %v2707
    %v2709 = vpop.f32.mrb[0].mxu0
    %2710 = vmatprep.mubr.f32.mxu0 0.0
    %2711 = vmatmul.mubr.f32.gmra.mrb[0].mxu0 %v1564
    %v2712 = vpop.f32.mrb[0].mxu0
    %v2713 = vadd.f32 %v2568, %v2712
    %v2714 = vpop.f32.mrb[0].mxu0
    %2715 = vmatprep.mubr.f32.mxu0 0.0
    %2716 = vmatmul.mubr.f32.gmra.mrb[0].mxu0 %v1566
    %v2717 = vpop.f32.mrb[0].mxu0
    %v2718 = vadd.f32 %v2573, %v2717
    %v2719 = vpop.f32.mrb[0].mxu0
    %2720 = vmatprep.mubr.f32.mxu0 0.0
    %2721 = vmatmul.mubr.f32.gmra.mrb[0].mxu0 %v1568
    %v2722 = vpop.f32.mrb[0].mxu0
    %v2723 = vadd.f32 %v2578, %v2722
    %v2724 = vpop.f32.mrb[0].mxu0
    %2725 = vmatprep.mubr.f32.mxu0 0.0
    %2726 = vmatmul.mubr.f32.gmra.mrb[0].mxu0 %v1570
    %v2727 = vpop.f32.mrb[0].mxu0
    %v2728 = vadd.f32 %v2583, %v2727
    %v2729 = vpop.f32.mrb[0].mxu0
    %2730 = vmatprep.mubr.f32.mxu0 0.0
    %2731 = vmatmul.mubr.f32.gmra.mrb[0].mxu0 %v1572
    %v2732 = vpop.f32.mrb[0].mxu0
    %v2733 = vadd.f32 %v2588, %v2732
    %v2734 = vpop.f32.mrb[0].mxu0
    %2735 = vmatprep.mubr.f32.mxu0 0.0
    %2736 = vmatmul.mubr.f32.gmra.mrb[0].mxu0 %v1574
    %v2737 = vpop.f32.mrb[0].mxu0
    %v2738 = vadd.f32 %v2593, %v2737
    %v2739 = vpop.f32.mrb[0].mxu0
    %2740 = vdwg.mxu0
    %s2741 = scalar_lea.vmem %s6, 64
    %v2742 = vld [vmem:[%s2741] sm:$0xff]
    %v2743 = vld [vmem:[%s2741 + $0x8] sm:$0xff]
    %v2744 = vld [vmem:[%s2741 + $0x10] sm:$0xff]
    %v2745 = vld [vmem:[%s2741 + $0x18] sm:$0xff]
    %s2746 = scalar_lea.vmem [#allocation7], 2
    %v2747 = vld [vmem:[%s2746] sm:$0x1]
    %v2749 = vlaneseq
    %v2750 = vshrl.u32 %v2749, 7
    %v2751 = vsub.s32 0, %v2750
    %v2752 = vrot.slane %v2747, %v2751
    %2754 = vmatprep.subr.mxu0 0.0
    %2755 = vmatpush1.msra.mxu0 %v2742
    %2756 = vmatprep.subr.mxu0 0.0
    %2757 = vmatpush1.msra.mxu0 %v2743
    %2758 = vmatprep.subr.mxu0 0.0
    %2759 = vmatpush1.msra.mxu0 %v2744
    %2760 = vmatprep.subr.mxu0 0.0
    %2761 = vmatpush1.msra.mxu0 %v2745
    %2762 = vmatprep.subr.mxu0 0.0
    %2763 = vmatpush1.msra.mxu0 0.0
    %2764 = vmatprep.subr.mxu0 0.0
    %2765 = vmatpush1.msra.mxu0 0.0
    %2766 = vmatprep.subr.mxu0 0.0
    %2767 = vmatpush1.msra.mxu0 0.0
    %2768 = vmatprep.subr.mxu0 0.0
    %2769 = vmatpush1.msra.mxu0 0.0
    %2770 = vmatprep.subr.mxu0 0.0
    %2771 = vmatpush1.msra.mxu0 0.0
    %2772 = vmatprep.subr.mxu0 0.0
    %2773 = vmatpush1.msra.mxu0 0.0
    %2774 = vmatprep.subr.mxu0 0.0
    %2775 = vmatpush1.msra.mxu0 0.0
    %2776 = vmatprep.subr.mxu0 0.0
    %2777 = vmatpush1.msra.mxu0 0.0
    %2778 = vmatprep.subr.mxu0 0.0
    %2779 = vmatpush1.msra.mxu0 0.0
    %2780 = vmatprep.subr.mxu0 0.0
    %2781 = vmatpush1.msra.mxu0 0.0
    %2782 = vmatprep.subr.mxu0 0.0
    %2783 = vmatpush1.msra.mxu0 0.0
    %2784 = vmatprep.subr.mxu0 0.0
    %2785 = vmatpush1.msra.mxu0 0.0
    %2786 = vmatprep.subr.mxu0 0.0
    %2787 = vmatpush1.msra.mxu0 0.0
    %2788 = vmatprep.subr.mxu0 0.0
    %2789 = vmatpush1.msra.mxu0 0.0
    %2790 = vmatprep.subr.mxu0 0.0
    %2791 = vmatpush1.msra.mxu0 0.0
    %2792 = vmatprep.subr.mxu0 0.0
    %2793 = vmatpush1.msra.mxu0 0.0
    %2794 = vmatprep.subr.mxu0 0.0
    %2795 = vmatpush1.msra.mxu0 0.0
    %2796 = vmatprep.subr.mxu0 0.0
    %2797 = vmatpush1.msra.mxu0 0.0
    %2798 = vmatprep.subr.mxu0 0.0
    %2799 = vmatpush1.msra.mxu0 0.0
    %2800 = vmatprep.subr.mxu0 0.0
    %2801 = vmatpush1.msra.mxu0 0.0
    %2802 = vmatprep.subr.mxu0 0.0
    %2803 = vmatpush1.msra.mxu0 0.0
    %2804 = vmatprep.subr.mxu0 0.0
    %2805 = vmatpush1.msra.mxu0 0.0
    %2806 = vmatprep.subr.mxu0 0.0
    %2807 = vmatpush1.msra.mxu0 0.0
    %2808 = vmatprep.subr.mxu0 0.0
    %2809 = vmatpush1.msra.mxu0 0.0
    %2810 = vmatprep.subr.mxu0 0.0
    %2811 = vmatpush1.msra.mxu0 0.0
    %2812 = vmatprep.subr.mxu0 0.0
    %2813 = vmatpush1.msra.mxu0 0.0
    %2814 = vmatprep.subr.mxu0 0.0
    %2815 = vmatpush1.msra.mxu0 0.0
    %2816 = vmatprep.subr.mxu0 0.0
    %2817 = vmatpush1.msra.mxu0 0.0
    %2818 = vmatprep.mubr.f32.mxu0 0.0
    %2819 = vmatmul.mubr.f32.gmra.mrb[0].mxu0 %v669
    %v2820 = vpop.f32.mrb[0].mxu0
    %v2821 = vadd.f32 %v2752, %v2820
    %v2822 = vpop.f32.mrb[0].mxu0
    %2823 = vmatprep.mubr.f32.mxu0 0.0
    %2824 = vmatmul.mubr.f32.gmra.mrb[0].mxu0 %v672
    %v2825 = vpop.f32.mrb[0].mxu0
    %v2826 = vadd.f32 %v2752, %v2825
    %v2827 = vpop.f32.mrb[0].mxu0
    %2828 = vmatprep.mubr.f32.mxu0 0.0
    %2829 = vmatmul.mubr.f32.gmra.mrb[0].mxu0 %v675
    %v2830 = vpop.f32.mrb[0].mxu0
    %v2831 = vadd.f32 %v2752, %v2830
    %v2832 = vpop.f32.mrb[0].mxu0
    %2833 = vmatprep.mubr.f32.mxu0 0.0
    %2834 = vmatmul.mubr.f32.gmra.mrb[0].mxu0 %v678
    %v2835 = vpop.f32.mrb[0].mxu0
    %v2836 = vadd.f32 %v2752, %v2835
    %v2837 = vpop.f32.mrb[0].mxu0
    %2838 = vmatprep.mubr.f32.mxu0 0.0
    %2839 = vmatmul.mubr.f32.gmra.mrb[0].mxu0 %v681
    %v2840 = vpop.f32.mrb[0].mxu0
    %v2841 = vadd.f32 %v2752, %v2840
    %v2842 = vpop.f32.mrb[0].mxu0
    %2843 = vmatprep.mubr.f32.mxu0 0.0
    %2844 = vmatmul.mubr.f32.gmra.mrb[0].mxu0 %v684
    %v2845 = vpop.f32.mrb[0].mxu0
    %v2846 = vadd.f32 %v2752, %v2845
    %v2847 = vpop.f32.mrb[0].mxu0
    %2848 = vmatprep.mubr.f32.mxu0 0.0
    %2849 = vmatmul.mubr.f32.gmra.mrb[0].mxu0 %v687
    %v2850 = vpop.f32.mrb[0].mxu0
    %v2851 = vadd.f32 %v2752, %v2850
    %v2852 = vpop.f32.mrb[0].mxu0
    %2853 = vmatprep.mubr.f32.mxu0 0.0
    %2854 = vmatmul.mubr.f32.gmra.mrb[0].mxu0 %v690
    %v2855 = vpop.f32.mrb[0].mxu0
    %v2856 = vadd.f32 %v2752, %v2855
    %v2857 = vpop.f32.mrb[0].mxu0
    %2858 = vmatprep.mubr.f32.mxu0 0.0
    %2859 = vmatmul.mubr.f32.gmra.mrb[0].mxu0 %v693
    %v2860 = vpop.f32.mrb[0].mxu0
    %v2861 = vadd.f32 %v2752, %v2860
    %v2862 = vpop.f32.mrb[0].mxu0
    %2863 = vmatprep.mubr.f32.mxu0 0.0
    %2864 = vmatmul.mubr.f32.gmra.mrb[0].mxu0 %v696
    %v2865 = vpop.f32.mrb[0].mxu0
    %v2866 = vadd.f32 %v2752, %v2865
    %v2867 = vpop.f32.mrb[0].mxu0
    %2868 = vmatprep.mubr.f32.mxu0 0.0
    %2869 = vmatmul.mubr.f32.gmra.mrb[0].mxu0 %v699
    %v2870 = vpop.f32.mrb[0].mxu0
    %v2871 = vadd.f32 %v2752, %v2870
    %v2872 = vpop.f32.mrb[0].mxu0
    %2873 = vmatprep.mubr.f32.mxu0 0.0
    %2874 = vmatmul.mubr.f32.gmra.mrb[0].mxu0 %v702
    %v2875 = vpop.f32.mrb[0].mxu0
    %v2876 = vadd.f32 %v2752, %v2875
    %v2877 = vpop.f32.mrb[0].mxu0
    %2878 = vmatprep.mubr.f32.mxu0 0.0
    %2879 = vmatmul.mubr.f32.gmra.mrb[0].mxu0 %v705
    %v2880 = vpop.f32.mrb[0].mxu0
    %v2881 = vadd.f32 %v2752, %v2880
    %v2882 = vpop.f32.mrb[0].mxu0
    %2883 = vmatprep.mubr.f32.mxu0 0.0
    %2884 = vmatmul.mubr.f32.gmra.mrb[0].mxu0 %v708
    %v2885 = vpop.f32.mrb[0].mxu0
    %v2886 = vadd.f32 %v2752, %v2885
    %v2887 = vpop.f32.mrb[0].mxu0
    %2888 = vmatprep.mubr.f32.mxu0 0.0
    %2889 = vmatmul.mubr.f32.gmra.mrb[0].mxu0 %v711
    %v2890 = vpop.f32.mrb[0].mxu0
    %v2891 = vadd.f32 %v2752, %v2890
    %v2892 = vpop.f32.mrb[0].mxu0
    %2893 = vmatprep.mubr.f32.mxu0 0.0
    %2894 = vmatmul.mubr.f32.gmra.mrb[0].mxu0 %v714
    %v2895 = vpop.f32.mrb[0].mxu0
    %v2896 = vadd.f32 %v2752, %v2895
    %v2897 = vpop.f32.mrb[0].mxu0
    %2898 = vdwg.mxu0
    %s2899 = scalar_lea.vmem %s8, 64
    %v2900 = vld [vmem:[%s2899] sm:$0xff]
    %v2901 = vld [vmem:[%s2899 + $0x8] sm:$0xff]
    %v2902 = vld [vmem:[%s2899 + $0x10] sm:$0xff]
    %v2903 = vld [vmem:[%s2899 + $0x18] sm:$0xff]
    %s2904 = scalar_lea.vmem [#allocation9], 2
    %v2905 = vld [vmem:[%s2904] sm:$0x1]
    %v2907 = vlaneseq
    %v2908 = vshrl.u32 %v2907, 7
    %v2909 = vsub.s32 0, %v2908
    %v2910 = vrot.slane %v2905, %v2909
    %2912 = vmatprep.subr.mxu0 0.0
    %2913 = vmatpush1.msra.mxu0 %v2900
    %2914 = vmatprep.subr.mxu0 0.0
    %2915 = vmatpush1.msra.mxu0 %v2901
    %2916 = vmatprep.subr.mxu0 0.0
    %2917 = vmatpush1.msra.mxu0 %v2902
    %2918 = vmatprep.subr.mxu0 0.0
    %2919 = vmatpush1.msra.mxu0 %v2903
    %2920 = vmatprep.subr.mxu0 0.0
    %2921 = vmatpush1.msra.mxu0 0.0
    %2922 = vmatprep.subr.mxu0 0.0
    %2923 = vmatpush1.msra.mxu0 0.0
    %2924 = vmatprep.subr.mxu0 0.0
    %2925 = vmatpush1.msra.mxu0 0.0
    %2926 = vmatprep.subr.mxu0 0.0
    %2927 = vmatpush1.msra.mxu0 0.0
    %2928 = vmatprep.subr.mxu0 0.0
    %2929 = vmatpush1.msra.mxu0 0.0
    %2930 = vmatprep.subr.mxu0 0.0
    %2931 = vmatpush1.msra.mxu0 0.0
    %2932 = vmatprep.subr.mxu0 0.0
    %2933 = vmatpush1.msra.mxu0 0.0
    %2934 = vmatprep.subr.mxu0 0.0
    %2935 = vmatpush1.msra.mxu0 0.0
    %2936 = vmatprep.subr.mxu0 0.0
    %2937 = vmatpush1.msra.mxu0 0.0
    %2938 = vmatprep.subr.mxu0 0.0
    %2939 = vmatpush1.msra.mxu0 0.0
    %2940 = vmatprep.subr.mxu0 0.0
    %2941 = vmatpush1.msra.mxu0 0.0
    %2942 = vmatprep.subr.mxu0 0.0
    %2943 = vmatpush1.msra.mxu0 0.0
    %2944 = vmatprep.subr.mxu0 0.0
    %2945 = vmatpush1.msra.mxu0 0.0
    %2946 = vmatprep.subr.mxu0 0.0
    %2947 = vmatpush1.msra.mxu0 0.0
    %2948 = vmatprep.subr.mxu0 0.0
    %2949 = vmatpush1.msra.mxu0 0.0
    %2950 = vmatprep.subr.mxu0 0.0
    %2951 = vmatpush1.msra.mxu0 0.0
    %2952 = vmatprep.subr.mxu0 0.0
    %2953 = vmatpush1.msra.mxu0 0.0
    %2954 = vmatprep.subr.mxu0 0.0
    %2955 = vmatpush1.msra.mxu0 0.0
    %2956 = vmatprep.subr.mxu0 0.0
    %2957 = vmatpush1.msra.mxu0 0.0
    %2958 = vmatprep.subr.mxu0 0.0
    %2959 = vmatpush1.msra.mxu0 0.0
    %2960 = vmatprep.subr.mxu0 0.0
    %2961 = vmatpush1.msra.mxu0 0.0
    %2962 = vmatprep.subr.mxu0 0.0
    %2963 = vmatpush1.msra.mxu0 0.0
    %2964 = vmatprep.subr.mxu0 0.0
    %2965 = vmatpush1.msra.mxu0 0.0
    %2966 = vmatprep.subr.mxu0 0.0
    %2967 = vmatpush1.msra.mxu0 0.0
    %2968 = vmatprep.subr.mxu0 0.0
    %2969 = vmatpush1.msra.mxu0 0.0
    %2970 = vmatprep.subr.mxu0 0.0
    %2971 = vmatpush1.msra.mxu0 0.0
    %2972 = vmatprep.subr.mxu0 0.0
    %2973 = vmatpush1.msra.mxu0 0.0
    %2974 = vmatprep.subr.mxu0 0.0
    %2975 = vmatpush1.msra.mxu0 0.0
    %2976 = vmatprep.mubr.f32.mxu0 0.0
    %2977 = vmatmul.mubr.f32.gmra.mrb[0].mxu0 %v669
    %v2978 = vpop.f32.mrb[0].mxu0
    %v2979 = vadd.f32 %v2910, %v2978
    %v2980 = vpop.f32.mrb[0].mxu0
    %2981 = vmatprep.mubr.f32.mxu0 0.0
    %2982 = vmatmul.mubr.f32.gmra.mrb[0].mxu0 %v672
    %v2983 = vpop.f32.mrb[0].mxu0
    %v2984 = vadd.f32 %v2910, %v2983
    %v2985 = vpop.f32.mrb[0].mxu0
    %2986 = vmatprep.mubr.f32.mxu0 0.0
    %2987 = vmatmul.mubr.f32.gmra.mrb[0].mxu0 %v675
    %v2988 = vpop.f32.mrb[0].mxu0
    %v2989 = vadd.f32 %v2910, %v2988
    %v2990 = vpop.f32.mrb[0].mxu0
    %2991 = vmatprep.mubr.f32.mxu0 0.0
    %2992 = vmatmul.mubr.f32.gmra.mrb[0].mxu0 %v678
    %v2993 = vpop.f32.mrb[0].mxu0
    %v2994 = vadd.f32 %v2910, %v2993
    %v2995 = vpop.f32.mrb[0].mxu0
    %2996 = vmatprep.mubr.f32.mxu0 0.0
    %2997 = vmatmul.mubr.f32.gmra.mrb[0].mxu0 %v681
    %v2998 = vpop.f32.mrb[0].mxu0
    %v2999 = vadd.f32 %v2910, %v2998
    %v3000 = vpop.f32.mrb[0].mxu0
    %3001 = vmatprep.mubr.f32.mxu0 0.0
    %3002 = vmatmul.mubr.f32.gmra.mrb[0].mxu0 %v684
    %v3003 = vpop.f32.mrb[0].mxu0
    %v3004 = vadd.f32 %v2910, %v3003
    %v3005 = vpop.f32.mrb[0].mxu0
    %3006 = vmatprep.mubr.f32.mxu0 0.0
    %3007 = vmatmul.mubr.f32.gmra.mrb[0].mxu0 %v687
    %v3008 = vpop.f32.mrb[0].mxu0
    %v3009 = vadd.f32 %v2910, %v3008
    %v3010 = vpop.f32.mrb[0].mxu0
    %3011 = vmatprep.mubr.f32.mxu0 0.0
    %3012 = vmatmul.mubr.f32.gmra.mrb[0].mxu0 %v690
    %v3013 = vpop.f32.mrb[0].mxu0
    %v3014 = vadd.f32 %v2910, %v3013
    %v3015 = vpop.f32.mrb[0].mxu0
    %3016 = vmatprep.mubr.f32.mxu0 0.0
    %3017 = vmatmul.mubr.f32.gmra.mrb[0].mxu0 %v693
    %v3018 = vpop.f32.mrb[0].mxu0
    %v3019 = vadd.f32 %v2910, %v3018
    %v3020 = vpop.f32.mrb[0].mxu0
    %3021 = vmatprep.mubr.f32.mxu0 0.0
    %3022 = vmatmul.mubr.f32.gmra.mrb[0].mxu0 %v696
    %v3023 = vpop.f32.mrb[0].mxu0
    %v3024 = vadd.f32 %v2910, %v3023
    %v3025 = vpop.f32.mrb[0].mxu0
    %3026 = vmatprep.mubr.f32.mxu0 0.0
    %3027 = vmatmul.mubr.f32.gmra.mrb[0].mxu0 %v699
    %v3028 = vpop.f32.mrb[0].mxu0
    %v3029 = vadd.f32 %v2910, %v3028
    %v3030 = vpop.f32.mrb[0].mxu0
    %3031 = vmatprep.mubr.f32.mxu0 0.0
    %3032 = vmatmul.mubr.f32.gmra.mrb[0].mxu0 %v702
    %v3033 = vpop.f32.mrb[0].mxu0
    %v3034 = vadd.f32 %v2910, %v3033
    %v3035 = vpop.f32.mrb[0].mxu0
    %3036 = vmatprep.mubr.f32.mxu0 0.0
    %3037 = vmatmul.mubr.f32.gmra.mrb[0].mxu0 %v705
    %v3038 = vpop.f32.mrb[0].mxu0
    %v3039 = vadd.f32 %v2910, %v3038
    %v3040 = vpop.f32.mrb[0].mxu0
    %3041 = vmatprep.mubr.f32.mxu0 0.0
    %3042 = vmatmul.mubr.f32.gmra.mrb[0].mxu0 %v708
    %v3043 = vpop.f32.mrb[0].mxu0
    %v3044 = vadd.f32 %v2910, %v3043
    %v3045 = vpop.f32.mrb[0].mxu0
    %3046 = vmatprep.mubr.f32.mxu0 0.0
    %3047 = vmatmul.mubr.f32.gmra.mrb[0].mxu0 %v711
    %v3048 = vpop.f32.mrb[0].mxu0
    %v3049 = vadd.f32 %v2910, %v3048
    %v3050 = vpop.f32.mrb[0].mxu0
    %3051 = vmatprep.mubr.f32.mxu0 0.0
    %3052 = vmatmul.mubr.f32.gmra.mrb[0].mxu0 %v714
    %v3053 = vpop.f32.mrb[0].mxu0
    %v3054 = vadd.f32 %v2910, %v3053
    %v3055 = vpop.f32.mrb[0].mxu0
    %3056 = vdwg.mxu0
    %s3057 = scalar_lea.vmem [#allocation10], 64
    %v3058 = vld [vmem:[%s3057] sm:$0xff]
    %v3059 = vld [vmem:[%s3057 + $0x8] sm:$0xff]
    %v3060 = vld [vmem:[%s3057 + $0x10] sm:$0xff]
    %v3061 = vld [vmem:[%s3057 + $0x18] sm:$0xff]
    %s3062 = scalar_lea.vmem [#allocation12], 2
    %v3063 = vld [vmem:[%s3062] sm:$0x1]
    %v3065 = vlaneseq
    %v3066 = vshrl.u32 %v3065, 7
    %v3067 = vsub.s32 0, %v3066
    %v3068 = vrot.slane %v3063, %v3067
    %3070 = vmatprep.subr.mxu0 0.0
    %3071 = vmatpush1.msra.mxu0 %v3058
    %3072 = vmatprep.subr.mxu0 0.0
    %3073 = vmatpush1.msra.mxu0 %v3059
    %3074 = vmatprep.subr.mxu0 0.0
    %3075 = vmatpush1.msra.mxu0 %v3060
    %3076 = vmatprep.subr.mxu0 0.0
    %3077 = vmatpush1.msra.mxu0 %v3061
    %3078 = vmatprep.subr.mxu0 0.0
    %3079 = vmatpush1.msra.mxu0 0.0
    %3080 = vmatprep.subr.mxu0 0.0
    %3081 = vmatpush1.msra.mxu0 0.0
    %3082 = vmatprep.subr.mxu0 0.0
    %3083 = vmatpush1.msra.mxu0 0.0
    %3084 = vmatprep.subr.mxu0 0.0
    %3085 = vmatpush1.msra.mxu0 0.0
    %3086 = vmatprep.subr.mxu0 0.0
    %3087 = vmatpush1.msra.mxu0 0.0
    %3088 = vmatprep.subr.mxu0 0.0
    %3089 = vmatpush1.msra.mxu0 0.0
    %3090 = vmatprep.subr.mxu0 0.0
    %3091 = vmatpush1.msra.mxu0 0.0
    %3092 = vmatprep.subr.mxu0 0.0
    %3093 = vmatpush1.msra.mxu0 0.0
    %3094 = vmatprep.subr.mxu0 0.0
    %3095 = vmatpush1.msra.mxu0 0.0
    %3096 = vmatprep.subr.mxu0 0.0
    %3097 = vmatpush1.msra.mxu0 0.0
    %3098 = vmatprep.subr.mxu0 0.0
    %3099 = vmatpush1.msra.mxu0 0.0
    %3100 = vmatprep.subr.mxu0 0.0
    %3101 = vmatpush1.msra.mxu0 0.0
    %3102 = vmatprep.subr.mxu0 0.0
    %3103 = vmatpush1.msra.mxu0 0.0
    %3104 = vmatprep.subr.mxu0 0.0
    %3105 = vmatpush1.msra.mxu0 0.0
    %3106 = vmatprep.subr.mxu0 0.0
    %3107 = vmatpush1.msra.mxu0 0.0
    %3108 = vmatprep.subr.mxu0 0.0
    %3109 = vmatpush1.msra.mxu0 0.0
    %3110 = vmatprep.subr.mxu0 0.0
    %3111 = vmatpush1.msra.mxu0 0.0
    %3112 = vmatprep.subr.mxu0 0.0
    %3113 = vmatpush1.msra.mxu0 0.0
    %3114 = vmatprep.subr.mxu0 0.0
    %3115 = vmatpush1.msra.mxu0 0.0
    %3116 = vmatprep.subr.mxu0 0.0
    %3117 = vmatpush1.msra.mxu0 0.0
    %3118 = vmatprep.subr.mxu0 0.0
    %3119 = vmatpush1.msra.mxu0 0.0
    %3120 = vmatprep.subr.mxu0 0.0
    %3121 = vmatpush1.msra.mxu0 0.0
    %3122 = vmatprep.subr.mxu0 0.0
    %3123 = vmatpush1.msra.mxu0 0.0
    %3124 = vmatprep.subr.mxu0 0.0
    %3125 = vmatpush1.msra.mxu0 0.0
    %3126 = vmatprep.subr.mxu0 0.0
    %3127 = vmatpush1.msra.mxu0 0.0
    %3128 = vmatprep.subr.mxu0 0.0
    %3129 = vmatpush1.msra.mxu0 0.0
    %3130 = vmatprep.subr.mxu0 0.0
    %3131 = vmatpush1.msra.mxu0 0.0
    %3132 = vmatprep.subr.mxu0 0.0
    %3133 = vmatpush1.msra.mxu0 0.0
    %3134 = vmatprep.mubr.f32.mxu0 0.0
    %3135 = vmatmul.mubr.f32.gmra.mrb[0].mxu0 %v669
    %v3136 = vpop.f32.mrb[0].mxu0
    %v3137 = vadd.f32 %v3068, %v3136
    %v3138 = vpop.f32.mrb[0].mxu0
    %3139 = vmatprep.mubr.f32.mxu0 0.0
    %3140 = vmatmul.mubr.f32.gmra.mrb[0].mxu0 %v672
    %v3141 = vpop.f32.mrb[0].mxu0
    %v3142 = vadd.f32 %v3068, %v3141
    %v3143 = vpop.f32.mrb[0].mxu0
    %3144 = vmatprep.mubr.f32.mxu0 0.0
    %3145 = vmatmul.mubr.f32.gmra.mrb[0].mxu0 %v675
    %v3146 = vpop.f32.mrb[0].mxu0
    %v3147 = vadd.f32 %v3068, %v3146
    %v3148 = vpop.f32.mrb[0].mxu0
    %3149 = vmatprep.mubr.f32.mxu0 0.0
    %3150 = vmatmul.mubr.f32.gmra.mrb[0].mxu0 %v678
    %v3151 = vpop.f32.mrb[0].mxu0
    %v3152 = vadd.f32 %v3068, %v3151
    %v3153 = vpop.f32.mrb[0].mxu0
    %3154 = vmatprep.mubr.f32.mxu0 0.0
    %3155 = vmatmul.mubr.f32.gmra.mrb[0].mxu0 %v681
    %v3156 = vpop.f32.mrb[0].mxu0
    %v3157 = vadd.f32 %v3068, %v3156
    %v3158 = vpop.f32.mrb[0].mxu0
    %3159 = vmatprep.mubr.f32.mxu0 0.0
    %3160 = vmatmul.mubr.f32.gmra.mrb[0].mxu0 %v684
    %v3161 = vpop.f32.mrb[0].mxu0
    %v3162 = vadd.f32 %v3068, %v3161
    %v3163 = vpop.f32.mrb[0].mxu0
    %3164 = vmatprep.mubr.f32.mxu0 0.0
    %3165 = vmatmul.mubr.f32.gmra.mrb[0].mxu0 %v687
    %v3166 = vpop.f32.mrb[0].mxu0
    %v3167 = vadd.f32 %v3068, %v3166
    %v3168 = vpop.f32.mrb[0].mxu0
    %3169 = vmatprep.mubr.f32.mxu0 0.0
    %3170 = vmatmul.mubr.f32.gmra.mrb[0].mxu0 %v690
    %v3171 = vpop.f32.mrb[0].mxu0
    %v3172 = vadd.f32 %v3068, %v3171
    %v3173 = vpop.f32.mrb[0].mxu0
    %3174 = vmatprep.mubr.f32.mxu0 0.0
    %3175 = vmatmul.mubr.f32.gmra.mrb[0].mxu0 %v693
    %v3176 = vpop.f32.mrb[0].mxu0
    %v3177 = vadd.f32 %v3068, %v3176
    %v3178 = vpop.f32.mrb[0].mxu0
    %3179 = vmatprep.mubr.f32.mxu0 0.0
    %3180 = vmatmul.mubr.f32.gmra.mrb[0].mxu0 %v696
    %v3181 = vpop.f32.mrb[0].mxu0
    %v3182 = vadd.f32 %v3068, %v3181
    %v3183 = vpop.f32.mrb[0].mxu0
    %3184 = vmatprep.mubr.f32.mxu0 0.0
    %3185 = vmatmul.mubr.f32.gmra.mrb[0].mxu0 %v699
    %v3186 = vpop.f32.mrb[0].mxu0
    %v3187 = vadd.f32 %v3068, %v3186
    %v3188 = vpop.f32.mrb[0].mxu0
    %3189 = vmatprep.mubr.f32.mxu0 0.0
    %3190 = vmatmul.mubr.f32.gmra.mrb[0].mxu0 %v702
    %v3191 = vpop.f32.mrb[0].mxu0
    %v3192 = vadd.f32 %v3068, %v3191
    %v3193 = vpop.f32.mrb[0].mxu0
    %3194 = vmatprep.mubr.f32.mxu0 0.0
    %3195 = vmatmul.mubr.f32.gmra.mrb[0].mxu0 %v705
    %v3196 = vpop.f32.mrb[0].mxu0
    %v3197 = vadd.f32 %v3068, %v3196
    %v3198 = vpop.f32.mrb[0].mxu0
    %3199 = vmatprep.mubr.f32.mxu0 0.0
    %3200 = vmatmul.mubr.f32.gmra.mrb[0].mxu0 %v708
    %v3201 = vpop.f32.mrb[0].mxu0
    %v3202 = vadd.f32 %v3068, %v3201
    %v3203 = vpop.f32.mrb[0].mxu0
    %3204 = vmatprep.mubr.f32.mxu0 0.0
    %3205 = vmatmul.mubr.f32.gmra.mrb[0].mxu0 %v711
    %v3206 = vpop.f32.mrb[0].mxu0
    %v3207 = vadd.f32 %v3068, %v3206
    %v3208 = vpop.f32.mrb[0].mxu0
    %3209 = vmatprep.mubr.f32.mxu0 0.0
    %3210 = vmatmul.mubr.f32.gmra.mrb[0].mxu0 %v714
    %v3211 = vpop.f32.mrb[0].mxu0
    %v3212 = vadd.f32 %v3068, %v3211
    %v3213 = vpop.f32.mrb[0].mxu0
    %3214 = vdwg.mxu0
    %s3215 = scalar_lea.vmem %s3, 256
    %v3216 = vld [vmem:[%s3215] sm:$0xff]
    %v3217 = vld [vmem:[%s3215 + $0x8] sm:$0xff]
    %v3218 = vld [vmem:[%s3215 + $0x10] sm:$0xff]
    %v3219 = vld [vmem:[%s3215 + $0x18] sm:$0xff]
    %v3220 = vld [vmem:[%s3215 + $0x20] sm:$0xff]
    %v3221 = vld [vmem:[%s3215 + $0x28] sm:$0xff]
    %v3222 = vld [vmem:[%s3215 + $0x30] sm:$0xff]
    %v3223 = vld [vmem:[%s3215 + $0x38] sm:$0xff]
    %v3224 = vld [vmem:[%s3215 + $0x40] sm:$0xff]
    %v3225 = vld [vmem:[%s3215 + $0x48] sm:$0xff]
    %v3226 = vld [vmem:[%s3215 + $0x50] sm:$0xff]
    %v3227 = vld [vmem:[%s3215 + $0x58] sm:$0xff]
    %v3228 = vld [vmem:[%s3215 + $0x60] sm:$0xff]
    %v3229 = vld [vmem:[%s3215 + $0x68] sm:$0xff]
    %v3230 = vld [vmem:[%s3215 + $0x70] sm:$0xff]
    %v3231 = vld [vmem:[%s3215 + $0x78] sm:$0xff]
    %v3233 = vsel %vm1189, %v2821, 0
    %v3236 = vsel %vm1189, %v2826, 0
    %v3239 = vsel %vm1189, %v2831, 0
    %v3242 = vsel %vm1189, %v2836, 0
    %v3245 = vsel %vm1189, %v2841, 0
    %v3248 = vsel %vm1189, %v2846, 0
    %v3251 = vsel %vm1189, %v2851, 0
    %v3254 = vsel %vm1189, %v2856, 0
    %v3257 = vsel %vm1189, %v2861, 0
    %v3260 = vsel %vm1189, %v2866, 0
    %v3263 = vsel %vm1189, %v2871, 0
    %v3266 = vsel %vm1189, %v2876, 0
    %v3269 = vsel %vm1189, %v2881, 0
    %v3272 = vsel %vm1189, %v2886, 0
    %v3275 = vsel %vm1189, %v2891, 0
    %v3278 = vsel %vm1189, %v2896, 0
    %v3281 = vsel %vm1189, %v2979, 0
    %v3284 = vsel %vm1189, %v2984, 0
    %v3287 = vsel %vm1189, %v2989, 0
    %v3290 = vsel %vm1189, %v2994, 0
    %v3293 = vsel %vm1189, %v2999, 0
    %v3296 = vsel %vm1189, %v3004, 0
    %v3299 = vsel %vm1189, %v3009, 0
    %v3302 = vsel %vm1189, %v3014, 0
    %v3305 = vsel %vm1189, %v3019, 0
    %v3308 = vsel %vm1189, %v3024, 0
    %v3311 = vsel %vm1189, %v3029, 0
    %v3314 = vsel %vm1189, %v3034, 0
    %v3317 = vsel %vm1189, %v3039, 0
    %v3320 = vsel %vm1189, %v3044, 0
    %v3323 = vsel %vm1189, %v3049, 0
    %v3326 = vsel %vm1189, %v3054, 0
    %3328 = vmatprep.subr.mxu0 0.0
    %3329 = vmatpush1.xpose.msra.mxu0 %v3281
    %3330 = vmatprep.subr.mxu0 0.0
    %3331 = vmatpush1.xpose.msra.mxu0 %v3284
    %3332 = vmatprep.subr.mxu0 0.0
    %3333 = vmatpush1.xpose.msra.mxu0 %v3287
    %3334 = vmatprep.subr.mxu0 0.0
    %3335 = vmatpush1.xpose.msra.mxu0 %v3290
    %3336 = vmatprep.subr.mxu0 0.0
    %3337 = vmatpush1.xpose.msra.mxu0 %v3293
    %3338 = vmatprep.subr.mxu0 0.0
    %3339 = vmatpush1.xpose.msra.mxu0 %v3296
    %3340 = vmatprep.subr.mxu0 0.0
    %3341 = vmatpush1.xpose.msra.mxu0 %v3299
    %3342 = vmatprep.subr.mxu0 0.0
    %3343 = vmatpush1.xpose.msra.mxu0 %v3302
    %3344 = vmatprep.subr.mxu0 0.0
    %3345 = vmatpush1.xpose.msra.mxu0 %v3305
    %3346 = vmatprep.subr.mxu0 0.0
    %3347 = vmatpush1.xpose.msra.mxu0 %v3308
    %3348 = vmatprep.subr.mxu0 0.0
    %3349 = vmatpush1.xpose.msra.mxu0 %v3311
    %3350 = vmatprep.subr.mxu0 0.0
    %3351 = vmatpush1.xpose.msra.mxu0 %v3314
    %3352 = vmatprep.subr.mxu0 0.0
    %3353 = vmatpush1.xpose.msra.mxu0 %v3317
    %3354 = vmatprep.subr.mxu0 0.0
    %3355 = vmatpush1.xpose.msra.mxu0 %v3320
    %3356 = vmatprep.subr.mxu0 0.0
    %3357 = vmatpush1.xpose.msra.mxu0 %v3323
    %3358 = vmatprep.subr.mxu0 0.0
    %3359 = vmatpush1.xpose.msra.mxu0 %v3326
    %3360 = vmatprep.subr.mxu0 0.0
    %3361 = vmatpush1.xpose.msra.mxu0 0.0
    %3362 = vmatprep.subr.mxu0 0.0
    %3363 = vmatpush1.xpose.msra.mxu0 0.0
    %3364 = vmatprep.subr.mxu0 0.0
    %3365 = vmatpush1.xpose.msra.mxu0 0.0
    %3366 = vmatprep.subr.mxu0 0.0
    %3367 = vmatpush1.xpose.msra.mxu0 0.0
    %3368 = vmatprep.subr.mxu0 0.0
    %3369 = vmatpush1.xpose.msra.mxu0 0.0
    %3370 = vmatprep.subr.mxu0 0.0
    %3371 = vmatpush1.xpose.msra.mxu0 0.0
    %3372 = vmatprep.subr.mxu0 0.0
    %3373 = vmatpush1.xpose.msra.mxu0 0.0
    %3374 = vmatprep.subr.mxu0 0.0
    %3375 = vmatpush1.xpose.msra.mxu0 0.0
    %3376 = vmatprep.subr.mxu0 0.0
    %3377 = vmatpush1.xpose.msra.mxu0 0.0
    %3378 = vmatprep.subr.mxu0 0.0
    %3379 = vmatpush1.xpose.msra.mxu0 0.0
    %3380 = vmatprep.subr.mxu0 0.0
    %3381 = vmatpush1.xpose.msra.mxu0 0.0
    %3382 = vmatprep.subr.mxu0 0.0
    %3383 = vmatpush1.xpose.msra.mxu0 0.0
    %3384 = vmatprep.subr.mxu0 0.0
    %3385 = vmatpush1.xpose.msra.mxu0 0.0
    %3386 = vmatprep.subr.mxu0 0.0
    %3387 = vmatpush1.xpose.msra.mxu0 0.0
    %3388 = vmatprep.subr.mxu0 0.0
    %3389 = vmatpush1.xpose.msra.mxu0 0.0
    %3390 = vmatprep.subr.mxu0 0.0
    %3391 = vmatpush1.xpose.msra.mxu0 0.0
    %3392 = vmatprep.mubr.f32.mxu0 0.0
    %3393 = vmatmul.mubr.f32.gmra.mrb[0].mxu0 %v3233
    %v3394 = vpop.f32.mrb[0].mxu0
    %v3395 = vadd.f32 %v3216, %v3394
    %v3396 = vpop.f32.mrb[0].mxu0
    %3397 = vmatprep.mubr.f32.mxu0 0.0
    %3398 = vmatmul.mubr.f32.gmra.mrb[0].mxu0 %v3236
    %v3399 = vpop.f32.mrb[0].mxu0
    %v3400 = vadd.f32 %v3217, %v3399
    %v3401 = vpop.f32.mrb[0].mxu0
    %3402 = vmatprep.mubr.f32.mxu0 0.0
    %3403 = vmatmul.mubr.f32.gmra.mrb[0].mxu0 %v3239
    %v3404 = vpop.f32.mrb[0].mxu0
    %v3405 = vadd.f32 %v3218, %v3404
    %v3406 = vpop.f32.mrb[0].mxu0
    %3407 = vmatprep.mubr.f32.mxu0 0.0
    %3408 = vmatmul.mubr.f32.gmra.mrb[0].mxu0 %v3242
    %v3409 = vpop.f32.mrb[0].mxu0
    %v3410 = vadd.f32 %v3219, %v3409
    %v3411 = vpop.f32.mrb[0].mxu0
    %3412 = vmatprep.mubr.f32.mxu0 0.0
    %3413 = vmatmul.mubr.f32.gmra.mrb[0].mxu0 %v3245
    %v3414 = vpop.f32.mrb[0].mxu0
    %v3415 = vadd.f32 %v3220, %v3414
    %v3416 = vpop.f32.mrb[0].mxu0
    %3417 = vmatprep.mubr.f32.mxu0 0.0
    %3418 = vmatmul.mubr.f32.gmra.mrb[0].mxu0 %v3248
    %v3419 = vpop.f32.mrb[0].mxu0
    %v3420 = vadd.f32 %v3221, %v3419
    %v3421 = vpop.f32.mrb[0].mxu0
    %3422 = vmatprep.mubr.f32.mxu0 0.0
    %3423 = vmatmul.mubr.f32.gmra.mrb[0].mxu0 %v3251
    %v3424 = vpop.f32.mrb[0].mxu0
    %v3425 = vadd.f32 %v3222, %v3424
    %v3426 = vpop.f32.mrb[0].mxu0
    %3427 = vmatprep.mubr.f32.mxu0 0.0
    %3428 = vmatmul.mubr.f32.gmra.mrb[0].mxu0 %v3254
    %v3429 = vpop.f32.mrb[0].mxu0
    %v3430 = vadd.f32 %v3223, %v3429
    %v3431 = vpop.f32.mrb[0].mxu0
    %3432 = vmatprep.mubr.f32.mxu0 0.0
    %3433 = vmatmul.mubr.f32.gmra.mrb[0].mxu0 %v3257
    %v3434 = vpop.f32.mrb[0].mxu0
    %v3435 = vadd.f32 %v3224, %v3434
    %v3436 = vpop.f32.mrb[0].mxu0
    %3437 = vmatprep.mubr.f32.mxu0 0.0
    %3438 = vmatmul.mubr.f32.gmra.mrb[0].mxu0 %v3260
    %v3439 = vpop.f32.mrb[0].mxu0
    %v3440 = vadd.f32 %v3225, %v3439
    %v3441 = vpop.f32.mrb[0].mxu0
    %3442 = vmatprep.mubr.f32.mxu0 0.0
    %3443 = vmatmul.mubr.f32.gmra.mrb[0].mxu0 %v3263
    %v3444 = vpop.f32.mrb[0].mxu0
    %v3445 = vadd.f32 %v3226, %v3444
    %v3446 = vpop.f32.mrb[0].mxu0
    %3447 = vmatprep.mubr.f32.mxu0 0.0
    %3448 = vmatmul.mubr.f32.gmra.mrb[0].mxu0 %v3266
    %v3449 = vpop.f32.mrb[0].mxu0
    %v3450 = vadd.f32 %v3227, %v3449
    %v3451 = vpop.f32.mrb[0].mxu0
    %3452 = vmatprep.mubr.f32.mxu0 0.0
    %3453 = vmatmul.mubr.f32.gmra.mrb[0].mxu0 %v3269
    %v3454 = vpop.f32.mrb[0].mxu0
    %v3455 = vadd.f32 %v3228, %v3454
    %v3456 = vpop.f32.mrb[0].mxu0
    %3457 = vmatprep.mubr.f32.mxu0 0.0
    %3458 = vmatmul.mubr.f32.gmra.mrb[0].mxu0 %v3272
    %v3459 = vpop.f32.mrb[0].mxu0
    %v3460 = vadd.f32 %v3229, %v3459
    %v3461 = vpop.f32.mrb[0].mxu0
    %3462 = vmatprep.mubr.f32.mxu0 0.0
    %3463 = vmatmul.mubr.f32.gmra.mrb[0].mxu0 %v3275
    %v3464 = vpop.f32.mrb[0].mxu0
    %v3465 = vadd.f32 %v3230, %v3464
    %v3466 = vpop.f32.mrb[0].mxu0
    %3467 = vmatprep.mubr.f32.mxu0 0.0
    %3468 = vmatmul.mubr.f32.gmra.mrb[0].mxu0 %v3278
    %v3469 = vpop.f32.mrb[0].mxu0
    %v3470 = vadd.f32 %v3231, %v3469
    %v3471 = vpop.f32.mrb[0].mxu0
    %3472 = vdwg.mxu0
    %3473 = vmax.xlane.f32.xlu0 %v3395
    %v3474 = vpop.xlane.xlu0 %3473
    %3475 = vmax.xlane.f32.xlu0 %v3400
    %v3476 = vpop.xlane.xlu0 %3475
    %3477 = vmax.xlane.f32.xlu0 %v3405
    %v3478 = vpop.xlane.xlu0 %3477
    %3479 = vmax.xlane.f32.xlu0 %v3410
    %v3480 = vpop.xlane.xlu0 %3479
    %3481 = vmax.xlane.f32.xlu0 %v3415
    %v3482 = vpop.xlane.xlu0 %3481
    %3483 = vmax.xlane.f32.xlu0 %v3420
    %v3484 = vpop.xlane.xlu0 %3483
    %3485 = vmax.xlane.f32.xlu0 %v3425
    %v3486 = vpop.xlane.xlu0 %3485
    %3487 = vmax.xlane.f32.xlu0 %v3430
    %v3488 = vpop.xlane.xlu0 %3487
    %3489 = vmax.xlane.f32.xlu0 %v3435
    %v3490 = vpop.xlane.xlu0 %3489
    %3491 = vmax.xlane.f32.xlu0 %v3440
    %v3492 = vpop.xlane.xlu0 %3491
    %3493 = vmax.xlane.f32.xlu0 %v3445
    %v3494 = vpop.xlane.xlu0 %3493
    %3495 = vmax.xlane.f32.xlu0 %v3450
    %v3496 = vpop.xlane.xlu0 %3495
    %3497 = vmax.xlane.f32.xlu0 %v3455
    %v3498 = vpop.xlane.xlu0 %3497
    %3499 = vmax.xlane.f32.xlu0 %v3460
    %v3500 = vpop.xlane.xlu0 %3499
    %3501 = vmax.xlane.f32.xlu0 %v3465
    %v3502 = vpop.xlane.xlu0 %3501
    %3503 = vmax.xlane.f32.xlu0 %v3470
    %v3504 = vpop.xlane.xlu0 %3503
    %v3505 = vsub.f32 %v3395, %v3474
    %v3506 = vsub.f32 %v3400, %v3476
    %v3507 = vsub.f32 %v3405, %v3478
    %v3508 = vsub.f32 %v3410, %v3480
    %v3509 = vsub.f32 %v3415, %v3482
    %v3510 = vsub.f32 %v3420, %v3484
    %v3511 = vsub.f32 %v3425, %v3486
    %v3512 = vsub.f32 %v3430, %v3488
    %v3513 = vsub.f32 %v3435, %v3490
    %v3514 = vsub.f32 %v3440, %v3492
    %v3515 = vsub.f32 %v3445, %v3494
    %v3516 = vsub.f32 %v3450, %v3496
    %v3517 = vsub.f32 %v3455, %v3498
    %v3518 = vsub.f32 %v3460, %v3500
    %v3519 = vsub.f32 %v3465, %v3502
    %v3520 = vsub.f32 %v3470, %v3504
    %v3521 = vmul.f32 %v3505, 1.442695
    %v3522 = vpow.pop %v3521
    %v3523 = vmul.f32 %v3506, 1.442695
    %v3524 = vpow.pop %v3523
    %v3525 = vmul.f32 %v3507, 1.442695
    %v3526 = vpow.pop %v3525
    %v3527 = vmul.f32 %v3508, 1.442695
    %v3528 = vpow.pop %v3527
    %v3529 = vmul.f32 %v3509, 1.442695
    %v3530 = vpow.pop %v3529
    %v3531 = vmul.f32 %v3510, 1.442695
    %v3532 = vpow.pop %v3531
    %v3533 = vmul.f32 %v3511, 1.442695
    %v3534 = vpow.pop %v3533
    %v3535 = vmul.f32 %v3512, 1.442695
    %v3536 = vpow.pop %v3535
    %v3537 = vmul.f32 %v3513, 1.442695
    %v3538 = vpow.pop %v3537
    %v3539 = vmul.f32 %v3514, 1.442695
    %v3540 = vpow.pop %v3539
    %v3541 = vmul.f32 %v3515, 1.442695
    %v3542 = vpow.pop %v3541
    %v3543 = vmul.f32 %v3516, 1.442695
    %v3544 = vpow.pop %v3543
    %v3545 = vmul.f32 %v3517, 1.442695
    %v3546 = vpow.pop %v3545
    %v3547 = vmul.f32 %v3518, 1.442695
    %v3548 = vpow.pop %v3547
    %v3549 = vmul.f32 %v3519, 1.442695
    %v3550 = vpow.pop %v3549
    %v3551 = vmul.f32 %v3520, 1.442695
    %v3552 = vpow.pop %v3551
    %3553 = vadd.xlane.f32.xlu0 %v3522
    %v3554 = vpop.xlane.xlu0 %3553
    %3555 = vadd.xlane.f32.xlu0 %v3524
    %v3556 = vpop.xlane.xlu0 %3555
    %3557 = vadd.xlane.f32.xlu0 %v3526
    %v3558 = vpop.xlane.xlu0 %3557
    %3559 = vadd.xlane.f32.xlu0 %v3528
    %v3560 = vpop.xlane.xlu0 %3559
    %3561 = vadd.xlane.f32.xlu0 %v3530
    %v3562 = vpop.xlane.xlu0 %3561
    %3563 = vadd.xlane.f32.xlu0 %v3532
    %v3564 = vpop.xlane.xlu0 %3563
    %3565 = vadd.xlane.f32.xlu0 %v3534
    %v3566 = vpop.xlane.xlu0 %3565
    %3567 = vadd.xlane.f32.xlu0 %v3536
    %v3568 = vpop.xlane.xlu0 %3567
    %3569 = vadd.xlane.f32.xlu0 %v3538
    %v3570 = vpop.xlane.xlu0 %3569
    %3571 = vadd.xlane.f32.xlu0 %v3540
    %v3572 = vpop.xlane.xlu0 %3571
    %3573 = vadd.xlane.f32.xlu0 %v3542
    %v3574 = vpop.xlane.xlu0 %3573
    %3575 = vadd.xlane.f32.xlu0 %v3544
    %v3576 = vpop.xlane.xlu0 %3575
    %3577 = vadd.xlane.f32.xlu0 %v3546
    %v3578 = vpop.xlane.xlu0 %3577
    %3579 = vadd.xlane.f32.xlu0 %v3548
    %v3580 = vpop.xlane.xlu0 %3579
    %3581 = vadd.xlane.f32.xlu0 %v3550
    %v3582 = vpop.xlane.xlu0 %3581
    %3583 = vadd.xlane.f32.xlu0 %v3552
    %v3584 = vpop.xlane.xlu0 %3583
    %v3585 = vrcp.pop %v3554
    %v3586 = vmul.f32 %v3522, %v3585
    %v3587 = vrcp.pop %v3556
    %v3588 = vmul.f32 %v3524, %v3587
    %v3589 = vrcp.pop %v3558
    %v3590 = vmul.f32 %v3526, %v3589
    %v3591 = vrcp.pop %v3560
    %v3592 = vmul.f32 %v3528, %v3591
    %v3593 = vrcp.pop %v3562
    %v3594 = vmul.f32 %v3530, %v3593
    %v3595 = vrcp.pop %v3564
    %v3596 = vmul.f32 %v3532, %v3595
    %v3597 = vrcp.pop %v3566
    %v3598 = vmul.f32 %v3534, %v3597
    %v3599 = vrcp.pop %v3568
    %v3600 = vmul.f32 %v3536, %v3599
    %v3601 = vrcp.pop %v3570
    %v3602 = vmul.f32 %v3538, %v3601
    %v3603 = vrcp.pop %v3572
    %v3604 = vmul.f32 %v3540, %v3603
    %v3605 = vrcp.pop %v3574
    %v3606 = vmul.f32 %v3542, %v3605
    %v3607 = vrcp.pop %v3576
    %v3608 = vmul.f32 %v3544, %v3607
    %v3609 = vrcp.pop %v3578
    %v3610 = vmul.f32 %v3546, %v3609
    %v3611 = vrcp.pop %v3580
    %v3612 = vmul.f32 %v3548, %v3611
    %v3613 = vrcp.pop %v3582
    %v3614 = vmul.f32 %v3550, %v3613
    %v3615 = vrcp.pop %v3584
    %v3616 = vmul.f32 %v3552, %v3615
    %3617 = vmatprep.subr.mxu0 0.0
    %3618 = vmatpush1.msra.mxu0 %v3137
    %3619 = vmatprep.subr.mxu0 0.0
    %3620 = vmatpush1.msra.mxu0 %v3142
    %3621 = vmatprep.subr.mxu0 0.0
    %3622 = vmatpush1.msra.mxu0 %v3147
    %3623 = vmatprep.subr.mxu0 0.0
    %3624 = vmatpush1.msra.mxu0 %v3152
    %3625 = vmatprep.subr.mxu0 0.0
    %3626 = vmatpush1.msra.mxu0 %v3157
    %3627 = vmatprep.subr.mxu0 0.0
    %3628 = vmatpush1.msra.mxu0 %v3162
    %3629 = vmatprep.subr.mxu0 0.0
    %3630 = vmatpush1.msra.mxu0 %v3167
    %3631 = vmatprep.subr.mxu0 0.0
    %3632 = vmatpush1.msra.mxu0 %v3172
    %3633 = vmatprep.subr.mxu0 0.0
    %3634 = vmatpush1.msra.mxu0 %v3177
    %3635 = vmatprep.subr.mxu0 0.0
    %3636 = vmatpush1.msra.mxu0 %v3182
    %3637 = vmatprep.subr.mxu0 0.0
    %3638 = vmatpush1.msra.mxu0 %v3187
    %3639 = vmatprep.subr.mxu0 0.0
    %3640 = vmatpush1.msra.mxu0 %v3192
    %3641 = vmatprep.subr.mxu0 0.0
    %3642 = vmatpush1.msra.mxu0 %v3197
    %3643 = vmatprep.subr.mxu0 0.0
    %3644 = vmatpush1.msra.mxu0 %v3202
    %3645 = vmatprep.subr.mxu0 0.0
    %3646 = vmatpush1.msra.mxu0 %v3207
    %3647 = vmatprep.subr.mxu0 0.0
    %3648 = vmatpush1.msra.mxu0 %v3212
    %3649 = vmatprep.subr.mxu0 0.0
    %3650 = vmatpush1.msra.mxu0 0.0
    %3651 = vmatprep.subr.mxu0 0.0
    %3652 = vmatpush1.msra.mxu0 0.0
    %3653 = vmatprep.subr.mxu0 0.0
    %3654 = vmatpush1.msra.mxu0 0.0
    %3655 = vmatprep.subr.mxu0 0.0
    %3656 = vmatpush1.msra.mxu0 0.0
    %3657 = vmatprep.subr.mxu0 0.0
    %3658 = vmatpush1.msra.mxu0 0.0
    %3659 = vmatprep.subr.mxu0 0.0
    %3660 = vmatpush1.msra.mxu0 0.0
    %3661 = vmatprep.subr.mxu0 0.0
    %3662 = vmatpush1.msra.mxu0 0.0
    %3663 = vmatprep.subr.mxu0 0.0
    %3664 = vmatpush1.msra.mxu0 0.0
    %3665 = vmatprep.subr.mxu0 0.0
    %3666 = vmatpush1.msra.mxu0 0.0
    %3667 = vmatprep.subr.mxu0 0.0
    %3668 = vmatpush1.msra.mxu0 0.0
    %3669 = vmatprep.subr.mxu0 0.0
    %3670 = vmatpush1.msra.mxu0 0.0
    %3671 = vmatprep.subr.mxu0 0.0
    %3672 = vmatpush1.msra.mxu0 0.0
    %3673 = vmatprep.subr.mxu0 0.0
    %3674 = vmatpush1.msra.mxu0 0.0
    %3675 = vmatprep.subr.mxu0 0.0
    %3676 = vmatpush1.msra.mxu0 0.0
    %3677 = vmatprep.subr.mxu0 0.0
    %3678 = vmatpush1.msra.mxu0 0.0
    %3679 = vmatprep.subr.mxu0 0.0
    %3680 = vmatpush1.msra.mxu0 0.0
    %3681 = vmatprep.mubr.f32.mxu0 0.0
    %3682 = vmatmul.mubr.f32.gmra.mrb[0].mxu0 %v3586
    %v3683 = vpop.f32.mrb[0].mxu0
    %v3684 = vadd.f32 0.0, %v3683
    %v3685 = vpop.f32.mrb[0].mxu0
    %3686 = vmatprep.mubr.f32.mxu0 0.0
    %3687 = vmatmul.mubr.f32.gmra.mrb[0].mxu0 %v3588
    %v3688 = vpop.f32.mrb[0].mxu0
    %v3689 = vadd.f32 0.0, %v3688
    %v3690 = vpop.f32.mrb[0].mxu0
    %3691 = vmatprep.mubr.f32.mxu0 0.0
    %3692 = vmatmul.mubr.f32.gmra.mrb[0].mxu0 %v3590
    %v3693 = vpop.f32.mrb[0].mxu0
    %v3694 = vadd.f32 0.0, %v3693
    %v3695 = vpop.f32.mrb[0].mxu0
    %3696 = vmatprep.mubr.f32.mxu0 0.0
    %3697 = vmatmul.mubr.f32.gmra.mrb[0].mxu0 %v3592
    %v3698 = vpop.f32.mrb[0].mxu0
    %v3699 = vadd.f32 0.0, %v3698
    %v3700 = vpop.f32.mrb[0].mxu0
    %3701 = vmatprep.mubr.f32.mxu0 0.0
    %3702 = vmatmul.mubr.f32.gmra.mrb[0].mxu0 %v3594
    %v3703 = vpop.f32.mrb[0].mxu0
    %v3704 = vadd.f32 0.0, %v3703
    %v3705 = vpop.f32.mrb[0].mxu0
    %3706 = vmatprep.mubr.f32.mxu0 0.0
    %3707 = vmatmul.mubr.f32.gmra.mrb[0].mxu0 %v3596
    %v3708 = vpop.f32.mrb[0].mxu0
    %v3709 = vadd.f32 0.0, %v3708
    %v3710 = vpop.f32.mrb[0].mxu0
    %3711 = vmatprep.mubr.f32.mxu0 0.0
    %3712 = vmatmul.mubr.f32.gmra.mrb[0].mxu0 %v3598
    %v3713 = vpop.f32.mrb[0].mxu0
    %v3714 = vadd.f32 0.0, %v3713
    %v3715 = vpop.f32.mrb[0].mxu0
    %3716 = vmatprep.mubr.f32.mxu0 0.0
    %3717 = vmatmul.mubr.f32.gmra.mrb[0].mxu0 %v3600
    %v3718 = vpop.f32.mrb[0].mxu0
    %v3719 = vadd.f32 0.0, %v3718
    %v3720 = vpop.f32.mrb[0].mxu0
    %3721 = vmatprep.mubr.f32.mxu0 0.0
    %3722 = vmatmul.mubr.f32.gmra.mrb[0].mxu0 %v3602
    %v3723 = vpop.f32.mrb[0].mxu0
    %v3724 = vadd.f32 0.0, %v3723
    %v3725 = vpop.f32.mrb[0].mxu0
    %3726 = vmatprep.mubr.f32.mxu0 0.0
    %3727 = vmatmul.mubr.f32.gmra.mrb[0].mxu0 %v3604
    %v3728 = vpop.f32.mrb[0].mxu0
    %v3729 = vadd.f32 0.0, %v3728
    %v3730 = vpop.f32.mrb[0].mxu0
    %3731 = vmatprep.mubr.f32.mxu0 0.0
    %3732 = vmatmul.mubr.f32.gmra.mrb[0].mxu0 %v3606
    %v3733 = vpop.f32.mrb[0].mxu0
    %v3734 = vadd.f32 0.0, %v3733
    %v3735 = vpop.f32.mrb[0].mxu0
    %3736 = vmatprep.mubr.f32.mxu0 0.0
    %3737 = vmatmul.mubr.f32.gmra.mrb[0].mxu0 %v3608
    %v3738 = vpop.f32.mrb[0].mxu0
    %v3739 = vadd.f32 0.0, %v3738
    %v3740 = vpop.f32.mrb[0].mxu0
    %3741 = vmatprep.mubr.f32.mxu0 0.0
    %3742 = vmatmul.mubr.f32.gmra.mrb[0].mxu0 %v3610
    %v3743 = vpop.f32.mrb[0].mxu0
    %v3744 = vadd.f32 0.0, %v3743
    %v3745 = vpop.f32.mrb[0].mxu0
    %3746 = vmatprep.mubr.f32.mxu0 0.0
    %3747 = vmatmul.mubr.f32.gmra.mrb[0].mxu0 %v3612
    %v3748 = vpop.f32.mrb[0].mxu0
    %v3749 = vadd.f32 0.0, %v3748
    %v3750 = vpop.f32.mrb[0].mxu0
    %3751 = vmatprep.mubr.f32.mxu0 0.0
    %3752 = vmatmul.mubr.f32.gmra.mrb[0].mxu0 %v3614
    %v3753 = vpop.f32.mrb[0].mxu0
    %v3754 = vadd.f32 0.0, %v3753
    %v3755 = vpop.f32.mrb[0].mxu0
    %3756 = vmatprep.mubr.f32.mxu0 0.0
    %3757 = vmatmul.mubr.f32.gmra.mrb[0].mxu0 %v3616
    %v3758 = vpop.f32.mrb[0].mxu0
    %v3759 = vadd.f32 0.0, %v3758
    %v3760 = vpop.f32.mrb[0].mxu0
    %3761 = vdwg.mxu0
    %v3762 = vadd.f32 %v2663, %v3684
    %v3763 = vadd.f32 %v2668, %v3689
    %v3764 = vadd.f32 %v2673, %v3694
    %v3765 = vadd.f32 %v2678, %v3699
    %v3766 = vadd.f32 %v2683, %v3704
    %v3767 = vadd.f32 %v2688, %v3709
    %v3768 = vadd.f32 %v2693, %v3714
    %v3769 = vadd.f32 %v2698, %v3719
    %v3770 = vadd.f32 %v2703, %v3724
    %v3771 = vadd.f32 %v2708, %v3729
    %v3772 = vadd.f32 %v2713, %v3734
    %v3773 = vadd.f32 %v2718, %v3739
    %v3774 = vadd.f32 %v2723, %v3744
    %v3775 = vadd.f32 %v2728, %v3749
    %v3776 = vadd.f32 %v2733, %v3754
    %v3777 = vadd.f32 %v2738, %v3759
    %s3778 = scalar_lea.vmem %s6, 96
    %v3779 = vld [vmem:[%s3778] sm:$0xff]
    %v3780 = vld [vmem:[%s3778 + $0x8] sm:$0xff]
    %v3781 = vld [vmem:[%s3778 + $0x10] sm:$0xff]
    %v3782 = vld [vmem:[%s3778 + $0x18] sm:$0xff]
    %s3783 = scalar_lea.vmem [#allocation7], 3
    %v3784 = vld [vmem:[%s3783] sm:$0x1]
    %v3786 = vlaneseq
    %v3787 = vshrl.u32 %v3786, 7
    %v3788 = vsub.s32 0, %v3787
    %v3789 = vrot.slane %v3784, %v3788
    %3791 = vmatprep.subr.mxu0 0.0
    %3792 = vmatpush1.msra.mxu0 %v3779
    %3793 = vmatprep.subr.mxu0 0.0
    %3794 = vmatpush1.msra.mxu0 %v3780
    %3795 = vmatprep.subr.mxu0 0.0
    %3796 = vmatpush1.msra.mxu0 %v3781
    %3797 = vmatprep.subr.mxu0 0.0
    %3798 = vmatpush1.msra.mxu0 %v3782
    %3799 = vmatprep.subr.mxu0 0.0
    %3800 = vmatpush1.msra.mxu0 0.0
    %3801 = vmatprep.subr.mxu0 0.0
    %3802 = vmatpush1.msra.mxu0 0.0
    %3803 = vmatprep.subr.mxu0 0.0
    %3804 = vmatpush1.msra.mxu0 0.0
    %3805 = vmatprep.subr.mxu0 0.0
    %3806 = vmatpush1.msra.mxu0 0.0
    %3807 = vmatprep.subr.mxu0 0.0
    %3808 = vmatpush1.msra.mxu0 0.0
    %3809 = vmatprep.subr.mxu0 0.0
    %3810 = vmatpush1.msra.mxu0 0.0
    %3811 = vmatprep.subr.mxu0 0.0
    %3812 = vmatpush1.msra.mxu0 0.0
    %3813 = vmatprep.subr.mxu0 0.0
    %3814 = vmatpush1.msra.mxu0 0.0
    %3815 = vmatprep.subr.mxu0 0.0
    %3816 = vmatpush1.msra.mxu0 0.0
    %3817 = vmatprep.subr.mxu0 0.0
    %3818 = vmatpush1.msra.mxu0 0.0
    %3819 = vmatprep.subr.mxu0 0.0
    %3820 = vmatpush1.msra.mxu0 0.0
    %3821 = vmatprep.subr.mxu0 0.0
    %3822 = vmatpush1.msra.mxu0 0.0
    %3823 = vmatprep.subr.mxu0 0.0
    %3824 = vmatpush1.msra.mxu0 0.0
    %3825 = vmatprep.subr.mxu0 0.0
    %3826 = vmatpush1.msra.mxu0 0.0
    %3827 = vmatprep.subr.mxu0 0.0
    %3828 = vmatpush1.msra.mxu0 0.0
    %3829 = vmatprep.subr.mxu0 0.0
    %3830 = vmatpush1.msra.mxu0 0.0
    %3831 = vmatprep.subr.mxu0 0.0
    %3832 = vmatpush1.msra.mxu0 0.0
    %3833 = vmatprep.subr.mxu0 0.0
    %3834 = vmatpush1.msra.mxu0 0.0
    %3835 = vmatprep.subr.mxu0 0.0
    %3836 = vmatpush1.msra.mxu0 0.0
    %3837 = vmatprep.subr.mxu0 0.0
    %3838 = vmatpush1.msra.mxu0 0.0
    %3839 = vmatprep.subr.mxu0 0.0
    %3840 = vmatpush1.msra.mxu0 0.0
    %3841 = vmatprep.subr.mxu0 0.0
    %3842 = vmatpush1.msra.mxu0 0.0
    %3843 = vmatprep.subr.mxu0 0.0
    %3844 = vmatpush1.msra.mxu0 0.0
    %3845 = vmatprep.subr.mxu0 0.0
    %3846 = vmatpush1.msra.mxu0 0.0
    %3847 = vmatprep.subr.mxu0 0.0
    %3848 = vmatpush1.msra.mxu0 0.0
    %3849 = vmatprep.subr.mxu0 0.0
    %3850 = vmatpush1.msra.mxu0 0.0
    %3851 = vmatprep.subr.mxu0 0.0
    %3852 = vmatpush1.msra.mxu0 0.0
    %3853 = vmatprep.subr.mxu0 0.0
    %3854 = vmatpush1.msra.mxu0 0.0
    %3855 = vmatprep.mubr.f32.mxu0 0.0
    %3856 = vmatmul.mubr.f32.gmra.mrb[0].mxu0 %v669
    %v3857 = vpop.f32.mrb[0].mxu0
    %v3858 = vadd.f32 %v3789, %v3857
    %v3859 = vpop.f32.mrb[0].mxu0
    %3860 = vmatprep.mubr.f32.mxu0 0.0
    %3861 = vmatmul.mubr.f32.gmra.mrb[0].mxu0 %v672
    %v3862 = vpop.f32.mrb[0].mxu0
    %v3863 = vadd.f32 %v3789, %v3862
    %v3864 = vpop.f32.mrb[0].mxu0
    %3865 = vmatprep.mubr.f32.mxu0 0.0
    %3866 = vmatmul.mubr.f32.gmra.mrb[0].mxu0 %v675
    %v3867 = vpop.f32.mrb[0].mxu0
    %v3868 = vadd.f32 %v3789, %v3867
    %v3869 = vpop.f32.mrb[0].mxu0
    %3870 = vmatprep.mubr.f32.mxu0 0.0
    %3871 = vmatmul.mubr.f32.gmra.mrb[0].mxu0 %v678
    %v3872 = vpop.f32.mrb[0].mxu0
    %v3873 = vadd.f32 %v3789, %v3872
    %v3874 = vpop.f32.mrb[0].mxu0
    %3875 = vmatprep.mubr.f32.mxu0 0.0
    %3876 = vmatmul.mubr.f32.gmra.mrb[0].mxu0 %v681
    %v3877 = vpop.f32.mrb[0].mxu0
    %v3878 = vadd.f32 %v3789, %v3877
    %v3879 = vpop.f32.mrb[0].mxu0
    %3880 = vmatprep.mubr.f32.mxu0 0.0
    %3881 = vmatmul.mubr.f32.gmra.mrb[0].mxu0 %v684
    %v3882 = vpop.f32.mrb[0].mxu0
    %v3883 = vadd.f32 %v3789, %v3882
    %v3884 = vpop.f32.mrb[0].mxu0
    %3885 = vmatprep.mubr.f32.mxu0 0.0
    %3886 = vmatmul.mubr.f32.gmra.mrb[0].mxu0 %v687
    %v3887 = vpop.f32.mrb[0].mxu0
    %v3888 = vadd.f32 %v3789, %v3887
    %v3889 = vpop.f32.mrb[0].mxu0
    %3890 = vmatprep.mubr.f32.mxu0 0.0
    %3891 = vmatmul.mubr.f32.gmra.mrb[0].mxu0 %v690
    %v3892 = vpop.f32.mrb[0].mxu0
    %v3893 = vadd.f32 %v3789, %v3892
    %v3894 = vpop.f32.mrb[0].mxu0
    %3895 = vmatprep.mubr.f32.mxu0 0.0
    %3896 = vmatmul.mubr.f32.gmra.mrb[0].mxu0 %v693
    %v3897 = vpop.f32.mrb[0].mxu0
    %v3898 = vadd.f32 %v3789, %v3897
    %v3899 = vpop.f32.mrb[0].mxu0
    %3900 = vmatprep.mubr.f32.mxu0 0.0
    %3901 = vmatmul.mubr.f32.gmra.mrb[0].mxu0 %v696
    %v3902 = vpop.f32.mrb[0].mxu0
    %v3903 = vadd.f32 %v3789, %v3902
    %v3904 = vpop.f32.mrb[0].mxu0
    %3905 = vmatprep.mubr.f32.mxu0 0.0
    %3906 = vmatmul.mubr.f32.gmra.mrb[0].mxu0 %v699
    %v3907 = vpop.f32.mrb[0].mxu0
    %v3908 = vadd.f32 %v3789, %v3907
    %v3909 = vpop.f32.mrb[0].mxu0
    %3910 = vmatprep.mubr.f32.mxu0 0.0
    %3911 = vmatmul.mubr.f32.gmra.mrb[0].mxu0 %v702
    %v3912 = vpop.f32.mrb[0].mxu0
    %v3913 = vadd.f32 %v3789, %v3912
    %v3914 = vpop.f32.mrb[0].mxu0
    %3915 = vmatprep.mubr.f32.mxu0 0.0
    %3916 = vmatmul.mubr.f32.gmra.mrb[0].mxu0 %v705
    %v3917 = vpop.f32.mrb[0].mxu0
    %v3918 = vadd.f32 %v3789, %v3917
    %v3919 = vpop.f32.mrb[0].mxu0
    %3920 = vmatprep.mubr.f32.mxu0 0.0
    %3921 = vmatmul.mubr.f32.gmra.mrb[0].mxu0 %v708
    %v3922 = vpop.f32.mrb[0].mxu0
    %v3923 = vadd.f32 %v3789, %v3922
    %v3924 = vpop.f32.mrb[0].mxu0
    %3925 = vmatprep.mubr.f32.mxu0 0.0
    %3926 = vmatmul.mubr.f32.gmra.mrb[0].mxu0 %v711
    %v3927 = vpop.f32.mrb[0].mxu0
    %v3928 = vadd.f32 %v3789, %v3927
    %v3929 = vpop.f32.mrb[0].mxu0
    %3930 = vmatprep.mubr.f32.mxu0 0.0
    %3931 = vmatmul.mubr.f32.gmra.mrb[0].mxu0 %v714
    %v3932 = vpop.f32.mrb[0].mxu0
    %v3933 = vadd.f32 %v3789, %v3932
    %v3934 = vpop.f32.mrb[0].mxu0
    %3935 = vdwg.mxu0
    %s3936 = scalar_lea.vmem %s8, 96
    %v3937 = vld [vmem:[%s3936] sm:$0xff]
    %v3938 = vld [vmem:[%s3936 + $0x8] sm:$0xff]
    %v3939 = vld [vmem:[%s3936 + $0x10] sm:$0xff]
    %v3940 = vld [vmem:[%s3936 + $0x18] sm:$0xff]
    %s3941 = scalar_lea.vmem [#allocation9], 3
    %v3942 = vld [vmem:[%s3941] sm:$0x1]
    %v3944 = vlaneseq
    %v3945 = vshrl.u32 %v3944, 7
    %v3946 = vsub.s32 0, %v3945
    %v3947 = vrot.slane %v3942, %v3946
    %3949 = vmatprep.subr.mxu0 0.0
    %3950 = vmatpush1.msra.mxu0 %v3937
    %3951 = vmatprep.subr.mxu0 0.0
    %3952 = vmatpush1.msra.mxu0 %v3938
    %3953 = vmatprep.subr.mxu0 0.0
    %3954 = vmatpush1.msra.mxu0 %v3939
    %3955 = vmatprep.subr.mxu0 0.0
    %3956 = vmatpush1.msra.mxu0 %v3940
    %3957 = vmatprep.subr.mxu0 0.0
    %3958 = vmatpush1.msra.mxu0 0.0
    %3959 = vmatprep.subr.mxu0 0.0
    %3960 = vmatpush1.msra.mxu0 0.0
    %3961 = vmatprep.subr.mxu0 0.0
    %3962 = vmatpush1.msra.mxu0 0.0
    %3963 = vmatprep.subr.mxu0 0.0
    %3964 = vmatpush1.msra.mxu0 0.0
    %3965 = vmatprep.subr.mxu0 0.0
    %3966 = vmatpush1.msra.mxu0 0.0
    %3967 = vmatprep.subr.mxu0 0.0
    %3968 = vmatpush1.msra.mxu0 0.0
    %3969 = vmatprep.subr.mxu0 0.0
    %3970 = vmatpush1.msra.mxu0 0.0
    %3971 = vmatprep.subr.mxu0 0.0
    %3972 = vmatpush1.msra.mxu0 0.0
    %3973 = vmatprep.subr.mxu0 0.0
    %3974 = vmatpush1.msra.mxu0 0.0
    %3975 = vmatprep.subr.mxu0 0.0
    %3976 = vmatpush1.msra.mxu0 0.0
    %3977 = vmatprep.subr.mxu0 0.0
    %3978 = vmatpush1.msra.mxu0 0.0
    %3979 = vmatprep.subr.mxu0 0.0
    %3980 = vmatpush1.msra.mxu0 0.0
    %3981 = vmatprep.subr.mxu0 0.0
    %3982 = vmatpush1.msra.mxu0 0.0
    %3983 = vmatprep.subr.mxu0 0.0
    %3984 = vmatpush1.msra.mxu0 0.0
    %3985 = vmatprep.subr.mxu0 0.0
    %3986 = vmatpush1.msra.mxu0 0.0
    %3987 = vmatprep.subr.mxu0 0.0
    %3988 = vmatpush1.msra.mxu0 0.0
    %3989 = vmatprep.subr.mxu0 0.0
    %3990 = vmatpush1.msra.mxu0 0.0
    %3991 = vmatprep.subr.mxu0 0.0
    %3992 = vmatpush1.msra.mxu0 0.0
    %3993 = vmatprep.subr.mxu0 0.0
    %3994 = vmatpush1.msra.mxu0 0.0
    %3995 = vmatprep.subr.mxu0 0.0
    %3996 = vmatpush1.msra.mxu0 0.0
    %3997 = vmatprep.subr.mxu0 0.0
    %3998 = vmatpush1.msra.mxu0 0.0
    %3999 = vmatprep.subr.mxu0 0.0
    %4000 = vmatpush1.msra.mxu0 0.0
    %4001 = vmatprep.subr.mxu0 0.0
    %4002 = vmatpush1.msra.mxu0 0.0
    %4003 = vmatprep.subr.mxu0 0.0
    %4004 = vmatpush1.msra.mxu0 0.0
    %4005 = vmatprep.subr.mxu0 0.0
    %4006 = vmatpush1.msra.mxu0 0.0
    %4007 = vmatprep.subr.mxu0 0.0
    %4008 = vmatpush1.msra.mxu0 0.0
    %4009 = vmatprep.subr.mxu0 0.0
    %4010 = vmatpush1.msra.mxu0 0.0
    %4011 = vmatprep.subr.mxu0 0.0
    %4012 = vmatpush1.msra.mxu0 0.0
    %4013 = vmatprep.mubr.f32.mxu0 0.0
    %4014 = vmatmul.mubr.f32.gmra.mrb[0].mxu0 %v669
    %v4015 = vpop.f32.mrb[0].mxu0
    %v4016 = vadd.f32 %v3947, %v4015
    %v4017 = vpop.f32.mrb[0].mxu0
    %4018 = vmatprep.mubr.f32.mxu0 0.0
    %4019 = vmatmul.mubr.f32.gmra.mrb[0].mxu0 %v672
    %v4020 = vpop.f32.mrb[0].mxu0
    %v4021 = vadd.f32 %v3947, %v4020
    %v4022 = vpop.f32.mrb[0].mxu0
    %4023 = vmatprep.mubr.f32.mxu0 0.0
    %4024 = vmatmul.mubr.f32.gmra.mrb[0].mxu0 %v675
    %v4025 = vpop.f32.mrb[0].mxu0
    %v4026 = vadd.f32 %v3947, %v4025
    %v4027 = vpop.f32.mrb[0].mxu0
    %4028 = vmatprep.mubr.f32.mxu0 0.0
    %4029 = vmatmul.mubr.f32.gmra.mrb[0].mxu0 %v678
    %v4030 = vpop.f32.mrb[0].mxu0
    %v4031 = vadd.f32 %v3947, %v4030
    %v4032 = vpop.f32.mrb[0].mxu0
    %4033 = vmatprep.mubr.f32.mxu0 0.0
    %4034 = vmatmul.mubr.f32.gmra.mrb[0].mxu0 %v681
    %v4035 = vpop.f32.mrb[0].mxu0
    %v4036 = vadd.f32 %v3947, %v4035
    %v4037 = vpop.f32.mrb[0].mxu0
    %4038 = vmatprep.mubr.f32.mxu0 0.0
    %4039 = vmatmul.mubr.f32.gmra.mrb[0].mxu0 %v684
    %v4040 = vpop.f32.mrb[0].mxu0
    %v4041 = vadd.f32 %v3947, %v4040
    %v4042 = vpop.f32.mrb[0].mxu0
    %4043 = vmatprep.mubr.f32.mxu0 0.0
    %4044 = vmatmul.mubr.f32.gmra.mrb[0].mxu0 %v687
    %v4045 = vpop.f32.mrb[0].mxu0
    %v4046 = vadd.f32 %v3947, %v4045
    %v4047 = vpop.f32.mrb[0].mxu0
    %4048 = vmatprep.mubr.f32.mxu0 0.0
    %4049 = vmatmul.mubr.f32.gmra.mrb[0].mxu0 %v690
    %v4050 = vpop.f32.mrb[0].mxu0
    %v4051 = vadd.f32 %v3947, %v4050
    %v4052 = vpop.f32.mrb[0].mxu0
    %4053 = vmatprep.mubr.f32.mxu0 0.0
    %4054 = vmatmul.mubr.f32.gmra.mrb[0].mxu0 %v693
    %v4055 = vpop.f32.mrb[0].mxu0
    %v4056 = vadd.f32 %v3947, %v4055
    %v4057 = vpop.f32.mrb[0].mxu0
    %4058 = vmatprep.mubr.f32.mxu0 0.0
    %4059 = vmatmul.mubr.f32.gmra.mrb[0].mxu0 %v696
    %v4060 = vpop.f32.mrb[0].mxu0
    %v4061 = vadd.f32 %v3947, %v4060
    %v4062 = vpop.f32.mrb[0].mxu0
    %4063 = vmatprep.mubr.f32.mxu0 0.0
    %4064 = vmatmul.mubr.f32.gmra.mrb[0].mxu0 %v699
    %v4065 = vpop.f32.mrb[0].mxu0
    %v4066 = vadd.f32 %v3947, %v4065
    %v4067 = vpop.f32.mrb[0].mxu0
    %4068 = vmatprep.mubr.f32.mxu0 0.0
    %4069 = vmatmul.mubr.f32.gmra.mrb[0].mxu0 %v702
    %v4070 = vpop.f32.mrb[0].mxu0
    %v4071 = vadd.f32 %v3947, %v4070
    %v4072 = vpop.f32.mrb[0].mxu0
    %4073 = vmatprep.mubr.f32.mxu0 0.0
    %4074 = vmatmul.mubr.f32.gmra.mrb[0].mxu0 %v705
    %v4075 = vpop.f32.mrb[0].mxu0
    %v4076 = vadd.f32 %v3947, %v4075
    %v4077 = vpop.f32.mrb[0].mxu0
    %4078 = vmatprep.mubr.f32.mxu0 0.0
    %4079 = vmatmul.mubr.f32.gmra.mrb[0].mxu0 %v708
    %v4080 = vpop.f32.mrb[0].mxu0
    %v4081 = vadd.f32 %v3947, %v4080
    %v4082 = vpop.f32.mrb[0].mxu0
    %4083 = vmatprep.mubr.f32.mxu0 0.0
    %4084 = vmatmul.mubr.f32.gmra.mrb[0].mxu0 %v711
    %v4085 = vpop.f32.mrb[0].mxu0
    %v4086 = vadd.f32 %v3947, %v4085
    %v4087 = vpop.f32.mrb[0].mxu0
    %4088 = vmatprep.mubr.f32.mxu0 0.0
    %4089 = vmatmul.mubr.f32.gmra.mrb[0].mxu0 %v714
    %v4090 = vpop.f32.mrb[0].mxu0
    %v4091 = vadd.f32 %v3947, %v4090
    %v4092 = vpop.f32.mrb[0].mxu0
    %4093 = vdwg.mxu0
    %s4094 = scalar_lea.vmem [#allocation10], 96
    %v4095 = vld [vmem:[%s4094] sm:$0xff]
    %v4096 = vld [vmem:[%s4094 + $0x8] sm:$0xff]
    %v4097 = vld [vmem:[%s4094 + $0x10] sm:$0xff]
    %v4098 = vld [vmem:[%s4094 + $0x18] sm:$0xff]
    %s4099 = scalar_lea.vmem [#allocation12], 3
    %v4100 = vld [vmem:[%s4099] sm:$0x1]
    %v4102 = vlaneseq
    %v4103 = vshrl.u32 %v4102, 7
    %v4104 = vsub.s32 0, %v4103
    %v4105 = vrot.slane %v4100, %v4104
    %4107 = vmatprep.subr.mxu0 0.0
    %4108 = vmatpush1.msra.mxu0 %v4095
    %4109 = vmatprep.subr.mxu0 0.0
    %4110 = vmatpush1.msra.mxu0 %v4096
    %4111 = vmatprep.subr.mxu0 0.0
    %4112 = vmatpush1.msra.mxu0 %v4097
    %4113 = vmatprep.subr.mxu0 0.0
    %4114 = vmatpush1.msra.mxu0 %v4098
    %4115 = vmatprep.subr.mxu0 0.0
    %4116 = vmatpush1.msra.mxu0 0.0
    %4117 = vmatprep.subr.mxu0 0.0
    %4118 = vmatpush1.msra.mxu0 0.0
    %4119 = vmatprep.subr.mxu0 0.0
    %4120 = vmatpush1.msra.mxu0 0.0
    %4121 = vmatprep.subr.mxu0 0.0
    %4122 = vmatpush1.msra.mxu0 0.0
    %4123 = vmatprep.subr.mxu0 0.0
    %4124 = vmatpush1.msra.mxu0 0.0
    %4125 = vmatprep.subr.mxu0 0.0
    %4126 = vmatpush1.msra.mxu0 0.0
    %4127 = vmatprep.subr.mxu0 0.0
    %4128 = vmatpush1.msra.mxu0 0.0
    %4129 = vmatprep.subr.mxu0 0.0
    %4130 = vmatpush1.msra.mxu0 0.0
    %4131 = vmatprep.subr.mxu0 0.0
    %4132 = vmatpush1.msra.mxu0 0.0
    %4133 = vmatprep.subr.mxu0 0.0
    %4134 = vmatpush1.msra.mxu0 0.0
    %4135 = vmatprep.subr.mxu0 0.0
    %4136 = vmatpush1.msra.mxu0 0.0
    %4137 = vmatprep.subr.mxu0 0.0
    %4138 = vmatpush1.msra.mxu0 0.0
    %4139 = vmatprep.subr.mxu0 0.0
    %4140 = vmatpush1.msra.mxu0 0.0
    %4141 = vmatprep.subr.mxu0 0.0
    %4142 = vmatpush1.msra.mxu0 0.0
    %4143 = vmatprep.subr.mxu0 0.0
    %4144 = vmatpush1.msra.mxu0 0.0
    %4145 = vmatprep.subr.mxu0 0.0
    %4146 = vmatpush1.msra.mxu0 0.0
    %4147 = vmatprep.subr.mxu0 0.0
    %4148 = vmatpush1.msra.mxu0 0.0
    %4149 = vmatprep.subr.mxu0 0.0
    %4150 = vmatpush1.msra.mxu0 0.0
    %4151 = vmatprep.subr.mxu0 0.0
    %4152 = vmatpush1.msra.mxu0 0.0
    %4153 = vmatprep.subr.mxu0 0.0
    %4154 = vmatpush1.msra.mxu0 0.0
    %4155 = vmatprep.subr.mxu0 0.0
    %4156 = vmatpush1.msra.mxu0 0.0
    %4157 = vmatprep.subr.mxu0 0.0
    %4158 = vmatpush1.msra.mxu0 0.0
    %4159 = vmatprep.subr.mxu0 0.0
    %4160 = vmatpush1.msra.mxu0 0.0
    %4161 = vmatprep.subr.mxu0 0.0
    %4162 = vmatpush1.msra.mxu0 0.0
    %4163 = vmatprep.subr.mxu0 0.0
    %4164 = vmatpush1.msra.mxu0 0.0
    %4165 = vmatprep.subr.mxu0 0.0
    %4166 = vmatpush1.msra.mxu0 0.0
    %4167 = vmatprep.subr.mxu0 0.0
    %4168 = vmatpush1.msra.mxu0 0.0
    %4169 = vmatprep.subr.mxu0 0.0
    %4170 = vmatpush1.msra.mxu0 0.0
    %4171 = vmatprep.mubr.f32.mxu0 0.0
    %4172 = vmatmul.mubr.f32.gmra.mrb[0].mxu0 %v669
    %v4173 = vpop.f32.mrb[0].mxu0
    %v4174 = vadd.f32 %v4105, %v4173
    %v4175 = vpop.f32.mrb[0].mxu0
    %4176 = vmatprep.mubr.f32.mxu0 0.0
    %4177 = vmatmul.mubr.f32.gmra.mrb[0].mxu0 %v672
    %v4178 = vpop.f32.mrb[0].mxu0
    %v4179 = vadd.f32 %v4105, %v4178
    %v4180 = vpop.f32.mrb[0].mxu0
    %4181 = vmatprep.mubr.f32.mxu0 0.0
    %4182 = vmatmul.mubr.f32.gmra.mrb[0].mxu0 %v675
    %v4183 = vpop.f32.mrb[0].mxu0
    %v4184 = vadd.f32 %v4105, %v4183
    %v4185 = vpop.f32.mrb[0].mxu0
    %4186 = vmatprep.mubr.f32.mxu0 0.0
    %4187 = vmatmul.mubr.f32.gmra.mrb[0].mxu0 %v678
    %v4188 = vpop.f32.mrb[0].mxu0
    %v4189 = vadd.f32 %v4105, %v4188
    %v4190 = vpop.f32.mrb[0].mxu0
    %4191 = vmatprep.mubr.f32.mxu0 0.0
    %4192 = vmatmul.mubr.f32.gmra.mrb[0].mxu0 %v681
    %v4193 = vpop.f32.mrb[0].mxu0
    %v4194 = vadd.f32 %v4105, %v4193
    %v4195 = vpop.f32.mrb[0].mxu0
    %4196 = vmatprep.mubr.f32.mxu0 0.0
    %4197 = vmatmul.mubr.f32.gmra.mrb[0].mxu0 %v684
    %v4198 = vpop.f32.mrb[0].mxu0
    %v4199 = vadd.f32 %v4105, %v4198
    %v4200 = vpop.f32.mrb[0].mxu0
    %4201 = vmatprep.mubr.f32.mxu0 0.0
    %4202 = vmatmul.mubr.f32.gmra.mrb[0].mxu0 %v687
    %v4203 = vpop.f32.mrb[0].mxu0
    %v4204 = vadd.f32 %v4105, %v4203
    %v4205 = vpop.f32.mrb[0].mxu0
    %4206 = vmatprep.mubr.f32.mxu0 0.0
    %4207 = vmatmul.mubr.f32.gmra.mrb[0].mxu0 %v690
    %v4208 = vpop.f32.mrb[0].mxu0
    %v4209 = vadd.f32 %v4105, %v4208
    %v4210 = vpop.f32.mrb[0].mxu0
    %4211 = vmatprep.mubr.f32.mxu0 0.0
    %4212 = vmatmul.mubr.f32.gmra.mrb[0].mxu0 %v693
    %v4213 = vpop.f32.mrb[0].mxu0
    %v4214 = vadd.f32 %v4105, %v4213
    %v4215 = vpop.f32.mrb[0].mxu0
    %4216 = vmatprep.mubr.f32.mxu0 0.0
    %4217 = vmatmul.mubr.f32.gmra.mrb[0].mxu0 %v696
    %v4218 = vpop.f32.mrb[0].mxu0
    %v4219 = vadd.f32 %v4105, %v4218
    %v4220 = vpop.f32.mrb[0].mxu0
    %4221 = vmatprep.mubr.f32.mxu0 0.0
    %4222 = vmatmul.mubr.f32.gmra.mrb[0].mxu0 %v699
    %v4223 = vpop.f32.mrb[0].mxu0
    %v4224 = vadd.f32 %v4105, %v4223
    %v4225 = vpop.f32.mrb[0].mxu0
    %4226 = vmatprep.mubr.f32.mxu0 0.0
    %4227 = vmatmul.mubr.f32.gmra.mrb[0].mxu0 %v702
    %v4228 = vpop.f32.mrb[0].mxu0
    %v4229 = vadd.f32 %v4105, %v4228
    %v4230 = vpop.f32.mrb[0].mxu0
    %4231 = vmatprep.mubr.f32.mxu0 0.0
    %4232 = vmatmul.mubr.f32.gmra.mrb[0].mxu0 %v705
    %v4233 = vpop.f32.mrb[0].mxu0
    %v4234 = vadd.f32 %v4105, %v4233
    %v4235 = vpop.f32.mrb[0].mxu0
    %4236 = vmatprep.mubr.f32.mxu0 0.0
    %4237 = vmatmul.mubr.f32.gmra.mrb[0].mxu0 %v708
    %v4238 = vpop.f32.mrb[0].mxu0
    %v4239 = vadd.f32 %v4105, %v4238
    %v4240 = vpop.f32.mrb[0].mxu0
    %4241 = vmatprep.mubr.f32.mxu0 0.0
    %4242 = vmatmul.mubr.f32.gmra.mrb[0].mxu0 %v711
    %v4243 = vpop.f32.mrb[0].mxu0
    %v4244 = vadd.f32 %v4105, %v4243
    %v4245 = vpop.f32.mrb[0].mxu0
    %4246 = vmatprep.mubr.f32.mxu0 0.0
    %4247 = vmatmul.mubr.f32.gmra.mrb[0].mxu0 %v714
    %v4248 = vpop.f32.mrb[0].mxu0
    %v4249 = vadd.f32 %v4105, %v4248
    %v4250 = vpop.f32.mrb[0].mxu0
    %4251 = vdwg.mxu0
    %s4252 = scalar_lea.vmem %s3, 384
    %v4253 = vld [vmem:[%s4252] sm:$0xff]
    %v4254 = vld [vmem:[%s4252 + $0x8] sm:$0xff]
    %v4255 = vld [vmem:[%s4252 + $0x10] sm:$0xff]
    %v4256 = vld [vmem:[%s4252 + $0x18] sm:$0xff]
    %v4257 = vld [vmem:[%s4252 + $0x20] sm:$0xff]
    %v4258 = vld [vmem:[%s4252 + $0x28] sm:$0xff]
    %v4259 = vld [vmem:[%s4252 + $0x30] sm:$0xff]
    %v4260 = vld [vmem:[%s4252 + $0x38] sm:$0xff]
    %v4261 = vld [vmem:[%s4252 + $0x40] sm:$0xff]
    %v4262 = vld [vmem:[%s4252 + $0x48] sm:$0xff]
    %v4263 = vld [vmem:[%s4252 + $0x50] sm:$0xff]
    %v4264 = vld [vmem:[%s4252 + $0x58] sm:$0xff]
    %v4265 = vld [vmem:[%s4252 + $0x60] sm:$0xff]
    %v4266 = vld [vmem:[%s4252 + $0x68] sm:$0xff]
    %v4267 = vld [vmem:[%s4252 + $0x70] sm:$0xff]
    %v4268 = vld [vmem:[%s4252 + $0x78] sm:$0xff]
    %v4270 = vsel %vm1189, %v3858, 0
    %v4273 = vsel %vm1189, %v3863, 0
    %v4276 = vsel %vm1189, %v3868, 0
    %v4279 = vsel %vm1189, %v3873, 0
    %v4282 = vsel %vm1189, %v3878, 0
    %v4285 = vsel %vm1189, %v3883, 0
    %v4288 = vsel %vm1189, %v3888, 0
    %v4291 = vsel %vm1189, %v3893, 0
    %v4294 = vsel %vm1189, %v3898, 0
    %v4297 = vsel %vm1189, %v3903, 0
    %v4300 = vsel %vm1189, %v3908, 0
    %v4303 = vsel %vm1189, %v3913, 0
    %v4306 = vsel %vm1189, %v3918, 0
    %v4309 = vsel %vm1189, %v3923, 0
    %v4312 = vsel %vm1189, %v3928, 0
    %v4315 = vsel %vm1189, %v3933, 0
    %v4318 = vsel %vm1189, %v4016, 0
    %v4321 = vsel %vm1189, %v4021, 0
    %v4324 = vsel %vm1189, %v4026, 0
    %v4327 = vsel %vm1189, %v4031, 0
    %v4330 = vsel %vm1189, %v4036, 0
    %v4333 = vsel %vm1189, %v4041, 0
    %v4336 = vsel %vm1189, %v4046, 0
    %v4339 = vsel %vm1189, %v4051, 0
    %v4342 = vsel %vm1189, %v4056, 0
    %v4345 = vsel %vm1189, %v4061, 0
    %v4348 = vsel %vm1189, %v4066, 0
    %v4351 = vsel %vm1189, %v4071, 0
    %v4354 = vsel %vm1189, %v4076, 0
    %v4357 = vsel %vm1189, %v4081, 0
    %v4360 = vsel %vm1189, %v4086, 0
    %v4363 = vsel %vm1189, %v4091, 0
    %4365 = vmatprep.subr.mxu0 0.0
    %4366 = vmatpush1.xpose.msra.mxu0 %v4318
    %4367 = vmatprep.subr.mxu0 0.0
    %4368 = vmatpush1.xpose.msra.mxu0 %v4321
    %4369 = vmatprep.subr.mxu0 0.0
    %4370 = vmatpush1.xpose.msra.mxu0 %v4324
    %4371 = vmatprep.subr.mxu0 0.0
    %4372 = vmatpush1.xpose.msra.mxu0 %v4327
    %4373 = vmatprep.subr.mxu0 0.0
    %4374 = vmatpush1.xpose.msra.mxu0 %v4330
    %4375 = vmatprep.subr.mxu0 0.0
    %4376 = vmatpush1.xpose.msra.mxu0 %v4333
    %4377 = vmatprep.subr.mxu0 0.0
    %4378 = vmatpush1.xpose.msra.mxu0 %v4336
    %4379 = vmatprep.subr.mxu0 0.0
    %4380 = vmatpush1.xpose.msra.mxu0 %v4339
    %4381 = vmatprep.subr.mxu0 0.0
    %4382 = vmatpush1.xpose.msra.mxu0 %v4342
    %4383 = vmatprep.subr.mxu0 0.0
    %4384 = vmatpush1.xpose.msra.mxu0 %v4345
    %4385 = vmatprep.subr.mxu0 0.0
    %4386 = vmatpush1.xpose.msra.mxu0 %v4348
    %4387 = vmatprep.subr.mxu0 0.0
    %4388 = vmatpush1.xpose.msra.mxu0 %v4351
    %4389 = vmatprep.subr.mxu0 0.0
    %4390 = vmatpush1.xpose.msra.mxu0 %v4354
    %4391 = vmatprep.subr.mxu0 0.0
    %4392 = vmatpush1.xpose.msra.mxu0 %v4357
    %4393 = vmatprep.subr.mxu0 0.0
    %4394 = vmatpush1.xpose.msra.mxu0 %v4360
    %4395 = vmatprep.subr.mxu0 0.0
    %4396 = vmatpush1.xpose.msra.mxu0 %v4363
    %4397 = vmatprep.subr.mxu0 0.0
    %4398 = vmatpush1.xpose.msra.mxu0 0.0
    %4399 = vmatprep.subr.mxu0 0.0
    %4400 = vmatpush1.xpose.msra.mxu0 0.0
    %4401 = vmatprep.subr.mxu0 0.0
    %4402 = vmatpush1.xpose.msra.mxu0 0.0
    %4403 = vmatprep.subr.mxu0 0.0
    %4404 = vmatpush1.xpose.msra.mxu0 0.0
    %4405 = vmatprep.subr.mxu0 0.0
    %4406 = vmatpush1.xpose.msra.mxu0 0.0
    %4407 = vmatprep.subr.mxu0 0.0
    %4408 = vmatpush1.xpose.msra.mxu0 0.0
    %4409 = vmatprep.subr.mxu0 0.0
    %4410 = vmatpush1.xpose.msra.mxu0 0.0
    %4411 = vmatprep.subr.mxu0 0.0
    %4412 = vmatpush1.xpose.msra.mxu0 0.0
    %4413 = vmatprep.subr.mxu0 0.0
    %4414 = vmatpush1.xpose.msra.mxu0 0.0
    %4415 = vmatprep.subr.mxu0 0.0
    %4416 = vmatpush1.xpose.msra.mxu0 0.0
    %4417 = vmatprep.subr.mxu0 0.0
    %4418 = vmatpush1.xpose.msra.mxu0 0.0
    %4419 = vmatprep.subr.mxu0 0.0
    %4420 = vmatpush1.xpose.msra.mxu0 0.0
    %4421 = vmatprep.subr.mxu0 0.0
    %4422 = vmatpush1.xpose.msra.mxu0 0.0
    %4423 = vmatprep.subr.mxu0 0.0
    %4424 = vmatpush1.xpose.msra.mxu0 0.0
    %4425 = vmatprep.subr.mxu0 0.0
    %4426 = vmatpush1.xpose.msra.mxu0 0.0
    %4427 = vmatprep.subr.mxu0 0.0
    %4428 = vmatpush1.xpose.msra.mxu0 0.0
    %4429 = vmatprep.mubr.f32.mxu0 0.0
    %4430 = vmatmul.mubr.f32.gmra.mrb[0].mxu0 %v4270
    %v4431 = vpop.f32.mrb[0].mxu0
    %v4432 = vadd.f32 %v4253, %v4431
    %v4433 = vpop.f32.mrb[0].mxu0
    %4434 = vmatprep.mubr.f32.mxu0 0.0
    %4435 = vmatmul.mubr.f32.gmra.mrb[0].mxu0 %v4273
    %v4436 = vpop.f32.mrb[0].mxu0
    %v4437 = vadd.f32 %v4254, %v4436
    %v4438 = vpop.f32.mrb[0].mxu0
    %4439 = vmatprep.mubr.f32.mxu0 0.0
    %4440 = vmatmul.mubr.f32.gmra.mrb[0].mxu0 %v4276
    %v4441 = vpop.f32.mrb[0].mxu0
    %v4442 = vadd.f32 %v4255, %v4441
    %v4443 = vpop.f32.mrb[0].mxu0
    %4444 = vmatprep.mubr.f32.mxu0 0.0
    %4445 = vmatmul.mubr.f32.gmra.mrb[0].mxu0 %v4279
    %v4446 = vpop.f32.mrb[0].mxu0
    %v4447 = vadd.f32 %v4256, %v4446
    %v4448 = vpop.f32.mrb[0].mxu0
    %4449 = vmatprep.mubr.f32.mxu0 0.0
    %4450 = vmatmul.mubr.f32.gmra.mrb[0].mxu0 %v4282
    %v4451 = vpop.f32.mrb[0].mxu0
    %v4452 = vadd.f32 %v4257, %v4451
    %v4453 = vpop.f32.mrb[0].mxu0
    %4454 = vmatprep.mubr.f32.mxu0 0.0
    %4455 = vmatmul.mubr.f32.gmra.mrb[0].mxu0 %v4285
    %v4456 = vpop.f32.mrb[0].mxu0
    %v4457 = vadd.f32 %v4258, %v4456
    %v4458 = vpop.f32.mrb[0].mxu0
    %4459 = vmatprep.mubr.f32.mxu0 0.0
    %4460 = vmatmul.mubr.f32.gmra.mrb[0].mxu0 %v4288
    %v4461 = vpop.f32.mrb[0].mxu0
    %v4462 = vadd.f32 %v4259, %v4461
    %v4463 = vpop.f32.mrb[0].mxu0
    %4464 = vmatprep.mubr.f32.mxu0 0.0
    %4465 = vmatmul.mubr.f32.gmra.mrb[0].mxu0 %v4291
    %v4466 = vpop.f32.mrb[0].mxu0
    %v4467 = vadd.f32 %v4260, %v4466
    %v4468 = vpop.f32.mrb[0].mxu0
    %4469 = vmatprep.mubr.f32.mxu0 0.0
    %4470 = vmatmul.mubr.f32.gmra.mrb[0].mxu0 %v4294
    %v4471 = vpop.f32.mrb[0].mxu0
    %v4472 = vadd.f32 %v4261, %v4471
    %v4473 = vpop.f32.mrb[0].mxu0
    %4474 = vmatprep.mubr.f32.mxu0 0.0
    %4475 = vmatmul.mubr.f32.gmra.mrb[0].mxu0 %v4297
    %v4476 = vpop.f32.mrb[0].mxu0
    %v4477 = vadd.f32 %v4262, %v4476
    %v4478 = vpop.f32.mrb[0].mxu0
    %4479 = vmatprep.mubr.f32.mxu0 0.0
    %4480 = vmatmul.mubr.f32.gmra.mrb[0].mxu0 %v4300
    %v4481 = vpop.f32.mrb[0].mxu0
    %v4482 = vadd.f32 %v4263, %v4481
    %v4483 = vpop.f32.mrb[0].mxu0
    %4484 = vmatprep.mubr.f32.mxu0 0.0
    %4485 = vmatmul.mubr.f32.gmra.mrb[0].mxu0 %v4303
    %v4486 = vpop.f32.mrb[0].mxu0
    %v4487 = vadd.f32 %v4264, %v4486
    %v4488 = vpop.f32.mrb[0].mxu0
    %4489 = vmatprep.mubr.f32.mxu0 0.0
    %4490 = vmatmul.mubr.f32.gmra.mrb[0].mxu0 %v4306
    %v4491 = vpop.f32.mrb[0].mxu0
    %v4492 = vadd.f32 %v4265, %v4491
    %v4493 = vpop.f32.mrb[0].mxu0
    %4494 = vmatprep.mubr.f32.mxu0 0.0
    %4495 = vmatmul.mubr.f32.gmra.mrb[0].mxu0 %v4309
    %v4496 = vpop.f32.mrb[0].mxu0
    %v4497 = vadd.f32 %v4266, %v4496
    %v4498 = vpop.f32.mrb[0].mxu0
    %4499 = vmatprep.mubr.f32.mxu0 0.0
    %4500 = vmatmul.mubr.f32.gmra.mrb[0].mxu0 %v4312
    %v4501 = vpop.f32.mrb[0].mxu0
    %v4502 = vadd.f32 %v4267, %v4501
    %v4503 = vpop.f32.mrb[0].mxu0
    %4504 = vmatprep.mubr.f32.mxu0 0.0
    %4505 = vmatmul.mubr.f32.gmra.mrb[0].mxu0 %v4315
    %v4506 = vpop.f32.mrb[0].mxu0
    %v4507 = vadd.f32 %v4268, %v4506
    %v4508 = vpop.f32.mrb[0].mxu0
    %4509 = vdwg.mxu0
    %4510 = vmax.xlane.f32.xlu0 %v4432
    %v4511 = vpop.xlane.xlu0 %4510
    %4512 = vmax.xlane.f32.xlu0 %v4437
    %v4513 = vpop.xlane.xlu0 %4512
    %4514 = vmax.xlane.f32.xlu0 %v4442
    %v4515 = vpop.xlane.xlu0 %4514
    %4516 = vmax.xlane.f32.xlu0 %v4447
    %v4517 = vpop.xlane.xlu0 %4516
    %4518 = vmax.xlane.f32.xlu0 %v4452
    %v4519 = vpop.xlane.xlu0 %4518
    %4520 = vmax.xlane.f32.xlu0 %v4457
    %v4521 = vpop.xlane.xlu0 %4520
    %4522 = vmax.xlane.f32.xlu0 %v4462
    %v4523 = vpop.xlane.xlu0 %4522
    %4524 = vmax.xlane.f32.xlu0 %v4467
    %v4525 = vpop.xlane.xlu0 %4524
    %4526 = vmax.xlane.f32.xlu0 %v4472
    %v4527 = vpop.xlane.xlu0 %4526
    %4528 = vmax.xlane.f32.xlu0 %v4477
    %v4529 = vpop.xlane.xlu0 %4528
    %4530 = vmax.xlane.f32.xlu0 %v4482
    %v4531 = vpop.xlane.xlu0 %4530
    %4532 = vmax.xlane.f32.xlu0 %v4487
    %v4533 = vpop.xlane.xlu0 %4532
    %4534 = vmax.xlane.f32.xlu0 %v4492
    %v4535 = vpop.xlane.xlu0 %4534
    %4536 = vmax.xlane.f32.xlu0 %v4497
    %v4537 = vpop.xlane.xlu0 %4536
    %4538 = vmax.xlane.f32.xlu0 %v4502
    %v4539 = vpop.xlane.xlu0 %4538
    %4540 = vmax.xlane.f32.xlu0 %v4507
    %v4541 = vpop.xlane.xlu0 %4540
    %v4542 = vsub.f32 %v4432, %v4511
    %v4543 = vsub.f32 %v4437, %v4513
    %v4544 = vsub.f32 %v4442, %v4515
    %v4545 = vsub.f32 %v4447, %v4517
    %v4546 = vsub.f32 %v4452, %v4519
    %v4547 = vsub.f32 %v4457, %v4521
    %v4548 = vsub.f32 %v4462, %v4523
    %v4549 = vsub.f32 %v4467, %v4525
    %v4550 = vsub.f32 %v4472, %v4527
    %v4551 = vsub.f32 %v4477, %v4529
    %v4552 = vsub.f32 %v4482, %v4531
    %v4553 = vsub.f32 %v4487, %v4533
    %v4554 = vsub.f32 %v4492, %v4535
    %v4555 = vsub.f32 %v4497, %v4537
    %v4556 = vsub.f32 %v4502, %v4539
    %v4557 = vsub.f32 %v4507, %v4541
    %v4558 = vmul.f32 %v4542, 1.442695
    %v4559 = vpow.pop %v4558
    %v4560 = vmul.f32 %v4543, 1.442695
    %v4561 = vpow.pop %v4560
    %v4562 = vmul.f32 %v4544, 1.442695
    %v4563 = vpow.pop %v4562
    %v4564 = vmul.f32 %v4545, 1.442695
    %v4565 = vpow.pop %v4564
    %v4566 = vmul.f32 %v4546, 1.442695
    %v4567 = vpow.pop %v4566
    %v4568 = vmul.f32 %v4547, 1.442695
    %v4569 = vpow.pop %v4568
    %v4570 = vmul.f32 %v4548, 1.442695
    %v4571 = vpow.pop %v4570
    %v4572 = vmul.f32 %v4549, 1.442695
    %v4573 = vpow.pop %v4572
    %v4574 = vmul.f32 %v4550, 1.442695
    %v4575 = vpow.pop %v4574
    %v4576 = vmul.f32 %v4551, 1.442695
    %v4577 = vpow.pop %v4576
    %v4578 = vmul.f32 %v4552, 1.442695
    %v4579 = vpow.pop %v4578
    %v4580 = vmul.f32 %v4553, 1.442695
    %v4581 = vpow.pop %v4580
    %v4582 = vmul.f32 %v4554, 1.442695
    %v4583 = vpow.pop %v4582
    %v4584 = vmul.f32 %v4555, 1.442695
    %v4585 = vpow.pop %v4584
    %v4586 = vmul.f32 %v4556, 1.442695
    %v4587 = vpow.pop %v4586
    %v4588 = vmul.f32 %v4557, 1.442695
    %v4589 = vpow.pop %v4588
    %4590 = vadd.xlane.f32.xlu0 %v4559
    %v4591 = vpop.xlane.xlu0 %4590
    %4592 = vadd.xlane.f32.xlu0 %v4561
    %v4593 = vpop.xlane.xlu0 %4592
    %4594 = vadd.xlane.f32.xlu0 %v4563
    %v4595 = vpop.xlane.xlu0 %4594
    %4596 = vadd.xlane.f32.xlu0 %v4565
    %v4597 = vpop.xlane.xlu0 %4596
    %4598 = vadd.xlane.f32.xlu0 %v4567
    %v4599 = vpop.xlane.xlu0 %4598
    %4600 = vadd.xlane.f32.xlu0 %v4569
    %v4601 = vpop.xlane.xlu0 %4600
    %4602 = vadd.xlane.f32.xlu0 %v4571
    %v4603 = vpop.xlane.xlu0 %4602
    %4604 = vadd.xlane.f32.xlu0 %v4573
    %v4605 = vpop.xlane.xlu0 %4604
    %4606 = vadd.xlane.f32.xlu0 %v4575
    %v4607 = vpop.xlane.xlu0 %4606
    %4608 = vadd.xlane.f32.xlu0 %v4577
    %v4609 = vpop.xlane.xlu0 %4608
    %4610 = vadd.xlane.f32.xlu0 %v4579
    %v4611 = vpop.xlane.xlu0 %4610
    %4612 = vadd.xlane.f32.xlu0 %v4581
    %v4613 = vpop.xlane.xlu0 %4612
    %4614 = vadd.xlane.f32.xlu0 %v4583
    %v4615 = vpop.xlane.xlu0 %4614
    %4616 = vadd.xlane.f32.xlu0 %v4585
    %v4617 = vpop.xlane.xlu0 %4616
    %4618 = vadd.xlane.f32.xlu0 %v4587
    %v4619 = vpop.xlane.xlu0 %4618
    %4620 = vadd.xlane.f32.xlu0 %v4589
    %v4621 = vpop.xlane.xlu0 %4620
    %v4622 = vrcp.pop %v4591
    %v4623 = vmul.f32 %v4559, %v4622
    %v4624 = vrcp.pop %v4593
    %v4625 = vmul.f32 %v4561, %v4624
    %v4626 = vrcp.pop %v4595
    %v4627 = vmul.f32 %v4563, %v4626
    %v4628 = vrcp.pop %v4597
    %v4629 = vmul.f32 %v4565, %v4628
    %v4630 = vrcp.pop %v4599
    %v4631 = vmul.f32 %v4567, %v4630
    %v4632 = vrcp.pop %v4601
    %v4633 = vmul.f32 %v4569, %v4632
    %v4634 = vrcp.pop %v4603
    %v4635 = vmul.f32 %v4571, %v4634
    %v4636 = vrcp.pop %v4605
    %v4637 = vmul.f32 %v4573, %v4636
    %v4638 = vrcp.pop %v4607
    %v4639 = vmul.f32 %v4575, %v4638
    %v4640 = vrcp.pop %v4609
    %v4641 = vmul.f32 %v4577, %v4640
    %v4642 = vrcp.pop %v4611
    %v4643 = vmul.f32 %v4579, %v4642
    %v4644 = vrcp.pop %v4613
    %v4645 = vmul.f32 %v4581, %v4644
    %v4646 = vrcp.pop %v4615
    %v4647 = vmul.f32 %v4583, %v4646
    %v4648 = vrcp.pop %v4617
    %v4649 = vmul.f32 %v4585, %v4648
    %v4650 = vrcp.pop %v4619
    %v4651 = vmul.f32 %v4587, %v4650
    %v4652 = vrcp.pop %v4621
    %v4653 = vmul.f32 %v4589, %v4652
    %4654 = vmatprep.subr.mxu0 0.0
    %4655 = vmatpush1.msra.mxu0 %v4174
    %4656 = vmatprep.subr.mxu0 0.0
    %4657 = vmatpush1.msra.mxu0 %v4179
    %4658 = vmatprep.subr.mxu0 0.0
    %4659 = vmatpush1.msra.mxu0 %v4184
    %4660 = vmatprep.subr.mxu0 0.0
    %4661 = vmatpush1.msra.mxu0 %v4189
    %4662 = vmatprep.subr.mxu0 0.0
    %4663 = vmatpush1.msra.mxu0 %v4194
    %4664 = vmatprep.subr.mxu0 0.0
    %4665 = vmatpush1.msra.mxu0 %v4199
    %4666 = vmatprep.subr.mxu0 0.0
    %4667 = vmatpush1.msra.mxu0 %v4204
    %4668 = vmatprep.subr.mxu0 0.0
    %4669 = vmatpush1.msra.mxu0 %v4209
    %4670 = vmatprep.subr.mxu0 0.0
    %4671 = vmatpush1.msra.mxu0 %v4214
    %4672 = vmatprep.subr.mxu0 0.0
    %4673 = vmatpush1.msra.mxu0 %v4219
    %4674 = vmatprep.subr.mxu0 0.0
    %4675 = vmatpush1.msra.mxu0 %v4224
    %4676 = vmatprep.subr.mxu0 0.0
    %4677 = vmatpush1.msra.mxu0 %v4229
    %4678 = vmatprep.subr.mxu0 0.0
    %4679 = vmatpush1.msra.mxu0 %v4234
    %4680 = vmatprep.subr.mxu0 0.0
    %4681 = vmatpush1.msra.mxu0 %v4239
    %4682 = vmatprep.subr.mxu0 0.0
    %4683 = vmatpush1.msra.mxu0 %v4244
    %4684 = vmatprep.subr.mxu0 0.0
    %4685 = vmatpush1.msra.mxu0 %v4249
    %4686 = vmatprep.subr.mxu0 0.0
    %4687 = vmatpush1.msra.mxu0 0.0
    %4688 = vmatprep.subr.mxu0 0.0
    %4689 = vmatpush1.msra.mxu0 0.0
    %4690 = vmatprep.subr.mxu0 0.0
    %4691 = vmatpush1.msra.mxu0 0.0
    %4692 = vmatprep.subr.mxu0 0.0
    %4693 = vmatpush1.msra.mxu0 0.0
    %4694 = vmatprep.subr.mxu0 0.0
    %4695 = vmatpush1.msra.mxu0 0.0
    %4696 = vmatprep.subr.mxu0 0.0
    %4697 = vmatpush1.msra.mxu0 0.0
    %4698 = vmatprep.subr.mxu0 0.0
    %4699 = vmatpush1.msra.mxu0 0.0
    %4700 = vmatprep.subr.mxu0 0.0
    %4701 = vmatpush1.msra.mxu0 0.0
    %4702 = vmatprep.subr.mxu0 0.0
    %4703 = vmatpush1.msra.mxu0 0.0
    %4704 = vmatprep.subr.mxu0 0.0
    %4705 = vmatpush1.msra.mxu0 0.0
    %4706 = vmatprep.subr.mxu0 0.0
    %4707 = vmatpush1.msra.mxu0 0.0
    %4708 = vmatprep.subr.mxu0 0.0
    %4709 = vmatpush1.msra.mxu0 0.0
    %4710 = vmatprep.subr.mxu0 0.0
    %4711 = vmatpush1.msra.mxu0 0.0
    %4712 = vmatprep.subr.mxu0 0.0
    %4713 = vmatpush1.msra.mxu0 0.0
    %4714 = vmatprep.subr.mxu0 0.0
    %4715 = vmatpush1.msra.mxu0 0.0
    %4716 = vmatprep.subr.mxu0 0.0
    %4717 = vmatpush1.msra.mxu0 0.0
    %4718 = vmatprep.mubr.f32.mxu0 0.0
    %4719 = vmatmul.mubr.f32.gmra.mrb[0].mxu0 %v4623
    %v4720 = vpop.f32.mrb[0].mxu0
    %v4721 = vadd.f32 0.0, %v4720
    %v4722 = vpop.f32.mrb[0].mxu0
    %4723 = vmatprep.mubr.f32.mxu0 0.0
    %4724 = vmatmul.mubr.f32.gmra.mrb[0].mxu0 %v4625
    %v4725 = vpop.f32.mrb[0].mxu0
    %v4726 = vadd.f32 0.0, %v4725
    %v4727 = vpop.f32.mrb[0].mxu0
    %4728 = vmatprep.mubr.f32.mxu0 0.0
    %4729 = vmatmul.mubr.f32.gmra.mrb[0].mxu0 %v4627
    %v4730 = vpop.f32.mrb[0].mxu0
    %v4731 = vadd.f32 0.0, %v4730
    %v4732 = vpop.f32.mrb[0].mxu0
    %4733 = vmatprep.mubr.f32.mxu0 0.0
    %4734 = vmatmul.mubr.f32.gmra.mrb[0].mxu0 %v4629
    %v4735 = vpop.f32.mrb[0].mxu0
    %v4736 = vadd.f32 0.0, %v4735
    %v4737 = vpop.f32.mrb[0].mxu0
    %4738 = vmatprep.mubr.f32.mxu0 0.0
    %4739 = vmatmul.mubr.f32.gmra.mrb[0].mxu0 %v4631
    %v4740 = vpop.f32.mrb[0].mxu0
    %v4741 = vadd.f32 0.0, %v4740
    %v4742 = vpop.f32.mrb[0].mxu0
    %4743 = vmatprep.mubr.f32.mxu0 0.0
    %4744 = vmatmul.mubr.f32.gmra.mrb[0].mxu0 %v4633
    %v4745 = vpop.f32.mrb[0].mxu0
    %v4746 = vadd.f32 0.0, %v4745
    %v4747 = vpop.f32.mrb[0].mxu0
    %4748 = vmatprep.mubr.f32.mxu0 0.0
    %4749 = vmatmul.mubr.f32.gmra.mrb[0].mxu0 %v4635
    %v4750 = vpop.f32.mrb[0].mxu0
    %v4751 = vadd.f32 0.0, %v4750
    %v4752 = vpop.f32.mrb[0].mxu0
    %4753 = vmatprep.mubr.f32.mxu0 0.0
    %4754 = vmatmul.mubr.f32.gmra.mrb[0].mxu0 %v4637
    %v4755 = vpop.f32.mrb[0].mxu0
    %v4756 = vadd.f32 0.0, %v4755
    %v4757 = vpop.f32.mrb[0].mxu0
    %4758 = vmatprep.mubr.f32.mxu0 0.0
    %4759 = vmatmul.mubr.f32.gmra.mrb[0].mxu0 %v4639
    %v4760 = vpop.f32.mrb[0].mxu0
    %v4761 = vadd.f32 0.0, %v4760
    %v4762 = vpop.f32.mrb[0].mxu0
    %4763 = vmatprep.mubr.f32.mxu0 0.0
    %4764 = vmatmul.mubr.f32.gmra.mrb[0].mxu0 %v4641
    %v4765 = vpop.f32.mrb[0].mxu0
    %v4766 = vadd.f32 0.0, %v4765
    %v4767 = vpop.f32.mrb[0].mxu0
    %4768 = vmatprep.mubr.f32.mxu0 0.0
    %4769 = vmatmul.mubr.f32.gmra.mrb[0].mxu0 %v4643
    %v4770 = vpop.f32.mrb[0].mxu0
    %v4771 = vadd.f32 0.0, %v4770
    %v4772 = vpop.f32.mrb[0].mxu0
    %4773 = vmatprep.mubr.f32.mxu0 0.0
    %4774 = vmatmul.mubr.f32.gmra.mrb[0].mxu0 %v4645
    %v4775 = vpop.f32.mrb[0].mxu0
    %v4776 = vadd.f32 0.0, %v4775
    %v4777 = vpop.f32.mrb[0].mxu0
    %4778 = vmatprep.mubr.f32.mxu0 0.0
    %4779 = vmatmul.mubr.f32.gmra.mrb[0].mxu0 %v4647
    %v4780 = vpop.f32.mrb[0].mxu0
    %v4781 = vadd.f32 0.0, %v4780
    %v4782 = vpop.f32.mrb[0].mxu0
    %4783 = vmatprep.mubr.f32.mxu0 0.0
    %4784 = vmatmul.mubr.f32.gmra.mrb[0].mxu0 %v4649
    %v4785 = vpop.f32.mrb[0].mxu0
    %v4786 = vadd.f32 0.0, %v4785
    %v4787 = vpop.f32.mrb[0].mxu0
    %4788 = vmatprep.mubr.f32.mxu0 0.0
    %4789 = vmatmul.mubr.f32.gmra.mrb[0].mxu0 %v4651
    %v4790 = vpop.f32.mrb[0].mxu0
    %v4791 = vadd.f32 0.0, %v4790
    %v4792 = vpop.f32.mrb[0].mxu0
    %4793 = vmatprep.mubr.f32.mxu0 0.0
    %4794 = vmatmul.mubr.f32.gmra.mrb[0].mxu0 %v4653
    %v4795 = vpop.f32.mrb[0].mxu0
    %v4796 = vadd.f32 0.0, %v4795
    %v4797 = vpop.f32.mrb[0].mxu0
    %4798 = vdwg.mxu0
    %v4799 = vadd.f32 %v3762, %v4721
    %v4800 = vadd.f32 %v3763, %v4726
    %v4801 = vadd.f32 %v3764, %v4731
    %v4802 = vadd.f32 %v3765, %v4736
    %v4803 = vadd.f32 %v3766, %v4741
    %v4804 = vadd.f32 %v3767, %v4746
    %v4805 = vadd.f32 %v3768, %v4751
    %v4806 = vadd.f32 %v3769, %v4756
    %v4807 = vadd.f32 %v3770, %v4761
    %v4808 = vadd.f32 %v3771, %v4766
    %v4809 = vadd.f32 %v3772, %v4771
    %v4810 = vadd.f32 %v3773, %v4776
    %v4811 = vadd.f32 %v3774, %v4781
    %v4812 = vadd.f32 %v3775, %v4786
    %v4813 = vadd.f32 %v3776, %v4791
    %v4814 = vadd.f32 %v3777, %v4796
    %v4815 = vld [vmem:[#allocation13] sm:$0x1]
    %v4817 = vlaneseq
    %v4818 = vshrl.u32 %v4817, 7
    %v4819 = vsub.s32 0, %v4818
    %v4820 = vrot.slane %v4815, %v4819
    %v4822 = vadd.f32 %v4799, %v4820
    %v4823 = vadd.f32 %v4800, %v4820
    %v4824 = vadd.f32 %v4801, %v4820
    %v4825 = vadd.f32 %v4802, %v4820
    %v4826 = vadd.f32 %v4803, %v4820
    %v4827 = vadd.f32 %v4804, %v4820
    %v4828 = vadd.f32 %v4805, %v4820
    %v4829 = vadd.f32 %v4806, %v4820
    %v4830 = vadd.f32 %v4807, %v4820
    %v4831 = vadd.f32 %v4808, %v4820
    %v4832 = vadd.f32 %v4809, %v4820
    %v4833 = vadd.f32 %v4810, %v4820
    %v4834 = vadd.f32 %v4811, %v4820
    %v4835 = vadd.f32 %v4812, %v4820
    %v4836 = vadd.f32 %v4813, %v4820
    %v4837 = vadd.f32 %v4814, %v4820
    %v4838 = vadd.f32 %v323, %v4822
    %v4839 = vadd.f32 %v328, %v4823
    %v4840 = vadd.f32 %v333, %v4824
    %v4841 = vadd.f32 %v338, %v4825
    %v4842 = vadd.f32 %v343, %v4826
    %v4843 = vadd.f32 %v348, %v4827
    %v4844 = vadd.f32 %v353, %v4828
    %v4845 = vadd.f32 %v358, %v4829
    %v4846 = vadd.f32 %v363, %v4830
    %v4847 = vadd.f32 %v368, %v4831
    %v4848 = vadd.f32 %v373, %v4832
    %v4849 = vadd.f32 %v378, %v4833
    %v4850 = vadd.f32 %v383, %v4834
    %v4851 = vadd.f32 %v388, %v4835
    %v4852 = vadd.f32 %v393, %v4836
    %v4853 = vadd.f32 %v398, %v4837
    %v4854 = vsel %vm401, %v4838, 0.0
    %4855 = vadd.xlane.f32.xlu0 %v4854
    %v4856 = vpop.xlane.xlu0 %4855
    %v4857 = vsel %vm401, %v4839, 0.0
    %4858 = vadd.xlane.f32.xlu0 %v4857
    %v4859 = vpop.xlane.xlu0 %4858
    %v4860 = vsel %vm401, %v4840, 0.0
    %4861 = vadd.xlane.f32.xlu0 %v4860
    %v4862 = vpop.xlane.xlu0 %4861
    %v4863 = vsel %vm401, %v4841, 0.0
    %4864 = vadd.xlane.f32.xlu0 %v4863
    %v4865 = vpop.xlane.xlu0 %4864
    %v4866 = vsel %vm401, %v4842, 0.0
    %4867 = vadd.xlane.f32.xlu0 %v4866
    %v4868 = vpop.xlane.xlu0 %4867
    %v4869 = vsel %vm401, %v4843, 0.0
    %4870 = vadd.xlane.f32.xlu0 %v4869
    %v4871 = vpop.xlane.xlu0 %4870
    %v4872 = vsel %vm401, %v4844, 0.0
    %4873 = vadd.xlane.f32.xlu0 %v4872
    %v4874 = vpop.xlane.xlu0 %4873
    %v4875 = vsel %vm401, %v4845, 0.0
    %4876 = vadd.xlane.f32.xlu0 %v4875
    %v4877 = vpop.xlane.xlu0 %4876
    %v4878 = vsel %vm401, %v4846, 0.0
    %4879 = vadd.xlane.f32.xlu0 %v4878
    %v4880 = vpop.xlane.xlu0 %4879
    %v4881 = vsel %vm401, %v4847, 0.0
    %4882 = vadd.xlane.f32.xlu0 %v4881
    %v4883 = vpop.xlane.xlu0 %4882
    %v4884 = vsel %vm401, %v4848, 0.0
    %4885 = vadd.xlane.f32.xlu0 %v4884
    %v4886 = vpop.xlane.xlu0 %4885
    %v4887 = vsel %vm401, %v4849, 0.0
    %4888 = vadd.xlane.f32.xlu0 %v4887
    %v4889 = vpop.xlane.xlu0 %4888
    %v4890 = vsel %vm401, %v4850, 0.0
    %4891 = vadd.xlane.f32.xlu0 %v4890
    %v4892 = vpop.xlane.xlu0 %4891
    %v4893 = vsel %vm401, %v4851, 0.0
    %4894 = vadd.xlane.f32.xlu0 %v4893
    %v4895 = vpop.xlane.xlu0 %4894
    %v4896 = vsel %vm401, %v4852, 0.0
    %4897 = vadd.xlane.f32.xlu0 %v4896
    %v4898 = vpop.xlane.xlu0 %4897
    %v4899 = vsel %vm401, %v4853, 0.0
    %4900 = vadd.xlane.f32.xlu0 %v4899
    %v4901 = vpop.xlane.xlu0 %4900
    %v4902 = vmul.f32 %v4856, %v450
    %v4903 = vmul.f32 %v4859, %v450
    %v4904 = vmul.f32 %v4862, %v450
    %v4905 = vmul.f32 %v4865, %v450
    %v4906 = vmul.f32 %v4868, %v450
    %v4907 = vmul.f32 %v4871, %v450
    %v4908 = vmul.f32 %v4874, %v450
    %v4909 = vmul.f32 %v4877, %v450
    %v4910 = vmul.f32 %v4880, %v450
    %v4911 = vmul.f32 %v4883, %v450
    %v4912 = vmul.f32 %v4886, %v450
    %v4913 = vmul.f32 %v4889, %v450
    %v4914 = vmul.f32 %v4892, %v450
    %v4915 = vmul.f32 %v4895, %v450
    %v4916 = vmul.f32 %v4898, %v450
    %v4917 = vmul.f32 %v4901, %v450
    %v4918 = vsub.f32 %v4838, %v4902
    %v4919 = vsub.f32 %v4839, %v4903
    %v4920 = vsub.f32 %v4840, %v4904
    %v4921 = vsub.f32 %v4841, %v4905
    %v4922 = vsub.f32 %v4842, %v4906
    %v4923 = vsub.f32 %v4843, %v4907
    %v4924 = vsub.f32 %v4844, %v4908
    %v4925 = vsub.f32 %v4845, %v4909
    %v4926 = vsub.f32 %v4846, %v4910
    %v4927 = vsub.f32 %v4847, %v4911
    %v4928 = vsub.f32 %v4848, %v4912
    %v4929 = vsub.f32 %v4849, %v4913
    %v4930 = vsub.f32 %v4850, %v4914
    %v4931 = vsub.f32 %v4851, %v4915
    %v4932 = vsub.f32 %v4852, %v4916
    %v4933 = vsub.f32 %v4853, %v4917
    %v4934 = vmul.f32 %v4918, %v4918
    %v4935 = vmul.f32 %v4919, %v4919
    %v4936 = vmul.f32 %v4920, %v4920
    %v4937 = vmul.f32 %v4921, %v4921
    %v4938 = vmul.f32 %v4922, %v4922
    %v4939 = vmul.f32 %v4923, %v4923
    %v4940 = vmul.f32 %v4924, %v4924
    %v4941 = vmul.f32 %v4925, %v4925
    %v4942 = vmul.f32 %v4926, %v4926
    %v4943 = vmul.f32 %v4927, %v4927
    %v4944 = vmul.f32 %v4928, %v4928
    %v4945 = vmul.f32 %v4929, %v4929
    %v4946 = vmul.f32 %v4930, %v4930
    %v4947 = vmul.f32 %v4931, %v4931
    %v4948 = vmul.f32 %v4932, %v4932
    %v4949 = vmul.f32 %v4933, %v4933
    %v4950 = vsel %vm401, %v4934, 0.0
    %4951 = vadd.xlane.f32.xlu0 %v4950
    %v4952 = vpop.xlane.xlu0 %4951
    %v4953 = vsel %vm401, %v4935, 0.0
    %4954 = vadd.xlane.f32.xlu0 %v4953
    %v4955 = vpop.xlane.xlu0 %4954
    %v4956 = vsel %vm401, %v4936, 0.0
    %4957 = vadd.xlane.f32.xlu0 %v4956
    %v4958 = vpop.xlane.xlu0 %4957
    %v4959 = vsel %vm401, %v4937, 0.0
    %4960 = vadd.xlane.f32.xlu0 %v4959
    %v4961 = vpop.xlane.xlu0 %4960
    %v4962 = vsel %vm401, %v4938, 0.0
    %4963 = vadd.xlane.f32.xlu0 %v4962
    %v4964 = vpop.xlane.xlu0 %4963
    %v4965 = vsel %vm401, %v4939, 0.0
    %4966 = vadd.xlane.f32.xlu0 %v4965
    %v4967 = vpop.xlane.xlu0 %4966
    %v4968 = vsel %vm401, %v4940, 0.0
    %4969 = vadd.xlane.f32.xlu0 %v4968
    %v4970 = vpop.xlane.xlu0 %4969
    %v4971 = vsel %vm401, %v4941, 0.0
    %4972 = vadd.xlane.f32.xlu0 %v4971
    %v4973 = vpop.xlane.xlu0 %4972
    %v4974 = vsel %vm401, %v4942, 0.0
    %4975 = vadd.xlane.f32.xlu0 %v4974
    %v4976 = vpop.xlane.xlu0 %4975
    %v4977 = vsel %vm401, %v4943, 0.0
    %4978 = vadd.xlane.f32.xlu0 %v4977
    %v4979 = vpop.xlane.xlu0 %4978
    %v4980 = vsel %vm401, %v4944, 0.0
    %4981 = vadd.xlane.f32.xlu0 %v4980
    %v4982 = vpop.xlane.xlu0 %4981
    %v4983 = vsel %vm401, %v4945, 0.0
    %4984 = vadd.xlane.f32.xlu0 %v4983
    %v4985 = vpop.xlane.xlu0 %4984
    %v4986 = vsel %vm401, %v4946, 0.0
    %4987 = vadd.xlane.f32.xlu0 %v4986
    %v4988 = vpop.xlane.xlu0 %4987
    %v4989 = vsel %vm401, %v4947, 0.0
    %4990 = vadd.xlane.f32.xlu0 %v4989
    %v4991 = vpop.xlane.xlu0 %4990
    %v4992 = vsel %vm401, %v4948, 0.0
    %4993 = vadd.xlane.f32.xlu0 %v4992
    %v4994 = vpop.xlane.xlu0 %4993
    %v4995 = vsel %vm401, %v4949, 0.0
    %4996 = vadd.xlane.f32.xlu0 %v4995
    %v4997 = vpop.xlane.xlu0 %4996
    %v4998 = vmul.f32 %v4952, %v450
    %v4999 = vmul.f32 %v4955, %v450
    %v5000 = vmul.f32 %v4958, %v450
    %v5001 = vmul.f32 %v4961, %v450
    %v5002 = vmul.f32 %v4964, %v450
    %v5003 = vmul.f32 %v4967, %v450
    %v5004 = vmul.f32 %v4970, %v450
    %v5005 = vmul.f32 %v4973, %v450
    %v5006 = vmul.f32 %v4976, %v450
    %v5007 = vmul.f32 %v4979, %v450
    %v5008 = vmul.f32 %v4982, %v450
    %v5009 = vmul.f32 %v4985, %v450
    %v5010 = vmul.f32 %v4988, %v450
    %v5011 = vmul.f32 %v4991, %v450
    %v5012 = vmul.f32 %v4994, %v450
    %v5013 = vmul.f32 %v4997, %v450
    %v5014 = vadd.f32 %v4998, 1e-05
    %v5015 = vadd.f32 %v4999, 1e-05
    %v5016 = vadd.f32 %v5000, 1e-05
    %v5017 = vadd.f32 %v5001, 1e-05
    %v5018 = vadd.f32 %v5002, 1e-05
    %v5019 = vadd.f32 %v5003, 1e-05
    %v5020 = vadd.f32 %v5004, 1e-05
    %v5021 = vadd.f32 %v5005, 1e-05
    %v5022 = vadd.f32 %v5006, 1e-05
    %v5023 = vadd.f32 %v5007, 1e-05
    %v5024 = vadd.f32 %v5008, 1e-05
    %v5025 = vadd.f32 %v5009, 1e-05
    %v5026 = vadd.f32 %v5010, 1e-05
    %v5027 = vadd.f32 %v5011, 1e-05
    %v5028 = vadd.f32 %v5012, 1e-05
    %v5029 = vadd.f32 %v5013, 1e-05
    %v5030 = vrsqrt.pop %v5014
    %v5031 = vrsqrt.pop %v5015
    %v5032 = vrsqrt.pop %v5016
    %v5033 = vrsqrt.pop %v5017
    %v5034 = vrsqrt.pop %v5018
    %v5035 = vrsqrt.pop %v5019
    %v5036 = vrsqrt.pop %v5020
    %v5037 = vrsqrt.pop %v5021
    %v5038 = vrsqrt.pop %v5022
    %v5039 = vrsqrt.pop %v5023
    %v5040 = vrsqrt.pop %v5024
    %v5041 = vrsqrt.pop %v5025
    %v5042 = vrsqrt.pop %v5026
    %v5043 = vrsqrt.pop %v5027
    %v5044 = vrsqrt.pop %v5028
    %v5045 = vrsqrt.pop %v5029
    %v5046 = vmul.f32 %v4918, %v5030
    %v5047 = vmul.f32 %v4919, %v5031
    %v5048 = vmul.f32 %v4920, %v5032
    %v5049 = vmul.f32 %v4921, %v5033
    %v5050 = vmul.f32 %v4922, %v5034
    %v5051 = vmul.f32 %v4923, %v5035
    %v5052 = vmul.f32 %v4924, %v5036
    %v5053 = vmul.f32 %v4925, %v5037
    %v5054 = vmul.f32 %v4926, %v5038
    %v5055 = vmul.f32 %v4927, %v5039
    %v5056 = vmul.f32 %v4928, %v5040
    %v5057 = vmul.f32 %v4929, %v5041
    %v5058 = vmul.f32 %v4930, %v5042
    %v5059 = vmul.f32 %v4931, %v5043
    %v5060 = vmul.f32 %v4932, %v5044
    %v5061 = vmul.f32 %v4933, %v5045
    %v5062 = vld [vmem:[#allocation15] sm:$0x1]
    %v5064 = vlaneseq
    %v5065 = vshrl.u32 %v5064, 7
    %v5066 = vsub.s32 0, %v5065
    %v5067 = vrot.slane %v5062, %v5066
    %v5069 = vmul.f32 %v5046, %v5067
    %v5070 = vmul.f32 %v5047, %v5067
    %v5071 = vmul.f32 %v5048, %v5067
    %v5072 = vmul.f32 %v5049, %v5067
    %v5073 = vmul.f32 %v5050, %v5067
    %v5074 = vmul.f32 %v5051, %v5067
    %v5075 = vmul.f32 %v5052, %v5067
    %v5076 = vmul.f32 %v5053, %v5067
    %v5077 = vmul.f32 %v5054, %v5067
    %v5078 = vmul.f32 %v5055, %v5067
    %v5079 = vmul.f32 %v5056, %v5067
    %v5080 = vmul.f32 %v5057, %v5067
    %v5081 = vmul.f32 %v5058, %v5067
    %v5082 = vmul.f32 %v5059, %v5067
    %v5083 = vmul.f32 %v5060, %v5067
    %v5084 = vmul.f32 %v5061, %v5067
    %v5085 = vld [vmem:[#allocation16] sm:$0x1]
    %v5087 = vlaneseq
    %v5088 = vshrl.u32 %v5087, 7
    %v5089 = vsub.s32 0, %v5088
    %v5090 = vrot.slane %v5085, %v5089
    %v5092 = vadd.f32 %v5069, %v5090
    %v5093 = vadd.f32 %v5070, %v5090
    %v5094 = vadd.f32 %v5071, %v5090
    %v5095 = vadd.f32 %v5072, %v5090
    %v5096 = vadd.f32 %v5073, %v5090
    %v5097 = vadd.f32 %v5074, %v5090
    %v5098 = vadd.f32 %v5075, %v5090
    %v5099 = vadd.f32 %v5076, %v5090
    %v5100 = vadd.f32 %v5077, %v5090
    %v5101 = vadd.f32 %v5078, %v5090
    %v5102 = vadd.f32 %v5079, %v5090
    %v5103 = vadd.f32 %v5080, %v5090
    %v5104 = vadd.f32 %v5081, %v5090
    %v5105 = vadd.f32 %v5082, %v5090
    %v5106 = vadd.f32 %v5083, %v5090
    %v5107 = vadd.f32 %v5084, %v5090
    %v5108 = vld [vmem:[#allocation18] sm:$0xff]
    %v5109 = vld [vmem:[#allocation18 + $0x8] sm:$0xff]
    %v5110 = vld [vmem:[#allocation18 + $0x10] sm:$0xff]
    %v5111 = vld [vmem:[#allocation18 + $0x18] sm:$0xff]
    %v5112 = vld [vmem:[#allocation19] sm:$0x1]
    %v5114 = vlaneseq
    %v5115 = vshrl.u32 %v5114, 7
    %v5116 = vsub.s32 0, %v5115
    %v5117 = vrot.slane %v5112, %v5116
    %v5120 = vsel %vm401, %v5092, 0
    %v5123 = vsel %vm401, %v5093, 0
    %v5126 = vsel %vm401, %v5094, 0
    %v5129 = vsel %vm401, %v5095, 0
    %v5132 = vsel %vm401, %v5096, 0
    %v5135 = vsel %vm401, %v5097, 0
    %v5138 = vsel %vm401, %v5098, 0
    %v5141 = vsel %vm401, %v5099, 0
    %v5144 = vsel %vm401, %v5100, 0
    %v5147 = vsel %vm401, %v5101, 0
    %v5150 = vsel %vm401, %v5102, 0
    %v5153 = vsel %vm401, %v5103, 0
    %v5156 = vsel %vm401, %v5104, 0
    %v5159 = vsel %vm401, %v5105, 0
    %v5162 = vsel %vm401, %v5106, 0
    %v5165 = vsel %vm401, %v5107, 0
    %5167 = vmatprep.subr.mxu0 0.0
    %5168 = vmatpush1.msra.mxu0 %v5108
    %5169 = vmatprep.subr.mxu0 0.0
    %5170 = vmatpush1.msra.mxu0 %v5109
    %5171 = vmatprep.subr.mxu0 0.0
    %5172 = vmatpush1.msra.mxu0 %v5110
    %5173 = vmatprep.subr.mxu0 0.0
    %5174 = vmatpush1.msra.mxu0 %v5111
    %5175 = vmatprep.subr.mxu0 0.0
    %5176 = vmatpush1.msra.mxu0 0.0
    %5177 = vmatprep.subr.mxu0 0.0
    %5178 = vmatpush1.msra.mxu0 0.0
    %5179 = vmatprep.subr.mxu0 0.0
    %5180 = vmatpush1.msra.mxu0 0.0
    %5181 = vmatprep.subr.mxu0 0.0
    %5182 = vmatpush1.msra.mxu0 0.0
    %5183 = vmatprep.subr.mxu0 0.0
    %5184 = vmatpush1.msra.mxu0 0.0
    %5185 = vmatprep.subr.mxu0 0.0
    %5186 = vmatpush1.msra.mxu0 0.0
    %5187 = vmatprep.subr.mxu0 0.0
    %5188 = vmatpush1.msra.mxu0 0.0
    %5189 = vmatprep.subr.mxu0 0.0
    %5190 = vmatpush1.msra.mxu0 0.0
    %5191 = vmatprep.subr.mxu0 0.0
    %5192 = vmatpush1.msra.mxu0 0.0
    %5193 = vmatprep.subr.mxu0 0.0
    %5194 = vmatpush1.msra.mxu0 0.0
    %5195 = vmatprep.subr.mxu0 0.0
    %5196 = vmatpush1.msra.mxu0 0.0
    %5197 = vmatprep.subr.mxu0 0.0
    %5198 = vmatpush1.msra.mxu0 0.0
    %5199 = vmatprep.subr.mxu0 0.0
    %5200 = vmatpush1.msra.mxu0 0.0
    %5201 = vmatprep.subr.mxu0 0.0
    %5202 = vmatpush1.msra.mxu0 0.0
    %5203 = vmatprep.subr.mxu0 0.0
    %5204 = vmatpush1.msra.mxu0 0.0
    %5205 = vmatprep.subr.mxu0 0.0
    %5206 = vmatpush1.msra.mxu0 0.0
    %5207 = vmatprep.subr.mxu0 0.0
    %5208 = vmatpush1.msra.mxu0 0.0
    %5209 = vmatprep.subr.mxu0 0.0
    %5210 = vmatpush1.msra.mxu0 0.0
    %5211 = vmatprep.subr.mxu0 0.0
    %5212 = vmatpush1.msra.mxu0 0.0
    %5213 = vmatprep.subr.mxu0 0.0
    %5214 = vmatpush1.msra.mxu0 0.0
    %5215 = vmatprep.subr.mxu0 0.0
    %5216 = vmatpush1.msra.mxu0 0.0
    %5217 = vmatprep.subr.mxu0 0.0
    %5218 = vmatpush1.msra.mxu0 0.0
    %5219 = vmatprep.subr.mxu0 0.0
    %5220 = vmatpush1.msra.mxu0 0.0
    %5221 = vmatprep.subr.mxu0 0.0
    %5222 = vmatpush1.msra.mxu0 0.0
    %5223 = vmatprep.subr.mxu0 0.0
    %5224 = vmatpush1.msra.mxu0 0.0
    %5225 = vmatprep.subr.mxu0 0.0
    %5226 = vmatpush1.msra.mxu0 0.0
    %5227 = vmatprep.subr.mxu0 0.0
    %5228 = vmatpush1.msra.mxu0 0.0
    %5229 = vmatprep.subr.mxu0 0.0
    %5230 = vmatpush1.msra.mxu0 0.0
    %5231 = vmatprep.mubr.f32.mxu0 0.0
    %5232 = vmatmul.mubr.f32.gmra.mrb[0].mxu0 %v5120
    %v5233 = vpop.f32.mrb[0].mxu0
    %v5234 = vadd.f32 %v5117, %v5233
    %v5235 = vpop.f32.mrb[0].mxu0
    %5236 = vmatprep.mubr.f32.mxu0 0.0
    %5237 = vmatmul.mubr.f32.gmra.mrb[0].mxu0 %v5123
    %v5238 = vpop.f32.mrb[0].mxu0
    %v5239 = vadd.f32 %v5117, %v5238
    %v5240 = vpop.f32.mrb[0].mxu0
    %5241 = vmatprep.mubr.f32.mxu0 0.0
    %5242 = vmatmul.mubr.f32.gmra.mrb[0].mxu0 %v5126
    %v5243 = vpop.f32.mrb[0].mxu0
    %v5244 = vadd.f32 %v5117, %v5243
    %v5245 = vpop.f32.mrb[0].mxu0
    %5246 = vmatprep.mubr.f32.mxu0 0.0
    %5247 = vmatmul.mubr.f32.gmra.mrb[0].mxu0 %v5129
    %v5248 = vpop.f32.mrb[0].mxu0
    %v5249 = vadd.f32 %v5117, %v5248
    %v5250 = vpop.f32.mrb[0].mxu0
    %5251 = vmatprep.mubr.f32.mxu0 0.0
    %5252 = vmatmul.mubr.f32.gmra.mrb[0].mxu0 %v5132
    %v5253 = vpop.f32.mrb[0].mxu0
    %v5254 = vadd.f32 %v5117, %v5253
    %v5255 = vpop.f32.mrb[0].mxu0
    %5256 = vmatprep.mubr.f32.mxu0 0.0
    %5257 = vmatmul.mubr.f32.gmra.mrb[0].mxu0 %v5135
    %v5258 = vpop.f32.mrb[0].mxu0
    %v5259 = vadd.f32 %v5117, %v5258
    %v5260 = vpop.f32.mrb[0].mxu0
    %5261 = vmatprep.mubr.f32.mxu0 0.0
    %5262 = vmatmul.mubr.f32.gmra.mrb[0].mxu0 %v5138
    %v5263 = vpop.f32.mrb[0].mxu0
    %v5264 = vadd.f32 %v5117, %v5263
    %v5265 = vpop.f32.mrb[0].mxu0
    %5266 = vmatprep.mubr.f32.mxu0 0.0
    %5267 = vmatmul.mubr.f32.gmra.mrb[0].mxu0 %v5141
    %v5268 = vpop.f32.mrb[0].mxu0
    %v5269 = vadd.f32 %v5117, %v5268
    %v5270 = vpop.f32.mrb[0].mxu0
    %5271 = vmatprep.mubr.f32.mxu0 0.0
    %5272 = vmatmul.mubr.f32.gmra.mrb[0].mxu0 %v5144
    %v5273 = vpop.f32.mrb[0].mxu0
    %v5274 = vadd.f32 %v5117, %v5273
    %v5275 = vpop.f32.mrb[0].mxu0
    %5276 = vmatprep.mubr.f32.mxu0 0.0
    %5277 = vmatmul.mubr.f32.gmra.mrb[0].mxu0 %v5147
    %v5278 = vpop.f32.mrb[0].mxu0
    %v5279 = vadd.f32 %v5117, %v5278
    %v5280 = vpop.f32.mrb[0].mxu0
    %5281 = vmatprep.mubr.f32.mxu0 0.0
    %5282 = vmatmul.mubr.f32.gmra.mrb[0].mxu0 %v5150
    %v5283 = vpop.f32.mrb[0].mxu0
    %v5284 = vadd.f32 %v5117, %v5283
    %v5285 = vpop.f32.mrb[0].mxu0
    %5286 = vmatprep.mubr.f32.mxu0 0.0
    %5287 = vmatmul.mubr.f32.gmra.mrb[0].mxu0 %v5153
    %v5288 = vpop.f32.mrb[0].mxu0
    %v5289 = vadd.f32 %v5117, %v5288
    %v5290 = vpop.f32.mrb[0].mxu0
    %5291 = vmatprep.mubr.f32.mxu0 0.0
    %5292 = vmatmul.mubr.f32.gmra.mrb[0].mxu0 %v5156
    %v5293 = vpop.f32.mrb[0].mxu0
    %v5294 = vadd.f32 %v5117, %v5293
    %v5295 = vpop.f32.mrb[0].mxu0
    %5296 = vmatprep.mubr.f32.mxu0 0.0
    %5297 = vmatmul.mubr.f32.gmra.mrb[0].mxu0 %v5159
    %v5298 = vpop.f32.mrb[0].mxu0
    %v5299 = vadd.f32 %v5117, %v5298
    %v5300 = vpop.f32.mrb[0].mxu0
    %5301 = vmatprep.mubr.f32.mxu0 0.0
    %5302 = vmatmul.mubr.f32.gmra.mrb[0].mxu0 %v5162
    %v5303 = vpop.f32.mrb[0].mxu0
    %v5304 = vadd.f32 %v5117, %v5303
    %v5305 = vpop.f32.mrb[0].mxu0
    %5306 = vmatprep.mubr.f32.mxu0 0.0
    %5307 = vmatmul.mubr.f32.gmra.mrb[0].mxu0 %v5165
    %v5308 = vpop.f32.mrb[0].mxu0
    %v5309 = vadd.f32 %v5117, %v5308
    %v5310 = vpop.f32.mrb[0].mxu0
    %5311 = vdwg.mxu0
    %v5312 = vmul.f32 %v5234, 0.5
    %v5313 = vmul.f32 %v5239, 0.5
    %v5314 = vmul.f32 %v5244, 0.5
    %v5315 = vmul.f32 %v5249, 0.5
    %v5316 = vmul.f32 %v5254, 0.5
    %v5317 = vmul.f32 %v5259, 0.5
    %v5318 = vmul.f32 %v5264, 0.5
    %v5319 = vmul.f32 %v5269, 0.5
    %v5320 = vmul.f32 %v5274, 0.5
    %v5321 = vmul.f32 %v5279, 0.5
    %v5322 = vmul.f32 %v5284, 0.5
    %v5323 = vmul.f32 %v5289, 0.5
    %v5324 = vmul.f32 %v5294, 0.5
    %v5325 = vmul.f32 %v5299, 0.5
    %v5326 = vmul.f32 %v5304, 0.5
    %v5327 = vmul.f32 %v5309, 0.5
    %v5328 = vmul.f32 %v5234, 0.70710677
    %v5329 = vmul.f32 %v5239, 0.70710677
    %v5330 = vmul.f32 %v5244, 0.70710677
    %v5331 = vmul.f32 %v5249, 0.70710677
    %v5332 = vmul.f32 %v5254, 0.70710677
    %v5333 = vmul.f32 %v5259, 0.70710677
    %v5334 = vmul.f32 %v5264, 0.70710677
    %v5335 = vmul.f32 %v5269, 0.70710677
    %v5336 = vmul.f32 %v5274, 0.70710677
    %v5337 = vmul.f32 %v5279, 0.70710677
    %v5338 = vmul.f32 %v5284, 0.70710677
    %v5339 = vmul.f32 %v5289, 0.70710677
    %v5340 = vmul.f32 %v5294, 0.70710677
    %v5341 = vmul.f32 %v5299, 0.70710677
    %v5342 = vmul.f32 %v5304, 0.70710677
    %v5343 = vmul.f32 %v5309, 0.70710677
    %v5344 = verf.f32.pop %v5328
    %v5345 = verf.f32.pop %v5329
    %v5346 = verf.f32.pop %v5330
    %v5347 = verf.f32.pop %v5331
    %v5348 = verf.f32.pop %v5332
    %v5349 = verf.f32.pop %v5333
    %v5350 = verf.f32.pop %v5334
    %v5351 = verf.f32.pop %v5335
    %v5352 = verf.f32.pop %v5336
    %v5353 = verf.f32.pop %v5337
    %v5354 = verf.f32.pop %v5338
    %v5355 = verf.f32.pop %v5339
    %v5356 = verf.f32.pop %v5340
    %v5357 = verf.f32.pop %v5341
    %v5358 = verf.f32.pop %v5342
    %v5359 = verf.f32.pop %v5343
    %v5360 = vadd.f32 %v5344, 1.0
    %v5361 = vadd.f32 %v5345, 1.0
    %v5362 = vadd.f32 %v5346, 1.0
    %v5363 = vadd.f32 %v5347, 1.0
    %v5364 = vadd.f32 %v5348, 1.0
    %v5365 = vadd.f32 %v5349, 1.0
    %v5366 = vadd.f32 %v5350, 1.0
    %v5367 = vadd.f32 %v5351, 1.0
    %v5368 = vadd.f32 %v5352, 1.0
    %v5369 = vadd.f32 %v5353, 1.0
    %v5370 = vadd.f32 %v5354, 1.0
    %v5371 = vadd.f32 %v5355, 1.0
    %v5372 = vadd.f32 %v5356, 1.0
    %v5373 = vadd.f32 %v5357, 1.0
    %v5374 = vadd.f32 %v5358, 1.0
    %v5375 = vadd.f32 %v5359, 1.0
    %v5376 = vmul.f32 %v5312, %v5360
    %v5377 = vmul.f32 %v5313, %v5361
    %v5378 = vmul.f32 %v5314, %v5362
    %v5379 = vmul.f32 %v5315, %v5363
    %v5380 = vmul.f32 %v5316, %v5364
    %v5381 = vmul.f32 %v5317, %v5365
    %v5382 = vmul.f32 %v5318, %v5366
    %v5383 = vmul.f32 %v5319, %v5367
    %v5384 = vmul.f32 %v5320, %v5368
    %v5385 = vmul.f32 %v5321, %v5369
    %v5386 = vmul.f32 %v5322, %v5370
    %v5387 = vmul.f32 %v5323, %v5371
    %v5388 = vmul.f32 %v5324, %v5372
    %v5389 = vmul.f32 %v5325, %v5373
    %v5390 = vmul.f32 %v5326, %v5374
    %v5391 = vmul.f32 %v5327, %v5375
    %v5392 = vld [vmem:[%s17] sm:$0xff]
    %v5393 = vld [vmem:[%s17 + $0x8] sm:$0xff]
    %v5394 = vld [vmem:[%s17 + $0x10] sm:$0xff]
    %v5395 = vld [vmem:[%s17 + $0x18] sm:$0xff]
    %v5396 = vld [vmem:[%s17 + $0x20] sm:$0xff]
    %v5397 = vld [vmem:[%s17 + $0x28] sm:$0xff]
    %v5398 = vld [vmem:[%s17 + $0x30] sm:$0xff]
    %v5399 = vld [vmem:[%s17 + $0x38] sm:$0xff]
    %v5400 = vld [vmem:[%s17 + $0x40] sm:$0xff]
    %v5401 = vld [vmem:[%s17 + $0x48] sm:$0xff]
    %v5402 = vld [vmem:[%s17 + $0x50] sm:$0xff]
    %v5403 = vld [vmem:[%s17 + $0x58] sm:$0xff]
    %v5404 = vld [vmem:[%s17 + $0x60] sm:$0xff]
    %v5405 = vld [vmem:[%s17 + $0x68] sm:$0xff]
    %v5406 = vld [vmem:[%s17 + $0x70] sm:$0xff]
    %v5407 = vld [vmem:[%s17 + $0x78] sm:$0xff]
    %5408 = vmatprep.subr.mxu0 0.0
    %5409 = vmatpush1.msra.mxu0 %v5392
    %5410 = vmatprep.subr.mxu0 0.0
    %5411 = vmatpush1.msra.mxu0 %v5393
    %5412 = vmatprep.subr.mxu0 0.0
    %5413 = vmatpush1.msra.mxu0 %v5394
    %5414 = vmatprep.subr.mxu0 0.0
    %5415 = vmatpush1.msra.mxu0 %v5395
    %5416 = vmatprep.subr.mxu0 0.0
    %5417 = vmatpush1.msra.mxu0 %v5396
    %5418 = vmatprep.subr.mxu0 0.0
    %5419 = vmatpush1.msra.mxu0 %v5397
    %5420 = vmatprep.subr.mxu0 0.0
    %5421 = vmatpush1.msra.mxu0 %v5398
    %5422 = vmatprep.subr.mxu0 0.0
    %5423 = vmatpush1.msra.mxu0 %v5399
    %5424 = vmatprep.subr.mxu0 0.0
    %5425 = vmatpush1.msra.mxu0 %v5400
    %5426 = vmatprep.subr.mxu0 0.0
    %5427 = vmatpush1.msra.mxu0 %v5401
    %5428 = vmatprep.subr.mxu0 0.0
    %5429 = vmatpush1.msra.mxu0 %v5402
    %5430 = vmatprep.subr.mxu0 0.0
    %5431 = vmatpush1.msra.mxu0 %v5403
    %5432 = vmatprep.subr.mxu0 0.0
    %5433 = vmatpush1.msra.mxu0 %v5404
    %5434 = vmatprep.subr.mxu0 0.0
    %5435 = vmatpush1.msra.mxu0 %v5405
    %5436 = vmatprep.subr.mxu0 0.0
    %5437 = vmatpush1.msra.mxu0 %v5406
    %5438 = vmatprep.subr.mxu0 0.0
    %5439 = vmatpush1.msra.mxu0 %v5407
    %5440 = vmatprep.subr.mxu0 0.0
    %5441 = vmatpush1.msra.mxu0 0.0
    %5442 = vmatprep.subr.mxu0 0.0
    %5443 = vmatpush1.msra.mxu0 0.0
    %5444 = vmatprep.subr.mxu0 0.0
    %5445 = vmatpush1.msra.mxu0 0.0
    %5446 = vmatprep.subr.mxu0 0.0
    %5447 = vmatpush1.msra.mxu0 0.0
    %5448 = vmatprep.subr.mxu0 0.0
    %5449 = vmatpush1.msra.mxu0 0.0
    %5450 = vmatprep.subr.mxu0 0.0
    %5451 = vmatpush1.msra.mxu0 0.0
    %5452 = vmatprep.subr.mxu0 0.0
    %5453 = vmatpush1.msra.mxu0 0.0
    %5454 = vmatprep.subr.mxu0 0.0
    %5455 = vmatpush1.msra.mxu0 0.0
    %5456 = vmatprep.subr.mxu0 0.0
    %5457 = vmatpush1.msra.mxu0 0.0
    %5458 = vmatprep.subr.mxu0 0.0
    %5459 = vmatpush1.msra.mxu0 0.0
    %5460 = vmatprep.subr.mxu0 0.0
    %5461 = vmatpush1.msra.mxu0 0.0
    %5462 = vmatprep.subr.mxu0 0.0
    %5463 = vmatpush1.msra.mxu0 0.0
    %5464 = vmatprep.subr.mxu0 0.0
    %5465 = vmatpush1.msra.mxu0 0.0
    %5466 = vmatprep.subr.mxu0 0.0
    %5467 = vmatpush1.msra.mxu0 0.0
    %5468 = vmatprep.subr.mxu0 0.0
    %5469 = vmatpush1.msra.mxu0 0.0
    %5470 = vmatprep.subr.mxu0 0.0
    %5471 = vmatpush1.msra.mxu0 0.0
    %5472 = vmatprep.mubr.f32.mxu0 0.0
    %5473 = vmatmul.mubr.f32.gmra.mrb[0].mxu0 %v5376
    %v5474 = vpop.f32.mrb[0].mxu0
    %v5475 = vadd.f32 0.0, %v5474
    %v5476 = vpop.f32.mrb[0].mxu0
    %5477 = vmatprep.mubr.f32.mxu0 0.0
    %5478 = vmatmul.mubr.f32.gmra.mrb[0].mxu0 %v5377
    %v5479 = vpop.f32.mrb[0].mxu0
    %v5480 = vadd.f32 0.0, %v5479
    %v5481 = vpop.f32.mrb[0].mxu0
    %5482 = vmatprep.mubr.f32.mxu0 0.0
    %5483 = vmatmul.mubr.f32.gmra.mrb[0].mxu0 %v5378
    %v5484 = vpop.f32.mrb[0].mxu0
    %v5485 = vadd.f32 0.0, %v5484
    %v5486 = vpop.f32.mrb[0].mxu0
    %5487 = vmatprep.mubr.f32.mxu0 0.0
    %5488 = vmatmul.mubr.f32.gmra.mrb[0].mxu0 %v5379
    %v5489 = vpop.f32.mrb[0].mxu0
    %v5490 = vadd.f32 0.0, %v5489
    %v5491 = vpop.f32.mrb[0].mxu0
    %5492 = vmatprep.mubr.f32.mxu0 0.0
    %5493 = vmatmul.mubr.f32.gmra.mrb[0].mxu0 %v5380
    %v5494 = vpop.f32.mrb[0].mxu0
    %v5495 = vadd.f32 0.0, %v5494
    %v5496 = vpop.f32.mrb[0].mxu0
    %5497 = vmatprep.mubr.f32.mxu0 0.0
    %5498 = vmatmul.mubr.f32.gmra.mrb[0].mxu0 %v5381
    %v5499 = vpop.f32.mrb[0].mxu0
    %v5500 = vadd.f32 0.0, %v5499
    %v5501 = vpop.f32.mrb[0].mxu0
    %5502 = vmatprep.mubr.f32.mxu0 0.0
    %5503 = vmatmul.mubr.f32.gmra.mrb[0].mxu0 %v5382
    %v5504 = vpop.f32.mrb[0].mxu0
    %v5505 = vadd.f32 0.0, %v5504
    %v5506 = vpop.f32.mrb[0].mxu0
    %5507 = vmatprep.mubr.f32.mxu0 0.0
    %5508 = vmatmul.mubr.f32.gmra.mrb[0].mxu0 %v5383
    %v5509 = vpop.f32.mrb[0].mxu0
    %v5510 = vadd.f32 0.0, %v5509
    %v5511 = vpop.f32.mrb[0].mxu0
    %5512 = vmatprep.mubr.f32.mxu0 0.0
    %5513 = vmatmul.mubr.f32.gmra.mrb[0].mxu0 %v5384
    %v5514 = vpop.f32.mrb[0].mxu0
    %v5515 = vadd.f32 0.0, %v5514
    %v5516 = vpop.f32.mrb[0].mxu0
    %5517 = vmatprep.mubr.f32.mxu0 0.0
    %5518 = vmatmul.mubr.f32.gmra.mrb[0].mxu0 %v5385
    %v5519 = vpop.f32.mrb[0].mxu0
    %v5520 = vadd.f32 0.0, %v5519
    %v5521 = vpop.f32.mrb[0].mxu0
    %5522 = vmatprep.mubr.f32.mxu0 0.0
    %5523 = vmatmul.mubr.f32.gmra.mrb[0].mxu0 %v5386
    %v5524 = vpop.f32.mrb[0].mxu0
    %v5525 = vadd.f32 0.0, %v5524
    %v5526 = vpop.f32.mrb[0].mxu0
    %5527 = vmatprep.mubr.f32.mxu0 0.0
    %5528 = vmatmul.mubr.f32.gmra.mrb[0].mxu0 %v5387
    %v5529 = vpop.f32.mrb[0].mxu0
    %v5530 = vadd.f32 0.0, %v5529
    %v5531 = vpop.f32.mrb[0].mxu0
    %5532 = vmatprep.mubr.f32.mxu0 0.0
    %5533 = vmatmul.mubr.f32.gmra.mrb[0].mxu0 %v5388
    %v5534 = vpop.f32.mrb[0].mxu0
    %v5535 = vadd.f32 0.0, %v5534
    %v5536 = vpop.f32.mrb[0].mxu0
    %5537 = vmatprep.mubr.f32.mxu0 0.0
    %5538 = vmatmul.mubr.f32.gmra.mrb[0].mxu0 %v5389
    %v5539 = vpop.f32.mrb[0].mxu0
    %v5540 = vadd.f32 0.0, %v5539
    %v5541 = vpop.f32.mrb[0].mxu0
    %5542 = vmatprep.mubr.f32.mxu0 0.0
    %5543 = vmatmul.mubr.f32.gmra.mrb[0].mxu0 %v5390
    %v5544 = vpop.f32.mrb[0].mxu0
    %v5545 = vadd.f32 0.0, %v5544
    %v5546 = vpop.f32.mrb[0].mxu0
    %5547 = vmatprep.mubr.f32.mxu0 0.0
    %5548 = vmatmul.mubr.f32.gmra.mrb[0].mxu0 %v5391
    %v5549 = vpop.f32.mrb[0].mxu0
    %v5550 = vadd.f32 0.0, %v5549
    %v5551 = vpop.f32.mrb[0].mxu0
    %5552 = vdwg.mxu0
    %v5553 = vadd.f32 %v4838, %v5475
    %v5554 = vadd.f32 %v4839, %v5480
    %v5555 = vadd.f32 %v4840, %v5485
    %v5556 = vadd.f32 %v4841, %v5490
    %v5557 = vadd.f32 %v4842, %v5495
    %v5558 = vadd.f32 %v4843, %v5500
    %v5559 = vadd.f32 %v4844, %v5505
    %v5560 = vadd.f32 %v4845, %v5510
    %v5561 = vadd.f32 %v4846, %v5515
    %v5562 = vadd.f32 %v4847, %v5520
    %v5563 = vadd.f32 %v4848, %v5525
    %v5564 = vadd.f32 %v4849, %v5530
    %v5565 = vadd.f32 %v4850, %v5535
    %v5566 = vadd.f32 %v4851, %v5540
    %v5567 = vadd.f32 %v4852, %v5545
    %v5568 = vadd.f32 %v4853, %v5550
    %v5569 = vld [vmem:[#allocation21] sm:$0x1]
    %v5571 = vlaneseq
    %v5572 = vshrl.u32 %v5571, 7
    %v5573 = vsub.s32 0, %v5572
    %v5574 = vrot.slane %v5569, %v5573
    %v5576 = vadd.f32 %v5553, %v5574
    %v5577 = vadd.f32 %v5554, %v5574
    %v5578 = vadd.f32 %v5555, %v5574
    %v5579 = vadd.f32 %v5556, %v5574
    %v5580 = vadd.f32 %v5557, %v5574
    %v5581 = vadd.f32 %v5558, %v5574
    %v5582 = vadd.f32 %v5559, %v5574
    %v5583 = vadd.f32 %v5560, %v5574
    %v5584 = vadd.f32 %v5561, %v5574
    %v5585 = vadd.f32 %v5562, %v5574
    %v5586 = vadd.f32 %v5563, %v5574
    %v5587 = vadd.f32 %v5564, %v5574
    %v5588 = vadd.f32 %v5565, %v5574
    %v5589 = vadd.f32 %v5566, %v5574
    %v5590 = vadd.f32 %v5567, %v5574
    %v5591 = vadd.f32 %v5568, %v5574
    %v5592 = vld [vmem:[#allocation2] sm:$0xff]
    %v5593 = vld [vmem:[#allocation2 + $0x8] sm:$0xff]
    %v5594 = vld [vmem:[#allocation2 + $0x10] sm:$0xff]
    %v5595 = vld [vmem:[#allocation2 + $0x18] sm:$0xff]
    %v5596 = vld [vmem:[#allocation2 + $0x20] sm:$0xff]
    %v5597 = vld [vmem:[#allocation2 + $0x28] sm:$0xff]
    %v5598 = vld [vmem:[#allocation2 + $0x30] sm:$0xff]
    %v5599 = vld [vmem:[#allocation2 + $0x38] sm:$0xff]
    %v5600 = vld [vmem:[#allocation2 + $0x40] sm:$0xff]
    %v5601 = vld [vmem:[#allocation2 + $0x48] sm:$0xff]
    %v5602 = vld [vmem:[#allocation2 + $0x50] sm:$0xff]
    %v5603 = vld [vmem:[#allocation2 + $0x58] sm:$0xff]
    %v5604 = vld [vmem:[#allocation2 + $0x60] sm:$0xff]
    %v5605 = vld [vmem:[#allocation2 + $0x68] sm:$0xff]
    %v5606 = vld [vmem:[#allocation2 + $0x70] sm:$0xff]
    %v5607 = vld [vmem:[#allocation2 + $0x78] sm:$0xff]
    %5608 = vmatprep.subr.mxu0 0.0
    %5609 = vmatpush1.msra.mxu0 %v5576
    %5610 = vmatprep.subr.mxu0 0.0
    %5611 = vmatpush1.msra.mxu0 %v5577
    %5612 = vmatprep.subr.mxu0 0.0
    %5613 = vmatpush1.msra.mxu0 %v5578
    %5614 = vmatprep.subr.mxu0 0.0
    %5615 = vmatpush1.msra.mxu0 %v5579
    %5616 = vmatprep.subr.mxu0 0.0
    %5617 = vmatpush1.msra.mxu0 %v5580
    %5618 = vmatprep.subr.mxu0 0.0
    %5619 = vmatpush1.msra.mxu0 %v5581
    %5620 = vmatprep.subr.mxu0 0.0
    %5621 = vmatpush1.msra.mxu0 %v5582
    %5622 = vmatprep.subr.mxu0 0.0
    %5623 = vmatpush1.msra.mxu0 %v5583
    %5624 = vmatprep.subr.mxu0 0.0
    %5625 = vmatpush1.msra.mxu0 %v5584
    %5626 = vmatprep.subr.mxu0 0.0
    %5627 = vmatpush1.msra.mxu0 %v5585
    %5628 = vmatprep.subr.mxu0 0.0
    %5629 = vmatpush1.msra.mxu0 %v5586
    %5630 = vmatprep.subr.mxu0 0.0
    %5631 = vmatpush1.msra.mxu0 %v5587
    %5632 = vmatprep.subr.mxu0 0.0
    %5633 = vmatpush1.msra.mxu0 %v5588
    %5634 = vmatprep.subr.mxu0 0.0
    %5635 = vmatpush1.msra.mxu0 %v5589
    %5636 = vmatprep.subr.mxu0 0.0
    %5637 = vmatpush1.msra.mxu0 %v5590
    %5638 = vmatprep.subr.mxu0 0.0
    %5639 = vmatpush1.msra.mxu0 %v5591
    %5640 = vmatprep.subr.mxu0 0.0
    %5641 = vmatpush1.msra.mxu0 0.0
    %5642 = vmatprep.subr.mxu0 0.0
    %5643 = vmatpush1.msra.mxu0 0.0
    %5644 = vmatprep.subr.mxu0 0.0
    %5645 = vmatpush1.msra.mxu0 0.0
    %5646 = vmatprep.subr.mxu0 0.0
    %5647 = vmatpush1.msra.mxu0 0.0
    %5648 = vmatprep.subr.mxu0 0.0
    %5649 = vmatpush1.msra.mxu0 0.0
    %5650 = vmatprep.subr.mxu0 0.0
    %5651 = vmatpush1.msra.mxu0 0.0
    %5652 = vmatprep.subr.mxu0 0.0
    %5653 = vmatpush1.msra.mxu0 0.0
    %5654 = vmatprep.subr.mxu0 0.0
    %5655 = vmatpush1.msra.mxu0 0.0
    %5656 = vmatprep.subr.mxu0 0.0
    %5657 = vmatpush1.msra.mxu0 0.0
    %5658 = vmatprep.subr.mxu0 0.0
    %5659 = vmatpush1.msra.mxu0 0.0
    %5660 = vmatprep.subr.mxu0 0.0
    %5661 = vmatpush1.msra.mxu0 0.0
    %5662 = vmatprep.subr.mxu0 0.0
    %5663 = vmatpush1.msra.mxu0 0.0
    %5664 = vmatprep.subr.mxu0 0.0
    %5665 = vmatpush1.msra.mxu0 0.0
    %5666 = vmatprep.subr.mxu0 0.0
    %5667 = vmatpush1.msra.mxu0 0.0
    %5668 = vmatprep.subr.mxu0 0.0
    %5669 = vmatpush1.msra.mxu0 0.0
    %5670 = vmatprep.subr.mxu0 0.0
    %5671 = vmatpush1.msra.mxu0 0.0
    %5672 = vmatprep.mubr.f32.mxu0 0.0
    %5673 = vmatmul.mubr.f32.gmra.mrb[0].mxu0 %v5592
    %v5674 = vpop.f32.mrb[0].mxu0
    %v5675 = vadd.f32 0.0, %v5674
    %v5676 = vpop.f32.mrb[0].mxu0
    %5677 = vmatprep.mubr.f32.mxu0 0.0
    %5678 = vmatmul.mubr.f32.gmra.mrb[0].mxu0 %v5593
    %v5679 = vpop.f32.mrb[0].mxu0
    %v5680 = vadd.f32 0.0, %v5679
    %v5681 = vpop.f32.mrb[0].mxu0
    %5682 = vmatprep.mubr.f32.mxu0 0.0
    %5683 = vmatmul.mubr.f32.gmra.mrb[0].mxu0 %v5594
    %v5684 = vpop.f32.mrb[0].mxu0
    %v5685 = vadd.f32 0.0, %v5684
    %v5686 = vpop.f32.mrb[0].mxu0
    %5687 = vmatprep.mubr.f32.mxu0 0.0
    %5688 = vmatmul.mubr.f32.gmra.mrb[0].mxu0 %v5595
    %v5689 = vpop.f32.mrb[0].mxu0
    %v5690 = vadd.f32 0.0, %v5689
    %v5691 = vpop.f32.mrb[0].mxu0
    %5692 = vmatprep.mubr.f32.mxu0 0.0
    %5693 = vmatmul.mubr.f32.gmra.mrb[0].mxu0 %v5596
    %v5694 = vpop.f32.mrb[0].mxu0
    %v5695 = vadd.f32 0.0, %v5694
    %v5696 = vpop.f32.mrb[0].mxu0
    %5697 = vmatprep.mubr.f32.mxu0 0.0
    %5698 = vmatmul.mubr.f32.gmra.mrb[0].mxu0 %v5597
    %v5699 = vpop.f32.mrb[0].mxu0
    %v5700 = vadd.f32 0.0, %v5699
    %v5701 = vpop.f32.mrb[0].mxu0
    %5702 = vmatprep.mubr.f32.mxu0 0.0
    %5703 = vmatmul.mubr.f32.gmra.mrb[0].mxu0 %v5598
    %v5704 = vpop.f32.mrb[0].mxu0
    %v5705 = vadd.f32 0.0, %v5704
    %v5706 = vpop.f32.mrb[0].mxu0
    %5707 = vmatprep.mubr.f32.mxu0 0.0
    %5708 = vmatmul.mubr.f32.gmra.mrb[0].mxu0 %v5599
    %v5709 = vpop.f32.mrb[0].mxu0
    %v5710 = vadd.f32 0.0, %v5709
    %v5711 = vpop.f32.mrb[0].mxu0
    %5712 = vmatprep.mubr.f32.mxu0 0.0
    %5713 = vmatmul.mubr.f32.gmra.mrb[0].mxu0 %v5600
    %v5714 = vpop.f32.mrb[0].mxu0
    %v5715 = vadd.f32 0.0, %v5714
    %v5716 = vpop.f32.mrb[0].mxu0
    %5717 = vmatprep.mubr.f32.mxu0 0.0
    %5718 = vmatmul.mubr.f32.gmra.mrb[0].mxu0 %v5601
    %v5719 = vpop.f32.mrb[0].mxu0
    %v5720 = vadd.f32 0.0, %v5719
    %v5721 = vpop.f32.mrb[0].mxu0
    %5722 = vmatprep.mubr.f32.mxu0 0.0
    %5723 = vmatmul.mubr.f32.gmra.mrb[0].mxu0 %v5602
    %v5724 = vpop.f32.mrb[0].mxu0
    %v5725 = vadd.f32 0.0, %v5724
    %v5726 = vpop.f32.mrb[0].mxu0
    %5727 = vmatprep.mubr.f32.mxu0 0.0
    %5728 = vmatmul.mubr.f32.gmra.mrb[0].mxu0 %v5603
    %v5729 = vpop.f32.mrb[0].mxu0
    %v5730 = vadd.f32 0.0, %v5729
    %v5731 = vpop.f32.mrb[0].mxu0
    %5732 = vmatprep.mubr.f32.mxu0 0.0
    %5733 = vmatmul.mubr.f32.gmra.mrb[0].mxu0 %v5604
    %v5734 = vpop.f32.mrb[0].mxu0
    %v5735 = vadd.f32 0.0, %v5734
    %v5736 = vpop.f32.mrb[0].mxu0
    %5737 = vmatprep.mubr.f32.mxu0 0.0
    %5738 = vmatmul.mubr.f32.gmra.mrb[0].mxu0 %v5605
    %v5739 = vpop.f32.mrb[0].mxu0
    %v5740 = vadd.f32 0.0, %v5739
    %v5741 = vpop.f32.mrb[0].mxu0
    %5742 = vmatprep.mubr.f32.mxu0 0.0
    %5743 = vmatmul.mubr.f32.gmra.mrb[0].mxu0 %v5606
    %v5744 = vpop.f32.mrb[0].mxu0
    %v5745 = vadd.f32 0.0, %v5744
    %v5746 = vpop.f32.mrb[0].mxu0
    %5747 = vmatprep.mubr.f32.mxu0 0.0
    %5748 = vmatmul.mubr.f32.gmra.mrb[0].mxu0 %v5607
    %v5749 = vpop.f32.mrb[0].mxu0
    %v5750 = vadd.f32 0.0, %v5749
    %v5751 = vpop.f32.mrb[0].mxu0
    %5752 = vdwg.mxu0
    %5753 = vst.msk [vmem:[%s19] sm:$0xff] %vm401, %v5675
    %5754 = vst.msk [vmem:[%s19 + $0x8] sm:$0xff] %vm401, %v5680
    %5755 = vst.msk [vmem:[%s19 + $0x10] sm:$0xff] %vm401, %v5685
    %5756 = vst.msk [vmem:[%s19 + $0x18] sm:$0xff] %vm401, %v5690
    %5757 = vst.msk [vmem:[%s19 + $0x20] sm:$0xff] %vm401, %v5695
    %5758 = vst.msk [vmem:[%s19 + $0x28] sm:$0xff] %vm401, %v5700
    %5759 = vst.msk [vmem:[%s19 + $0x30] sm:$0xff] %vm401, %v5705
    %5760 = vst.msk [vmem:[%s19 + $0x38] sm:$0xff] %vm401, %v5710
    %5761 = vst.msk [vmem:[%s19 + $0x40] sm:$0xff] %vm401, %v5715
    %5762 = vst.msk [vmem:[%s19 + $0x48] sm:$0xff] %vm401, %v5720
    %5763 = vst.msk [vmem:[%s19 + $0x50] sm:$0xff] %vm401, %v5725
    %5764 = vst.msk [vmem:[%s19 + $0x58] sm:$0xff] %vm401, %v5730
    %5765 = vst.msk [vmem:[%s19 + $0x60] sm:$0xff] %vm401, %v5735
    %5766 = vst.msk [vmem:[%s19 + $0x68] sm:$0xff] %vm401, %v5740
    %5767 = vst.msk [vmem:[%s19 + $0x70] sm:$0xff] %vm401, %v5745
    %5768 = vst.msk [vmem:[%s19 + $0x78] sm:$0xff] %vm401, %v5750
    // Predicated region
    $region130: #{swin_block_forward.1} parent=1 // pred_check
      _
    $region131: #{swin_block_forward.1} parent=1 // pred_check_branch
      %5770 = sbr.rel (0) target = $region133
    $region132: #{swin_block_forward.1} parent=1 // pred_region
      _
    $region133: #{swin_block_forward.1} parent=1 // pred_fallthru
      _
    // Predicated region
    $region134: #{swin_block_forward.1} parent=1 // pred_check
      _
    $region135: #{swin_block_forward.1} parent=1 // pred_check_branch
      %5772 = sbr.rel (0) target = $region137
    $region136: #{swin_block_forward.1} parent=1 // pred_region
      _
    $region137: #{swin_block_forward.1} parent=1 // pred_fallthru
      _
    %5773 = vsyncpa [#allocation3], 1
    %5774 = vsyncpa [#allocation5], 1
    %5775 = vsyncpa [#allocation8], 1
    %5776 = vsyncpa [#allocation11], 1
    %5777 = vsyncpa [#allocation14], 1
    %5778 = vsyncpa [#allocation17], 1
    %5779 = vsyncpa [#allocation20], 1

</llo_original>
